<compile_context>
chip_gen: v6e
topology: v6e:2x2x1
jax: 0.10.0
libtpu: 0.0.40
codegen_flags: <defaults>
</compile_context>

<pallas_src>
import math
import functools

import jax
import jax.numpy as jnp
from jax import lax
from jax.experimental import pallas as pl
from jax.experimental.pallas import tpu as pltpu

MATMUL_DTYPE = jnp.bfloat16   # MXU operand dtype; accumulation stays f32
LN_EPS = 1e-5


def _row_tile(m, max_tile=256):
    """Largest row tile that divides m: either m itself (small) or a multiple of 8."""
    if m <= max_tile:
        return m
    start = max_tile - (max_tile % 8)
    for t in range(start, 7, -8):
        if m % t == 0:
            return t
    return m


# ----------------------- fused multi-head attention block -----------------------
#
# grid = (B, nhead); batch axis "parallel", head axis "arbitrary" (output accumulator).
# Per program: one batch element, one head.  Per-head weight slices arrive via BlockSpec
# (wq/wk/wv pre-split to (H, E, hd), wo to (H, hd, E)), so all matmuls are plain 2-D dots.
# The output block (1, Lq, E) stays resident across the head axis and accumulates the
# per-head contribution of the output projection; the last head adds the out-proj bias,
# the residual and applies LayerNorm.

def _fused_attn_kernel(*refs, nhead, scale, self_attn, has_extra, has_bias):
    it = iter(refs)
    q_ref = next(it)
    kv_ref = None if self_attn else next(it)
    extra_ref = next(it) if has_extra else None
    bias_ref = next(it) if has_bias else None
    (wq_ref, bq_ref, wk_ref, bk_ref, wv_ref, bv_ref,
     wo_ref, bo_ref, g_ref, b_ref, o_ref) = [next(it) for _ in range(11)]

    h = pl.program_id(1)
    mm = MATMUL_DTYPE

    x = q_ref[0].astype(jnp.float32)                          # (Lq, E)
    if has_extra:
        x = x + extra_ref[0].astype(jnp.float32)              # fused pos / query_embed add
    kv = x if self_attn else kv_ref[0].astype(jnp.float32)    # (Lk, E)

    xb, kvb = x.astype(mm), kv.astype(mm)
    # per-head projections (contraction over E)
    q = jnp.dot(xb, wq_ref[0], preferred_element_type=jnp.float32) + bq_ref[0]   # (Lq, hd)
    k = jnp.dot(kvb, wk_ref[0], preferred_element_type=jnp.float32) + bk_ref[0]  # (Lk, hd)
    v = jnp.dot(kvb, wv_ref[0], preferred_element_type=jnp.float32) + bv_ref[0]  # (Lk, hd)

    # scores: q @ k^T, contraction over head_dim
    s = lax.dot_general((q * scale).astype(mm), k.astype(mm),
                        (((1,), (1,)), ((), ())),
                        preferred_element_type=jnp.float32)                       # (Lq, Lk)
    if has_bias:
        s = s + bias_ref[0]                                                        # (1, Lk)

    m = jnp.max(s, axis=-1, keepdims=True)
    p = jnp.exp(s - m)
    attn = p * pl.reciprocal(jnp.sum(p, axis=-1, keepdims=True), approx=True)

    ctx = jnp.dot(attn.astype(mm), v.astype(mm),
                  preferred_element_type=jnp.float32)                              # (Lq, hd)
    partial = jnp.dot(ctx.astype(mm), wo_ref[0],
                      preferred_element_type=jnp.float32)                          # (Lq, E)

    @pl.when(h == 0)
    def _():
        o_ref[0] = partial.astype(o_ref.dtype)

    @pl.when(h > 0)
    def _():
        o_ref[0] = (o_ref[0].astype(jnp.float32) + partial).astype(o_ref.dtype)

    @pl.when(h == nhead - 1)
    def _():
        y = o_ref[0].astype(jnp.float32) + bo_ref[...] + x      # out-proj bias + residual
        mean = jnp.mean(y, axis=-1, keepdims=True)
        var = jnp.mean(jnp.square(y - mean), axis=-1, keepdims=True)   # biased (PyTorch LN)
        y = (y - mean) * lax.rsqrt(var + LN_EPS) * g_ref[...] + b_ref[...]
        o_ref[0] = y.astype(o_ref.dtype)


def fused_attention_block(q_in, kv_in, extra, key_bias, attn_p, norm_g, norm_b, nhead,
                          *, self_attn):
    """q_in: (B, Lq, E); kv_in: (B, Lk, E) (cross-attn only); extra: optional (B, Lq, E)
    added to q/k/v input and residual; key_bias: optional (B, 1, Lk) additive mask."""
    B, Lq, E = q_in.shape
    Lk = Lq if self_attn else kv_in.shape[1]
    hd = E // nhead
    mm = MATMUL_DTYPE

    # Pre-split projection weights per head (tiny, once per call); bf16 halves weight DMA.
    wq = attn_p["wq"].reshape(E, nhead, hd).transpose(1, 0, 2).astype(mm)   # (H, E, hd)
    wk = attn_p["wk"].reshape(E, nhead, hd).transpose(1, 0, 2).astype(mm)
    wv = attn_p["wv"].reshape(E, nhead, hd).transpose(1, 0, 2).astype(mm)
    wo = attn_p["wo"].reshape(nhead, hd, E).astype(mm)                       # (H, hd, E)
    bq = attn_p["bq"].reshape(nhead, 1, hd)
    bk = attn_p["bk"].reshape(nhead, 1, hd)
    bv = attn_p["bv"].reshape(nhead, 1, hd)
    bo = attn_p["bo"].reshape(1, E)
    g = norm_g.reshape(1, E)
    b = norm_b.reshape(1, E)

    inputs = [q_in]
    in_specs = [pl.BlockSpec((1, Lq, E), lambda bi, hi: (bi, 0, 0))]
    if not self_attn:
        inputs.append(kv_in)
        in_specs.append(pl.BlockSpec((1, Lk, E), lambda bi, hi: (bi, 0, 0)))
    if extra is not None:
        inputs.append(extra)
        in_specs.append(pl.BlockSpec((1, Lq, E), lambda bi, hi: (bi, 0, 0)))
    if key_bias is not None:
        inputs.append(key_bias)                                               # (B, 1, Lk)
        in_specs.append(pl.BlockSpec((1, 1, Lk), lambda bi, hi: (bi, 0, 0)))

    inputs += [wq, bq, wk, bk, wv, bv, wo, bo, g, b]
    in_specs += [
        pl.BlockSpec((1, E, hd), lambda bi, hi: (hi, 0, 0)),   # wq (per head)
        pl.BlockSpec((1, 1, hd), lambda bi, hi: (hi, 0, 0)),   # bq
        pl.BlockSpec((1, E, hd), lambda bi, hi: (hi, 0, 0)),   # wk
        pl.BlockSpec((1, 1, hd), lambda bi, hi: (hi, 0, 0)),   # bk
        pl.BlockSpec((1, E, hd), lambda bi, hi: (hi, 0, 0)),   # wv
        pl.BlockSpec((1, 1, hd), lambda bi, hi: (hi, 0, 0)),   # bv
        pl.BlockSpec((1, hd, E), lambda bi, hi: (hi, 0, 0)),   # wo (per head rows)
        pl.BlockSpec((1, E), lambda bi, hi: (0, 0)),           # bo
        pl.BlockSpec((1, E), lambda bi, hi: (0, 0)),           # LN gamma
        pl.BlockSpec((1, E), lambda bi, hi: (0, 0)),           # LN beta
    ]

    kernel = functools.partial(
        _fused_attn_kernel, nhead=nhead, scale=1.0 / math.sqrt(hd),
        self_attn=self_attn, has_extra=extra is not None, has_bias=key_bias is not None)

    return pl.pallas_call(
        kernel,
        out_shape=jax.ShapeDtypeStruct((B, Lq, E), jnp.float32),
        grid=(B, nhead),
        in_specs=in_specs,
        out_specs=pl.BlockSpec((1, Lq, E), lambda bi, hi: (bi, 0, 0)),
        compiler_params=pltpu.CompilerParams(
            dimension_semantics=("parallel", "arbitrary")),
    )(*inputs)


# ------------------------------- fused FFN block --------------------------------

def _fused_ffn_kernel(x_ref, w1_ref, b1_ref, w2_ref, b2_ref, g_ref, b_ref, o_ref):
    mm = MATMUL_DTYPE
    x = x_ref[...].astype(jnp.float32)                                              # (TM, E)
    h = jnp.dot(x.astype(mm), w1_ref[...], preferred_element_type=jnp.float32) + b1_ref[...]
    h = jnp.maximum(h, 0.0)                                                         # relu
    y = jnp.dot(h.astype(mm), w2_ref[...], preferred_element_type=jnp.float32) + b2_ref[...]
    y = y + x                                                                       # residual
    mean = jnp.mean(y, axis=-1, keepdims=True)
    var = jnp.mean(jnp.square(y - mean), axis=-1, keepdims=True)
    o_ref[...] = ((y - mean) * lax.rsqrt(var + LN_EPS) * g_ref[...] + b_ref[...]
                  ).astype(o_ref.dtype)


def fused_ffn_block(x, w1, b1, w2, b2, norm_g, norm_b, max_tile=256):
    B, L, E = x.shape
    F = w1.shape[1]
    M = B * L
    TM = _row_tile(M, max_tile)
    mm = MATMUL_DTYPE
    out = pl.pallas_call(
        _fused_ffn_kernel,
        out_shape=jax.ShapeDtypeStruct((M, E), jnp.float32),
        grid=(M // TM,),
        in_specs=[
            pl.BlockSpec((TM, E), lambda i: (i, 0)),
            pl.BlockSpec((E, F), lambda i: (0, 0)),    # weights resident across row tiles
            pl.BlockSpec((1, F), lambda i: (0, 0)),
            pl.BlockSpec((F, E), lambda i: (0, 0)),
            pl.BlockSpec((1, E), lambda i: (0, 0)),
            pl.BlockSpec((1, E), lambda i: (0, 0)),
            pl.BlockSpec((1, E), lambda i: (0, 0)),
        ],
        out_specs=pl.BlockSpec((TM, E), lambda i: (i, 0)),
        compiler_params=pltpu.CompilerParams(dimension_semantics=("parallel",)),
    )(x.reshape(M, E), w1.astype(mm), b1.reshape(1, F), w2.astype(mm),
      b2.reshape(1, E), norm_g.reshape(1, E), norm_b.reshape(1, E))
    return out.reshape(B, L, E)


# ------------------------ fused LayerNorm + pos-embedding add -------------------

def _ln_add_kernel(x_ref, a_ref, g_ref, b_ref, o_ref):
    x = x_ref[...].astype(jnp.float32)
    mean = jnp.mean(x, axis=-1, keepdims=True)
    var = jnp.mean(jnp.square(x - mean), axis=-1, keepdims=True)
    y = (x - mean) * lax.rsqrt(var + LN_EPS) * g_ref[...] + b_ref[...]
    o_ref[...] = (y + a_ref[...].astype(jnp.float32)).astype(o_ref.dtype)


def layernorm_add(x, add, gamma, beta, max_tile=512):
    B, L, E = x.shape
    M = B * L
    TM = _row_tile(M, max_tile)
    out = pl.pallas_call(
        _ln_add_kernel,
        out_shape=jax.ShapeDtypeStruct((M, E), jnp.float32),
        grid=(M // TM,),
        in_specs=[
            pl.BlockSpec((TM, E), lambda i: (i, 0)),
            pl.BlockSpec((TM, E), lambda i: (i, 0)),
            pl.BlockSpec((1, E), lambda i: (0, 0)),
            pl.BlockSpec((1, E), lambda i: (0, 0)),
        ],
        out_specs=pl.BlockSpec((TM, E), lambda i: (i, 0)),
        compiler_params=pltpu.CompilerParams(dimension_semantics=("parallel",)),
    )(x.reshape(M, E), add.reshape(M, E), gamma.reshape(1, E), beta.reshape(1, E))
    return out.reshape(B, L, E)


# --------------------------- composed transformer --------------------------

def encoder_layer(x, lp, nhead, key_bias, extra):
    x = fused_attention_block(x, None, extra, key_bias, lp["self_attn"],
                              lp["norm1_g"], lp["norm1_b"], nhead, self_attn=True)
    return fused_ffn_block(x, lp["w1"], lp["b1"], lp["w2"], lp["b2"],
                           lp["norm2_g"], lp["norm2_b"])


def decoder_layer(tgt, memory, qe, lp, nhead, key_bias):
    # query_embed add fused into the self-attn kernel (it reaches q/k/v and the residual,
    # matching `layer(tgt + query_embed, memory, ...)` of the PyTorch wrapper).
    tgt = fused_attention_block(tgt, None, qe, None, lp["self_attn"],
                                lp["norm1_g"], lp["norm1_b"], nhead, self_attn=True)
    tgt = fused_attention_block(tgt, memory, None, key_bias, lp["cross_attn"],
                                lp["norm2_g"], lp["norm2_b"], nhead, self_attn=False)
    return fused_ffn_block(tgt, lp["w1"], lp["b1"], lp["w2"], lp["b2"],
                           lp["norm3_g"], lp["norm3_b"])


def transformer_forward(params, src, mask, query_embed, pos_embed, nhead):
    bs, c, l = src.shape
    x = jnp.transpose(src, (0, 2, 1))                   # (B, L, E)  batch-first canonical
    pos = jnp.transpose(pos_embed, (0, 2, 1))           # (B, L, E)
    kpm = jnp.transpose(mask, (1, 0))                   # (B, L), True = ignore
    key_bias = jnp.where(kpm, -1e9, 0.0).astype(jnp.float32).reshape(bs, 1, l)  # once
    qe = jnp.transpose(query_embed, (1, 0, 2))          # (B, NQ, E)

    enc_layers = params["encoder_layers"]
    if not enc_layers:                                   # corner case only
        x = x + pos
    for i, lp in enumerate(enc_layers):
        # src = src + pos fused into the first encoder layer's attention kernel
        x = encoder_layer(x, lp, nhead, key_bias, pos if i == 0 else None)

    # encoder final LayerNorm, then memory = memory + pos (fused)
    memory = layernorm_add(x, pos, params["enc_norm_g"], params["enc_norm_b"])

    # manual decoder-layer loop (no final decoder norm)
    tgt = jnp.zeros_like(qe)
    for lp in params["decoder_layers"]:
        tgt = decoder_layer(tgt, memory, qe, lp, nhead, key_bias)

    hs = tgt[None]                                       # (1, bs, nq, c)
    mem_out = jnp.transpose(memory, (0, 2, 1))           # (bs, c, l)
    return hs, mem_out


# ------------------------------- init helpers ------------------------------

def _xavier(key, fan_in, fan_out):
    bound = math.sqrt(6.0 / (fan_in + fan_out))
    return jax.random.uniform(key, (fan_in, fan_out), jnp.float32, -bound, bound)


def init_attn_params(key, E):
    ks = jax.random.split(key, 4)
    z = jnp.zeros((E,), jnp.float32)
    return dict(wq=_xavier(ks[0], E, E), bq=z,
                wk=_xavier(ks[1], E, E), bk=z,
                wv=_xavier(ks[2], E, E), bv=z,
                wo=_xavier(ks[3], E, E), bo=z)


def init_encoder_layer_params(key, E, F):
    k1, k2, k3 = jax.random.split(key, 3)
    ones, zeros = jnp.ones((E,), jnp.float32), jnp.zeros((E,), jnp.float32)
    return dict(self_attn=init_attn_params(k1, E),
                w1=_xavier(k2, E, F), b1=jnp.zeros((F,), jnp.float32),
                w2=_xavier(k3, F, E), b2=zeros,
                norm1_g=ones, norm1_b=zeros, norm2_g=ones, norm2_b=zeros)


def init_decoder_layer_params(key, E, F):
    k1, k2, k3, k4 = jax.random.split(key, 4)
    ones, zeros = jnp.ones((E,), jnp.float32), jnp.zeros((E,), jnp.float32)
    return dict(self_attn=init_attn_params(k1, E),
                cross_attn=init_attn_params(k2, E),
                w1=_xavier(k3, E, F), b1=jnp.zeros((F,), jnp.float32),
                w2=_xavier(k4, F, E), b2=zeros,
                norm1_g=ones, norm1_b=zeros,
                norm2_g=ones, norm2_b=zeros,
                norm3_g=ones, norm3_b=zeros)


def init_params(key, E, F, n_enc, n_dec):
    keys = jax.random.split(key, n_enc + n_dec)
    return dict(
        encoder_layers=[init_encoder_layer_params(keys[i], E, F) for i in range(n_enc)],
        decoder_layers=[init_decoder_layer_params(keys[n_enc + i], E, F)
                        for i in range(n_dec)],
        enc_norm_g=jnp.ones((E,), jnp.float32),
        enc_norm_b=jnp.zeros((E,), jnp.float32),
    )


# ----------------------------------- main -----------------------------------

if __name__ == "__main__":
    D_MODEL, NHEAD, ENC_LAYERS, DEC_LAYERS, FF = 32, 4, 2, 2, 64
    BS, L, NQ = 2, 16, 8

    key = jax.random.PRNGKey(0)
    k_params, k_src, k_pos, k_query = jax.random.split(key, 4)

    params = init_params(k_params, D_MODEL, FF, ENC_LAYERS, DEC_LAYERS)

    src = jax.random.normal(k_src, (BS, D_MODEL, L), jnp.float32)         # (bs, c, l)
    pos_embed = 0.1 * jax.random.normal(k_pos, (BS, D_MODEL, L), jnp.float32)
    query_embed = jax.random.normal(k_query, (NQ, BS, D_MODEL), jnp.float32)
    # mask arrives as (l, bs); forward permutes it to (bs, l) key_padding_mask
    mask = jnp.zeros((L, BS), jnp.bool_).at[L - 2:, 1].set(True)

    fwd = jax.jit(functools.partial(transformer_forward, nhead=NHEAD))
    hs, memory = fwd(params, src, mask, query_embed, pos_embed)
    hs, memory = jax.block_until_ready((hs, memory))

    assert hs.shape == (1, BS, NQ, D_MODEL), hs.shape
    assert memory.shape == (BS, D_MODEL, L), memory.shape
    assert not bool(jnp.isnan(hs).any()) and not bool(jnp.isnan(memory).any())
    print("KERNEL_OK")
</pallas_src>

<mosaic_0001>
module attributes {stable_mosaic.version = 11 : i64} {
  func.func @_fused_attn_kernel(%arg0: i32, %arg1: i32, %arg2: memref<1x16x32xf32, #tpu.memory_space<vmem>>, %arg3: memref<1x16x32xf32, #tpu.memory_space<vmem>>, %arg4: memref<1x1x16xf32, #tpu.memory_space<vmem>>, %arg5: memref<1x32x8xbf16, #tpu.memory_space<vmem>>, %arg6: memref<1x1x8xf32, #tpu.memory_space<vmem>>, %arg7: memref<1x32x8xbf16, #tpu.memory_space<vmem>>, %arg8: memref<1x1x8xf32, #tpu.memory_space<vmem>>, %arg9: memref<1x32x8xbf16, #tpu.memory_space<vmem>>, %arg10: memref<1x1x8xf32, #tpu.memory_space<vmem>>, %arg11: memref<1x8x32xbf16, #tpu.memory_space<vmem>>, %arg12: memref<1x32xf32, #tpu.memory_space<vmem>>, %arg13: memref<1x32xf32, #tpu.memory_space<vmem>>, %arg14: memref<1x32xf32, #tpu.memory_space<vmem>>, %arg15: memref<1x16x32xf32, #tpu.memory_space<vmem>>) attributes {dimension_semantics = [#tpu.dimension_semantics<parallel>, #tpu.dimension_semantics<arbitrary>], iteration_bounds = array<i64: 2, 4>, scalar_prefetch = 0 : i64, scratch_operands = 0 : i64, tpu.core_type = #tpu.core_type<tc>, window_params = [{transform_indices = @transform_0, window_bounds = array<i64: 1, 16, 32>}, {transform_indices = @transform_1, window_bounds = array<i64: 1, 16, 32>}, {transform_indices = @transform_2, window_bounds = array<i64: 1, 1, 16>}, {transform_indices = @transform_3, window_bounds = array<i64: 1, 32, 8>}, {transform_indices = @transform_4, window_bounds = array<i64: 1, 1, 8>}, {transform_indices = @transform_5, window_bounds = array<i64: 1, 32, 8>}, {transform_indices = @transform_6, window_bounds = array<i64: 1, 1, 8>}, {transform_indices = @transform_7, window_bounds = array<i64: 1, 32, 8>}, {transform_indices = @transform_8, window_bounds = array<i64: 1, 1, 8>}, {transform_indices = @transform_9, window_bounds = array<i64: 1, 8, 32>}, {pipeline_mode = #tpu.pipeline_mode<synchronous>, transform_indices = @transform_10, window_bounds = array<i64: 1, 32>}, {pipeline_mode = #tpu.pipeline_mode<synchronous>, transform_indices = @transform_11, window_bounds = array<i64: 1, 32>}, {pipeline_mode = #tpu.pipeline_mode<synchronous>, transform_indices = @transform_12, window_bounds = array<i64: 1, 32>}, {transform_indices = @transform_13, window_bounds = array<i64: 1, 16, 32>}]} {
    %c0 = arith.constant 0 : index
    %c0_0 = arith.constant 0 : index
    %c0_1 = arith.constant 0 : index
    %0 = vector.load %arg2[%c0, %c0_0, %c0_1] : memref<1x16x32xf32, #tpu.memory_space<vmem>>, vector<1x16x32xf32>
    %1 = vector.shape_cast %0 : vector<1x16x32xf32> to vector<16x32xf32>
    %c0_2 = arith.constant 0 : index
    %c0_3 = arith.constant 0 : index
    %c0_4 = arith.constant 0 : index
    %2 = vector.load %arg3[%c0_2, %c0_3, %c0_4] : memref<1x16x32xf32, #tpu.memory_space<vmem>>, vector<1x16x32xf32>
    %3 = vector.shape_cast %2 : vector<1x16x32xf32> to vector<16x32xf32>
    %4 = arith.addf %1, %3 : vector<16x32xf32>
    %5 = arith.truncf %4 : vector<16x32xf32> to vector<16x32xbf16>
    %6 = arith.truncf %4 : vector<16x32xf32> to vector<16x32xbf16>
    %c0_5 = arith.constant 0 : index
    %c0_6 = arith.constant 0 : index
    %c0_7 = arith.constant 0 : index
    %7 = vector.load %arg5[%c0_5, %c0_6, %c0_7] : memref<1x32x8xbf16, #tpu.memory_space<vmem>>, vector<1x32x8xbf16>
    %8 = vector.shape_cast %7 : vector<1x32x8xbf16> to vector<32x8xbf16>
    %cst = arith.constant dense<0.000000e+00> : vector<16x8xf32>
    %9 = tpu.matmul %5, %8, %cst {dimension_numbers = #tpu.dot_dimension_numbers<[1], [0], [0], [1], [0, 0, 1, 1], [], []>} : vector<16x32xbf16>, vector<32x8xbf16>, vector<16x8xf32> -> vector<16x8xf32>
    %c0_8 = arith.constant 0 : index
    %c0_9 = arith.constant 0 : index
    %c0_10 = arith.constant 0 : index
    %10 = vector.load %arg6[%c0_8, %c0_9, %c0_10] : memref<1x1x8xf32, #tpu.memory_space<vmem>>, vector<1x1x8xf32>
    %11 = vector.shape_cast %10 : vector<1x1x8xf32> to vector<1x8xf32>
    %12 = vector.broadcast %11 : vector<1x8xf32> to vector<16x8xf32>
    %13 = arith.addf %9, %12 : vector<16x8xf32>
    %c0_11 = arith.constant 0 : index
    %c0_12 = arith.constant 0 : index
    %c0_13 = arith.constant 0 : index
    %14 = vector.load %arg7[%c0_11, %c0_12, %c0_13] : memref<1x32x8xbf16, #tpu.memory_space<vmem>>, vector<1x32x8xbf16>
    %15 = vector.shape_cast %14 : vector<1x32x8xbf16> to vector<32x8xbf16>
    %cst_14 = arith.constant dense<0.000000e+00> : vector<16x8xf32>
    %16 = tpu.matmul %6, %15, %cst_14 {dimension_numbers = #tpu.dot_dimension_numbers<[1], [0], [0], [1], [0, 0, 1, 1], [], []>} : vector<16x32xbf16>, vector<32x8xbf16>, vector<16x8xf32> -> vector<16x8xf32>
    %c0_15 = arith.constant 0 : index
    %c0_16 = arith.constant 0 : index
    %c0_17 = arith.constant 0 : index
    %17 = vector.load %arg8[%c0_15, %c0_16, %c0_17] : memref<1x1x8xf32, #tpu.memory_space<vmem>>, vector<1x1x8xf32>
    %18 = vector.shape_cast %17 : vector<1x1x8xf32> to vector<1x8xf32>
    %19 = vector.broadcast %18 : vector<1x8xf32> to vector<16x8xf32>
    %20 = arith.addf %16, %19 : vector<16x8xf32>
    %c0_18 = arith.constant 0 : index
    %c0_19 = arith.constant 0 : index
    %c0_20 = arith.constant 0 : index
    %21 = vector.load %arg9[%c0_18, %c0_19, %c0_20] : memref<1x32x8xbf16, #tpu.memory_space<vmem>>, vector<1x32x8xbf16>
    %22 = vector.shape_cast %21 : vector<1x32x8xbf16> to vector<32x8xbf16>
    %cst_21 = arith.constant dense<0.000000e+00> : vector<16x8xf32>
    %23 = tpu.matmul %6, %22, %cst_21 {dimension_numbers = #tpu.dot_dimension_numbers<[1], [0], [0], [1], [0, 0, 1, 1], [], []>} : vector<16x32xbf16>, vector<32x8xbf16>, vector<16x8xf32> -> vector<16x8xf32>
    %c0_22 = arith.constant 0 : index
    %c0_23 = arith.constant 0 : index
    %c0_24 = arith.constant 0 : index
    %24 = vector.load %arg10[%c0_22, %c0_23, %c0_24] : memref<1x1x8xf32, #tpu.memory_space<vmem>>, vector<1x1x8xf32>
    %25 = vector.shape_cast %24 : vector<1x1x8xf32> to vector<1x8xf32>
    %26 = vector.broadcast %25 : vector<1x8xf32> to vector<16x8xf32>
    %27 = arith.addf %23, %26 : vector<16x8xf32>
    %cst_25 = arith.constant 0.353553385 : f32
    %28 = vector.broadcast %cst_25 : f32 to vector<16x8xf32>
    %29 = arith.mulf %13, %28 : vector<16x8xf32>
    %30 = arith.truncf %29 : vector<16x8xf32> to vector<16x8xbf16>
    %31 = arith.truncf %20 : vector<16x8xf32> to vector<16x8xbf16>
    %cst_26 = arith.constant dense<0.000000e+00> : vector<16x16xf32>
    %32 = tpu.matmul %30, %31, %cst_26 {dimension_numbers = #tpu.dot_dimension_numbers<[1], [1], [0], [0], [0, 0, 1, 0], [], []>} : vector<16x8xbf16>, vector<16x8xbf16>, vector<16x16xf32> -> vector<16x16xf32>
    %c0_27 = arith.constant 0 : index
    %c0_28 = arith.constant 0 : index
    %c0_29 = arith.constant 0 : index
    %33 = vector.load %arg4[%c0_27, %c0_28, %c0_29] : memref<1x1x16xf32, #tpu.memory_space<vmem>>, vector<1x1x16xf32>
    %34 = vector.shape_cast %33 : vector<1x1x16xf32> to vector<1x16xf32>
    %35 = vector.broadcast %34 : vector<1x16xf32> to vector<16x16xf32>
    %36 = arith.addf %32, %35 : vector<16x16xf32>
    %cst_30 = arith.constant dense<0xFF800000> : vector<16xf32>
    %37 = vector.multi_reduction <maximumf>, %36, %cst_30 [1] : vector<16x16xf32> to vector<16xf32>
    %38 = vector.shape_cast %37 : vector<16xf32> to vector<16x1xf32>
    %39 = vector.broadcast %38 : vector<16x1xf32> to vector<16x16xf32>
    %40 = arith.subf %36, %39 : vector<16x16xf32>
    %41 = math.exp %40 : vector<16x16xf32>
    %cst_31 = arith.constant dense<0.000000e+00> : vector<16xf32>
    %42 = vector.multi_reduction <add>, %41, %cst_31 [1] : vector<16x16xf32> to vector<16xf32>
    %43 = vector.shape_cast %42 : vector<16xf32> to vector<16x1xf32>
    %44 = tpu.reciprocal %43 {approx = true} : vector<16x1xf32> -> vector<16x1xf32>
    %45 = vector.broadcast %44 : vector<16x1xf32> to vector<16x16xf32>
    %46 = arith.mulf %41, %45 : vector<16x16xf32>
    %47 = arith.truncf %46 : vector<16x16xf32> to vector<16x16xbf16>
    %48 = arith.truncf %27 : vector<16x8xf32> to vector<16x8xbf16>
    %cst_32 = arith.constant dense<0.000000e+00> : vector<16x8xf32>
    %49 = tpu.matmul %47, %48, %cst_32 {dimension_numbers = #tpu.dot_dimension_numbers<[1], [0], [0], [1], [0, 0, 1, 1], [], []>} : vector<16x16xbf16>, vector<16x8xbf16>, vector<16x8xf32> -> vector<16x8xf32>
    %50 = arith.truncf %49 : vector<16x8xf32> to vector<16x8xbf16>
    %c0_33 = arith.constant 0 : index
    %c0_34 = arith.constant 0 : index
    %c0_35 = arith.constant 0 : index
    %51 = vector.load %arg11[%c0_33, %c0_34, %c0_35] : memref<1x8x32xbf16, #tpu.memory_space<vmem>>, vector<1x8x32xbf16>
    %52 = vector.shape_cast %51 : vector<1x8x32xbf16> to vector<8x32xbf16>
    %cst_36 = arith.constant dense<0.000000e+00> : vector<16x32xf32>
    %53 = tpu.matmul %50, %52, %cst_36 {dimension_numbers = #tpu.dot_dimension_numbers<[1], [0], [0], [1], [0, 0, 1, 1], [], []>} : vector<16x8xbf16>, vector<8x32xbf16>, vector<16x32xf32> -> vector<16x32xf32>
    %c0_i32 = arith.constant 0 : i32
    %54 = arith.cmpi eq, %arg1, %c0_i32 : i32
    %55 = arith.extui %54 : i1 to i32
    %c0_i32_37 = arith.constant 0 : i32
    %56 = arith.cmpi ne, %55, %c0_i32_37 : i32
    scf.if %56 {
      %c0_41 = arith.constant 0 : index
      %c0_42 = arith.constant 0 : index
      %c0_43 = arith.constant 0 : index
      %63 = vector.load %arg15[%c0_41, %c0_42, %c0_43] : memref<1x16x32xf32, #tpu.memory_space<vmem>>, vector<1x16x32xf32>
      %64 = vector.shape_cast %63 : vector<1x16x32xf32> to vector<16x32xf32>
      %65 = vector.shape_cast %53 : vector<16x32xf32> to vector<1x16x32xf32>
      tpu.vector_store %arg15[%c0_41, %c0_42, %c0_43], %65 {strides = array<i32>} : memref<1x16x32xf32, #tpu.memory_space<vmem>>, vector<1x16x32xf32>,
    } else {
    }
    %c0_i32_38 = arith.constant 0 : i32
    %57 = arith.cmpi sgt, %arg1, %c0_i32_38 : i32
    %58 = arith.extui %57 : i1 to i32
    %c0_i32_39 = arith.constant 0 : i32
    %59 = arith.cmpi ne, %58, %c0_i32_39 : i32
    scf.if %59 {
      %c0_41 = arith.constant 0 : index
      %c0_42 = arith.constant 0 : index
      %c0_43 = arith.constant 0 : index
      %63 = vector.load %arg15[%c0_41, %c0_42, %c0_43] : memref<1x16x32xf32, #tpu.memory_space<vmem>>, vector<1x16x32xf32>
      %64 = vector.shape_cast %63 : vector<1x16x32xf32> to vector<16x32xf32>
      %65 = arith.addf %64, %53 : vector<16x32xf32>
      %c0_44 = arith.constant 0 : index
      %c0_45 = arith.constant 0 : index
      %c0_46 = arith.constant 0 : index
      %66 = vector.load %arg15[%c0_44, %c0_45, %c0_46] : memref<1x16x32xf32, #tpu.memory_space<vmem>>, vector<1x16x32xf32>
      %67 = vector.shape_cast %66 : vector<1x16x32xf32> to vector<16x32xf32>
      %68 = vector.shape_cast %65 : vector<16x32xf32> to vector<1x16x32xf32>
      tpu.vector_store %arg15[%c0_44, %c0_45, %c0_46], %68 {strides = array<i32>} : memref<1x16x32xf32, #tpu.memory_space<vmem>>, vector<1x16x32xf32>,
    } else {
    }
    %c3_i32 = arith.constant 3 : i32
    %60 = arith.cmpi eq, %arg1, %c3_i32 : i32
    %61 = arith.extui %60 : i1 to i32
    %c0_i32_40 = arith.constant 0 : i32
    %62 = arith.cmpi ne, %61, %c0_i32_40 : i32
    scf.if %62 {
      %c0_41 = arith.constant 0 : index
      %c0_42 = arith.constant 0 : index
      %c0_43 = arith.constant 0 : index
      %63 = vector.load %arg15[%c0_41, %c0_42, %c0_43] : memref<1x16x32xf32, #tpu.memory_space<vmem>>, vector<1x16x32xf32>
      %64 = vector.shape_cast %63 : vector<1x16x32xf32> to vector<16x32xf32>
      %c0_44 = arith.constant 0 : index
      %c0_45 = arith.constant 0 : index
      %65 = vector.load %arg12[%c0_44, %c0_45] : memref<1x32xf32, #tpu.memory_space<vmem>>, vector<1x32xf32>
      %66 = vector.broadcast %65 : vector<1x32xf32> to vector<16x32xf32>
      %67 = arith.addf %64, %66 : vector<16x32xf32>
      %68 = arith.addf %67, %4 : vector<16x32xf32>
      %cst_46 = arith.constant dense<0.000000e+00> : vector<16xf32>
      %69 = vector.multi_reduction <add>, %68, %cst_46 [1] : vector<16x32xf32> to vector<16xf32>
      %70 = vector.shape_cast %69 : vector<16xf32> to vector<16x1xf32>
      %cst_47 = arith.constant 3.200000e+01 : f32
      %71 = vector.broadcast %cst_47 : f32 to vector<16x1xf32>
      %72 = arith.divf %70, %71 : vector<16x1xf32>
      %73 = vector.broadcast %72 : vector<16x1xf32> to vector<16x32xf32>
      %74 = arith.subf %68, %73 : vector<16x32xf32>
      %75 = arith.mulf %74, %74 : vector<16x32xf32>
      %cst_48 = arith.constant dense<0.000000e+00> : vector<16xf32>
      %76 = vector.multi_reduction <add>, %75, %cst_48 [1] : vector<16x32xf32> to vector<16xf32>
      %77 = vector.shape_cast %76 : vector<16xf32> to vector<16x1xf32>
      %cst_49 = arith.constant 3.200000e+01 : f32
      %78 = vector.broadcast %cst_49 : f32 to vector<16x1xf32>
      %79 = arith.divf %77, %78 : vector<16x1xf32>
      %80 = vector.broadcast %72 : vector<16x1xf32> to vector<16x32xf32>
      %81 = arith.subf %68, %80 : vector<16x32xf32>
      %cst_50 = arith.constant 9.99999974E-6 : f32
      %82 = vector.broadcast %cst_50 : f32 to vector<16x1xf32>
      %83 = arith.addf %79, %82 : vector<16x1xf32>
      %84 = math.rsqrt %83 : vector<16x1xf32>
      %85 = vector.broadcast %84 : vector<16x1xf32> to vector<16x32xf32>
      %86 = arith.mulf %81, %85 : vector<16x32xf32>
      %c0_51 = arith.constant 0 : index
      %c0_52 = arith.constant 0 : index
      %87 = vector.load %arg13[%c0_51, %c0_52] : memref<1x32xf32, #tpu.memory_space<vmem>>, vector<1x32xf32>
      %88 = vector.broadcast %87 : vector<1x32xf32> to vector<16x32xf32>
      %89 = arith.mulf %86, %88 : vector<16x32xf32>
      %c0_53 = arith.constant 0 : index
      %c0_54 = arith.constant 0 : index
      %90 = vector.load %arg14[%c0_53, %c0_54] : memref<1x32xf32, #tpu.memory_space<vmem>>, vector<1x32xf32>
      %91 = vector.broadcast %90 : vector<1x32xf32> to vector<16x32xf32>
      %92 = arith.addf %89, %91 : vector<16x32xf32>
      %c0_55 = arith.constant 0 : index
      %c0_56 = arith.constant 0 : index
      %c0_57 = arith.constant 0 : index
      %93 = vector.load %arg15[%c0_55, %c0_56, %c0_57] : memref<1x16x32xf32, #tpu.memory_space<vmem>>, vector<1x16x32xf32>
      %94 = vector.shape_cast %93 : vector<1x16x32xf32> to vector<16x32xf32>
      %95 = vector.shape_cast %92 : vector<16x32xf32> to vector<1x16x32xf32>
      tpu.vector_store %arg15[%c0_55, %c0_56, %c0_57], %95 {strides = array<i32>} : memref<1x16x32xf32, #tpu.memory_space<vmem>>, vector<1x16x32xf32>,
    } else {
    }
    return
  }
  func.func @transform_0(%arg0: i32, %arg1: i32) -> (i32, i32, i32) {
    %c0_i32 = arith.constant 0 : i32
    %c0_i32_0 = arith.constant 0 : i32
    %c0_i32_1 = arith.constant 0 : i32
    return %arg0, %c0_i32, %c0_i32_0 : i32, i32, i32
  }
  func.func @transform_1(%arg0: i32, %arg1: i32) -> (i32, i32, i32) {
    %c0_i32 = arith.constant 0 : i32
    %c0_i32_0 = arith.constant 0 : i32
    %c0_i32_1 = arith.constant 0 : i32
    return %arg0, %c0_i32, %c0_i32_0 : i32, i32, i32
  }
  func.func @transform_2(%arg0: i32, %arg1: i32) -> (i32, i32, i32) {
    %c0_i32 = arith.constant 0 : i32
    %c0_i32_0 = arith.constant 0 : i32
    %c0_i32_1 = arith.constant 0 : i32
    return %arg0, %c0_i32, %c0_i32_0 : i32, i32, i32
  }
  func.func @transform_3(%arg0: i32, %arg1: i32) -> (i32, i32, i32) {
    %c0_i32 = arith.constant 0 : i32
    %c0_i32_0 = arith.constant 0 : i32
    %c0_i32_1 = arith.constant 0 : i32
    return %arg1, %c0_i32, %c0_i32_0 : i32, i32, i32
  }
  func.func @transform_4(%arg0: i32, %arg1: i32) -> (i32, i32, i32) {
    %c0_i32 = arith.constant 0 : i32
    %c0_i32_0 = arith.constant 0 : i32
    %c0_i32_1 = arith.constant 0 : i32
    return %arg1, %c0_i32, %c0_i32_0 : i32, i32, i32
  }
  func.func @transform_5(%arg0: i32, %arg1: i32) -> (i32, i32, i32) {
    %c0_i32 = arith.constant 0 : i32
    %c0_i32_0 = arith.constant 0 : i32
    %c0_i32_1 = arith.constant 0 : i32
    return %arg1, %c0_i32, %c0_i32_0 : i32, i32, i32
  }
  func.func @transform_6(%arg0: i32, %arg1: i32) -> (i32, i32, i32) {
    %c0_i32 = arith.constant 0 : i32
    %c0_i32_0 = arith.constant 0 : i32
    %c0_i32_1 = arith.constant 0 : i32
    return %arg1, %c0_i32, %c0_i32_0 : i32, i32, i32
  }
  func.func @transform_7(%arg0: i32, %arg1: i32) -> (i32, i32, i32) {
    %c0_i32 = arith.constant 0 : i32
    %c0_i32_0 = arith.constant 0 : i32
    %c0_i32_1 = arith.constant 0 : i32
    return %arg1, %c0_i32, %c0_i32_0 : i32, i32, i32
  }
  func.func @transform_8(%arg0: i32, %arg1: i32) -> (i32, i32, i32) {
    %c0_i32 = arith.constant 0 : i32
    %c0_i32_0 = arith.constant 0 : i32
    %c0_i32_1 = arith.constant 0 : i32
    return %arg1, %c0_i32, %c0_i32_0 : i32, i32, i32
  }
  func.func @transform_9(%arg0: i32, %arg1: i32) -> (i32, i32, i32) {
    %c0_i32 = arith.constant 0 : i32
    %c0_i32_0 = arith.constant 0 : i32
    %c0_i32_1 = arith.constant 0 : i32
    return %arg1, %c0_i32, %c0_i32_0 : i32, i32, i32
  }
  func.func @transform_10(%arg0: i32, %arg1: i32) -> (i32, i32) {
    %c0_i32 = arith.constant 0 : i32
    %c0_i32_0 = arith.constant 0 : i32
    %c0_i32_1 = arith.constant 0 : i32
    return %c0_i32, %c0_i32_0 : i32, i32
  }
  func.func @transform_11(%arg0: i32, %arg1: i32) -> (i32, i32) {
    %c0_i32 = arith.constant 0 : i32
    %c0_i32_0 = arith.constant 0 : i32
    %c0_i32_1 = arith.constant 0 : i32
    return %c0_i32, %c0_i32_0 : i32, i32
  }
  func.func @transform_12(%arg0: i32, %arg1: i32) -> (i32, i32) {
    %c0_i32 = arith.constant 0 : i32
    %c0_i32_0 = arith.constant 0 : i32
    %c0_i32_1 = arith.constant 0 : i32
    return %c0_i32, %c0_i32_0 : i32, i32
  }
  func.func @transform_13(%arg0: i32, %arg1: i32) -> (i32, i32, i32) {
    %c0_i32 = arith.constant 0 : i32
    %c0_i32_0 = arith.constant 0 : i32
    %c0_i32_1 = arith.constant 0 : i32
    return %arg0, %c0_i32, %c0_i32_0 : i32, i32, i32
  }
}

module attributes {stable_mosaic.version = 11 : i64} {
  func.func @_fused_attn_kernel(%arg0: i32, %arg1: i32, %arg2: memref<1x16x32xf32, #tpu.memory_space<vmem>>, %arg3: memref<1x1x16xf32, #tpu.memory_space<vmem>>, %arg4: memref<1x32x8xbf16, #tpu.memory_space<vmem>>, %arg5: memref<1x1x8xf32, #tpu.memory_space<vmem>>, %arg6: memref<1x32x8xbf16, #tpu.memory_space<vmem>>, %arg7: memref<1x1x8xf32, #tpu.memory_space<vmem>>, %arg8: memref<1x32x8xbf16, #tpu.memory_space<vmem>>, %arg9: memref<1x1x8xf32, #tpu.memory_space<vmem>>, %arg10: memref<1x8x32xbf16, #tpu.memory_space<vmem>>, %arg11: memref<1x32xf32, #tpu.memory_space<vmem>>, %arg12: memref<1x32xf32, #tpu.memory_space<vmem>>, %arg13: memref<1x32xf32, #tpu.memory_space<vmem>>, %arg14: memref<1x16x32xf32, #tpu.memory_space<vmem>>) attributes {dimension_semantics = [#tpu.dimension_semantics<parallel>, #tpu.dimension_semantics<arbitrary>], iteration_bounds = array<i64: 2, 4>, scalar_prefetch = 0 : i64, scratch_operands = 0 : i64, tpu.core_type = #tpu.core_type<tc>, window_params = [{transform_indices = @transform_0, window_bounds = array<i64: 1, 16, 32>}, {transform_indices = @transform_1, window_bounds = array<i64: 1, 1, 16>}, {transform_indices = @transform_2, window_bounds = array<i64: 1, 32, 8>}, {transform_indices = @transform_3, window_bounds = array<i64: 1, 1, 8>}, {transform_indices = @transform_4, window_bounds = array<i64: 1, 32, 8>}, {transform_indices = @transform_5, window_bounds = array<i64: 1, 1, 8>}, {transform_indices = @transform_6, window_bounds = array<i64: 1, 32, 8>}, {transform_indices = @transform_7, window_bounds = array<i64: 1, 1, 8>}, {transform_indices = @transform_8, window_bounds = array<i64: 1, 8, 32>}, {pipeline_mode = #tpu.pipeline_mode<synchronous>, transform_indices = @transform_9, window_bounds = array<i64: 1, 32>}, {pipeline_mode = #tpu.pipeline_mode<synchronous>, transform_indices = @transform_10, window_bounds = array<i64: 1, 32>}, {pipeline_mode = #tpu.pipeline_mode<synchronous>, transform_indices = @transform_11, window_bounds = array<i64: 1, 32>}, {transform_indices = @transform_12, window_bounds = array<i64: 1, 16, 32>}]} {
    %c0 = arith.constant 0 : index
    %c0_0 = arith.constant 0 : index
    %c0_1 = arith.constant 0 : index
    %0 = vector.load %arg2[%c0, %c0_0, %c0_1] : memref<1x16x32xf32, #tpu.memory_space<vmem>>, vector<1x16x32xf32>
    %1 = vector.shape_cast %0 : vector<1x16x32xf32> to vector<16x32xf32>
    %2 = arith.truncf %1 : vector<16x32xf32> to vector<16x32xbf16>
    %3 = arith.truncf %1 : vector<16x32xf32> to vector<16x32xbf16>
    %c0_2 = arith.constant 0 : index
    %c0_3 = arith.constant 0 : index
    %c0_4 = arith.constant 0 : index
    %4 = vector.load %arg4[%c0_2, %c0_3, %c0_4] : memref<1x32x8xbf16, #tpu.memory_space<vmem>>, vector<1x32x8xbf16>
    %5 = vector.shape_cast %4 : vector<1x32x8xbf16> to vector<32x8xbf16>
    %cst = arith.constant dense<0.000000e+00> : vector<16x8xf32>
    %6 = tpu.matmul %2, %5, %cst {dimension_numbers = #tpu.dot_dimension_numbers<[1], [0], [0], [1], [0, 0, 1, 1], [], []>} : vector<16x32xbf16>, vector<32x8xbf16>, vector<16x8xf32> -> vector<16x8xf32>
    %c0_5 = arith.constant 0 : index
    %c0_6 = arith.constant 0 : index
    %c0_7 = arith.constant 0 : index
    %7 = vector.load %arg5[%c0_5, %c0_6, %c0_7] : memref<1x1x8xf32, #tpu.memory_space<vmem>>, vector<1x1x8xf32>
    %8 = vector.shape_cast %7 : vector<1x1x8xf32> to vector<1x8xf32>
    %9 = vector.broadcast %8 : vector<1x8xf32> to vector<16x8xf32>
    %10 = arith.addf %6, %9 : vector<16x8xf32>
    %c0_8 = arith.constant 0 : index
    %c0_9 = arith.constant 0 : index
    %c0_10 = arith.constant 0 : index
    %11 = vector.load %arg6[%c0_8, %c0_9, %c0_10] : memref<1x32x8xbf16, #tpu.memory_space<vmem>>, vector<1x32x8xbf16>
    %12 = vector.shape_cast %11 : vector<1x32x8xbf16> to vector<32x8xbf16>
    %cst_11 = arith.constant dense<0.000000e+00> : vector<16x8xf32>
    %13 = tpu.matmul %3, %12, %cst_11 {dimension_numbers = #tpu.dot_dimension_numbers<[1], [0], [0], [1], [0, 0, 1, 1], [], []>} : vector<16x32xbf16>, vector<32x8xbf16>, vector<16x8xf32> -> vector<16x8xf32>
    %c0_12 = arith.constant 0 : index
    %c0_13 = arith.constant 0 : index
    %c0_14 = arith.constant 0 : index
    %14 = vector.load %arg7[%c0_12, %c0_13, %c0_14] : memref<1x1x8xf32, #tpu.memory_space<vmem>>, vector<1x1x8xf32>
    %15 = vector.shape_cast %14 : vector<1x1x8xf32> to vector<1x8xf32>
    %16 = vector.broadcast %15 : vector<1x8xf32> to vector<16x8xf32>
    %17 = arith.addf %13, %16 : vector<16x8xf32>
    %c0_15 = arith.constant 0 : index
    %c0_16 = arith.constant 0 : index
    %c0_17 = arith.constant 0 : index
    %18 = vector.load %arg8[%c0_15, %c0_16, %c0_17] : memref<1x32x8xbf16, #tpu.memory_space<vmem>>, vector<1x32x8xbf16>
    %19 = vector.shape_cast %18 : vector<1x32x8xbf16> to vector<32x8xbf16>
    %cst_18 = arith.constant dense<0.000000e+00> : vector<16x8xf32>
    %20 = tpu.matmul %3, %19, %cst_18 {dimension_numbers = #tpu.dot_dimension_numbers<[1], [0], [0], [1], [0, 0, 1, 1], [], []>} : vector<16x32xbf16>, vector<32x8xbf16>, vector<16x8xf32> -> vector<16x8xf32>
    %c0_19 = arith.constant 0 : index
    %c0_20 = arith.constant 0 : index
    %c0_21 = arith.constant 0 : index
    %21 = vector.load %arg9[%c0_19, %c0_20, %c0_21] : memref<1x1x8xf32, #tpu.memory_space<vmem>>, vector<1x1x8xf32>
    %22 = vector.shape_cast %21 : vector<1x1x8xf32> to vector<1x8xf32>
    %23 = vector.broadcast %22 : vector<1x8xf32> to vector<16x8xf32>
    %24 = arith.addf %20, %23 : vector<16x8xf32>
    %cst_22 = arith.constant 0.353553385 : f32
    %25 = vector.broadcast %cst_22 : f32 to vector<16x8xf32>
    %26 = arith.mulf %10, %25 : vector<16x8xf32>
    %27 = arith.truncf %26 : vector<16x8xf32> to vector<16x8xbf16>
    %28 = arith.truncf %17 : vector<16x8xf32> to vector<16x8xbf16>
    %cst_23 = arith.constant dense<0.000000e+00> : vector<16x16xf32>
    %29 = tpu.matmul %27, %28, %cst_23 {dimension_numbers = #tpu.dot_dimension_numbers<[1], [1], [0], [0], [0, 0, 1, 0], [], []>} : vector<16x8xbf16>, vector<16x8xbf16>, vector<16x16xf32> -> vector<16x16xf32>
    %c0_24 = arith.constant 0 : index
    %c0_25 = arith.constant 0 : index
    %c0_26 = arith.constant 0 : index
    %30 = vector.load %arg3[%c0_24, %c0_25, %c0_26] : memref<1x1x16xf32, #tpu.memory_space<vmem>>, vector<1x1x16xf32>
    %31 = vector.shape_cast %30 : vector<1x1x16xf32> to vector<1x16xf32>
    %32 = vector.broadcast %31 : vector<1x16xf32> to vector<16x16xf32>
    %33 = arith.addf %29, %32 : vector<16x16xf32>
    %cst_27 = arith.constant dense<0xFF800000> : vector<16xf32>
    %34 = vector.multi_reduction <maximumf>, %33, %cst_27 [1] : vector<16x16xf32> to vector<16xf32>
    %35 = vector.shape_cast %34 : vector<16xf32> to vector<16x1xf32>
    %36 = vector.broadcast %35 : vector<16x1xf32> to vector<16x16xf32>
    %37 = arith.subf %33, %36 : vector<16x16xf32>
    %38 = math.exp %37 : vector<16x16xf32>
    %cst_28 = arith.constant dense<0.000000e+00> : vector<16xf32>
    %39 = vector.multi_reduction <add>, %38, %cst_28 [1] : vector<16x16xf32> to vector<16xf32>
    %40 = vector.shape_cast %39 : vector<16xf32> to vector<16x1xf32>
    %41 = tpu.reciprocal %40 {approx = true} : vector<16x1xf32> -> vector<16x1xf32>
    %42 = vector.broadcast %41 : vector<16x1xf32> to vector<16x16xf32>
    %43 = arith.mulf %38, %42 : vector<16x16xf32>
    %44 = arith.truncf %43 : vector<16x16xf32> to vector<16x16xbf16>
    %45 = arith.truncf %24 : vector<16x8xf32> to vector<16x8xbf16>
    %cst_29 = arith.constant dense<0.000000e+00> : vector<16x8xf32>
    %46 = tpu.matmul %44, %45, %cst_29 {dimension_numbers = #tpu.dot_dimension_numbers<[1], [0], [0], [1], [0, 0, 1, 1], [], []>} : vector<16x16xbf16>, vector<16x8xbf16>, vector<16x8xf32> -> vector<16x8xf32>
    %47 = arith.truncf %46 : vector<16x8xf32> to vector<16x8xbf16>
    %c0_30 = arith.constant 0 : index
    %c0_31 = arith.constant 0 : index
    %c0_32 = arith.constant 0 : index
    %48 = vector.load %arg10[%c0_30, %c0_31, %c0_32] : memref<1x8x32xbf16, #tpu.memory_space<vmem>>, vector<1x8x32xbf16>
    %49 = vector.shape_cast %48 : vector<1x8x32xbf16> to vector<8x32xbf16>
    %cst_33 = arith.constant dense<0.000000e+00> : vector<16x32xf32>
    %50 = tpu.matmul %47, %49, %cst_33 {dimension_numbers = #tpu.dot_dimension_numbers<[1], [0], [0], [1], [0, 0, 1, 1], [], []>} : vector<16x8xbf16>, vector<8x32xbf16>, vector<16x32xf32> -> vector<16x32xf32>
    %c0_i32 = arith.constant 0 : i32
    %51 = arith.cmpi eq, %arg1, %c0_i32 : i32
    %52 = arith.extui %51 : i1 to i32
    %c0_i32_34 = arith.constant 0 : i32
    %53 = arith.cmpi ne, %52, %c0_i32_34 : i32
    scf.if %53 {
      %c0_38 = arith.constant 0 : index
      %c0_39 = arith.constant 0 : index
      %c0_40 = arith.constant 0 : index
      %60 = vector.load %arg14[%c0_38, %c0_39, %c0_40] : memref<1x16x32xf32, #tpu.memory_space<vmem>>, vector<1x16x32xf32>
      %61 = vector.shape_cast %60 : vector<1x16x32xf32> to vector<16x32xf32>
      %62 = vector.shape_cast %50 : vector<16x32xf32> to vector<1x16x32xf32>
      tpu.vector_store %arg14[%c0_38, %c0_39, %c0_40], %62 {strides = array<i32>} : memref<1x16x32xf32, #tpu.memory_space<vmem>>, vector<1x16x32xf32>,
    } else {
    }
    %c0_i32_35 = arith.constant 0 : i32
    %54 = arith.cmpi sgt, %arg1, %c0_i32_35 : i32
    %55 = arith.extui %54 : i1 to i32
    %c0_i32_36 = arith.constant 0 : i32
    %56 = arith.cmpi ne, %55, %c0_i32_36 : i32
    scf.if %56 {
      %c0_38 = arith.constant 0 : index
      %c0_39 = arith.constant 0 : index
      %c0_40 = arith.constant 0 : index
      %60 = vector.load %arg14[%c0_38, %c0_39, %c0_40] : memref<1x16x32xf32, #tpu.memory_space<vmem>>, vector<1x16x32xf32>
      %61 = vector.shape_cast %60 : vector<1x16x32xf32> to vector<16x32xf32>
      %62 = arith.addf %61, %50 : vector<16x32xf32>
      %c0_41 = arith.constant 0 : index
      %c0_42 = arith.constant 0 : index
      %c0_43 = arith.constant 0 : index
      %63 = vector.load %arg14[%c0_41, %c0_42, %c0_43] : memref<1x16x32xf32, #tpu.memory_space<vmem>>, vector<1x16x32xf32>
      %64 = vector.shape_cast %63 : vector<1x16x32xf32> to vector<16x32xf32>
      %65 = vector.shape_cast %62 : vector<16x32xf32> to vector<1x16x32xf32>
      tpu.vector_store %arg14[%c0_41, %c0_42, %c0_43], %65 {strides = array<i32>} : memref<1x16x32xf32, #tpu.memory_space<vmem>>, vector<1x16x32xf32>,
    } else {
    }
    %c3_i32 = arith.constant 3 : i32
    %57 = arith.cmpi eq, %arg1, %c3_i32 : i32
    %58 = arith.extui %57 : i1 to i32
    %c0_i32_37 = arith.constant 0 : i32
    %59 = arith.cmpi ne, %58, %c0_i32_37 : i32
    scf.if %59 {
      %c0_38 = arith.constant 0 : index
      %c0_39 = arith.constant 0 : index
      %c0_40 = arith.constant 0 : index
      %60 = vector.load %arg14[%c0_38, %c0_39, %c0_40] : memref<1x16x32xf32, #tpu.memory_space<vmem>>, vector<1x16x32xf32>
      %61 = vector.shape_cast %60 : vector<1x16x32xf32> to vector<16x32xf32>
      %c0_41 = arith.constant 0 : index
      %c0_42 = arith.constant 0 : index
      %62 = vector.load %arg11[%c0_41, %c0_42] : memref<1x32xf32, #tpu.memory_space<vmem>>, vector<1x32xf32>
      %63 = vector.broadcast %62 : vector<1x32xf32> to vector<16x32xf32>
      %64 = arith.addf %61, %63 : vector<16x32xf32>
      %65 = arith.addf %64, %1 : vector<16x32xf32>
      %cst_43 = arith.constant dense<0.000000e+00> : vector<16xf32>
      %66 = vector.multi_reduction <add>, %65, %cst_43 [1] : vector<16x32xf32> to vector<16xf32>
      %67 = vector.shape_cast %66 : vector<16xf32> to vector<16x1xf32>
      %cst_44 = arith.constant 3.200000e+01 : f32
      %68 = vector.broadcast %cst_44 : f32 to vector<16x1xf32>
      %69 = arith.divf %67, %68 : vector<16x1xf32>
      %70 = vector.broadcast %69 : vector<16x1xf32> to vector<16x32xf32>
      %71 = arith.subf %65, %70 : vector<16x32xf32>
      %72 = arith.mulf %71, %71 : vector<16x32xf32>
      %cst_45 = arith.constant dense<0.000000e+00> : vector<16xf32>
      %73 = vector.multi_reduction <add>, %72, %cst_45 [1] : vector<16x32xf32> to vector<16xf32>
      %74 = vector.shape_cast %73 : vector<16xf32> to vector<16x1xf32>
      %cst_46 = arith.constant 3.200000e+01 : f32
      %75 = vector.broadcast %cst_46 : f32 to vector<16x1xf32>
      %76 = arith.divf %74, %75 : vector<16x1xf32>
      %77 = vector.broadcast %69 : vector<16x1xf32> to vector<16x32xf32>
      %78 = arith.subf %65, %77 : vector<16x32xf32>
      %cst_47 = arith.constant 9.99999974E-6 : f32
      %79 = vector.broadcast %cst_47 : f32 to vector<16x1xf32>
      %80 = arith.addf %76, %79 : vector<16x1xf32>
      %81 = math.rsqrt %80 : vector<16x1xf32>
      %82 = vector.broadcast %81 : vector<16x1xf32> to vector<16x32xf32>
      %83 = arith.mulf %78, %82 : vector<16x32xf32>
      %c0_48 = arith.constant 0 : index
      %c0_49 = arith.constant 0 : index
      %84 = vector.load %arg12[%c0_48, %c0_49] : memref<1x32xf32, #tpu.memory_space<vmem>>, vector<1x32xf32>
      %85 = vector.broadcast %84 : vector<1x32xf32> to vector<16x32xf32>
      %86 = arith.mulf %83, %85 : vector<16x32xf32>
      %c0_50 = arith.constant 0 : index
      %c0_51 = arith.constant 0 : index
      %87 = vector.load %arg13[%c0_50, %c0_51] : memref<1x32xf32, #tpu.memory_space<vmem>>, vector<1x32xf32>
      %88 = vector.broadcast %87 : vector<1x32xf32> to vector<16x32xf32>
      %89 = arith.addf %86, %88 : vector<16x32xf32>
      %c0_52 = arith.constant 0 : index
      %c0_53 = arith.constant 0 : index
      %c0_54 = arith.constant 0 : index
      %90 = vector.load %arg14[%c0_52, %c0_53, %c0_54] : memref<1x16x32xf32, #tpu.memory_space<vmem>>, vector<1x16x32xf32>
      %91 = vector.shape_cast %90 : vector<1x16x32xf32> to vector<16x32xf32>
      %92 = vector.shape_cast %89 : vector<16x32xf32> to vector<1x16x32xf32>
      tpu.vector_store %arg14[%c0_52, %c0_53, %c0_54], %92 {strides = array<i32>} : memref<1x16x32xf32, #tpu.memory_space<vmem>>, vector<1x16x32xf32>,
    } else {
    }
    return
  }
  func.func @transform_0(%arg0: i32, %arg1: i32) -> (i32, i32, i32) {
    %c0_i32 = arith.constant 0 : i32
    %c0_i32_0 = arith.constant 0 : i32
    %c0_i32_1 = arith.constant 0 : i32
    return %arg0, %c0_i32, %c0_i32_0 : i32, i32, i32
  }
  func.func @transform_1(%arg0: i32, %arg1: i32) -> (i32, i32, i32) {
    %c0_i32 = arith.constant 0 : i32
    %c0_i32_0 = arith.constant 0 : i32
    %c0_i32_1 = arith.constant 0 : i32
    return %arg0, %c0_i32, %c0_i32_0 : i32, i32, i32
  }
  func.func @transform_2(%arg0: i32, %arg1: i32) -> (i32, i32, i32) {
    %c0_i32 = arith.constant 0 : i32
    %c0_i32_0 = arith.constant 0 : i32
    %c0_i32_1 = arith.constant 0 : i32
    return %arg1, %c0_i32, %c0_i32_0 : i32, i32, i32
  }
  func.func @transform_3(%arg0: i32, %arg1: i32) -> (i32, i32, i32) {
    %c0_i32 = arith.constant 0 : i32
    %c0_i32_0 = arith.constant 0 : i32
    %c0_i32_1 = arith.constant 0 : i32
    return %arg1, %c0_i32, %c0_i32_0 : i32, i32, i32
  }
  func.func @transform_4(%arg0: i32, %arg1: i32) -> (i32, i32, i32) {
    %c0_i32 = arith.constant 0 : i32
    %c0_i32_0 = arith.constant 0 : i32
    %c0_i32_1 = arith.constant 0 : i32
    return %arg1, %c0_i32, %c0_i32_0 : i32, i32, i32
  }
  func.func @transform_5(%arg0: i32, %arg1: i32) -> (i32, i32, i32) {
    %c0_i32 = arith.constant 0 : i32
    %c0_i32_0 = arith.constant 0 : i32
    %c0_i32_1 = arith.constant 0 : i32
    return %arg1, %c0_i32, %c0_i32_0 : i32, i32, i32
  }
  func.func @transform_6(%arg0: i32, %arg1: i32) -> (i32, i32, i32) {
    %c0_i32 = arith.constant 0 : i32
    %c0_i32_0 = arith.constant 0 : i32
    %c0_i32_1 = arith.constant 0 : i32
    return %arg1, %c0_i32, %c0_i32_0 : i32, i32, i32
  }
  func.func @transform_7(%arg0: i32, %arg1: i32) -> (i32, i32, i32) {
    %c0_i32 = arith.constant 0 : i32
    %c0_i32_0 = arith.constant 0 : i32
    %c0_i32_1 = arith.constant 0 : i32
    return %arg1, %c0_i32, %c0_i32_0 : i32, i32, i32
  }
  func.func @transform_8(%arg0: i32, %arg1: i32) -> (i32, i32, i32) {
    %c0_i32 = arith.constant 0 : i32
    %c0_i32_0 = arith.constant 0 : i32
    %c0_i32_1 = arith.constant 0 : i32
    return %arg1, %c0_i32, %c0_i32_0 : i32, i32, i32
  }
  func.func @transform_9(%arg0: i32, %arg1: i32) -> (i32, i32) {
    %c0_i32 = arith.constant 0 : i32
    %c0_i32_0 = arith.constant 0 : i32
    %c0_i32_1 = arith.constant 0 : i32
    return %c0_i32, %c0_i32_0 : i32, i32
  }
  func.func @transform_10(%arg0: i32, %arg1: i32) -> (i32, i32) {
    %c0_i32 = arith.constant 0 : i32
    %c0_i32_0 = arith.constant 0 : i32
    %c0_i32_1 = arith.constant 0 : i32
    return %c0_i32, %c0_i32_0 : i32, i32
  }
  func.func @transform_11(%arg0: i32, %arg1: i32) -> (i32, i32) {
    %c0_i32 = arith.constant 0 : i32
    %c0_i32_0 = arith.constant 0 : i32
    %c0_i32_1 = arith.constant 0 : i32
    return %c0_i32, %c0_i32_0 : i32, i32
  }
  func.func @transform_12(%arg0: i32, %arg1: i32) -> (i32, i32, i32) {
    %c0_i32 = arith.constant 0 : i32
    %c0_i32_0 = arith.constant 0 : i32
    %c0_i32_1 = arith.constant 0 : i32
    return %arg0, %c0_i32, %c0_i32_0 : i32, i32, i32
  }
}

module attributes {stable_mosaic.version = 11 : i64} {
  func.func @_fused_ffn_kernel(%arg0: i32, %arg1: memref<32x32xf32, #tpu.memory_space<vmem>>, %arg2: memref<32x64xbf16, #tpu.memory_space<vmem>>, %arg3: memref<1x64xf32, #tpu.memory_space<vmem>>, %arg4: memref<64x32xbf16, #tpu.memory_space<vmem>>, %arg5: memref<1x32xf32, #tpu.memory_space<vmem>>, %arg6: memref<1x32xf32, #tpu.memory_space<vmem>>, %arg7: memref<1x32xf32, #tpu.memory_space<vmem>>, %arg8: memref<32x32xf32, #tpu.memory_space<vmem>>) attributes {dimension_semantics = [#tpu.dimension_semantics<parallel>], iteration_bounds = array<i64: 1>, scalar_prefetch = 0 : i64, scratch_operands = 0 : i64, tpu.core_type = #tpu.core_type<tc>, window_params = [{transform_indices = @transform_0, window_bounds = array<i64: 32, 32>}, {pipeline_mode = #tpu.pipeline_mode<synchronous>, transform_indices = @transform_1, window_bounds = array<i64: 32, 64>}, {pipeline_mode = #tpu.pipeline_mode<synchronous>, transform_indices = @transform_2, window_bounds = array<i64: 1, 64>}, {pipeline_mode = #tpu.pipeline_mode<synchronous>, transform_indices = @transform_3, window_bounds = array<i64: 64, 32>}, {pipeline_mode = #tpu.pipeline_mode<synchronous>, transform_indices = @transform_4, window_bounds = array<i64: 1, 32>}, {pipeline_mode = #tpu.pipeline_mode<synchronous>, transform_indices = @transform_5, window_bounds = array<i64: 1, 32>}, {pipeline_mode = #tpu.pipeline_mode<synchronous>, transform_indices = @transform_6, window_bounds = array<i64: 1, 32>}, {transform_indices = @transform_7, window_bounds = array<i64: 32, 32>}]} {
    %c0 = arith.constant 0 : index
    %c0_0 = arith.constant 0 : index
    %0 = vector.load %arg1[%c0, %c0_0] : memref<32x32xf32, #tpu.memory_space<vmem>>, vector<32x32xf32>
    %1 = arith.truncf %0 : vector<32x32xf32> to vector<32x32xbf16>
    %c0_1 = arith.constant 0 : index
    %c0_2 = arith.constant 0 : index
    %2 = vector.load %arg2[%c0_1, %c0_2] : memref<32x64xbf16, #tpu.memory_space<vmem>>, vector<32x64xbf16>
    %cst = arith.constant dense<0.000000e+00> : vector<32x64xf32>
    %3 = tpu.matmul %1, %2, %cst {dimension_numbers = #tpu.dot_dimension_numbers<[1], [0], [0], [1], [0, 0, 1, 1], [], []>} : vector<32x32xbf16>, vector<32x64xbf16>, vector<32x64xf32> -> vector<32x64xf32>
    %c0_3 = arith.constant 0 : index
    %c0_4 = arith.constant 0 : index
    %4 = vector.load %arg3[%c0_3, %c0_4] : memref<1x64xf32, #tpu.memory_space<vmem>>, vector<1x64xf32>
    %5 = vector.broadcast %4 : vector<1x64xf32> to vector<32x64xf32>
    %6 = arith.addf %3, %5 : vector<32x64xf32>
    %cst_5 = arith.constant 0.000000e+00 : f32
    %7 = vector.broadcast %cst_5 : f32 to vector<32x64xf32>
    %8 = arith.maximumf %6, %7 : vector<32x64xf32>
    %9 = arith.truncf %8 : vector<32x64xf32> to vector<32x64xbf16>
    %c0_6 = arith.constant 0 : index
    %c0_7 = arith.constant 0 : index
    %10 = vector.load %arg4[%c0_6, %c0_7] : memref<64x32xbf16, #tpu.memory_space<vmem>>, vector<64x32xbf16>
    %cst_8 = arith.constant dense<0.000000e+00> : vector<32x32xf32>
    %11 = tpu.matmul %9, %10, %cst_8 {dimension_numbers = #tpu.dot_dimension_numbers<[1], [0], [0], [1], [0, 0, 1, 1], [], []>} : vector<32x64xbf16>, vector<64x32xbf16>, vector<32x32xf32> -> vector<32x32xf32>
    %c0_9 = arith.constant 0 : index
    %c0_10 = arith.constant 0 : index
    %12 = vector.load %arg5[%c0_9, %c0_10] : memref<1x32xf32, #tpu.memory_space<vmem>>, vector<1x32xf32>
    %13 = vector.broadcast %12 : vector<1x32xf32> to vector<32x32xf32>
    %14 = arith.addf %11, %13 : vector<32x32xf32>
    %15 = arith.addf %14, %0 : vector<32x32xf32>
    %cst_11 = arith.constant dense<0.000000e+00> : vector<32xf32>
    %16 = vector.multi_reduction <add>, %15, %cst_11 [1] : vector<32x32xf32> to vector<32xf32>
    %17 = vector.shape_cast %16 : vector<32xf32> to vector<32x1xf32>
    %cst_12 = arith.constant 3.200000e+01 : f32
    %18 = vector.broadcast %cst_12 : f32 to vector<32x1xf32>
    %19 = arith.divf %17, %18 : vector<32x1xf32>
    %20 = vector.broadcast %19 : vector<32x1xf32> to vector<32x32xf32>
    %21 = arith.subf %15, %20 : vector<32x32xf32>
    %22 = arith.mulf %21, %21 : vector<32x32xf32>
    %cst_13 = arith.constant dense<0.000000e+00> : vector<32xf32>
    %23 = vector.multi_reduction <add>, %22, %cst_13 [1] : vector<32x32xf32> to vector<32xf32>
    %24 = vector.shape_cast %23 : vector<32xf32> to vector<32x1xf32>
    %cst_14 = arith.constant 3.200000e+01 : f32
    %25 = vector.broadcast %cst_14 : f32 to vector<32x1xf32>
    %26 = arith.divf %24, %25 : vector<32x1xf32>
    %27 = vector.broadcast %19 : vector<32x1xf32> to vector<32x32xf32>
    %28 = arith.subf %15, %27 : vector<32x32xf32>
    %cst_15 = arith.constant 9.99999974E-6 : f32
    %29 = vector.broadcast %cst_15 : f32 to vector<32x1xf32>
    %30 = arith.addf %26, %29 : vector<32x1xf32>
    %31 = math.rsqrt %30 : vector<32x1xf32>
    %32 = vector.broadcast %31 : vector<32x1xf32> to vector<32x32xf32>
    %33 = arith.mulf %28, %32 : vector<32x32xf32>
    %c0_16 = arith.constant 0 : index
    %c0_17 = arith.constant 0 : index
    %34 = vector.load %arg6[%c0_16, %c0_17] : memref<1x32xf32, #tpu.memory_space<vmem>>, vector<1x32xf32>
    %35 = vector.broadcast %34 : vector<1x32xf32> to vector<32x32xf32>
    %36 = arith.mulf %33, %35 : vector<32x32xf32>
    %c0_18 = arith.constant 0 : index
    %c0_19 = arith.constant 0 : index
    %37 = vector.load %arg7[%c0_18, %c0_19] : memref<1x32xf32, #tpu.memory_space<vmem>>, vector<1x32xf32>
    %38 = vector.broadcast %37 : vector<1x32xf32> to vector<32x32xf32>
    %39 = arith.addf %36, %38 : vector<32x32xf32>
    %c0_20 = arith.constant 0 : index
    %c0_21 = arith.constant 0 : index
    %40 = vector.load %arg8[%c0_20, %c0_21] : memref<32x32xf32, #tpu.memory_space<vmem>>, vector<32x32xf32>
    tpu.vector_store %arg8[%c0_20, %c0_21], %39 {strides = array<i32>} : memref<32x32xf32, #tpu.memory_space<vmem>>, vector<32x32xf32>,
    return
  }
  func.func @transform_0(%arg0: i32) -> (i32, i32) {
    %c0_i32 = arith.constant 0 : i32
    %c0_i32_0 = arith.constant 0 : i32
    return %arg0, %c0_i32 : i32, i32
  }
  func.func @transform_1(%arg0: i32) -> (i32, i32) {
    %c0_i32 = arith.constant 0 : i32
    %c0_i32_0 = arith.constant 0 : i32
    %c0_i32_1 = arith.constant 0 : i32
    return %c0_i32, %c0_i32_0 : i32, i32
  }
  func.func @transform_2(%arg0: i32) -> (i32, i32) {
    %c0_i32 = arith.constant 0 : i32
    %c0_i32_0 = arith.constant 0 : i32
    %c0_i32_1 = arith.constant 0 : i32
    return %c0_i32, %c0_i32_0 : i32, i32
  }
  func.func @transform_3(%arg0: i32) -> (i32, i32) {
    %c0_i32 = arith.constant 0 : i32
    %c0_i32_0 = arith.constant 0 : i32
    %c0_i32_1 = arith.constant 0 : i32
    return %c0_i32, %c0_i32_0 : i32, i32
  }
  func.func @transform_4(%arg0: i32) -> (i32, i32) {
    %c0_i32 = arith.constant 0 : i32
    %c0_i32_0 = arith.constant 0 : i32
    %c0_i32_1 = arith.constant 0 : i32
    return %c0_i32, %c0_i32_0 : i32, i32
  }
  func.func @transform_5(%arg0: i32) -> (i32, i32) {
    %c0_i32 = arith.constant 0 : i32
    %c0_i32_0 = arith.constant 0 : i32
    %c0_i32_1 = arith.constant 0 : i32
    return %c0_i32, %c0_i32_0 : i32, i32
  }
  func.func @transform_6(%arg0: i32) -> (i32, i32) {
    %c0_i32 = arith.constant 0 : i32
    %c0_i32_0 = arith.constant 0 : i32
    %c0_i32_1 = arith.constant 0 : i32
    return %c0_i32, %c0_i32_0 : i32, i32
  }
  func.func @transform_7(%arg0: i32) -> (i32, i32) {
    %c0_i32 = arith.constant 0 : i32
    %c0_i32_0 = arith.constant 0 : i32
    return %arg0, %c0_i32 : i32, i32
  }
}

module attributes {stable_mosaic.version = 11 : i64} {
  func.func @_ln_add_kernel(%arg0: i32, %arg1: memref<32x32xf32, #tpu.memory_space<vmem>>, %arg2: memref<32x32xf32, #tpu.memory_space<vmem>>, %arg3: memref<1x32xf32, #tpu.memory_space<vmem>>, %arg4: memref<1x32xf32, #tpu.memory_space<vmem>>, %arg5: memref<32x32xf32, #tpu.memory_space<vmem>>) attributes {dimension_semantics = [#tpu.dimension_semantics<parallel>], iteration_bounds = array<i64: 1>, scalar_prefetch = 0 : i64, scratch_operands = 0 : i64, tpu.core_type = #tpu.core_type<tc>, window_params = [{transform_indices = @transform_0, window_bounds = array<i64: 32, 32>}, {transform_indices = @transform_1, window_bounds = array<i64: 32, 32>}, {pipeline_mode = #tpu.pipeline_mode<synchronous>, transform_indices = @transform_2, window_bounds = array<i64: 1, 32>}, {pipeline_mode = #tpu.pipeline_mode<synchronous>, transform_indices = @transform_3, window_bounds = array<i64: 1, 32>}, {transform_indices = @transform_4, window_bounds = array<i64: 32, 32>}]} {
    %c0 = arith.constant 0 : index
    %c0_0 = arith.constant 0 : index
    %0 = vector.load %arg1[%c0, %c0_0] : memref<32x32xf32, #tpu.memory_space<vmem>>, vector<32x32xf32>
    %cst = arith.constant dense<0.000000e+00> : vector<32xf32>
    %1 = vector.multi_reduction <add>, %0, %cst [1] : vector<32x32xf32> to vector<32xf32>
    %2 = vector.shape_cast %1 : vector<32xf32> to vector<32x1xf32>
    %cst_1 = arith.constant 3.200000e+01 : f32
    %3 = vector.broadcast %cst_1 : f32 to vector<32x1xf32>
    %4 = arith.divf %2, %3 : vector<32x1xf32>
    %5 = vector.broadcast %4 : vector<32x1xf32> to vector<32x32xf32>
    %6 = arith.subf %0, %5 : vector<32x32xf32>
    %7 = arith.mulf %6, %6 : vector<32x32xf32>
    %cst_2 = arith.constant dense<0.000000e+00> : vector<32xf32>
    %8 = vector.multi_reduction <add>, %7, %cst_2 [1] : vector<32x32xf32> to vector<32xf32>
    %9 = vector.shape_cast %8 : vector<32xf32> to vector<32x1xf32>
    %cst_3 = arith.constant 3.200000e+01 : f32
    %10 = vector.broadcast %cst_3 : f32 to vector<32x1xf32>
    %11 = arith.divf %9, %10 : vector<32x1xf32>
    %12 = vector.broadcast %4 : vector<32x1xf32> to vector<32x32xf32>
    %13 = arith.subf %0, %12 : vector<32x32xf32>
    %cst_4 = arith.constant 9.99999974E-6 : f32
    %14 = vector.broadcast %cst_4 : f32 to vector<32x1xf32>
    %15 = arith.addf %11, %14 : vector<32x1xf32>
    %16 = math.rsqrt %15 : vector<32x1xf32>
    %17 = vector.broadcast %16 : vector<32x1xf32> to vector<32x32xf32>
    %18 = arith.mulf %13, %17 : vector<32x32xf32>
    %c0_5 = arith.constant 0 : index
    %c0_6 = arith.constant 0 : index
    %19 = vector.load %arg3[%c0_5, %c0_6] : memref<1x32xf32, #tpu.memory_space<vmem>>, vector<1x32xf32>
    %20 = vector.broadcast %19 : vector<1x32xf32> to vector<32x32xf32>
    %21 = arith.mulf %18, %20 : vector<32x32xf32>
    %c0_7 = arith.constant 0 : index
    %c0_8 = arith.constant 0 : index
    %22 = vector.load %arg4[%c0_7, %c0_8] : memref<1x32xf32, #tpu.memory_space<vmem>>, vector<1x32xf32>
    %23 = vector.broadcast %22 : vector<1x32xf32> to vector<32x32xf32>
    %24 = arith.addf %21, %23 : vector<32x32xf32>
    %c0_9 = arith.constant 0 : index
    %c0_10 = arith.constant 0 : index
    %25 = vector.load %arg2[%c0_9, %c0_10] : memref<32x32xf32, #tpu.memory_space<vmem>>, vector<32x32xf32>
    %26 = arith.addf %24, %25 : vector<32x32xf32>
    %c0_11 = arith.constant 0 : index
    %c0_12 = arith.constant 0 : index
    %27 = vector.load %arg5[%c0_11, %c0_12] : memref<32x32xf32, #tpu.memory_space<vmem>>, vector<32x32xf32>
    tpu.vector_store %arg5[%c0_11, %c0_12], %26 {strides = array<i32>} : memref<32x32xf32, #tpu.memory_space<vmem>>, vector<32x32xf32>,
    return
  }
  func.func @transform_0(%arg0: i32) -> (i32, i32) {
    %c0_i32 = arith.constant 0 : i32
    %c0_i32_0 = arith.constant 0 : i32
    return %arg0, %c0_i32 : i32, i32
  }
  func.func @transform_1(%arg0: i32) -> (i32, i32) {
    %c0_i32 = arith.constant 0 : i32
    %c0_i32_0 = arith.constant 0 : i32
    return %arg0, %c0_i32 : i32, i32
  }
  func.func @transform_2(%arg0: i32) -> (i32, i32) {
    %c0_i32 = arith.constant 0 : i32
    %c0_i32_0 = arith.constant 0 : i32
    %c0_i32_1 = arith.constant 0 : i32
    return %c0_i32, %c0_i32_0 : i32, i32
  }
  func.func @transform_3(%arg0: i32) -> (i32, i32) {
    %c0_i32 = arith.constant 0 : i32
    %c0_i32_0 = arith.constant 0 : i32
    %c0_i32_1 = arith.constant 0 : i32
    return %c0_i32, %c0_i32_0 : i32, i32
  }
  func.func @transform_4(%arg0: i32) -> (i32, i32) {
    %c0_i32 = arith.constant 0 : i32
    %c0_i32_0 = arith.constant 0 : i32
    return %arg0, %c0_i32 : i32, i32
  }
}

module attributes {stable_mosaic.version = 11 : i64} {
  func.func @_fused_ffn_kernel(%arg0: i32, %arg1: memref<16x32xf32, #tpu.memory_space<vmem>>, %arg2: memref<32x64xbf16, #tpu.memory_space<vmem>>, %arg3: memref<1x64xf32, #tpu.memory_space<vmem>>, %arg4: memref<64x32xbf16, #tpu.memory_space<vmem>>, %arg5: memref<1x32xf32, #tpu.memory_space<vmem>>, %arg6: memref<1x32xf32, #tpu.memory_space<vmem>>, %arg7: memref<1x32xf32, #tpu.memory_space<vmem>>, %arg8: memref<16x32xf32, #tpu.memory_space<vmem>>) attributes {dimension_semantics = [#tpu.dimension_semantics<parallel>], iteration_bounds = array<i64: 1>, scalar_prefetch = 0 : i64, scratch_operands = 0 : i64, tpu.core_type = #tpu.core_type<tc>, window_params = [{transform_indices = @transform_0, window_bounds = array<i64: 16, 32>}, {pipeline_mode = #tpu.pipeline_mode<synchronous>, transform_indices = @transform_1, window_bounds = array<i64: 32, 64>}, {pipeline_mode = #tpu.pipeline_mode<synchronous>, transform_indices = @transform_2, window_bounds = array<i64: 1, 64>}, {pipeline_mode = #tpu.pipeline_mode<synchronous>, transform_indices = @transform_3, window_bounds = array<i64: 64, 32>}, {pipeline_mode = #tpu.pipeline_mode<synchronous>, transform_indices = @transform_4, window_bounds = array<i64: 1, 32>}, {pipeline_mode = #tpu.pipeline_mode<synchronous>, transform_indices = @transform_5, window_bounds = array<i64: 1, 32>}, {pipeline_mode = #tpu.pipeline_mode<synchronous>, transform_indices = @transform_6, window_bounds = array<i64: 1, 32>}, {transform_indices = @transform_7, window_bounds = array<i64: 16, 32>}]} {
    %c0 = arith.constant 0 : index
    %c0_0 = arith.constant 0 : index
    %0 = vector.load %arg1[%c0, %c0_0] : memref<16x32xf32, #tpu.memory_space<vmem>>, vector<16x32xf32>
    %1 = arith.truncf %0 : vector<16x32xf32> to vector<16x32xbf16>
    %c0_1 = arith.constant 0 : index
    %c0_2 = arith.constant 0 : index
    %2 = vector.load %arg2[%c0_1, %c0_2] : memref<32x64xbf16, #tpu.memory_space<vmem>>, vector<32x64xbf16>
    %cst = arith.constant dense<0.000000e+00> : vector<16x64xf32>
    %3 = tpu.matmul %1, %2, %cst {dimension_numbers = #tpu.dot_dimension_numbers<[1], [0], [0], [1], [0, 0, 1, 1], [], []>} : vector<16x32xbf16>, vector<32x64xbf16>, vector<16x64xf32> -> vector<16x64xf32>
    %c0_3 = arith.constant 0 : index
    %c0_4 = arith.constant 0 : index
    %4 = vector.load %arg3[%c0_3, %c0_4] : memref<1x64xf32, #tpu.memory_space<vmem>>, vector<1x64xf32>
    %5 = vector.broadcast %4 : vector<1x64xf32> to vector<16x64xf32>
    %6 = arith.addf %3, %5 : vector<16x64xf32>
    %cst_5 = arith.constant 0.000000e+00 : f32
    %7 = vector.broadcast %cst_5 : f32 to vector<16x64xf32>
    %8 = arith.maximumf %6, %7 : vector<16x64xf32>
    %9 = arith.truncf %8 : vector<16x64xf32> to vector<16x64xbf16>
    %c0_6 = arith.constant 0 : index
    %c0_7 = arith.constant 0 : index
    %10 = vector.load %arg4[%c0_6, %c0_7] : memref<64x32xbf16, #tpu.memory_space<vmem>>, vector<64x32xbf16>
    %cst_8 = arith.constant dense<0.000000e+00> : vector<16x32xf32>
    %11 = tpu.matmul %9, %10, %cst_8 {dimension_numbers = #tpu.dot_dimension_numbers<[1], [0], [0], [1], [0, 0, 1, 1], [], []>} : vector<16x64xbf16>, vector<64x32xbf16>, vector<16x32xf32> -> vector<16x32xf32>
    %c0_9 = arith.constant 0 : index
    %c0_10 = arith.constant 0 : index
    %12 = vector.load %arg5[%c0_9, %c0_10] : memref<1x32xf32, #tpu.memory_space<vmem>>, vector<1x32xf32>
    %13 = vector.broadcast %12 : vector<1x32xf32> to vector<16x32xf32>
    %14 = arith.addf %11, %13 : vector<16x32xf32>
    %15 = arith.addf %14, %0 : vector<16x32xf32>
    %cst_11 = arith.constant dense<0.000000e+00> : vector<16xf32>
    %16 = vector.multi_reduction <add>, %15, %cst_11 [1] : vector<16x32xf32> to vector<16xf32>
    %17 = vector.shape_cast %16 : vector<16xf32> to vector<16x1xf32>
    %cst_12 = arith.constant 3.200000e+01 : f32
    %18 = vector.broadcast %cst_12 : f32 to vector<16x1xf32>
    %19 = arith.divf %17, %18 : vector<16x1xf32>
    %20 = vector.broadcast %19 : vector<16x1xf32> to vector<16x32xf32>
    %21 = arith.subf %15, %20 : vector<16x32xf32>
    %22 = arith.mulf %21, %21 : vector<16x32xf32>
    %cst_13 = arith.constant dense<0.000000e+00> : vector<16xf32>
    %23 = vector.multi_reduction <add>, %22, %cst_13 [1] : vector<16x32xf32> to vector<16xf32>
    %24 = vector.shape_cast %23 : vector<16xf32> to vector<16x1xf32>
    %cst_14 = arith.constant 3.200000e+01 : f32
    %25 = vector.broadcast %cst_14 : f32 to vector<16x1xf32>
    %26 = arith.divf %24, %25 : vector<16x1xf32>
    %27 = vector.broadcast %19 : vector<16x1xf32> to vector<16x32xf32>
    %28 = arith.subf %15, %27 : vector<16x32xf32>
    %cst_15 = arith.constant 9.99999974E-6 : f32
    %29 = vector.broadcast %cst_15 : f32 to vector<16x1xf32>
    %30 = arith.addf %26, %29 : vector<16x1xf32>
    %31 = math.rsqrt %30 : vector<16x1xf32>
    %32 = vector.broadcast %31 : vector<16x1xf32> to vector<16x32xf32>
    %33 = arith.mulf %28, %32 : vector<16x32xf32>
    %c0_16 = arith.constant 0 : index
    %c0_17 = arith.constant 0 : index
    %34 = vector.load %arg6[%c0_16, %c0_17] : memref<1x32xf32, #tpu.memory_space<vmem>>, vector<1x32xf32>
    %35 = vector.broadcast %34 : vector<1x32xf32> to vector<16x32xf32>
    %36 = arith.mulf %33, %35 : vector<16x32xf32>
    %c0_18 = arith.constant 0 : index
    %c0_19 = arith.constant 0 : index
    %37 = vector.load %arg7[%c0_18, %c0_19] : memref<1x32xf32, #tpu.memory_space<vmem>>, vector<1x32xf32>
    %38 = vector.broadcast %37 : vector<1x32xf32> to vector<16x32xf32>
    %39 = arith.addf %36, %38 : vector<16x32xf32>
    %c0_20 = arith.constant 0 : index
    %c0_21 = arith.constant 0 : index
    %40 = vector.load %arg8[%c0_20, %c0_21] : memref<16x32xf32, #tpu.memory_space<vmem>>, vector<16x32xf32>
    tpu.vector_store %arg8[%c0_20, %c0_21], %39 {strides = array<i32>} : memref<16x32xf32, #tpu.memory_space<vmem>>, vector<16x32xf32>,
    return
  }
  func.func @transform_0(%arg0: i32) -> (i32, i32) {
    %c0_i32 = arith.constant 0 : i32
    %c0_i32_0 = arith.constant 0 : i32
    return %arg0, %c0_i32 : i32, i32
  }
  func.func @transform_1(%arg0: i32) -> (i32, i32) {
    %c0_i32 = arith.constant 0 : i32
    %c0_i32_0 = arith.constant 0 : i32
    %c0_i32_1 = arith.constant 0 : i32
    return %c0_i32, %c0_i32_0 : i32, i32
  }
  func.func @transform_2(%arg0: i32) -> (i32, i32) {
    %c0_i32 = arith.constant 0 : i32
    %c0_i32_0 = arith.constant 0 : i32
    %c0_i32_1 = arith.constant 0 : i32
    return %c0_i32, %c0_i32_0 : i32, i32
  }
  func.func @transform_3(%arg0: i32) -> (i32, i32) {
    %c0_i32 = arith.constant 0 : i32
    %c0_i32_0 = arith.constant 0 : i32
    %c0_i32_1 = arith.constant 0 : i32
    return %c0_i32, %c0_i32_0 : i32, i32
  }
  func.func @transform_4(%arg0: i32) -> (i32, i32) {
    %c0_i32 = arith.constant 0 : i32
    %c0_i32_0 = arith.constant 0 : i32
    %c0_i32_1 = arith.constant 0 : i32
    return %c0_i32, %c0_i32_0 : i32, i32
  }
  func.func @transform_5(%arg0: i32) -> (i32, i32) {
    %c0_i32 = arith.constant 0 : i32
    %c0_i32_0 = arith.constant 0 : i32
    %c0_i32_1 = arith.constant 0 : i32
    return %c0_i32, %c0_i32_0 : i32, i32
  }
  func.func @transform_6(%arg0: i32) -> (i32, i32) {
    %c0_i32 = arith.constant 0 : i32
    %c0_i32_0 = arith.constant 0 : i32
    %c0_i32_1 = arith.constant 0 : i32
    return %c0_i32, %c0_i32_0 : i32, i32
  }
  func.func @transform_7(%arg0: i32) -> (i32, i32) {
    %c0_i32 = arith.constant 0 : i32
    %c0_i32_0 = arith.constant 0 : i32
    return %arg0, %c0_i32 : i32, i32
  }
}

module attributes {stable_mosaic.version = 11 : i64} {
  func.func @_fused_ffn_kernel(%arg0: i32, %arg1: memref<16x32xf32, #tpu.memory_space<vmem>>, %arg2: memref<32x64xbf16, #tpu.memory_space<vmem>>, %arg3: memref<1x64xf32, #tpu.memory_space<vmem>>, %arg4: memref<64x32xbf16, #tpu.memory_space<vmem>>, %arg5: memref<1x32xf32, #tpu.memory_space<vmem>>, %arg6: memref<1x32xf32, #tpu.memory_space<vmem>>, %arg7: memref<1x32xf32, #tpu.memory_space<vmem>>, %arg8: memref<16x32xf32, #tpu.memory_space<vmem>>) attributes {dimension_semantics = [#tpu.dimension_semantics<parallel>], iteration_bounds = array<i64: 1>, scalar_prefetch = 0 : i64, scratch_operands = 0 : i64, tpu.core_type = #tpu.core_type<tc>, window_params = [{transform_indices = @transform_0, window_bounds = array<i64: 16, 32>}, {pipeline_mode = #tpu.pipeline_mode<synchronous>, transform_indices = @transform_1, window_bounds = array<i64: 32, 64>}, {pipeline_mode = #tpu.pipeline_mode<synchronous>, transform_indices = @transform_2, window_bounds = array<i64: 1, 64>}, {pipeline_mode = #tpu.pipeline_mode<synchronous>, transform_indices = @transform_3, window_bounds = array<i64: 64, 32>}, {pipeline_mode = #tpu.pipeline_mode<synchronous>, transform_indices = @transform_4, window_bounds = array<i64: 1, 32>}, {pipeline_mode = #tpu.pipeline_mode<synchronous>, transform_indices = @transform_5, window_bounds = array<i64: 1, 32>}, {pipeline_mode = #tpu.pipeline_mode<synchronous>, transform_indices = @transform_6, window_bounds = array<i64: 1, 32>}, {transform_indices = @transform_7, window_bounds = array<i64: 16, 32>}]} {
    %c0 = arith.constant 0 : index
    %c0_0 = arith.constant 0 : index
    %0 = vector.load %arg1[%c0, %c0_0] : memref<16x32xf32, #tpu.memory_space<vmem>>, vector<16x32xf32>
    %1 = arith.truncf %0 : vector<16x32xf32> to vector<16x32xbf16>
    %c0_1 = arith.constant 0 : index
    %c0_2 = arith.constant 0 : index
    %2 = vector.load %arg2[%c0_1, %c0_2] : memref<32x64xbf16, #tpu.memory_space<vmem>>, vector<32x64xbf16>
    %cst = arith.constant dense<0.000000e+00> : vector<16x64xf32>
    %3 = tpu.matmul %1, %2, %cst {dimension_numbers = #tpu.dot_dimension_numbers<[1], [0], [0], [1], [0, 0, 1, 1], [], []>} : vector<16x32xbf16>, vector<32x64xbf16>, vector<16x64xf32> -> vector<16x64xf32>
    %c0_3 = arith.constant 0 : index
    %c0_4 = arith.constant 0 : index
    %4 = vector.load %arg3[%c0_3, %c0_4] : memref<1x64xf32, #tpu.memory_space<vmem>>, vector<1x64xf32>
    %5 = vector.broadcast %4 : vector<1x64xf32> to vector<16x64xf32>
    %6 = arith.addf %3, %5 : vector<16x64xf32>
    %cst_5 = arith.constant 0.000000e+00 : f32
    %7 = vector.broadcast %cst_5 : f32 to vector<16x64xf32>
    %8 = arith.maximumf %6, %7 : vector<16x64xf32>
    %9 = arith.truncf %8 : vector<16x64xf32> to vector<16x64xbf16>
    %c0_6 = arith.constant 0 : index
    %c0_7 = arith.constant 0 : index
    %10 = vector.load %arg4[%c0_6, %c0_7] : memref<64x32xbf16, #tpu.memory_space<vmem>>, vector<64x32xbf16>
    %cst_8 = arith.constant dense<0.000000e+00> : vector<16x32xf32>
    %11 = tpu.matmul %9, %10, %cst_8 {dimension_numbers = #tpu.dot_dimension_numbers<[1], [0], [0], [1], [0, 0, 1, 1], [], []>} : vector<16x64xbf16>, vector<64x32xbf16>, vector<16x32xf32> -> vector<16x32xf32>
    %c0_9 = arith.constant 0 : index
    %c0_10 = arith.constant 0 : index
    %12 = vector.load %arg5[%c0_9, %c0_10] : memref<1x32xf32, #tpu.memory_space<vmem>>, vector<1x32xf32>
    %13 = vector.broadcast %12 : vector<1x32xf32> to vector<16x32xf32>
    %14 = arith.addf %11, %13 : vector<16x32xf32>
    %15 = arith.addf %14, %0 : vector<16x32xf32>
    %cst_11 = arith.constant dense<0.000000e+00> : vector<16xf32>
    %16 = vector.multi_reduction <add>, %15, %cst_11 [1] : vector<16x32xf32> to vector<16xf32>
    %17 = vector.shape_cast %16 : vector<16xf32> to vector<16x1xf32>
    %cst_12 = arith.constant 3.200000e+01 : f32
    %18 = vector.broadcast %cst_12 : f32 to vector<16x1xf32>
    %19 = arith.divf %17, %18 : vector<16x1xf32>
    %20 = vector.broadcast %19 : vector<16x1xf32> to vector<16x32xf32>
    %21 = arith.subf %15, %20 : vector<16x32xf32>
    %22 = arith.mulf %21, %21 : vector<16x32xf32>
    %cst_13 = arith.constant dense<0.000000e+00> : vector<16xf32>
    %23 = vector.multi_reduction <add>, %22, %cst_13 [1] : vector<16x32xf32> to vector<16xf32>
    %24 = vector.shape_cast %23 : vector<16xf32> to vector<16x1xf32>
    %cst_14 = arith.constant 3.200000e+01 : f32
    %25 = vector.broadcast %cst_14 : f32 to vector<16x1xf32>
    %26 = arith.divf %24, %25 : vector<16x1xf32>
    %27 = vector.broadcast %19 : vector<16x1xf32> to vector<16x32xf32>
    %28 = arith.subf %15, %27 : vector<16x32xf32>
    %cst_15 = arith.constant 9.99999974E-6 : f32
    %29 = vector.broadcast %cst_15 : f32 to vector<16x1xf32>
    %30 = arith.addf %26, %29 : vector<16x1xf32>
    %31 = math.rsqrt %30 : vector<16x1xf32>
    %32 = vector.broadcast %31 : vector<16x1xf32> to vector<16x32xf32>
    %33 = arith.mulf %28, %32 : vector<16x32xf32>
    %c0_16 = arith.constant 0 : index
    %c0_17 = arith.constant 0 : index
    %34 = vector.load %arg6[%c0_16, %c0_17] : memref<1x32xf32, #tpu.memory_space<vmem>>, vector<1x32xf32>
    %35 = vector.broadcast %34 : vector<1x32xf32> to vector<16x32xf32>
    %36 = arith.mulf %33, %35 : vector<16x32xf32>
    %c0_18 = arith.constant 0 : index
    %c0_19 = arith.constant 0 : index
    %37 = vector.load %arg7[%c0_18, %c0_19] : memref<1x32xf32, #tpu.memory_space<vmem>>, vector<1x32xf32>
    %38 = vector.broadcast %37 : vector<1x32xf32> to vector<16x32xf32>
    %39 = arith.addf %36, %38 : vector<16x32xf32>
    %c0_20 = arith.constant 0 : index
    %c0_21 = arith.constant 0 : index
    %40 = vector.load %arg8[%c0_20, %c0_21] : memref<16x32xf32, #tpu.memory_space<vmem>>, vector<16x32xf32>
    tpu.vector_store %arg8[%c0_20, %c0_21], %39 {strides = array<i32>} : memref<16x32xf32, #tpu.memory_space<vmem>>, vector<16x32xf32>,
    return
  }
  func.func @transform_0(%arg0: i32) -> (i32, i32) {
    %c0_i32 = arith.constant 0 : i32
    %c0_i32_0 = arith.constant 0 : i32
    return %arg0, %c0_i32 : i32, i32
  }
  func.func @transform_1(%arg0: i32) -> (i32, i32) {
    %c0_i32 = arith.constant 0 : i32
    %c0_i32_0 = arith.constant 0 : i32
    %c0_i32_1 = arith.constant 0 : i32
    return %c0_i32, %c0_i32_0 : i32, i32
  }
  func.func @transform_2(%arg0: i32) -> (i32, i32) {
    %c0_i32 = arith.constant 0 : i32
    %c0_i32_0 = arith.constant 0 : i32
    %c0_i32_1 = arith.constant 0 : i32
    return %c0_i32, %c0_i32_0 : i32, i32
  }
  func.func @transform_3(%arg0: i32) -> (i32, i32) {
    %c0_i32 = arith.constant 0 : i32
    %c0_i32_0 = arith.constant 0 : i32
    %c0_i32_1 = arith.constant 0 : i32
    return %c0_i32, %c0_i32_0 : i32, i32
  }
  func.func @transform_4(%arg0: i32) -> (i32, i32) {
    %c0_i32 = arith.constant 0 : i32
    %c0_i32_0 = arith.constant 0 : i32
    %c0_i32_1 = arith.constant 0 : i32
    return %c0_i32, %c0_i32_0 : i32, i32
  }
  func.func @transform_5(%arg0: i32) -> (i32, i32) {
    %c0_i32 = arith.constant 0 : i32
    %c0_i32_0 = arith.constant 0 : i32
    %c0_i32_1 = arith.constant 0 : i32
    return %c0_i32, %c0_i32_0 : i32, i32
  }
  func.func @transform_6(%arg0: i32) -> (i32, i32) {
    %c0_i32 = arith.constant 0 : i32
    %c0_i32_0 = arith.constant 0 : i32
    %c0_i32_1 = arith.constant 0 : i32
    return %c0_i32, %c0_i32_0 : i32, i32
  }
  func.func @transform_7(%arg0: i32) -> (i32, i32) {
    %c0_i32 = arith.constant 0 : i32
    %c0_i32_0 = arith.constant 0 : i32
    return %arg0, %c0_i32 : i32, i32
  }
}

module attributes {stable_mosaic.version = 11 : i64} {
  func.func @_fused_attn_kernel(%arg0: i32, %arg1: i32, %arg2: memref<1x8x32xf32, #tpu.memory_space<vmem>>, %arg3: memref<1x8x32xf32, #tpu.memory_space<vmem>>, %arg4: memref<1x32x8xbf16, #tpu.memory_space<vmem>>, %arg5: memref<1x1x8xf32, #tpu.memory_space<vmem>>, %arg6: memref<1x32x8xbf16, #tpu.memory_space<vmem>>, %arg7: memref<1x1x8xf32, #tpu.memory_space<vmem>>, %arg8: memref<1x32x8xbf16, #tpu.memory_space<vmem>>, %arg9: memref<1x1x8xf32, #tpu.memory_space<vmem>>, %arg10: memref<1x8x32xbf16, #tpu.memory_space<vmem>>, %arg11: memref<1x32xf32, #tpu.memory_space<vmem>>, %arg12: memref<1x32xf32, #tpu.memory_space<vmem>>, %arg13: memref<1x32xf32, #tpu.memory_space<vmem>>, %arg14: memref<1x8x32xf32, #tpu.memory_space<vmem>>) attributes {dimension_semantics = [#tpu.dimension_semantics<parallel>, #tpu.dimension_semantics<arbitrary>], iteration_bounds = array<i64: 2, 4>, scalar_prefetch = 0 : i64, scratch_operands = 0 : i64, tpu.core_type = #tpu.core_type<tc>, window_params = [{transform_indices = @transform_0, window_bounds = array<i64: 1, 8, 32>}, {transform_indices = @transform_1, window_bounds = array<i64: 1, 8, 32>}, {transform_indices = @transform_2, window_bounds = array<i64: 1, 32, 8>}, {transform_indices = @transform_3, window_bounds = array<i64: 1, 1, 8>}, {transform_indices = @transform_4, window_bounds = array<i64: 1, 32, 8>}, {transform_indices = @transform_5, window_bounds = array<i64: 1, 1, 8>}, {transform_indices = @transform_6, window_bounds = array<i64: 1, 32, 8>}, {transform_indices = @transform_7, window_bounds = array<i64: 1, 1, 8>}, {transform_indices = @transform_8, window_bounds = array<i64: 1, 8, 32>}, {pipeline_mode = #tpu.pipeline_mode<synchronous>, transform_indices = @transform_9, window_bounds = array<i64: 1, 32>}, {pipeline_mode = #tpu.pipeline_mode<synchronous>, transform_indices = @transform_10, window_bounds = array<i64: 1, 32>}, {pipeline_mode = #tpu.pipeline_mode<synchronous>, transform_indices = @transform_11, window_bounds = array<i64: 1, 32>}, {transform_indices = @transform_12, window_bounds = array<i64: 1, 8, 32>}]} {
    %c0 = arith.constant 0 : index
    %c0_0 = arith.constant 0 : index
    %c0_1 = arith.constant 0 : index
    %0 = vector.load %arg2[%c0, %c0_0, %c0_1] : memref<1x8x32xf32, #tpu.memory_space<vmem>>, vector<1x8x32xf32>
    %1 = vector.shape_cast %0 : vector<1x8x32xf32> to vector<8x32xf32>
    %c0_2 = arith.constant 0 : index
    %c0_3 = arith.constant 0 : index
    %c0_4 = arith.constant 0 : index
    %2 = vector.load %arg3[%c0_2, %c0_3, %c0_4] : memref<1x8x32xf32, #tpu.memory_space<vmem>>, vector<1x8x32xf32>
    %3 = vector.shape_cast %2 : vector<1x8x32xf32> to vector<8x32xf32>
    %4 = arith.addf %1, %3 : vector<8x32xf32>
    %5 = arith.truncf %4 : vector<8x32xf32> to vector<8x32xbf16>
    %6 = arith.truncf %4 : vector<8x32xf32> to vector<8x32xbf16>
    %c0_5 = arith.constant 0 : index
    %c0_6 = arith.constant 0 : index
    %c0_7 = arith.constant 0 : index
    %7 = vector.load %arg4[%c0_5, %c0_6, %c0_7] : memref<1x32x8xbf16, #tpu.memory_space<vmem>>, vector<1x32x8xbf16>
    %8 = vector.shape_cast %7 : vector<1x32x8xbf16> to vector<32x8xbf16>
    %cst = arith.constant dense<0.000000e+00> : vector<8x8xf32>
    %9 = tpu.matmul %5, %8, %cst {dimension_numbers = #tpu.dot_dimension_numbers<[1], [0], [0], [1], [0, 0, 1, 1], [], []>} : vector<8x32xbf16>, vector<32x8xbf16>, vector<8x8xf32> -> vector<8x8xf32>
    %c0_8 = arith.constant 0 : index
    %c0_9 = arith.constant 0 : index
    %c0_10 = arith.constant 0 : index
    %10 = vector.load %arg5[%c0_8, %c0_9, %c0_10] : memref<1x1x8xf32, #tpu.memory_space<vmem>>, vector<1x1x8xf32>
    %11 = vector.shape_cast %10 : vector<1x1x8xf32> to vector<1x8xf32>
    %12 = vector.broadcast %11 : vector<1x8xf32> to vector<8x8xf32>
    %13 = arith.addf %9, %12 : vector<8x8xf32>
    %c0_11 = arith.constant 0 : index
    %c0_12 = arith.constant 0 : index
    %c0_13 = arith.constant 0 : index
    %14 = vector.load %arg6[%c0_11, %c0_12, %c0_13] : memref<1x32x8xbf16, #tpu.memory_space<vmem>>, vector<1x32x8xbf16>
    %15 = vector.shape_cast %14 : vector<1x32x8xbf16> to vector<32x8xbf16>
    %cst_14 = arith.constant dense<0.000000e+00> : vector<8x8xf32>
    %16 = tpu.matmul %6, %15, %cst_14 {dimension_numbers = #tpu.dot_dimension_numbers<[1], [0], [0], [1], [0, 0, 1, 1], [], []>} : vector<8x32xbf16>, vector<32x8xbf16>, vector<8x8xf32> -> vector<8x8xf32>
    %c0_15 = arith.constant 0 : index
    %c0_16 = arith.constant 0 : index
    %c0_17 = arith.constant 0 : index
    %17 = vector.load %arg7[%c0_15, %c0_16, %c0_17] : memref<1x1x8xf32, #tpu.memory_space<vmem>>, vector<1x1x8xf32>
    %18 = vector.shape_cast %17 : vector<1x1x8xf32> to vector<1x8xf32>
    %19 = vector.broadcast %18 : vector<1x8xf32> to vector<8x8xf32>
    %20 = arith.addf %16, %19 : vector<8x8xf32>
    %c0_18 = arith.constant 0 : index
    %c0_19 = arith.constant 0 : index
    %c0_20 = arith.constant 0 : index
    %21 = vector.load %arg8[%c0_18, %c0_19, %c0_20] : memref<1x32x8xbf16, #tpu.memory_space<vmem>>, vector<1x32x8xbf16>
    %22 = vector.shape_cast %21 : vector<1x32x8xbf16> to vector<32x8xbf16>
    %cst_21 = arith.constant dense<0.000000e+00> : vector<8x8xf32>
    %23 = tpu.matmul %6, %22, %cst_21 {dimension_numbers = #tpu.dot_dimension_numbers<[1], [0], [0], [1], [0, 0, 1, 1], [], []>} : vector<8x32xbf16>, vector<32x8xbf16>, vector<8x8xf32> -> vector<8x8xf32>
    %c0_22 = arith.constant 0 : index
    %c0_23 = arith.constant 0 : index
    %c0_24 = arith.constant 0 : index
    %24 = vector.load %arg9[%c0_22, %c0_23, %c0_24] : memref<1x1x8xf32, #tpu.memory_space<vmem>>, vector<1x1x8xf32>
    %25 = vector.shape_cast %24 : vector<1x1x8xf32> to vector<1x8xf32>
    %26 = vector.broadcast %25 : vector<1x8xf32> to vector<8x8xf32>
    %27 = arith.addf %23, %26 : vector<8x8xf32>
    %cst_25 = arith.constant 0.353553385 : f32
    %28 = vector.broadcast %cst_25 : f32 to vector<8x8xf32>
    %29 = arith.mulf %13, %28 : vector<8x8xf32>
    %30 = arith.truncf %29 : vector<8x8xf32> to vector<8x8xbf16>
    %31 = arith.truncf %20 : vector<8x8xf32> to vector<8x8xbf16>
    %cst_26 = arith.constant dense<0.000000e+00> : vector<8x8xf32>
    %32 = tpu.matmul %30, %31, %cst_26 {dimension_numbers = #tpu.dot_dimension_numbers<[1], [1], [0], [0], [0, 0, 1, 0], [], []>} : vector<8x8xbf16>, vector<8x8xbf16>, vector<8x8xf32> -> vector<8x8xf32>
    %cst_27 = arith.constant dense<0xFF800000> : vector<8xf32>
    %33 = vector.multi_reduction <maximumf>, %32, %cst_27 [1] : vector<8x8xf32> to vector<8xf32>
    %34 = vector.shape_cast %33 : vector<8xf32> to vector<8x1xf32>
    %35 = vector.broadcast %34 : vector<8x1xf32> to vector<8x8xf32>
    %36 = arith.subf %32, %35 : vector<8x8xf32>
    %37 = math.exp %36 : vector<8x8xf32>
    %cst_28 = arith.constant dense<0.000000e+00> : vector<8xf32>
    %38 = vector.multi_reduction <add>, %37, %cst_28 [1] : vector<8x8xf32> to vector<8xf32>
    %39 = vector.shape_cast %38 : vector<8xf32> to vector<8x1xf32>
    %40 = tpu.reciprocal %39 {approx = true} : vector<8x1xf32> -> vector<8x1xf32>
    %41 = vector.broadcast %40 : vector<8x1xf32> to vector<8x8xf32>
    %42 = arith.mulf %37, %41 : vector<8x8xf32>
    %43 = arith.truncf %42 : vector<8x8xf32> to vector<8x8xbf16>
    %44 = arith.truncf %27 : vector<8x8xf32> to vector<8x8xbf16>
    %cst_29 = arith.constant dense<0.000000e+00> : vector<8x8xf32>
    %45 = tpu.matmul %43, %44, %cst_29 {dimension_numbers = #tpu.dot_dimension_numbers<[1], [0], [0], [1], [0, 0, 1, 1], [], []>} : vector<8x8xbf16>, vector<8x8xbf16>, vector<8x8xf32> -> vector<8x8xf32>
    %46 = arith.truncf %45 : vector<8x8xf32> to vector<8x8xbf16>
    %c0_30 = arith.constant 0 : index
    %c0_31 = arith.constant 0 : index
    %c0_32 = arith.constant 0 : index
    %47 = vector.load %arg10[%c0_30, %c0_31, %c0_32] : memref<1x8x32xbf16, #tpu.memory_space<vmem>>, vector<1x8x32xbf16>
    %48 = vector.shape_cast %47 : vector<1x8x32xbf16> to vector<8x32xbf16>
    %cst_33 = arith.constant dense<0.000000e+00> : vector<8x32xf32>
    %49 = tpu.matmul %46, %48, %cst_33 {dimension_numbers = #tpu.dot_dimension_numbers<[1], [0], [0], [1], [0, 0, 1, 1], [], []>} : vector<8x8xbf16>, vector<8x32xbf16>, vector<8x32xf32> -> vector<8x32xf32>
    %c0_i32 = arith.constant 0 : i32
    %50 = arith.cmpi eq, %arg1, %c0_i32 : i32
    %51 = arith.extui %50 : i1 to i32
    %c0_i32_34 = arith.constant 0 : i32
    %52 = arith.cmpi ne, %51, %c0_i32_34 : i32
    scf.if %52 {
      %c0_38 = arith.constant 0 : index
      %c0_39 = arith.constant 0 : index
      %c0_40 = arith.constant 0 : index
      %59 = vector.load %arg14[%c0_38, %c0_39, %c0_40] : memref<1x8x32xf32, #tpu.memory_space<vmem>>, vector<1x8x32xf32>
      %60 = vector.shape_cast %59 : vector<1x8x32xf32> to vector<8x32xf32>
      %61 = vector.shape_cast %49 : vector<8x32xf32> to vector<1x8x32xf32>
      tpu.vector_store %arg14[%c0_38, %c0_39, %c0_40], %61 {strides = array<i32>} : memref<1x8x32xf32, #tpu.memory_space<vmem>>, vector<1x8x32xf32>,
    } else {
    }
    %c0_i32_35 = arith.constant 0 : i32
    %53 = arith.cmpi sgt, %arg1, %c0_i32_35 : i32
    %54 = arith.extui %53 : i1 to i32
    %c0_i32_36 = arith.constant 0 : i32
    %55 = arith.cmpi ne, %54, %c0_i32_36 : i32
    scf.if %55 {
      %c0_38 = arith.constant 0 : index
      %c0_39 = arith.constant 0 : index
      %c0_40 = arith.constant 0 : index
      %59 = vector.load %arg14[%c0_38, %c0_39, %c0_40] : memref<1x8x32xf32, #tpu.memory_space<vmem>>, vector<1x8x32xf32>
      %60 = vector.shape_cast %59 : vector<1x8x32xf32> to vector<8x32xf32>
      %61 = arith.addf %60, %49 : vector<8x32xf32>
      %c0_41 = arith.constant 0 : index
      %c0_42 = arith.constant 0 : index
      %c0_43 = arith.constant 0 : index
      %62 = vector.load %arg14[%c0_41, %c0_42, %c0_43] : memref<1x8x32xf32, #tpu.memory_space<vmem>>, vector<1x8x32xf32>
      %63 = vector.shape_cast %62 : vector<1x8x32xf32> to vector<8x32xf32>
      %64 = vector.shape_cast %61 : vector<8x32xf32> to vector<1x8x32xf32>
      tpu.vector_store %arg14[%c0_41, %c0_42, %c0_43], %64 {strides = array<i32>} : memref<1x8x32xf32, #tpu.memory_space<vmem>>, vector<1x8x32xf32>,
    } else {
    }
    %c3_i32 = arith.constant 3 : i32
    %56 = arith.cmpi eq, %arg1, %c3_i32 : i32
    %57 = arith.extui %56 : i1 to i32
    %c0_i32_37 = arith.constant 0 : i32
    %58 = arith.cmpi ne, %57, %c0_i32_37 : i32
    scf.if %58 {
      %c0_38 = arith.constant 0 : index
      %c0_39 = arith.constant 0 : index
      %c0_40 = arith.constant 0 : index
      %59 = vector.load %arg14[%c0_38, %c0_39, %c0_40] : memref<1x8x32xf32, #tpu.memory_space<vmem>>, vector<1x8x32xf32>
      %60 = vector.shape_cast %59 : vector<1x8x32xf32> to vector<8x32xf32>
      %c0_41 = arith.constant 0 : index
      %c0_42 = arith.constant 0 : index
      %61 = vector.load %arg11[%c0_41, %c0_42] : memref<1x32xf32, #tpu.memory_space<vmem>>, vector<1x32xf32>
      %62 = vector.broadcast %61 : vector<1x32xf32> to vector<8x32xf32>
      %63 = arith.addf %60, %62 : vector<8x32xf32>
      %64 = arith.addf %63, %4 : vector<8x32xf32>
      %cst_43 = arith.constant dense<0.000000e+00> : vector<8xf32>
      %65 = vector.multi_reduction <add>, %64, %cst_43 [1] : vector<8x32xf32> to vector<8xf32>
      %66 = vector.shape_cast %65 : vector<8xf32> to vector<8x1xf32>
      %cst_44 = arith.constant 3.200000e+01 : f32
      %67 = vector.broadcast %cst_44 : f32 to vector<8x1xf32>
      %68 = arith.divf %66, %67 : vector<8x1xf32>
      %69 = vector.broadcast %68 : vector<8x1xf32> to vector<8x32xf32>
      %70 = arith.subf %64, %69 : vector<8x32xf32>
      %71 = arith.mulf %70, %70 : vector<8x32xf32>
      %cst_45 = arith.constant dense<0.000000e+00> : vector<8xf32>
      %72 = vector.multi_reduction <add>, %71, %cst_45 [1] : vector<8x32xf32> to vector<8xf32>
      %73 = vector.shape_cast %72 : vector<8xf32> to vector<8x1xf32>
      %cst_46 = arith.constant 3.200000e+01 : f32
      %74 = vector.broadcast %cst_46 : f32 to vector<8x1xf32>
      %75 = arith.divf %73, %74 : vector<8x1xf32>
      %76 = vector.broadcast %68 : vector<8x1xf32> to vector<8x32xf32>
      %77 = arith.subf %64, %76 : vector<8x32xf32>
      %cst_47 = arith.constant 9.99999974E-6 : f32
      %78 = vector.broadcast %cst_47 : f32 to vector<8x1xf32>
      %79 = arith.addf %75, %78 : vector<8x1xf32>
      %80 = math.rsqrt %79 : vector<8x1xf32>
      %81 = vector.broadcast %80 : vector<8x1xf32> to vector<8x32xf32>
      %82 = arith.mulf %77, %81 : vector<8x32xf32>
      %c0_48 = arith.constant 0 : index
      %c0_49 = arith.constant 0 : index
      %83 = vector.load %arg12[%c0_48, %c0_49] : memref<1x32xf32, #tpu.memory_space<vmem>>, vector<1x32xf32>
      %84 = vector.broadcast %83 : vector<1x32xf32> to vector<8x32xf32>
      %85 = arith.mulf %82, %84 : vector<8x32xf32>
      %c0_50 = arith.constant 0 : index
      %c0_51 = arith.constant 0 : index
      %86 = vector.load %arg13[%c0_50, %c0_51] : memref<1x32xf32, #tpu.memory_space<vmem>>, vector<1x32xf32>
      %87 = vector.broadcast %86 : vector<1x32xf32> to vector<8x32xf32>
      %88 = arith.addf %85, %87 : vector<8x32xf32>
      %c0_52 = arith.constant 0 : index
      %c0_53 = arith.constant 0 : index
      %c0_54 = arith.constant 0 : index
      %89 = vector.load %arg14[%c0_52, %c0_53, %c0_54] : memref<1x8x32xf32, #tpu.memory_space<vmem>>, vector<1x8x32xf32>
      %90 = vector.shape_cast %89 : vector<1x8x32xf32> to vector<8x32xf32>
      %91 = vector.shape_cast %88 : vector<8x32xf32> to vector<1x8x32xf32>
      tpu.vector_store %arg14[%c0_52, %c0_53, %c0_54], %91 {strides = array<i32>} : memref<1x8x32xf32, #tpu.memory_space<vmem>>, vector<1x8x32xf32>,
    } else {
    }
    return
  }
  func.func @transform_0(%arg0: i32, %arg1: i32) -> (i32, i32, i32) {
    %c0_i32 = arith.constant 0 : i32
    %c0_i32_0 = arith.constant 0 : i32
    %c0_i32_1 = arith.constant 0 : i32
    return %arg0, %c0_i32, %c0_i32_0 : i32, i32, i32
  }
  func.func @transform_1(%arg0: i32, %arg1: i32) -> (i32, i32, i32) {
    %c0_i32 = arith.constant 0 : i32
    %c0_i32_0 = arith.constant 0 : i32
    %c0_i32_1 = arith.constant 0 : i32
    return %arg0, %c0_i32, %c0_i32_0 : i32, i32, i32
  }
  func.func @transform_2(%arg0: i32, %arg1: i32) -> (i32, i32, i32) {
    %c0_i32 = arith.constant 0 : i32
    %c0_i32_0 = arith.constant 0 : i32
    %c0_i32_1 = arith.constant 0 : i32
    return %arg1, %c0_i32, %c0_i32_0 : i32, i32, i32
  }
  func.func @transform_3(%arg0: i32, %arg1: i32) -> (i32, i32, i32) {
    %c0_i32 = arith.constant 0 : i32
    %c0_i32_0 = arith.constant 0 : i32
    %c0_i32_1 = arith.constant 0 : i32
    return %arg1, %c0_i32, %c0_i32_0 : i32, i32, i32
  }
  func.func @transform_4(%arg0: i32, %arg1: i32) -> (i32, i32, i32) {
    %c0_i32 = arith.constant 0 : i32
    %c0_i32_0 = arith.constant 0 : i32
    %c0_i32_1 = arith.constant 0 : i32
    return %arg1, %c0_i32, %c0_i32_0 : i32, i32, i32
  }
  func.func @transform_5(%arg0: i32, %arg1: i32) -> (i32, i32, i32) {
    %c0_i32 = arith.constant 0 : i32
    %c0_i32_0 = arith.constant 0 : i32
    %c0_i32_1 = arith.constant 0 : i32
    return %arg1, %c0_i32, %c0_i32_0 : i32, i32, i32
  }
  func.func @transform_6(%arg0: i32, %arg1: i32) -> (i32, i32, i32) {
    %c0_i32 = arith.constant 0 : i32
    %c0_i32_0 = arith.constant 0 : i32
    %c0_i32_1 = arith.constant 0 : i32
    return %arg1, %c0_i32, %c0_i32_0 : i32, i32, i32
  }
  func.func @transform_7(%arg0: i32, %arg1: i32) -> (i32, i32, i32) {
    %c0_i32 = arith.constant 0 : i32
    %c0_i32_0 = arith.constant 0 : i32
    %c0_i32_1 = arith.constant 0 : i32
    return %arg1, %c0_i32, %c0_i32_0 : i32, i32, i32
  }
  func.func @transform_8(%arg0: i32, %arg1: i32) -> (i32, i32, i32) {
    %c0_i32 = arith.constant 0 : i32
    %c0_i32_0 = arith.constant 0 : i32
    %c0_i32_1 = arith.constant 0 : i32
    return %arg1, %c0_i32, %c0_i32_0 : i32, i32, i32
  }
  func.func @transform_9(%arg0: i32, %arg1: i32) -> (i32, i32) {
    %c0_i32 = arith.constant 0 : i32
    %c0_i32_0 = arith.constant 0 : i32
    %c0_i32_1 = arith.constant 0 : i32
    return %c0_i32, %c0_i32_0 : i32, i32
  }
  func.func @transform_10(%arg0: i32, %arg1: i32) -> (i32, i32) {
    %c0_i32 = arith.constant 0 : i32
    %c0_i32_0 = arith.constant 0 : i32
    %c0_i32_1 = arith.constant 0 : i32
    return %c0_i32, %c0_i32_0 : i32, i32
  }
  func.func @transform_11(%arg0: i32, %arg1: i32) -> (i32, i32) {
    %c0_i32 = arith.constant 0 : i32
    %c0_i32_0 = arith.constant 0 : i32
    %c0_i32_1 = arith.constant 0 : i32
    return %c0_i32, %c0_i32_0 : i32, i32
  }
  func.func @transform_12(%arg0: i32, %arg1: i32) -> (i32, i32, i32) {
    %c0_i32 = arith.constant 0 : i32
    %c0_i32_0 = arith.constant 0 : i32
    %c0_i32_1 = arith.constant 0 : i32
    return %arg0, %c0_i32, %c0_i32_0 : i32, i32, i32
  }
}

module attributes {stable_mosaic.version = 11 : i64} {
  func.func @_fused_attn_kernel(%arg0: i32, %arg1: i32, %arg2: memref<1x8x32xf32, #tpu.memory_space<vmem>>, %arg3: memref<1x16x32xf32, #tpu.memory_space<vmem>>, %arg4: memref<1x1x16xf32, #tpu.memory_space<vmem>>, %arg5: memref<1x32x8xbf16, #tpu.memory_space<vmem>>, %arg6: memref<1x1x8xf32, #tpu.memory_space<vmem>>, %arg7: memref<1x32x8xbf16, #tpu.memory_space<vmem>>, %arg8: memref<1x1x8xf32, #tpu.memory_space<vmem>>, %arg9: memref<1x32x8xbf16, #tpu.memory_space<vmem>>, %arg10: memref<1x1x8xf32, #tpu.memory_space<vmem>>, %arg11: memref<1x8x32xbf16, #tpu.memory_space<vmem>>, %arg12: memref<1x32xf32, #tpu.memory_space<vmem>>, %arg13: memref<1x32xf32, #tpu.memory_space<vmem>>, %arg14: memref<1x32xf32, #tpu.memory_space<vmem>>, %arg15: memref<1x8x32xf32, #tpu.memory_space<vmem>>) attributes {dimension_semantics = [#tpu.dimension_semantics<parallel>, #tpu.dimension_semantics<arbitrary>], iteration_bounds = array<i64: 2, 4>, scalar_prefetch = 0 : i64, scratch_operands = 0 : i64, tpu.core_type = #tpu.core_type<tc>, window_params = [{transform_indices = @transform_0, window_bounds = array<i64: 1, 8, 32>}, {transform_indices = @transform_1, window_bounds = array<i64: 1, 16, 32>}, {transform_indices = @transform_2, window_bounds = array<i64: 1, 1, 16>}, {transform_indices = @transform_3, window_bounds = array<i64: 1, 32, 8>}, {transform_indices = @transform_4, window_bounds = array<i64: 1, 1, 8>}, {transform_indices = @transform_5, window_bounds = array<i64: 1, 32, 8>}, {transform_indices = @transform_6, window_bounds = array<i64: 1, 1, 8>}, {transform_indices = @transform_7, window_bounds = array<i64: 1, 32, 8>}, {transform_indices = @transform_8, window_bounds = array<i64: 1, 1, 8>}, {transform_indices = @transform_9, window_bounds = array<i64: 1, 8, 32>}, {pipeline_mode = #tpu.pipeline_mode<synchronous>, transform_indices = @transform_10, window_bounds = array<i64: 1, 32>}, {pipeline_mode = #tpu.pipeline_mode<synchronous>, transform_indices = @transform_11, window_bounds = array<i64: 1, 32>}, {pipeline_mode = #tpu.pipeline_mode<synchronous>, transform_indices = @transform_12, window_bounds = array<i64: 1, 32>}, {transform_indices = @transform_13, window_bounds = array<i64: 1, 8, 32>}]} {
    %c0 = arith.constant 0 : index
    %c0_0 = arith.constant 0 : index
    %c0_1 = arith.constant 0 : index
    %0 = vector.load %arg2[%c0, %c0_0, %c0_1] : memref<1x8x32xf32, #tpu.memory_space<vmem>>, vector<1x8x32xf32>
    %1 = vector.shape_cast %0 : vector<1x8x32xf32> to vector<8x32xf32>
    %c0_2 = arith.constant 0 : index
    %c0_3 = arith.constant 0 : index
    %c0_4 = arith.constant 0 : index
    %2 = vector.load %arg3[%c0_2, %c0_3, %c0_4] : memref<1x16x32xf32, #tpu.memory_space<vmem>>, vector<1x16x32xf32>
    %3 = vector.shape_cast %2 : vector<1x16x32xf32> to vector<16x32xf32>
    %4 = arith.truncf %1 : vector<8x32xf32> to vector<8x32xbf16>
    %5 = arith.truncf %3 : vector<16x32xf32> to vector<16x32xbf16>
    %c0_5 = arith.constant 0 : index
    %c0_6 = arith.constant 0 : index
    %c0_7 = arith.constant 0 : index
    %6 = vector.load %arg5[%c0_5, %c0_6, %c0_7] : memref<1x32x8xbf16, #tpu.memory_space<vmem>>, vector<1x32x8xbf16>
    %7 = vector.shape_cast %6 : vector<1x32x8xbf16> to vector<32x8xbf16>
    %cst = arith.constant dense<0.000000e+00> : vector<8x8xf32>
    %8 = tpu.matmul %4, %7, %cst {dimension_numbers = #tpu.dot_dimension_numbers<[1], [0], [0], [1], [0, 0, 1, 1], [], []>} : vector<8x32xbf16>, vector<32x8xbf16>, vector<8x8xf32> -> vector<8x8xf32>
    %c0_8 = arith.constant 0 : index
    %c0_9 = arith.constant 0 : index
    %c0_10 = arith.constant 0 : index
    %9 = vector.load %arg6[%c0_8, %c0_9, %c0_10] : memref<1x1x8xf32, #tpu.memory_space<vmem>>, vector<1x1x8xf32>
    %10 = vector.shape_cast %9 : vector<1x1x8xf32> to vector<1x8xf32>
    %11 = vector.broadcast %10 : vector<1x8xf32> to vector<8x8xf32>
    %12 = arith.addf %8, %11 : vector<8x8xf32>
    %c0_11 = arith.constant 0 : index
    %c0_12 = arith.constant 0 : index
    %c0_13 = arith.constant 0 : index
    %13 = vector.load %arg7[%c0_11, %c0_12, %c0_13] : memref<1x32x8xbf16, #tpu.memory_space<vmem>>, vector<1x32x8xbf16>
    %14 = vector.shape_cast %13 : vector<1x32x8xbf16> to vector<32x8xbf16>
    %cst_14 = arith.constant dense<0.000000e+00> : vector<16x8xf32>
    %15 = tpu.matmul %5, %14, %cst_14 {dimension_numbers = #tpu.dot_dimension_numbers<[1], [0], [0], [1], [0, 0, 1, 1], [], []>} : vector<16x32xbf16>, vector<32x8xbf16>, vector<16x8xf32> -> vector<16x8xf32>
    %c0_15 = arith.constant 0 : index
    %c0_16 = arith.constant 0 : index
    %c0_17 = arith.constant 0 : index
    %16 = vector.load %arg8[%c0_15, %c0_16, %c0_17] : memref<1x1x8xf32, #tpu.memory_space<vmem>>, vector<1x1x8xf32>
    %17 = vector.shape_cast %16 : vector<1x1x8xf32> to vector<1x8xf32>
    %18 = vector.broadcast %17 : vector<1x8xf32> to vector<16x8xf32>
    %19 = arith.addf %15, %18 : vector<16x8xf32>
    %c0_18 = arith.constant 0 : index
    %c0_19 = arith.constant 0 : index
    %c0_20 = arith.constant 0 : index
    %20 = vector.load %arg9[%c0_18, %c0_19, %c0_20] : memref<1x32x8xbf16, #tpu.memory_space<vmem>>, vector<1x32x8xbf16>
    %21 = vector.shape_cast %20 : vector<1x32x8xbf16> to vector<32x8xbf16>
    %cst_21 = arith.constant dense<0.000000e+00> : vector<16x8xf32>
    %22 = tpu.matmul %5, %21, %cst_21 {dimension_numbers = #tpu.dot_dimension_numbers<[1], [0], [0], [1], [0, 0, 1, 1], [], []>} : vector<16x32xbf16>, vector<32x8xbf16>, vector<16x8xf32> -> vector<16x8xf32>
    %c0_22 = arith.constant 0 : index
    %c0_23 = arith.constant 0 : index
    %c0_24 = arith.constant 0 : index
    %23 = vector.load %arg10[%c0_22, %c0_23, %c0_24] : memref<1x1x8xf32, #tpu.memory_space<vmem>>, vector<1x1x8xf32>
    %24 = vector.shape_cast %23 : vector<1x1x8xf32> to vector<1x8xf32>
    %25 = vector.broadcast %24 : vector<1x8xf32> to vector<16x8xf32>
    %26 = arith.addf %22, %25 : vector<16x8xf32>
    %cst_25 = arith.constant 0.353553385 : f32
    %27 = vector.broadcast %cst_25 : f32 to vector<8x8xf32>
    %28 = arith.mulf %12, %27 : vector<8x8xf32>
    %29 = arith.truncf %28 : vector<8x8xf32> to vector<8x8xbf16>
    %30 = arith.truncf %19 : vector<16x8xf32> to vector<16x8xbf16>
    %cst_26 = arith.constant dense<0.000000e+00> : vector<8x16xf32>
    %31 = tpu.matmul %29, %30, %cst_26 {dimension_numbers = #tpu.dot_dimension_numbers<[1], [1], [0], [0], [0, 0, 1, 0], [], []>} : vector<8x8xbf16>, vector<16x8xbf16>, vector<8x16xf32> -> vector<8x16xf32>
    %c0_27 = arith.constant 0 : index
    %c0_28 = arith.constant 0 : index
    %c0_29 = arith.constant 0 : index
    %32 = vector.load %arg4[%c0_27, %c0_28, %c0_29] : memref<1x1x16xf32, #tpu.memory_space<vmem>>, vector<1x1x16xf32>
    %33 = vector.shape_cast %32 : vector<1x1x16xf32> to vector<1x16xf32>
    %34 = vector.broadcast %33 : vector<1x16xf32> to vector<8x16xf32>
    %35 = arith.addf %31, %34 : vector<8x16xf32>
    %cst_30 = arith.constant dense<0xFF800000> : vector<8xf32>
    %36 = vector.multi_reduction <maximumf>, %35, %cst_30 [1] : vector<8x16xf32> to vector<8xf32>
    %37 = vector.shape_cast %36 : vector<8xf32> to vector<8x1xf32>
    %38 = vector.broadcast %37 : vector<8x1xf32> to vector<8x16xf32>
    %39 = arith.subf %35, %38 : vector<8x16xf32>
    %40 = math.exp %39 : vector<8x16xf32>
    %cst_31 = arith.constant dense<0.000000e+00> : vector<8xf32>
    %41 = vector.multi_reduction <add>, %40, %cst_31 [1] : vector<8x16xf32> to vector<8xf32>
    %42 = vector.shape_cast %41 : vector<8xf32> to vector<8x1xf32>
    %43 = tpu.reciprocal %42 {approx = true} : vector<8x1xf32> -> vector<8x1xf32>
    %44 = vector.broadcast %43 : vector<8x1xf32> to vector<8x16xf32>
    %45 = arith.mulf %40, %44 : vector<8x16xf32>
    %46 = arith.truncf %45 : vector<8x16xf32> to vector<8x16xbf16>
    %47 = arith.truncf %26 : vector<16x8xf32> to vector<16x8xbf16>
    %cst_32 = arith.constant dense<0.000000e+00> : vector<8x8xf32>
    %48 = tpu.matmul %46, %47, %cst_32 {dimension_numbers = #tpu.dot_dimension_numbers<[1], [0], [0], [1], [0, 0, 1, 1], [], []>} : vector<8x16xbf16>, vector<16x8xbf16>, vector<8x8xf32> -> vector<8x8xf32>
    %49 = arith.truncf %48 : vector<8x8xf32> to vector<8x8xbf16>
    %c0_33 = arith.constant 0 : index
    %c0_34 = arith.constant 0 : index
    %c0_35 = arith.constant 0 : index
    %50 = vector.load %arg11[%c0_33, %c0_34, %c0_35] : memref<1x8x32xbf16, #tpu.memory_space<vmem>>, vector<1x8x32xbf16>
    %51 = vector.shape_cast %50 : vector<1x8x32xbf16> to vector<8x32xbf16>
    %cst_36 = arith.constant dense<0.000000e+00> : vector<8x32xf32>
    %52 = tpu.matmul %49, %51, %cst_36 {dimension_numbers = #tpu.dot_dimension_numbers<[1], [0], [0], [1], [0, 0, 1, 1], [], []>} : vector<8x8xbf16>, vector<8x32xbf16>, vector<8x32xf32> -> vector<8x32xf32>
    %c0_i32 = arith.constant 0 : i32
    %53 = arith.cmpi eq, %arg1, %c0_i32 : i32
    %54 = arith.extui %53 : i1 to i32
    %c0_i32_37 = arith.constant 0 : i32
    %55 = arith.cmpi ne, %54, %c0_i32_37 : i32
    scf.if %55 {
      %c0_41 = arith.constant 0 : index
      %c0_42 = arith.constant 0 : index
      %c0_43 = arith.constant 0 : index
      %62 = vector.load %arg15[%c0_41, %c0_42, %c0_43] : memref<1x8x32xf32, #tpu.memory_space<vmem>>, vector<1x8x32xf32>
      %63 = vector.shape_cast %62 : vector<1x8x32xf32> to vector<8x32xf32>
      %64 = vector.shape_cast %52 : vector<8x32xf32> to vector<1x8x32xf32>
      tpu.vector_store %arg15[%c0_41, %c0_42, %c0_43], %64 {strides = array<i32>} : memref<1x8x32xf32, #tpu.memory_space<vmem>>, vector<1x8x32xf32>,
    } else {
    }
    %c0_i32_38 = arith.constant 0 : i32
    %56 = arith.cmpi sgt, %arg1, %c0_i32_38 : i32
    %57 = arith.extui %56 : i1 to i32
    %c0_i32_39 = arith.constant 0 : i32
    %58 = arith.cmpi ne, %57, %c0_i32_39 : i32
    scf.if %58 {
      %c0_41 = arith.constant 0 : index
      %c0_42 = arith.constant 0 : index
      %c0_43 = arith.constant 0 : index
      %62 = vector.load %arg15[%c0_41, %c0_42, %c0_43] : memref<1x8x32xf32, #tpu.memory_space<vmem>>, vector<1x8x32xf32>
      %63 = vector.shape_cast %62 : vector<1x8x32xf32> to vector<8x32xf32>
      %64 = arith.addf %63, %52 : vector<8x32xf32>
      %c0_44 = arith.constant 0 : index
      %c0_45 = arith.constant 0 : index
      %c0_46 = arith.constant 0 : index
      %65 = vector.load %arg15[%c0_44, %c0_45, %c0_46] : memref<1x8x32xf32, #tpu.memory_space<vmem>>, vector<1x8x32xf32>
      %66 = vector.shape_cast %65 : vector<1x8x32xf32> to vector<8x32xf32>
      %67 = vector.shape_cast %64 : vector<8x32xf32> to vector<1x8x32xf32>
      tpu.vector_store %arg15[%c0_44, %c0_45, %c0_46], %67 {strides = array<i32>} : memref<1x8x32xf32, #tpu.memory_space<vmem>>, vector<1x8x32xf32>,
    } else {
    }
    %c3_i32 = arith.constant 3 : i32
    %59 = arith.cmpi eq, %arg1, %c3_i32 : i32
    %60 = arith.extui %59 : i1 to i32
    %c0_i32_40 = arith.constant 0 : i32
    %61 = arith.cmpi ne, %60, %c0_i32_40 : i32
    scf.if %61 {
      %c0_41 = arith.constant 0 : index
      %c0_42 = arith.constant 0 : index
      %c0_43 = arith.constant 0 : index
      %62 = vector.load %arg15[%c0_41, %c0_42, %c0_43] : memref<1x8x32xf32, #tpu.memory_space<vmem>>, vector<1x8x32xf32>
      %63 = vector.shape_cast %62 : vector<1x8x32xf32> to vector<8x32xf32>
      %c0_44 = arith.constant 0 : index
      %c0_45 = arith.constant 0 : index
      %64 = vector.load %arg12[%c0_44, %c0_45] : memref<1x32xf32, #tpu.memory_space<vmem>>, vector<1x32xf32>
      %65 = vector.broadcast %64 : vector<1x32xf32> to vector<8x32xf32>
      %66 = arith.addf %63, %65 : vector<8x32xf32>
      %67 = arith.addf %66, %1 : vector<8x32xf32>
      %cst_46 = arith.constant dense<0.000000e+00> : vector<8xf32>
      %68 = vector.multi_reduction <add>, %67, %cst_46 [1] : vector<8x32xf32> to vector<8xf32>
      %69 = vector.shape_cast %68 : vector<8xf32> to vector<8x1xf32>
      %cst_47 = arith.constant 3.200000e+01 : f32
      %70 = vector.broadcast %cst_47 : f32 to vector<8x1xf32>
      %71 = arith.divf %69, %70 : vector<8x1xf32>
      %72 = vector.broadcast %71 : vector<8x1xf32> to vector<8x32xf32>
      %73 = arith.subf %67, %72 : vector<8x32xf32>
      %74 = arith.mulf %73, %73 : vector<8x32xf32>
      %cst_48 = arith.constant dense<0.000000e+00> : vector<8xf32>
      %75 = vector.multi_reduction <add>, %74, %cst_48 [1] : vector<8x32xf32> to vector<8xf32>
      %76 = vector.shape_cast %75 : vector<8xf32> to vector<8x1xf32>
      %cst_49 = arith.constant 3.200000e+01 : f32
      %77 = vector.broadcast %cst_49 : f32 to vector<8x1xf32>
      %78 = arith.divf %76, %77 : vector<8x1xf32>
      %79 = vector.broadcast %71 : vector<8x1xf32> to vector<8x32xf32>
      %80 = arith.subf %67, %79 : vector<8x32xf32>
      %cst_50 = arith.constant 9.99999974E-6 : f32
      %81 = vector.broadcast %cst_50 : f32 to vector<8x1xf32>
      %82 = arith.addf %78, %81 : vector<8x1xf32>
      %83 = math.rsqrt %82 : vector<8x1xf32>
      %84 = vector.broadcast %83 : vector<8x1xf32> to vector<8x32xf32>
      %85 = arith.mulf %80, %84 : vector<8x32xf32>
      %c0_51 = arith.constant 0 : index
      %c0_52 = arith.constant 0 : index
      %86 = vector.load %arg13[%c0_51, %c0_52] : memref<1x32xf32, #tpu.memory_space<vmem>>, vector<1x32xf32>
      %87 = vector.broadcast %86 : vector<1x32xf32> to vector<8x32xf32>
      %88 = arith.mulf %85, %87 : vector<8x32xf32>
      %c0_53 = arith.constant 0 : index
      %c0_54 = arith.constant 0 : index
      %89 = vector.load %arg14[%c0_53, %c0_54] : memref<1x32xf32, #tpu.memory_space<vmem>>, vector<1x32xf32>
      %90 = vector.broadcast %89 : vector<1x32xf32> to vector<8x32xf32>
      %91 = arith.addf %88, %90 : vector<8x32xf32>
      %c0_55 = arith.constant 0 : index
      %c0_56 = arith.constant 0 : index
      %c0_57 = arith.constant 0 : index
      %92 = vector.load %arg15[%c0_55, %c0_56, %c0_57] : memref<1x8x32xf32, #tpu.memory_space<vmem>>, vector<1x8x32xf32>
      %93 = vector.shape_cast %92 : vector<1x8x32xf32> to vector<8x32xf32>
      %94 = vector.shape_cast %91 : vector<8x32xf32> to vector<1x8x32xf32>
      tpu.vector_store %arg15[%c0_55, %c0_56, %c0_57], %94 {strides = array<i32>} : memref<1x8x32xf32, #tpu.memory_space<vmem>>, vector<1x8x32xf32>,
    } else {
    }
    return
  }
  func.func @transform_0(%arg0: i32, %arg1: i32) -> (i32, i32, i32) {
    %c0_i32 = arith.constant 0 : i32
    %c0_i32_0 = arith.constant 0 : i32
    %c0_i32_1 = arith.constant 0 : i32
    return %arg0, %c0_i32, %c0_i32_0 : i32, i32, i32
  }
  func.func @transform_1(%arg0: i32, %arg1: i32) -> (i32, i32, i32) {
    %c0_i32 = arith.constant 0 : i32
    %c0_i32_0 = arith.constant 0 : i32
    %c0_i32_1 = arith.constant 0 : i32
    return %arg0, %c0_i32, %c0_i32_0 : i32, i32, i32
  }
  func.func @transform_2(%arg0: i32, %arg1: i32) -> (i32, i32, i32) {
    %c0_i32 = arith.constant 0 : i32
    %c0_i32_0 = arith.constant 0 : i32
    %c0_i32_1 = arith.constant 0 : i32
    return %arg0, %c0_i32, %c0_i32_0 : i32, i32, i32
  }
  func.func @transform_3(%arg0: i32, %arg1: i32) -> (i32, i32, i32) {
    %c0_i32 = arith.constant 0 : i32
    %c0_i32_0 = arith.constant 0 : i32
    %c0_i32_1 = arith.constant 0 : i32
    return %arg1, %c0_i32, %c0_i32_0 : i32, i32, i32
  }
  func.func @transform_4(%arg0: i32, %arg1: i32) -> (i32, i32, i32) {
    %c0_i32 = arith.constant 0 : i32
    %c0_i32_0 = arith.constant 0 : i32
    %c0_i32_1 = arith.constant 0 : i32
    return %arg1, %c0_i32, %c0_i32_0 : i32, i32, i32
  }
  func.func @transform_5(%arg0: i32, %arg1: i32) -> (i32, i32, i32) {
    %c0_i32 = arith.constant 0 : i32
    %c0_i32_0 = arith.constant 0 : i32
    %c0_i32_1 = arith.constant 0 : i32
    return %arg1, %c0_i32, %c0_i32_0 : i32, i32, i32
  }
  func.func @transform_6(%arg0: i32, %arg1: i32) -> (i32, i32, i32) {
    %c0_i32 = arith.constant 0 : i32
    %c0_i32_0 = arith.constant 0 : i32
    %c0_i32_1 = arith.constant 0 : i32
    return %arg1, %c0_i32, %c0_i32_0 : i32, i32, i32
  }
  func.func @transform_7(%arg0: i32, %arg1: i32) -> (i32, i32, i32) {
    %c0_i32 = arith.constant 0 : i32
    %c0_i32_0 = arith.constant 0 : i32
    %c0_i32_1 = arith.constant 0 : i32
    return %arg1, %c0_i32, %c0_i32_0 : i32, i32, i32
  }
  func.func @transform_8(%arg0: i32, %arg1: i32) -> (i32, i32, i32) {
    %c0_i32 = arith.constant 0 : i32
    %c0_i32_0 = arith.constant 0 : i32
    %c0_i32_1 = arith.constant 0 : i32
    return %arg1, %c0_i32, %c0_i32_0 : i32, i32, i32
  }
  func.func @transform_9(%arg0: i32, %arg1: i32) -> (i32, i32, i32) {
    %c0_i32 = arith.constant 0 : i32
    %c0_i32_0 = arith.constant 0 : i32
    %c0_i32_1 = arith.constant 0 : i32
    return %arg1, %c0_i32, %c0_i32_0 : i32, i32, i32
  }
  func.func @transform_10(%arg0: i32, %arg1: i32) -> (i32, i32) {
    %c0_i32 = arith.constant 0 : i32
    %c0_i32_0 = arith.constant 0 : i32
    %c0_i32_1 = arith.constant 0 : i32
    return %c0_i32, %c0_i32_0 : i32, i32
  }
  func.func @transform_11(%arg0: i32, %arg1: i32) -> (i32, i32) {
    %c0_i32 = arith.constant 0 : i32
    %c0_i32_0 = arith.constant 0 : i32
    %c0_i32_1 = arith.constant 0 : i32
    return %c0_i32, %c0_i32_0 : i32, i32
  }
  func.func @transform_12(%arg0: i32, %arg1: i32) -> (i32, i32) {
    %c0_i32 = arith.constant 0 : i32
    %c0_i32_0 = arith.constant 0 : i32
    %c0_i32_1 = arith.constant 0 : i32
    return %c0_i32, %c0_i32_0 : i32, i32
  }
  func.func @transform_13(%arg0: i32, %arg1: i32) -> (i32, i32, i32) {
    %c0_i32 = arith.constant 0 : i32
    %c0_i32_0 = arith.constant 0 : i32
    %c0_i32_1 = arith.constant 0 : i32
    return %arg0, %c0_i32, %c0_i32_0 : i32, i32, i32
  }
}

</mosaic_0001>

<llo_original>
// kernel: transformer_forward.15
$region0: #{transformer_forward.15}
  #allocation0 [shape = 'u32[]', space=smem, size = 0x4, offset = 0x4, fixed_abs, tag = 'smem constant byte address 0x4 - core index']
  #allocation1 [shape = 'u32[144,128]{1,0:T(1,128)}', space=vmem, size = 0x12000, scoped, tag = 'internal scratch']
  %s0 = inlined_call_operand.vmem [shape: f32[32,32], index: 0, kind: input, shape index: {}]
  %s1 = inlined_call_operand.vmem [shape: f32[32,32], index: 1, kind: input, shape index: {}]
  %s2 = inlined_call_operand.vmem [shape: f32[1,32], index: 2, kind: input, shape index: {}]
  %s3 = inlined_call_operand.vmem [shape: f32[1,32], index: 3, kind: input, shape index: {}]
  %s4 = inlined_call_operand.vmem [shape: f32[32,32], index: 4, kind: output, shape index: {}]
  %s5 = sld [smem:[#allocation0]]
  $region26: #{transformer_forward.15} parent=0
    _
  %s7 = ssub.s32 1, %s5
  %s8 = scalar_select 0, %s7, %s5
  // Predicated region
  $region2: #{transformer_forward.15} parent=0 // pred_check
    _
  $region3: #{transformer_forward.15} parent=0 // pred_check_branch
    %10 = sbr.rel (0) target = $region5
  $region4: #{transformer_forward.15} parent=0 // pred_region
    _
  $region5: #{transformer_forward.15} parent=0 // pred_fallthru
    _
  // Predicated region
  $region6: #{transformer_forward.15} parent=0 // pred_check
    _
  $region7: #{transformer_forward.15} parent=0 // pred_check_branch
    %12 = sbr.rel (0) target = $region9
  $region8: #{transformer_forward.15} parent=0 // pred_region
    _
  $region9: #{transformer_forward.15} parent=0 // pred_fallthru
    _
  // Predicated region
  $region10: #{transformer_forward.15} parent=0 // pred_check
    _
  $region11: #{transformer_forward.15} parent=0 // pred_check_branch
    %14 = sbr.rel (0) target = $region13
  $region12: #{transformer_forward.15} parent=0 // pred_region
    _
  $region13: #{transformer_forward.15} parent=0 // pred_fallthru
    _
  // Predicated region
  $region14: #{transformer_forward.15} parent=0 // pred_check
    _
  $region15: #{transformer_forward.15} parent=0 // pred_check_branch
    %16 = sbr.rel (0) target = $region17
  $region16: #{transformer_forward.15} parent=0 // pred_region
    _
  $region17: #{transformer_forward.15} parent=0 // pred_fallthru
    _
  %v17 = vld [vmem:[%s0] sm:$0xff]
  %v18 = vld [vmem:[%s0 + $0x8] sm:$0xff]
  %v19 = vld [vmem:[%s0 + $0x10] sm:$0xff]
  %v20 = vld [vmem:[%s0 + $0x18] sm:$0xff]
  %vm21 = vcmask 261120
  %v22 = vsel %vm21, %v17, 0.0
  %23 = vadd.xlane.f32.xlu0 %v22
  %v24 = vpop.xlane.xlu0 %23
  %v25 = vsel %vm21, %v18, 0.0
  %26 = vadd.xlane.f32.xlu0 %v25
  %v27 = vpop.xlane.xlu0 %26
  %v28 = vsel %vm21, %v19, 0.0
  %29 = vadd.xlane.f32.xlu0 %v28
  %v30 = vpop.xlane.xlu0 %29
  %v31 = vsel %vm21, %v20, 0.0
  %32 = vadd.xlane.f32.xlu0 %v31
  %v33 = vpop.xlane.xlu0 %32
  %v34 = vrcp.pop 32.0
  %v35 = vmul.f32 %v24, %v34
  %v36 = vmul.f32 %v27, %v34
  %v37 = vmul.f32 %v30, %v34
  %v38 = vmul.f32 %v33, %v34
  %v39 = vsub.f32 %v17, %v35
  %v40 = vsub.f32 %v18, %v36
  %v41 = vsub.f32 %v19, %v37
  %v42 = vsub.f32 %v20, %v38
  %v43 = vmul.f32 %v39, %v39
  %v44 = vmul.f32 %v40, %v40
  %v45 = vmul.f32 %v41, %v41
  %v46 = vmul.f32 %v42, %v42
  %v47 = vsel %vm21, %v43, 0.0
  %48 = vadd.xlane.f32.xlu0 %v47
  %v49 = vpop.xlane.xlu0 %48
  %v50 = vsel %vm21, %v44, 0.0
  %51 = vadd.xlane.f32.xlu0 %v50
  %v52 = vpop.xlane.xlu0 %51
  %v53 = vsel %vm21, %v45, 0.0
  %54 = vadd.xlane.f32.xlu0 %v53
  %v55 = vpop.xlane.xlu0 %54
  %v56 = vsel %vm21, %v46, 0.0
  %57 = vadd.xlane.f32.xlu0 %v56
  %v58 = vpop.xlane.xlu0 %57
  %v59 = vmul.f32 %v49, %v34
  %v60 = vmul.f32 %v52, %v34
  %v61 = vmul.f32 %v55, %v34
  %v62 = vmul.f32 %v58, %v34
  %v63 = vadd.f32 %v59, 1e-05
  %v64 = vadd.f32 %v60, 1e-05
  %v65 = vadd.f32 %v61, 1e-05
  %v66 = vadd.f32 %v62, 1e-05
  %v67 = vrsqrt.pop %v63
  %v68 = vrsqrt.pop %v64
  %v69 = vrsqrt.pop %v65
  %v70 = vrsqrt.pop %v66
  %v71 = vmul.f32 %v39, %v67
  %v72 = vmul.f32 %v40, %v68
  %v73 = vmul.f32 %v41, %v69
  %v74 = vmul.f32 %v42, %v70
  %v75 = vld [vmem:[%s2] sm:$0x1]
  %v77 = vlaneseq
  %v78 = vshrl.u32 %v77, 7
  %v79 = vsub.s32 0, %v78
  %v80 = vrot.slane %v75, %v79
  %v82 = vmul.f32 %v71, %v80
  %v83 = vmul.f32 %v72, %v80
  %v84 = vmul.f32 %v73, %v80
  %v85 = vmul.f32 %v74, %v80
  %v86 = vld [vmem:[%s3] sm:$0x1]
  %v88 = vlaneseq
  %v89 = vshrl.u32 %v88, 7
  %v90 = vsub.s32 0, %v89
  %v91 = vrot.slane %v86, %v90
  %v93 = vadd.f32 %v82, %v91
  %v94 = vadd.f32 %v83, %v91
  %v95 = vadd.f32 %v84, %v91
  %v96 = vadd.f32 %v85, %v91
  %v97 = vld [vmem:[%s1] sm:$0xff]
  %v98 = vld [vmem:[%s1 + $0x8] sm:$0xff]
  %v99 = vld [vmem:[%s1 + $0x10] sm:$0xff]
  %v100 = vld [vmem:[%s1 + $0x18] sm:$0xff]
  %v101 = vadd.f32 %v93, %v97
  %v102 = vadd.f32 %v94, %v98
  %v103 = vadd.f32 %v95, %v99
  %v104 = vadd.f32 %v96, %v100
  %105 = vst.msk [vmem:[%s4] sm:$0xff] %vm21, %v101
  %106 = vst.msk [vmem:[%s4 + $0x8] sm:$0xff] %vm21, %v102
  %107 = vst.msk [vmem:[%s4 + $0x10] sm:$0xff] %vm21, %v103
  %108 = vst.msk [vmem:[%s4 + $0x18] sm:$0xff] %vm21, %v104
  // Predicated region
  $region18: #{transformer_forward.15} parent=0 // pred_check
    _
  $region19: #{transformer_forward.15} parent=0 // pred_check_branch
    %110 = sbr.rel (0) target = $region21
  $region20: #{transformer_forward.15} parent=0 // pred_region
    _
  $region21: #{transformer_forward.15} parent=0 // pred_fallthru
    _
  // Predicated region
  $region22: #{transformer_forward.15} parent=0 // pred_check
    _
  $region23: #{transformer_forward.15} parent=0 // pred_check_branch
    %112 = sbr.rel (0) target = $region25
  $region24: #{transformer_forward.15} parent=0 // pred_region
    _
  $region25: #{transformer_forward.15} parent=0 // pred_fallthru
    _

// kernel: transformer_forward.12
$region0: #{transformer_forward.12}
  #allocation0 [shape = 'u32[]', space=smem, size = 0x4, offset = 0x4, fixed_abs, tag = 'smem constant byte address 0x4 - core index']
  #allocation1 [shape = 'u32[144,128]{1,0:T(1,128)}', space=vmem, size = 0x12000, scoped, tag = 'internal scratch']
  %s0 = inlined_call_operand.vmem [shape: f32[32,32], index: 0, kind: input, shape index: {}]
  %s1 = inlined_call_operand.vmem [shape: bf16[32,64], index: 1, kind: input, shape index: {}]
  %s2 = inlined_call_operand.vmem [shape: f32[1,64], index: 2, kind: input, shape index: {}]
  %s3 = inlined_call_operand.vmem [shape: bf16[64,32], index: 3, kind: input, shape index: {}]
  %s4 = inlined_call_operand.vmem [shape: f32[1,32], index: 4, kind: input, shape index: {}]
  %s5 = inlined_call_operand.vmem [shape: f32[1,32], index: 5, kind: input, shape index: {}]
  %s6 = inlined_call_operand.vmem [shape: f32[1,32], index: 6, kind: input, shape index: {}]
  %s7 = inlined_call_operand.vmem [shape: f32[32,32], index: 7, kind: output, shape index: {}]
  %s8 = sld [smem:[#allocation0]]
  $region38: #{transformer_forward.12} parent=0
    _
  %s10 = ssub.s32 1, %s8
  %s11 = scalar_select 0, %s10, %s8
  // Predicated region
  $region2: #{transformer_forward.12} parent=0 // pred_check
    _
  $region3: #{transformer_forward.12} parent=0 // pred_check_branch
    %13 = sbr.rel (0) target = $region5
  $region4: #{transformer_forward.12} parent=0 // pred_region
    _
  $region5: #{transformer_forward.12} parent=0 // pred_fallthru
    _
  // Predicated region
  $region6: #{transformer_forward.12} parent=0 // pred_check
    _
  $region7: #{transformer_forward.12} parent=0 // pred_check_branch
    %15 = sbr.rel (0) target = $region9
  $region8: #{transformer_forward.12} parent=0 // pred_region
    _
  $region9: #{transformer_forward.12} parent=0 // pred_fallthru
    _
  // Predicated region
  $region10: #{transformer_forward.12} parent=0 // pred_check
    _
  $region11: #{transformer_forward.12} parent=0 // pred_check_branch
    %17 = sbr.rel (0) target = $region13
  $region12: #{transformer_forward.12} parent=0 // pred_region
    _
  $region13: #{transformer_forward.12} parent=0 // pred_fallthru
    _
  // Predicated region
  $region14: #{transformer_forward.12} parent=0 // pred_check
    _
  $region15: #{transformer_forward.12} parent=0 // pred_check_branch
    %19 = sbr.rel (0) target = $region17
  $region16: #{transformer_forward.12} parent=0 // pred_region
    _
  $region17: #{transformer_forward.12} parent=0 // pred_fallthru
    _
  // Predicated region
  $region18: #{transformer_forward.12} parent=0 // pred_check
    _
  $region19: #{transformer_forward.12} parent=0 // pred_check_branch
    %21 = sbr.rel (0) target = $region21
  $region20: #{transformer_forward.12} parent=0 // pred_region
    _
  $region21: #{transformer_forward.12} parent=0 // pred_fallthru
    _
  // Predicated region
  $region22: #{transformer_forward.12} parent=0 // pred_check
    _
  $region23: #{transformer_forward.12} parent=0 // pred_check_branch
    %23 = sbr.rel (0) target = $region25
  $region24: #{transformer_forward.12} parent=0 // pred_region
    _
  $region25: #{transformer_forward.12} parent=0 // pred_fallthru
    _
  // Predicated region
  $region26: #{transformer_forward.12} parent=0 // pred_check
    _
  $region27: #{transformer_forward.12} parent=0 // pred_check_branch
    %25 = sbr.rel (0) target = $region29
  $region28: #{transformer_forward.12} parent=0 // pred_region
    _
  $region29: #{transformer_forward.12} parent=0 // pred_fallthru
    _
  %v27 = vld [vmem:[%s0] sm:$0xff]
  %v28 = vld [vmem:[%s0 + $0x8] sm:$0xff]
  %v29 = vld [vmem:[%s0 + $0x10] sm:$0xff]
  %v30 = vld [vmem:[%s0 + $0x18] sm:$0xff]
  %v31 = vpack.c.bf16 %v28, %v27
  %v32 = vpack.c.bf16 %v30, %v29
  %v33 = vld [vmem:[%s1] sm:$0xf]
  %v34 = vld [vmem:[%s1 + $0x4] sm:$0xf]
  %v35 = vld [vmem:[%s1 + $0x8] sm:$0xf]
  %v36 = vld [vmem:[%s1 + $0xc] sm:$0xf]
  %v37 = vld [vmem:[%s2] sm:$0x1]
  %v39 = vlaneseq
  %v40 = vshrl.u32 %v39, 7
  %v41 = vsub.s32 0, %v40
  %v42 = vrot.slane %v37, %v41
  %v48 = vunpack.c.l.b16 %v33
  %v49 = vunpack.c.l.b16 %v34
  %v50 = vunpack.c.l.b16 %v35
  %v51 = vunpack.c.l.b16 %v36
  %v52 = vpack.c.b16 %v49, %v48
  %v53 = vpack.c.b16 %v51, %v50
  %vm56 = vcmask 261120
  %v58 = vsel %vm56, %v31, 0
  %v61 = vsel %vm56, %v32, 0
  %63 = vmatprep.subr.bf16.mxu0 0
  %64 = vmatpush1.bf16.msra.mxu0 0
  %65 = vmatprep.subr.bf16.mxu0 0
  %66 = vmatpush1.bf16.msra.mxu0 0
  %67 = vmatprep.subr.bf16.mxu0 0
  %68 = vmatpush1.bf16.msra.mxu0 0
  %69 = vmatprep.subr.bf16.mxu0 0
  %70 = vmatpush1.bf16.msra.mxu0 0
  %71 = vmatprep.subr.bf16.mxu0 0
  %72 = vmatpush1.bf16.msra.mxu0 0
  %73 = vmatprep.subr.bf16.mxu0 0
  %74 = vmatpush1.bf16.msra.mxu0 0
  %75 = vmatprep.subr.bf16.mxu0 0
  %76 = vmatpush1.bf16.msra.mxu0 %v53
  %77 = vmatprep.subr.bf16.mxu0 0
  %78 = vmatpush1.bf16.msra.mxu0 %v52
  %79 = vmatprep.subr.bf16.mxu0 0
  %80 = vmatpush2.bf16.msra.mxu0 0
  %81 = vmatprep.subr.bf16.mxu0 0
  %82 = vmatpush2.bf16.msra.mxu0 0
  %83 = vmatprep.subr.bf16.mxu0 0
  %84 = vmatpush2.bf16.msra.mxu0 0
  %85 = vmatprep.subr.bf16.mxu0 0
  %86 = vmatpush2.bf16.msra.mxu0 0
  %87 = vmatprep.subr.bf16.mxu0 0
  %88 = vmatpush2.bf16.msra.mxu0 0
  %89 = vmatprep.subr.bf16.mxu0 0
  %90 = vmatpush2.bf16.msra.mxu0 0
  %91 = vmatprep.subr.bf16.mxu0 0
  %92 = vmatpush2.bf16.msra.mxu0 0
  %93 = vmatprep.subr.bf16.mxu0 0
  %94 = vmatpush2.bf16.msra.mxu0 0
  %95 = vmatprep.mubr.bf16.mxu0 0
  %96 = vmatmul.mubr.bf16.gmra.mxu0 %v58
  %v97 = vpop.f32.mrf.mxu0
  %v98 = vadd.f32 %v42, %v97
  %v99 = vpop.f32.mrf.mxu0
  %v100 = vpop.f32.mrf.mxu0
  %v101 = vadd.f32 %v42, %v100
  %v102 = vpop.f32.mrf.mxu0
  %103 = vmatprep.mubr.bf16.mxu0 0
  %104 = vmatmul.mubr.bf16.gmra.mxu0 %v61
  %v105 = vpop.f32.mrf.mxu0
  %v106 = vadd.f32 %v42, %v105
  %v107 = vpop.f32.mrf.mxu0
  %v108 = vpop.f32.mrf.mxu0
  %v109 = vadd.f32 %v42, %v108
  %v110 = vpop.f32.mrf.mxu0
  %111 = vdwg.mxu0
  %v112 = vmax.f32 %v98, 0.0
  %v113 = vmax.f32 %v101, 0.0
  %v114 = vmax.f32 %v106, 0.0
  %v115 = vmax.f32 %v109, 0.0
  %v116 = vpack.c.bf16 %v113, %v112
  %v117 = vpack.c.bf16 %v115, %v114
  %v118 = vld [vmem:[%s3] sm:$0xf]
  %v119 = vld [vmem:[%s3 + $0x4] sm:$0xf]
  %v120 = vld [vmem:[%s3 + $0x8] sm:$0xf]
  %v121 = vld [vmem:[%s3 + $0xc] sm:$0xf]
  %v122 = vld [vmem:[%s3 + $0x10] sm:$0xf]
  %v123 = vld [vmem:[%s3 + $0x14] sm:$0xf]
  %v124 = vld [vmem:[%s3 + $0x18] sm:$0xf]
  %v125 = vld [vmem:[%s3 + $0x1c] sm:$0xf]
  %v126 = vld [vmem:[%s4] sm:$0x1]
  %v128 = vlaneseq
  %v129 = vshrl.u32 %v128, 7
  %v130 = vsub.s32 0, %v129
  %v131 = vrot.slane %v126, %v130
  %v141 = vunpack.c.l.b16 %v118
  %v142 = vunpack.c.l.b16 %v119
  %v143 = vunpack.c.l.b16 %v120
  %v144 = vunpack.c.l.b16 %v121
  %v145 = vunpack.c.l.b16 %v122
  %v146 = vunpack.c.l.b16 %v123
  %v147 = vunpack.c.l.b16 %v124
  %v148 = vunpack.c.l.b16 %v125
  %v149 = vpack.c.b16 %v142, %v141
  %v150 = vpack.c.b16 %v144, %v143
  %v151 = vpack.c.b16 %v146, %v145
  %v152 = vpack.c.b16 %v148, %v147
  %vm157 = vcmask 523264
  %v159 = vsel %vm157, %v116, 0
  %v162 = vsel %vm157, %v117, 0
  %164 = vmatprep.subr.bf16.mxu0 0
  %165 = vmatpush1.bf16.msra.mxu0 0
  %166 = vmatprep.subr.bf16.mxu0 0
  %167 = vmatpush1.bf16.msra.mxu0 0
  %168 = vmatprep.subr.bf16.mxu0 0
  %169 = vmatpush1.bf16.msra.mxu0 0
  %170 = vmatprep.subr.bf16.mxu0 0
  %171 = vmatpush1.bf16.msra.mxu0 0
  %172 = vmatprep.subr.bf16.mxu0 0
  %173 = vmatpush1.bf16.msra.mxu0 %v152
  %174 = vmatprep.subr.bf16.mxu0 0
  %175 = vmatpush1.bf16.msra.mxu0 %v151
  %176 = vmatprep.subr.bf16.mxu0 0
  %177 = vmatpush1.bf16.msra.mxu0 %v150
  %178 = vmatprep.subr.bf16.mxu0 0
  %179 = vmatpush1.bf16.msra.mxu0 %v149
  %180 = vmatprep.subr.bf16.mxu0 0
  %181 = vmatpush2.bf16.msra.mxu0 0
  %182 = vmatprep.subr.bf16.mxu0 0
  %183 = vmatpush2.bf16.msra.mxu0 0
  %184 = vmatprep.subr.bf16.mxu0 0
  %185 = vmatpush2.bf16.msra.mxu0 0
  %186 = vmatprep.subr.bf16.mxu0 0
  %187 = vmatpush2.bf16.msra.mxu0 0
  %188 = vmatprep.subr.bf16.mxu0 0
  %189 = vmatpush2.bf16.msra.mxu0 0
  %190 = vmatprep.subr.bf16.mxu0 0
  %191 = vmatpush2.bf16.msra.mxu0 0
  %192 = vmatprep.subr.bf16.mxu0 0
  %193 = vmatpush2.bf16.msra.mxu0 0
  %194 = vmatprep.subr.bf16.mxu0 0
  %195 = vmatpush2.bf16.msra.mxu0 0
  %196 = vmatprep.mubr.bf16.mxu0 0
  %197 = vmatmul.mubr.bf16.gmra.mxu0 %v159
  %v198 = vpop.f32.mrf.mxu0
  %v199 = vadd.f32 %v131, %v198
  %v200 = vpop.f32.mrf.mxu0
  %v201 = vpop.f32.mrf.mxu0
  %v202 = vadd.f32 %v131, %v201
  %v203 = vpop.f32.mrf.mxu0
  %204 = vmatprep.mubr.bf16.mxu0 0
  %205 = vmatmul.mubr.bf16.gmra.mxu0 %v162
  %v206 = vpop.f32.mrf.mxu0
  %v207 = vadd.f32 %v131, %v206
  %v208 = vpop.f32.mrf.mxu0
  %v209 = vpop.f32.mrf.mxu0
  %v210 = vadd.f32 %v131, %v209
  %v211 = vpop.f32.mrf.mxu0
  %212 = vdwg.mxu0
  %v213 = vadd.f32 %v199, %v27
  %v214 = vadd.f32 %v202, %v28
  %v215 = vadd.f32 %v207, %v29
  %v216 = vadd.f32 %v210, %v30
  %v217 = vsel %vm56, %v213, 0.0
  %218 = vadd.xlane.f32.xlu0 %v217
  %v219 = vpop.xlane.xlu0 %218
  %v220 = vsel %vm56, %v214, 0.0
  %221 = vadd.xlane.f32.xlu0 %v220
  %v222 = vpop.xlane.xlu0 %221
  %v223 = vsel %vm56, %v215, 0.0
  %224 = vadd.xlane.f32.xlu0 %v223
  %v225 = vpop.xlane.xlu0 %224
  %v226 = vsel %vm56, %v216, 0.0
  %227 = vadd.xlane.f32.xlu0 %v226
  %v228 = vpop.xlane.xlu0 %227
  %v229 = vrcp.pop 32.0
  %v230 = vmul.f32 %v219, %v229
  %v231 = vmul.f32 %v222, %v229
  %v232 = vmul.f32 %v225, %v229
  %v233 = vmul.f32 %v228, %v229
  %v234 = vsub.f32 %v213, %v230
  %v235 = vsub.f32 %v214, %v231
  %v236 = vsub.f32 %v215, %v232
  %v237 = vsub.f32 %v216, %v233
  %v238 = vmul.f32 %v234, %v234
  %v239 = vmul.f32 %v235, %v235
  %v240 = vmul.f32 %v236, %v236
  %v241 = vmul.f32 %v237, %v237
  %v242 = vsel %vm56, %v238, 0.0
  %243 = vadd.xlane.f32.xlu0 %v242
  %v244 = vpop.xlane.xlu0 %243
  %v245 = vsel %vm56, %v239, 0.0
  %246 = vadd.xlane.f32.xlu0 %v245
  %v247 = vpop.xlane.xlu0 %246
  %v248 = vsel %vm56, %v240, 0.0
  %249 = vadd.xlane.f32.xlu0 %v248
  %v250 = vpop.xlane.xlu0 %249
  %v251 = vsel %vm56, %v241, 0.0
  %252 = vadd.xlane.f32.xlu0 %v251
  %v253 = vpop.xlane.xlu0 %252
  %v254 = vmul.f32 %v244, %v229
  %v255 = vmul.f32 %v247, %v229
  %v256 = vmul.f32 %v250, %v229
  %v257 = vmul.f32 %v253, %v229
  %v258 = vadd.f32 %v254, 1e-05
  %v259 = vadd.f32 %v255, 1e-05
  %v260 = vadd.f32 %v256, 1e-05
  %v261 = vadd.f32 %v257, 1e-05
  %v262 = vrsqrt.pop %v258
  %v263 = vrsqrt.pop %v259
  %v264 = vrsqrt.pop %v260
  %v265 = vrsqrt.pop %v261
  %v266 = vmul.f32 %v234, %v262
  %v267 = vmul.f32 %v235, %v263
  %v268 = vmul.f32 %v236, %v264
  %v269 = vmul.f32 %v237, %v265
  %v270 = vld [vmem:[%s5] sm:$0x1]
  %v272 = vlaneseq
  %v273 = vshrl.u32 %v272, 7
  %v274 = vsub.s32 0, %v273
  %v275 = vrot.slane %v270, %v274
  %v277 = vmul.f32 %v266, %v275
  %v278 = vmul.f32 %v267, %v275
  %v279 = vmul.f32 %v268, %v275
  %v280 = vmul.f32 %v269, %v275
  %v281 = vld [vmem:[%s6] sm:$0x1]
  %v283 = vlaneseq
  %v284 = vshrl.u32 %v283, 7
  %v285 = vsub.s32 0, %v284
  %v286 = vrot.slane %v281, %v285
  %v288 = vadd.f32 %v277, %v286
  %v289 = vadd.f32 %v278, %v286
  %v290 = vadd.f32 %v279, %v286
  %v291 = vadd.f32 %v280, %v286
  %292 = vst.msk [vmem:[%s7] sm:$0xff] %vm56, %v288
  %293 = vst.msk [vmem:[%s7 + $0x8] sm:$0xff] %vm56, %v289
  %294 = vst.msk [vmem:[%s7 + $0x10] sm:$0xff] %vm56, %v290
  %295 = vst.msk [vmem:[%s7 + $0x18] sm:$0xff] %vm56, %v291
  // Predicated region
  $region30: #{transformer_forward.12} parent=0 // pred_check
    _
  $region31: #{transformer_forward.12} parent=0 // pred_check_branch
    %297 = sbr.rel (0) target = $region33
  $region32: #{transformer_forward.12} parent=0 // pred_region
    _
  $region33: #{transformer_forward.12} parent=0 // pred_fallthru
    _
  // Predicated region
  $region34: #{transformer_forward.12} parent=0 // pred_check
    _
  $region35: #{transformer_forward.12} parent=0 // pred_check_branch
    %299 = sbr.rel (0) target = $region37
  $region36: #{transformer_forward.12} parent=0 // pred_region
    _
  $region37: #{transformer_forward.12} parent=0 // pred_fallthru
    _

// kernel: transformer_forward.13
$region0: #{transformer_forward.13}
  #allocation0 [shape = 'u32[]', space=smem, size = 0x4, offset = 0x4, fixed_abs, tag = 'smem constant byte address 0x4 - core index']
  #allocation1 [shape = 'u32[144,128]{1,0:T(1,128)}', space=vmem, size = 0x12000, scoped, tag = 'internal scratch']
  %s0 = inlined_call_operand.vmem [shape: f32[2,16,32], index: 0, kind: input, shape index: {}]
  %s1 = inlined_call_operand.vmem [shape: f32[2,1,16], index: 1, kind: input, shape index: {}]
  %s2 = inlined_call_operand.vmem [shape: bf16[4,32,8], index: 2, kind: input, shape index: {}]
  %s3 = inlined_call_operand.vmem [shape: f32[4,1,8], index: 3, kind: input, shape index: {}]
  %s4 = inlined_call_operand.vmem [shape: bf16[4,32,8], index: 4, kind: input, shape index: {}]
  %s5 = inlined_call_operand.vmem [shape: f32[4,1,8], index: 5, kind: input, shape index: {}]
  %s6 = inlined_call_operand.vmem [shape: bf16[4,32,8], index: 6, kind: input, shape index: {}]
  %s7 = inlined_call_operand.vmem [shape: f32[4,1,8], index: 7, kind: input, shape index: {}]
  %s8 = inlined_call_operand.vmem [shape: bf16[4,8,32], index: 8, kind: input, shape index: {}]
  %s9 = inlined_call_operand.vmem [shape: f32[1,32], index: 9, kind: input, shape index: {}]
  %s10 = inlined_call_operand.vmem [shape: f32[1,32], index: 10, kind: input, shape index: {}]
  %s11 = inlined_call_operand.vmem [shape: f32[1,32], index: 11, kind: input, shape index: {}]
  %s12 = inlined_call_operand.vmem [shape: f32[2,16,32], index: 12, kind: output, shape index: {}]
  %s13 = sld [smem:[#allocation0]]
  $region93: #{transformer_forward.13} parent=0
    _
  %s15 = ssub.s32 1, %s13
  %s16 = scalar_select 0, %s15, %s13
  loop: start=0, step=1, limit=10
  $region2: #{transformer_forward.13} parent=0 // loop_pre_header
    _
  $region3: #{transformer_forward.13} parent=0 // loop_header
    %s18 = sphi 0, %s22
    %p19 = scmp.ge.s32.totalorder %s18, 10
    %s25 = sphi 0, %s37
    %s26 = sphi 0, %s33
    %s27 = sphi 0, %s25
    %s28 = sphi 0, %s26
    %s29 = sphi 0, %s27
    %s30 = sphi 0, %s28
    %s40 = sphi 0, %s42
    %s43 = sphi 0, %s40
    %s44 = sphi 0, %s43
    %s60 = sphi 0, %s44
    %s66 = sphi 0, %s68
    %s69 = sphi 0, %s66
    %s70 = sphi 0, %s69
    %s86 = sphi 0, %s70
    %s92 = sphi 0, %s94
    %s95 = sphi 0, %s92
    %s96 = sphi 0, %s95
    %s112 = sphi 0, %s96
    %s118 = sphi 0, %s120
    %s121 = sphi 0, %s118
    %s122 = sphi 0, %s121
    %s138 = sphi 0, %s122
    %s144 = sphi 0, %s146
    %s147 = sphi 0, %s144
    %s148 = sphi 0, %s147
    %s164 = sphi 0, %s148
    %s170 = sphi 0, %s172
    %s173 = sphi 0, %s170
    %s174 = sphi 0, %s173
    %s190 = sphi 0, %s174
    %s196 = sphi 0, %s198
    %s199 = sphi 0, %s196
    %s200 = sphi 0, %s199
    %s216 = sphi 0, %s200
    %s222 = sphi 0, %s224
    %s225 = sphi 0, %s222
    %s226 = sphi 0, %s225
    %s242 = sphi 0, %s226
    %s248 = sphi 0, %s250
    %s251 = sphi 0, %s248
    %s252 = sphi 0, %s251
    %s268 = sphi 0, %s252
    %s272 = sphi 0, %s272
    %s274 = sphi 0, %s272
    %s275 = sphi 0, %s274
    %s289 = sphi 0, %s275
    %s293 = sphi 0, %s293
    %s295 = sphi 0, %s293
    %s296 = sphi 0, %s295
    %s310 = sphi 0, %s296
    %s314 = sphi 0, %s314
    %s316 = sphi 0, %s314
    %s317 = sphi 0, %s316
    %s331 = sphi 0, %s317
    %s337 = sphi 0, %s339
    %s340 = sphi 0, %s337
    %s341 = sphi 0, %s340
    %s357 = sphi 0, %s341
  $region4: #{transformer_forward.13} parent=0 // loop_header_branch
    %21 = sbr.rel (%p19) target = $region8
  $region5: #{transformer_forward.13} parent=0 // loop_body
    %s23 = ssub.s32 %s18, 1
    %s24 = ssub.s32 %s18, 2
    %s31 = sadd.s32 1, %s26
    %p32 = scmp.ge.s32.totalorder %s31, 4
    %s33 = scalar_select %p32, 0, %s31
    %s34 = sadd.s32 1, %s25
    %s35 = scalar_select %p32, %s34, %s25
    %p36 = scmp.ge.s32.totalorder %s35, 2
    %s37 = scalar_select %p36, 0, %s35
    %s38 = ssub.s32 %s25, %s37
    %p39 = scmp.eq.s32.totalorder %s38, 0
    %s41 = sadd.s32 %s40, 1
    %s42 = scalar_select %p39, %s40, %s41
    %p45 = pneg %p39
    %p46 = scmp.eq.s32.totalorder %s18, 7
    %p47 = por %p45, %p46
    %p48 = scmp.ne.s32.totalorder %s40, %s43
    %p49 = scmp.eq.s32.totalorder %s18, 0
    %p50 = por %p48, %p49
    %p51 = scmp.ne.s32.totalorder %s40, %s43
    %p52 = scmp.eq.s32.totalorder %s23, 7
    %p53 = por %p51, %p52
    %p54 = scmp.ne.s32.totalorder %s43, %s44
    %p55 = scmp.eq.s32.totalorder %s23, 0
    %p56 = por %p54, %p55
    %p57 = scmp.ne.s32.totalorder %s43, %s44
    %p58 = scmp.eq.s32.totalorder %s24, 7
    %p59 = por %p57, %p58
    %p61 = scmp.ne.s32.totalorder %s44, %s60
    %p62 = scmp.eq.s32.totalorder %s24, 0
    %p63 = por %p61, %p62
    %s64 = ssub.s32 %s25, %s37
    %p65 = scmp.eq.s32.totalorder %s64, 0
    %s67 = sadd.s32 %s66, 1
    %s68 = scalar_select %p65, %s66, %s67
    %p71 = pneg %p65
    %p72 = scmp.eq.s32.totalorder %s18, 7
    %p73 = por %p71, %p72
    %p74 = scmp.ne.s32.totalorder %s66, %s69
    %p75 = scmp.eq.s32.totalorder %s18, 0
    %p76 = por %p74, %p75
    %p77 = scmp.ne.s32.totalorder %s66, %s69
    %p78 = scmp.eq.s32.totalorder %s23, 7
    %p79 = por %p77, %p78
    %p80 = scmp.ne.s32.totalorder %s69, %s70
    %p81 = scmp.eq.s32.totalorder %s23, 0
    %p82 = por %p80, %p81
    %p83 = scmp.ne.s32.totalorder %s69, %s70
    %p84 = scmp.eq.s32.totalorder %s24, 7
    %p85 = por %p83, %p84
    %p87 = scmp.ne.s32.totalorder %s70, %s86
    %p88 = scmp.eq.s32.totalorder %s24, 0
    %p89 = por %p87, %p88
    %s90 = ssub.s32 %s26, %s33
    %p91 = scmp.eq.s32.totalorder %s90, 0
    %s93 = sadd.s32 %s92, 1
    %s94 = scalar_select %p91, %s92, %s93
    %p97 = pneg %p91
    %p98 = scmp.eq.s32.totalorder %s18, 7
    %p99 = por %p97, %p98
    %p100 = scmp.ne.s32.totalorder %s92, %s95
    %p101 = scmp.eq.s32.totalorder %s18, 0
    %p102 = por %p100, %p101
    %p103 = scmp.ne.s32.totalorder %s92, %s95
    %p104 = scmp.eq.s32.totalorder %s23, 7
    %p105 = por %p103, %p104
    %p106 = scmp.ne.s32.totalorder %s95, %s96
    %p107 = scmp.eq.s32.totalorder %s23, 0
    %p108 = por %p106, %p107
    %p109 = scmp.ne.s32.totalorder %s95, %s96
    %p110 = scmp.eq.s32.totalorder %s24, 7
    %p111 = por %p109, %p110
    %p113 = scmp.ne.s32.totalorder %s96, %s112
    %p114 = scmp.eq.s32.totalorder %s24, 0
    %p115 = por %p113, %p114
    %s116 = ssub.s32 %s26, %s33
    %p117 = scmp.eq.s32.totalorder %s116, 0
    %s119 = sadd.s32 %s118, 1
    %s120 = scalar_select %p117, %s118, %s119
    %p123 = pneg %p117
    %p124 = scmp.eq.s32.totalorder %s18, 7
    %p125 = por %p123, %p124
    %p126 = scmp.ne.s32.totalorder %s118, %s121
    %p127 = scmp.eq.s32.totalorder %s18, 0
    %p128 = por %p126, %p127
    %p129 = scmp.ne.s32.totalorder %s118, %s121
    %p130 = scmp.eq.s32.totalorder %s23, 7
    %p131 = por %p129, %p130
    %p132 = scmp.ne.s32.totalorder %s121, %s122
    %p133 = scmp.eq.s32.totalorder %s23, 0
    %p134 = por %p132, %p133
    %p135 = scmp.ne.s32.totalorder %s121, %s122
    %p136 = scmp.eq.s32.totalorder %s24, 7
    %p137 = por %p135, %p136
    %p139 = scmp.ne.s32.totalorder %s122, %s138
    %p140 = scmp.eq.s32.totalorder %s24, 0
    %p141 = por %p139, %p140
    %s142 = ssub.s32 %s26, %s33
    %p143 = scmp.eq.s32.totalorder %s142, 0
    %s145 = sadd.s32 %s144, 1
    %s146 = scalar_select %p143, %s144, %s145
    %p149 = pneg %p143
    %p150 = scmp.eq.s32.totalorder %s18, 7
    %p151 = por %p149, %p150
    %p152 = scmp.ne.s32.totalorder %s144, %s147
    %p153 = scmp.eq.s32.totalorder %s18, 0
    %p154 = por %p152, %p153
    %p155 = scmp.ne.s32.totalorder %s144, %s147
    %p156 = scmp.eq.s32.totalorder %s23, 7
    %p157 = por %p155, %p156
    %p158 = scmp.ne.s32.totalorder %s147, %s148
    %p159 = scmp.eq.s32.totalorder %s23, 0
    %p160 = por %p158, %p159
    %p161 = scmp.ne.s32.totalorder %s147, %s148
    %p162 = scmp.eq.s32.totalorder %s24, 7
    %p163 = por %p161, %p162
    %p165 = scmp.ne.s32.totalorder %s148, %s164
    %p166 = scmp.eq.s32.totalorder %s24, 0
    %p167 = por %p165, %p166
    %s168 = ssub.s32 %s26, %s33
    %p169 = scmp.eq.s32.totalorder %s168, 0
    %s171 = sadd.s32 %s170, 1
    %s172 = scalar_select %p169, %s170, %s171
    %p175 = pneg %p169
    %p176 = scmp.eq.s32.totalorder %s18, 7
    %p177 = por %p175, %p176
    %p178 = scmp.ne.s32.totalorder %s170, %s173
    %p179 = scmp.eq.s32.totalorder %s18, 0
    %p180 = por %p178, %p179
    %p181 = scmp.ne.s32.totalorder %s170, %s173
    %p182 = scmp.eq.s32.totalorder %s23, 7
    %p183 = por %p181, %p182
    %p184 = scmp.ne.s32.totalorder %s173, %s174
    %p185 = scmp.eq.s32.totalorder %s23, 0
    %p186 = por %p184, %p185
    %p187 = scmp.ne.s32.totalorder %s173, %s174
    %p188 = scmp.eq.s32.totalorder %s24, 7
    %p189 = por %p187, %p188
    %p191 = scmp.ne.s32.totalorder %s174, %s190
    %p192 = scmp.eq.s32.totalorder %s24, 0
    %p193 = por %p191, %p192
    %s194 = ssub.s32 %s26, %s33
    %p195 = scmp.eq.s32.totalorder %s194, 0
    %s197 = sadd.s32 %s196, 1
    %s198 = scalar_select %p195, %s196, %s197
    %p201 = pneg %p195
    %p202 = scmp.eq.s32.totalorder %s18, 7
    %p203 = por %p201, %p202
    %p204 = scmp.ne.s32.totalorder %s196, %s199
    %p205 = scmp.eq.s32.totalorder %s18, 0
    %p206 = por %p204, %p205
    %p207 = scmp.ne.s32.totalorder %s196, %s199
    %p208 = scmp.eq.s32.totalorder %s23, 7
    %p209 = por %p207, %p208
    %p210 = scmp.ne.s32.totalorder %s199, %s200
    %p211 = scmp.eq.s32.totalorder %s23, 0
    %p212 = por %p210, %p211
    %p213 = scmp.ne.s32.totalorder %s199, %s200
    %p214 = scmp.eq.s32.totalorder %s24, 7
    %p215 = por %p213, %p214
    %p217 = scmp.ne.s32.totalorder %s200, %s216
    %p218 = scmp.eq.s32.totalorder %s24, 0
    %p219 = por %p217, %p218
    %s220 = ssub.s32 %s26, %s33
    %p221 = scmp.eq.s32.totalorder %s220, 0
    %s223 = sadd.s32 %s222, 1
    %s224 = scalar_select %p221, %s222, %s223
    %p227 = pneg %p221
    %p228 = scmp.eq.s32.totalorder %s18, 7
    %p229 = por %p227, %p228
    %p230 = scmp.ne.s32.totalorder %s222, %s225
    %p231 = scmp.eq.s32.totalorder %s18, 0
    %p232 = por %p230, %p231
    %p233 = scmp.ne.s32.totalorder %s222, %s225
    %p234 = scmp.eq.s32.totalorder %s23, 7
    %p235 = por %p233, %p234
    %p236 = scmp.ne.s32.totalorder %s225, %s226
    %p237 = scmp.eq.s32.totalorder %s23, 0
    %p238 = por %p236, %p237
    %p239 = scmp.ne.s32.totalorder %s225, %s226
    %p240 = scmp.eq.s32.totalorder %s24, 7
    %p241 = por %p239, %p240
    %p243 = scmp.ne.s32.totalorder %s226, %s242
    %p244 = scmp.eq.s32.totalorder %s24, 0
    %p245 = por %p243, %p244
    %s246 = ssub.s32 %s26, %s33
    %p247 = scmp.eq.s32.totalorder %s246, 0
    %s249 = sadd.s32 %s248, 1
    %s250 = scalar_select %p247, %s248, %s249
    %p253 = pneg %p247
    %p254 = scmp.eq.s32.totalorder %s18, 7
    %p255 = por %p253, %p254
    %p256 = scmp.ne.s32.totalorder %s248, %s251
    %p257 = scmp.eq.s32.totalorder %s18, 0
    %p258 = por %p256, %p257
    %p259 = scmp.ne.s32.totalorder %s248, %s251
    %p260 = scmp.eq.s32.totalorder %s23, 7
    %p261 = por %p259, %p260
    %p262 = scmp.ne.s32.totalorder %s251, %s252
    %p263 = scmp.eq.s32.totalorder %s23, 0
    %p264 = por %p262, %p263
    %p265 = scmp.ne.s32.totalorder %s251, %s252
    %p266 = scmp.eq.s32.totalorder %s24, 7
    %p267 = por %p265, %p266
    %p269 = scmp.ne.s32.totalorder %s252, %s268
    %p270 = scmp.eq.s32.totalorder %s24, 0
    %p271 = por %p269, %p270
    %s273 = sadd.s32 %s272, 1
    %p276 = scmp.eq.s32.totalorder %s18, 7
    %p277 = scmp.ne.s32.totalorder %s272, %s274
    %p278 = scmp.eq.s32.totalorder %s18, 0
    %p279 = por %p277, %p278
    %p280 = scmp.ne.s32.totalorder %s272, %s274
    %p281 = scmp.eq.s32.totalorder %s23, 7
    %p282 = por %p280, %p281
    %p283 = scmp.ne.s32.totalorder %s274, %s275
    %p284 = scmp.eq.s32.totalorder %s23, 0
    %p285 = por %p283, %p284
    %p286 = scmp.ne.s32.totalorder %s274, %s275
    %p287 = scmp.eq.s32.totalorder %s24, 7
    %p288 = por %p286, %p287
    %p290 = scmp.ne.s32.totalorder %s275, %s289
    %p291 = scmp.eq.s32.totalorder %s24, 0
    %p292 = por %p290, %p291
    %s294 = sadd.s32 %s293, 1
    %p297 = scmp.eq.s32.totalorder %s18, 7
    %p298 = scmp.ne.s32.totalorder %s293, %s295
    %p299 = scmp.eq.s32.totalorder %s18, 0
    %p300 = por %p298, %p299
    %p301 = scmp.ne.s32.totalorder %s293, %s295
    %p302 = scmp.eq.s32.totalorder %s23, 7
    %p303 = por %p301, %p302
    %p304 = scmp.ne.s32.totalorder %s295, %s296
    %p305 = scmp.eq.s32.totalorder %s23, 0
    %p306 = por %p304, %p305
    %p307 = scmp.ne.s32.totalorder %s295, %s296
    %p308 = scmp.eq.s32.totalorder %s24, 7
    %p309 = por %p307, %p308
    %p311 = scmp.ne.s32.totalorder %s296, %s310
    %p312 = scmp.eq.s32.totalorder %s24, 0
    %p313 = por %p311, %p312
    %s315 = sadd.s32 %s314, 1
    %p318 = scmp.eq.s32.totalorder %s18, 7
    %p319 = scmp.ne.s32.totalorder %s314, %s316
    %p320 = scmp.eq.s32.totalorder %s18, 0
    %p321 = por %p319, %p320
    %p322 = scmp.ne.s32.totalorder %s314, %s316
    %p323 = scmp.eq.s32.totalorder %s23, 7
    %p324 = por %p322, %p323
    %p325 = scmp.ne.s32.totalorder %s316, %s317
    %p326 = scmp.eq.s32.totalorder %s23, 0
    %p327 = por %p325, %p326
    %p328 = scmp.ne.s32.totalorder %s316, %s317
    %p329 = scmp.eq.s32.totalorder %s24, 7
    %p330 = por %p328, %p329
    %p332 = scmp.ne.s32.totalorder %s317, %s331
    %p333 = scmp.eq.s32.totalorder %s24, 0
    %p334 = por %p332, %p333
    %s335 = ssub.s32 %s25, %s37
    %p336 = scmp.eq.s32.totalorder %s335, 0
    %s338 = sadd.s32 %s337, 1
    %s339 = scalar_select %p336, %s337, %s338
    %p342 = pneg %p336
    %p343 = scmp.eq.s32.totalorder %s18, 7
    %p344 = por %p342, %p343
    %p345 = scmp.ne.s32.totalorder %s337, %s340
    %p346 = scmp.eq.s32.totalorder %s18, 0
    %p347 = por %p345, %p346
    %p348 = scmp.ne.s32.totalorder %s337, %s340
    %p349 = scmp.eq.s32.totalorder %s23, 7
    %p350 = por %p348, %p349
    %p351 = scmp.ne.s32.totalorder %s340, %s341
    %p352 = scmp.eq.s32.totalorder %s23, 0
    %p353 = por %p351, %p352
    %p354 = scmp.ne.s32.totalorder %s340, %s341
    %p355 = scmp.eq.s32.totalorder %s24, 7
    %p356 = por %p354, %p355
    %p358 = scmp.ne.s32.totalorder %s341, %s357
    %p359 = scmp.eq.s32.totalorder %s24, 0
    %p360 = por %p358, %p359
    %p361 = scmp.le.s32.totalorder 1, %s18
    %p362 = scmp.lt.s32.totalorder %s18, 9
    %p363 = pnand %p361, %p362
    %p364 = pneg %p363
    // Predicated region
    $region9: #{transformer_forward.13} parent=5 // pred_check
      _
    $region10: #{transformer_forward.13} parent=5 // pred_check_branch
      %366 = sbr.rel (%p363) target = $region12
    $region11: #{transformer_forward.13} parent=5 // pred_region
      %s367 = ssub.s32 %s18, 1
      // Predicated region
      $region13: #{transformer_forward.13} parent=11 // pred_check
        %p368 = pneg %p285
      $region14: #{transformer_forward.13} parent=11 // pred_check_branch
        %370 = sbr.rel (%p368) target = $region16
      $region15: #{transformer_forward.13} parent=11 // pred_region
        _
      $region16: #{transformer_forward.13} parent=11 // pred_fallthru
        _
      // Predicated region
      $region17: #{transformer_forward.13} parent=11 // pred_check
        %p371 = pneg %p306
      $region18: #{transformer_forward.13} parent=11 // pred_check_branch
        %373 = sbr.rel (%p371) target = $region20
      $region19: #{transformer_forward.13} parent=11 // pred_region
        _
      $region20: #{transformer_forward.13} parent=11 // pred_fallthru
        _
      // Predicated region
      $region21: #{transformer_forward.13} parent=11 // pred_check
        %p374 = pneg %p327
      $region22: #{transformer_forward.13} parent=11 // pred_check_branch
        %376 = sbr.rel (%p374) target = $region24
      $region23: #{transformer_forward.13} parent=11 // pred_region
        _
      $region24: #{transformer_forward.13} parent=11 // pred_fallthru
        _
    $region12: #{transformer_forward.13} parent=5 // pred_fallthru
      _
    %p377 = scmp.lt.s32.totalorder %s18, 8
    // Predicated region
    $region25: #{transformer_forward.13} parent=5 // pred_check
      %p378 = pneg %p377
    $region26: #{transformer_forward.13} parent=5 // pred_check_branch
      %380 = sbr.rel (%p378) target = $region28
    $region27: #{transformer_forward.13} parent=5 // pred_region
      // Predicated region
      $region29: #{transformer_forward.13} parent=27 // pred_check
        %p381 = pneg %p50
      $region30: #{transformer_forward.13} parent=27 // pred_check_branch
        %383 = sbr.rel (%p381) target = $region32
      $region31: #{transformer_forward.13} parent=27 // pred_region
        %p384 = scmp.lt.s32.totalorder %s25, 1
        %s385 = scalar_select %p384, %s25, 1
        %s386 = smul.addr %s385, 2
        %s387 = smul.addr %s386, 8
        %s388 = scalar_lea.vmem %s0, %s387
      $region32: #{transformer_forward.13} parent=27 // pred_fallthru
        _
      // Predicated region
      $region33: #{transformer_forward.13} parent=27 // pred_check
        %p389 = pneg %p76
      $region34: #{transformer_forward.13} parent=27 // pred_check_branch
        %391 = sbr.rel (%p389) target = $region36
      $region35: #{transformer_forward.13} parent=27 // pred_region
        %p392 = scmp.lt.s32.totalorder %s25, 1
        %s393 = scalar_select %p392, %s25, 1
        %s394 = scalar_lea.vmem %s1, %s393
      $region36: #{transformer_forward.13} parent=27 // pred_fallthru
        _
      // Predicated region
      $region37: #{transformer_forward.13} parent=27 // pred_check
        %p395 = pneg %p102
      $region38: #{transformer_forward.13} parent=27 // pred_check_branch
        %397 = sbr.rel (%p395) target = $region40
      $region39: #{transformer_forward.13} parent=27 // pred_region
        %p398 = scmp.lt.s32.totalorder %s26, 3
        %s399 = scalar_select %p398, %s26, 3
        %s400 = smul.addr %s399, 4
        %s401 = smul.addr %s400, 4
        %s402 = scalar_lea.vmem %s2, %s401
      $region40: #{transformer_forward.13} parent=27 // pred_fallthru
        _
      // Predicated region
      $region41: #{transformer_forward.13} parent=27 // pred_check
        %p403 = pneg %p128
      $region42: #{transformer_forward.13} parent=27 // pred_check_branch
        %405 = sbr.rel (%p403) target = $region44
      $region43: #{transformer_forward.13} parent=27 // pred_region
        %p406 = scmp.lt.s32.totalorder %s26, 3
        %s407 = scalar_select %p406, %s26, 3
        %s408 = scalar_lea.vmem %s3, %s407
      $region44: #{transformer_forward.13} parent=27 // pred_fallthru
        _
      // Predicated region
      $region45: #{transformer_forward.13} parent=27 // pred_check
        %p409 = pneg %p154
      $region46: #{transformer_forward.13} parent=27 // pred_check_branch
        %411 = sbr.rel (%p409) target = $region48
      $region47: #{transformer_forward.13} parent=27 // pred_region
        %p412 = scmp.lt.s32.totalorder %s26, 3
        %s413 = scalar_select %p412, %s26, 3
        %s414 = smul.addr %s413, 4
        %s415 = smul.addr %s414, 4
        %s416 = scalar_lea.vmem %s4, %s415
      $region48: #{transformer_forward.13} parent=27 // pred_fallthru
        _
      // Predicated region
      $region49: #{transformer_forward.13} parent=27 // pred_check
        %p417 = pneg %p180
      $region50: #{transformer_forward.13} parent=27 // pred_check_branch
        %419 = sbr.rel (%p417) target = $region52
      $region51: #{transformer_forward.13} parent=27 // pred_region
        %p420 = scmp.lt.s32.totalorder %s26, 3
        %s421 = scalar_select %p420, %s26, 3
        %s422 = scalar_lea.vmem %s5, %s421
      $region52: #{transformer_forward.13} parent=27 // pred_fallthru
        _
      // Predicated region
      $region53: #{transformer_forward.13} parent=27 // pred_check
        %p423 = pneg %p206
      $region54: #{transformer_forward.13} parent=27 // pred_check_branch
        %425 = sbr.rel (%p423) target = $region56
      $region55: #{transformer_forward.13} parent=27 // pred_region
        %p426 = scmp.lt.s32.totalorder %s26, 3
        %s427 = scalar_select %p426, %s26, 3
        %s428 = smul.addr %s427, 4
        %s429 = smul.addr %s428, 4
        %s430 = scalar_lea.vmem %s6, %s429
      $region56: #{transformer_forward.13} parent=27 // pred_fallthru
        _
      // Predicated region
      $region57: #{transformer_forward.13} parent=27 // pred_check
        %p431 = pneg %p232
      $region58: #{transformer_forward.13} parent=27 // pred_check_branch
        %433 = sbr.rel (%p431) target = $region60
      $region59: #{transformer_forward.13} parent=27 // pred_region
        %p434 = scmp.lt.s32.totalorder %s26, 3
        %s435 = scalar_select %p434, %s26, 3
        %s436 = scalar_lea.vmem %s7, %s435
      $region60: #{transformer_forward.13} parent=27 // pred_fallthru
        _
      // Predicated region
      $region61: #{transformer_forward.13} parent=27 // pred_check
        %p437 = pneg %p258
      $region62: #{transformer_forward.13} parent=27 // pred_check_branch
        %439 = sbr.rel (%p437) target = $region64
      $region63: #{transformer_forward.13} parent=27 // pred_region
        %p440 = scmp.lt.s32.totalorder %s26, 3
        %s441 = scalar_select %p440, %s26, 3
        %s442 = smul.addr %s441, 4
        %s443 = scalar_lea.vmem %s8, %s442
      $region64: #{transformer_forward.13} parent=27 // pred_fallthru
        _
    $region28: #{transformer_forward.13} parent=5 // pred_fallthru
      _
    %p444 = scmp.le.s32.totalorder 1, %s18
    %p445 = scmp.lt.s32.totalorder %s18, 9
    %p446 = pnand %p444, %p445
    %p447 = pneg %p446
    // Predicated region
    $region65: #{transformer_forward.13} parent=5 // pred_check
      _
    $region66: #{transformer_forward.13} parent=5 // pred_check_branch
      %449 = sbr.rel (%p446) target = $region68
    $region67: #{transformer_forward.13} parent=5 // pred_region
      %s450 = ssub.s32 %s18, 1
      %p451 = scmp.lt.s32.totalorder %s27, 1
      %s452 = scalar_select %p451, %s27, 1
      %s453 = smul.addr %s452, 2
      %s454 = smul.addr %s453, 8
      %s455 = scalar_lea.vmem %s0, %s454
      %p456 = pneg %p56
      %p457 = pneg %p53
      %p458 = scmp.lt.s32.totalorder %s27, 1
      %s459 = scalar_select %p458, %s27, 1
      %s460 = scalar_lea.vmem %s1, %s459
      %p461 = pneg %p82
      %p462 = pneg %p79
      %p463 = scmp.lt.s32.totalorder %s28, 3
      %s464 = scalar_select %p463, %s28, 3
      %s465 = smul.addr %s464, 4
      %s466 = smul.addr %s465, 4
      %s467 = scalar_lea.vmem %s2, %s466
      %p468 = pneg %p108
      %p469 = pneg %p105
      %p470 = scmp.lt.s32.totalorder %s28, 3
      %s471 = scalar_select %p470, %s28, 3
      %s472 = scalar_lea.vmem %s3, %s471
      %p473 = pneg %p134
      %p474 = pneg %p131
      %p475 = scmp.lt.s32.totalorder %s28, 3
      %s476 = scalar_select %p475, %s28, 3
      %s477 = smul.addr %s476, 4
      %s478 = smul.addr %s477, 4
      %s479 = scalar_lea.vmem %s4, %s478
      %p480 = pneg %p160
      %p481 = pneg %p157
      %p482 = scmp.lt.s32.totalorder %s28, 3
      %s483 = scalar_select %p482, %s28, 3
      %s484 = scalar_lea.vmem %s5, %s483
      %p485 = pneg %p186
      %p486 = pneg %p183
      %p487 = scmp.lt.s32.totalorder %s28, 3
      %s488 = scalar_select %p487, %s28, 3
      %s489 = smul.addr %s488, 4
      %s490 = smul.addr %s489, 4
      %s491 = scalar_lea.vmem %s6, %s490
      %p492 = pneg %p212
      %p493 = pneg %p209
      %p494 = scmp.lt.s32.totalorder %s28, 3
      %s495 = scalar_select %p494, %s28, 3
      %s496 = scalar_lea.vmem %s7, %s495
      %p497 = pneg %p238
      %p498 = pneg %p235
      %p499 = scmp.lt.s32.totalorder %s28, 3
      %s500 = scalar_select %p499, %s28, 3
      %s501 = smul.addr %s500, 4
      %s502 = scalar_lea.vmem %s8, %s501
      %p503 = pneg %p264
      %p504 = pneg %p261
      %p505 = pneg %p285
      %p506 = pneg %p282
      %p507 = pneg %p306
      %p508 = pneg %p303
      %p509 = pneg %p327
      %p510 = pneg %p324
      %p511 = pneg %p353
      %p512 = pneg %p350
      %p513 = scmp.lt.s32.totalorder %s27, 1
      %s514 = scalar_select %p513, %s27, 1
      %s515 = smul.addr %s514, 2
      %s516 = smul.addr %s515, 8
      %s517 = scalar_lea.vmem %s12, %s516
      %p518 = scmp.lt.s32.totalorder %s27, 1
      %s519 = scalar_select %p518, %s27, 1
      %s520 = smul.addr %s519, 2
      %s521 = smul.addr %s520, 8
      %s522 = scalar_lea.vmem %s0, %s521
      %p523 = scmp.lt.s32.totalorder %s27, 1
      %s524 = scalar_select %p523, %s27, 1
      %s525 = scalar_lea.vmem %s1, %s524
      %p526 = scmp.lt.s32.totalorder %s28, 3
      %s527 = scalar_select %p526, %s28, 3
      %s528 = smul.addr %s527, 4
      %s529 = smul.addr %s528, 4
      %s530 = scalar_lea.vmem %s2, %s529
      %p531 = scmp.lt.s32.totalorder %s28, 3
      %s532 = scalar_select %p531, %s28, 3
      %s533 = scalar_lea.vmem %s3, %s532
      %p534 = scmp.lt.s32.totalorder %s28, 3
      %s535 = scalar_select %p534, %s28, 3
      %s536 = smul.addr %s535, 4
      %s537 = smul.addr %s536, 4
      %s538 = scalar_lea.vmem %s4, %s537
      %p539 = scmp.lt.s32.totalorder %s28, 3
      %s540 = scalar_select %p539, %s28, 3
      %s541 = scalar_lea.vmem %s5, %s540
      %p542 = scmp.lt.s32.totalorder %s28, 3
      %s543 = scalar_select %p542, %s28, 3
      %s544 = smul.addr %s543, 4
      %s545 = smul.addr %s544, 4
      %s546 = scalar_lea.vmem %s6, %s545
      %p547 = scmp.lt.s32.totalorder %s28, 3
      %s548 = scalar_select %p547, %s28, 3
      %s549 = scalar_lea.vmem %s7, %s548
      %p550 = scmp.lt.s32.totalorder %s28, 3
      %s551 = scalar_select %p550, %s28, 3
      %s552 = smul.addr %s551, 4
      %s553 = scalar_lea.vmem %s8, %s552
      %p554 = scmp.lt.s32.totalorder %s27, 1
      %s555 = scalar_select %p554, %s27, 1
      %s556 = smul.addr %s555, 2
      %s557 = smul.addr %s556, 8
      %s558 = scalar_lea.vmem %s12, %s557
      %v560 = vld [vmem:[%s522] sm:$0xff]
      %v561 = vld [vmem:[%s522 + $0x8] sm:$0xff]
      %v562 = vpack.c.bf16 %v561, %v560
      %v563 = vld [vmem:[%s530] sm:$0xf]
      %v564 = vld [vmem:[%s530 + $0x4] sm:$0xf]
      %v565 = vld [vmem:[%s530 + $0x8] sm:$0xf]
      %v566 = vld [vmem:[%s530 + $0xc] sm:$0xf]
      %v567 = vld [vmem:[%s533] sm:$0x1]
      %v569 = vlaneseq
      %v570 = vshrl.u32 %v569, 7
      %v571 = vsub.s32 0, %v570
      %v572 = vrot.slane %v567, %v571
      %v578 = vunpack.c.l.b16 %v563
      %v579 = vunpack.c.l.b16 %v564
      %v580 = vunpack.c.l.b16 %v565
      %v581 = vunpack.c.l.b16 %v566
      %v582 = vpack.c.b16 %v579, %v578
      %v583 = vpack.c.b16 %v581, %v580
      %vm586 = vcmask 261120
      %v588 = vsel %vm586, %v562, 0
      %590 = vmatprep.subr.bf16.mxu0 0
      %591 = vmatpush1.bf16.msra.mxu0 0
      %592 = vmatprep.subr.bf16.mxu0 0
      %593 = vmatpush1.bf16.msra.mxu0 0
      %594 = vmatprep.subr.bf16.mxu0 0
      %595 = vmatpush1.bf16.msra.mxu0 0
      %596 = vmatprep.subr.bf16.mxu0 0
      %597 = vmatpush1.bf16.msra.mxu0 0
      %598 = vmatprep.subr.bf16.mxu0 0
      %599 = vmatpush1.bf16.msra.mxu0 0
      %600 = vmatprep.subr.bf16.mxu0 0
      %601 = vmatpush1.bf16.msra.mxu0 0
      %602 = vmatprep.subr.bf16.mxu0 0
      %603 = vmatpush1.bf16.msra.mxu0 %v583
      %604 = vmatprep.subr.bf16.mxu0 0
      %605 = vmatpush1.bf16.msra.mxu0 %v582
      %606 = vmatprep.subr.bf16.mxu0 0
      %607 = vmatpush2.bf16.msra.mxu0 0
      %608 = vmatprep.subr.bf16.mxu0 0
      %609 = vmatpush2.bf16.msra.mxu0 0
      %610 = vmatprep.subr.bf16.mxu0 0
      %611 = vmatpush2.bf16.msra.mxu0 0
      %612 = vmatprep.subr.bf16.mxu0 0
      %613 = vmatpush2.bf16.msra.mxu0 0
      %614 = vmatprep.subr.bf16.mxu0 0
      %615 = vmatpush2.bf16.msra.mxu0 0
      %616 = vmatprep.subr.bf16.mxu0 0
      %617 = vmatpush2.bf16.msra.mxu0 0
      %618 = vmatprep.subr.bf16.mxu0 0
      %619 = vmatpush2.bf16.msra.mxu0 0
      %620 = vmatprep.subr.bf16.mxu0 0
      %621 = vmatpush2.bf16.msra.mxu0 0
      %622 = vmatprep.mubr.bf16.mxu0 0
      %623 = vmatmul.mubr.bf16.gmra.mxu0 %v588
      %v624 = vpop.f32.mrf.mxu0
      %v625 = vadd.f32 %v572, %v624
      %v626 = vpop.f32.mrf.mxu0
      %v627 = vpop.f32.mrf.mxu0
      %v628 = vadd.f32 %v572, %v627
      %v629 = vpop.f32.mrf.mxu0
      %630 = vdwg.mxu0
      %v631 = vld [vmem:[%s538] sm:$0xf]
      %v632 = vld [vmem:[%s538 + $0x4] sm:$0xf]
      %v633 = vld [vmem:[%s538 + $0x8] sm:$0xf]
      %v634 = vld [vmem:[%s538 + $0xc] sm:$0xf]
      %v635 = vld [vmem:[%s541] sm:$0x1]
      %v637 = vlaneseq
      %v638 = vshrl.u32 %v637, 7
      %v639 = vsub.s32 0, %v638
      %v640 = vrot.slane %v635, %v639
      %v646 = vunpack.c.l.b16 %v631
      %v647 = vunpack.c.l.b16 %v632
      %v648 = vunpack.c.l.b16 %v633
      %v649 = vunpack.c.l.b16 %v634
      %v650 = vpack.c.b16 %v647, %v646
      %v651 = vpack.c.b16 %v649, %v648
      %654 = vmatprep.subr.bf16.mxu0 0
      %655 = vmatpush1.bf16.msra.mxu0 0
      %656 = vmatprep.subr.bf16.mxu0 0
      %657 = vmatpush1.bf16.msra.mxu0 0
      %658 = vmatprep.subr.bf16.mxu0 0
      %659 = vmatpush1.bf16.msra.mxu0 0
      %660 = vmatprep.subr.bf16.mxu0 0
      %661 = vmatpush1.bf16.msra.mxu0 0
      %662 = vmatprep.subr.bf16.mxu0 0
      %663 = vmatpush1.bf16.msra.mxu0 0
      %664 = vmatprep.subr.bf16.mxu0 0
      %665 = vmatpush1.bf16.msra.mxu0 0
      %666 = vmatprep.subr.bf16.mxu0 0
      %667 = vmatpush1.bf16.msra.mxu0 %v651
      %668 = vmatprep.subr.bf16.mxu0 0
      %669 = vmatpush1.bf16.msra.mxu0 %v650
      %670 = vmatprep.subr.bf16.mxu0 0
      %671 = vmatpush2.bf16.msra.mxu0 0
      %672 = vmatprep.subr.bf16.mxu0 0
      %673 = vmatpush2.bf16.msra.mxu0 0
      %674 = vmatprep.subr.bf16.mxu0 0
      %675 = vmatpush2.bf16.msra.mxu0 0
      %676 = vmatprep.subr.bf16.mxu0 0
      %677 = vmatpush2.bf16.msra.mxu0 0
      %678 = vmatprep.subr.bf16.mxu0 0
      %679 = vmatpush2.bf16.msra.mxu0 0
      %680 = vmatprep.subr.bf16.mxu0 0
      %681 = vmatpush2.bf16.msra.mxu0 0
      %682 = vmatprep.subr.bf16.mxu0 0
      %683 = vmatpush2.bf16.msra.mxu0 0
      %684 = vmatprep.subr.bf16.mxu0 0
      %685 = vmatpush2.bf16.msra.mxu0 0
      %686 = vmatprep.mubr.bf16.mxu0 0
      %687 = vmatmul.mubr.bf16.gmra.mxu0 %v588
      %v688 = vpop.f32.mrf.mxu0
      %v689 = vadd.f32 %v640, %v688
      %v690 = vpop.f32.mrf.mxu0
      %v691 = vpop.f32.mrf.mxu0
      %v692 = vadd.f32 %v640, %v691
      %v693 = vpop.f32.mrf.mxu0
      %694 = vdwg.mxu0
      %v695 = vld [vmem:[%s546] sm:$0xf]
      %v696 = vld [vmem:[%s546 + $0x4] sm:$0xf]
      %v697 = vld [vmem:[%s546 + $0x8] sm:$0xf]
      %v698 = vld [vmem:[%s546 + $0xc] sm:$0xf]
      %v699 = vld [vmem:[%s549] sm:$0x1]
      %v701 = vlaneseq
      %v702 = vshrl.u32 %v701, 7
      %v703 = vsub.s32 0, %v702
      %v704 = vrot.slane %v699, %v703
      %v710 = vunpack.c.l.b16 %v695
      %v711 = vunpack.c.l.b16 %v696
      %v712 = vunpack.c.l.b16 %v697
      %v713 = vunpack.c.l.b16 %v698
      %v714 = vpack.c.b16 %v711, %v710
      %v715 = vpack.c.b16 %v713, %v712
      %718 = vmatprep.subr.bf16.mxu0 0
      %719 = vmatpush1.bf16.msra.mxu0 0
      %720 = vmatprep.subr.bf16.mxu0 0
      %721 = vmatpush1.bf16.msra.mxu0 0
      %722 = vmatprep.subr.bf16.mxu0 0
      %723 = vmatpush1.bf16.msra.mxu0 0
      %724 = vmatprep.subr.bf16.mxu0 0
      %725 = vmatpush1.bf16.msra.mxu0 0
      %726 = vmatprep.subr.bf16.mxu0 0
      %727 = vmatpush1.bf16.msra.mxu0 0
      %728 = vmatprep.subr.bf16.mxu0 0
      %729 = vmatpush1.bf16.msra.mxu0 0
      %730 = vmatprep.subr.bf16.mxu0 0
      %731 = vmatpush1.bf16.msra.mxu0 %v715
      %732 = vmatprep.subr.bf16.mxu0 0
      %733 = vmatpush1.bf16.msra.mxu0 %v714
      %734 = vmatprep.subr.bf16.mxu0 0
      %735 = vmatpush2.bf16.msra.mxu0 0
      %736 = vmatprep.subr.bf16.mxu0 0
      %737 = vmatpush2.bf16.msra.mxu0 0
      %738 = vmatprep.subr.bf16.mxu0 0
      %739 = vmatpush2.bf16.msra.mxu0 0
      %740 = vmatprep.subr.bf16.mxu0 0
      %741 = vmatpush2.bf16.msra.mxu0 0
      %742 = vmatprep.subr.bf16.mxu0 0
      %743 = vmatpush2.bf16.msra.mxu0 0
      %744 = vmatprep.subr.bf16.mxu0 0
      %745 = vmatpush2.bf16.msra.mxu0 0
      %746 = vmatprep.subr.bf16.mxu0 0
      %747 = vmatpush2.bf16.msra.mxu0 0
      %748 = vmatprep.subr.bf16.mxu0 0
      %749 = vmatpush2.bf16.msra.mxu0 0
      %750 = vmatprep.mubr.bf16.mxu0 0
      %751 = vmatmul.mubr.bf16.gmra.mxu0 %v588
      %v752 = vpop.f32.mrf.mxu0
      %v753 = vadd.f32 %v704, %v752
      %v754 = vpop.f32.mrf.mxu0
      %v755 = vpop.f32.mrf.mxu0
      %v756 = vadd.f32 %v704, %v755
      %v757 = vpop.f32.mrf.mxu0
      %758 = vdwg.mxu0
      %v759 = vmul.f32 %v625, 0.35355338
      %v760 = vmul.f32 %v628, 0.35355338
      %v761 = vpack.c.bf16 %v760, %v759
      %v762 = vpack.c.bf16 %v692, %v689
      %v763 = vld [vmem:[%s525] sm:$0x1]
      %v765 = vlaneseq
      %v766 = vshrl.u32 %v765, 7
      %v767 = vsub.s32 0, %v766
      %v768 = vrot.slane %v763, %v767
      %vm770 = vcmask 64512
      %v772 = vsel %vm770, %v761, 0
      %v775 = vsel %vm770, %v762, 0
      %777 = vmatprep.subr.bf16.mxu0 0
      %778 = vmatpush1.bf16.xpose.msra.mxu0 0
      %779 = vmatprep.subr.bf16.mxu0 0
      %780 = vmatpush1.bf16.xpose.msra.mxu0 0
      %781 = vmatprep.subr.bf16.mxu0 0
      %782 = vmatpush1.bf16.xpose.msra.mxu0 0
      %783 = vmatprep.subr.bf16.mxu0 0
      %784 = vmatpush1.bf16.xpose.msra.mxu0 0
      %785 = vmatprep.subr.bf16.mxu0 0
      %786 = vmatpush1.bf16.xpose.msra.mxu0 0
      %787 = vmatprep.subr.bf16.mxu0 0
      %788 = vmatpush1.bf16.xpose.msra.mxu0 0
      %789 = vmatprep.subr.bf16.mxu0 0
      %790 = vmatpush1.bf16.xpose.msra.mxu0 0
      %791 = vmatprep.subr.bf16.mxu0 0
      %792 = vmatpush1.bf16.xpose.msra.mxu0 %v775
      %793 = vmatprep.subr.bf16.mxu0 0
      %794 = vmatpush2.bf16.xpose.msra.mxu0 0
      %795 = vmatprep.subr.bf16.mxu0 0
      %796 = vmatpush2.bf16.xpose.msra.mxu0 0
      %797 = vmatprep.subr.bf16.mxu0 0
      %798 = vmatpush2.bf16.xpose.msra.mxu0 0
      %799 = vmatprep.subr.bf16.mxu0 0
      %800 = vmatpush2.bf16.xpose.msra.mxu0 0
      %801 = vmatprep.subr.bf16.mxu0 0
      %802 = vmatpush2.bf16.xpose.msra.mxu0 0
      %803 = vmatprep.subr.bf16.mxu0 0
      %804 = vmatpush2.bf16.xpose.msra.mxu0 0
      %805 = vmatprep.subr.bf16.mxu0 0
      %806 = vmatpush2.bf16.xpose.msra.mxu0 0
      %807 = vmatprep.subr.bf16.mxu0 0
      %808 = vmatpush2.bf16.xpose.msra.mxu0 0
      %809 = vmatprep.mubr.bf16.mxu0 0
      %810 = vmatmul.mubr.bf16.gmra.mxu0 %v772
      %v811 = vpop.f32.mrf.mxu0
      %v812 = vadd.f32 %v768, %v811
      %v813 = vpop.f32.mrf.mxu0
      %v814 = vpop.f32.mrf.mxu0
      %v815 = vadd.f32 %v768, %v814
      %v816 = vpop.f32.mrf.mxu0
      %817 = vdwg.mxu0
      %vm818 = vcmask 130048
      %v819 = vsel %vm818, %v812, -inf
      %820 = vmax.xlane.f32.xlu0 %v819
      %v821 = vpop.xlane.xlu0 %820
      %v822 = vsel %vm818, %v815, -inf
      %823 = vmax.xlane.f32.xlu0 %v822
      %v824 = vpop.xlane.xlu0 %823
      %v825 = vsub.f32 %v812, %v821
      %v826 = vsub.f32 %v815, %v824
      %v827 = vmul.f32 %v825, 1.442695
      %v828 = vpow.pop %v827
      %v829 = vmul.f32 %v826, 1.442695
      %v830 = vpow.pop %v829
      %v831 = vsel %vm818, %v828, 0.0
      %832 = vadd.xlane.f32.xlu0 %v831
      %v833 = vpop.xlane.xlu0 %832
      %v834 = vsel %vm818, %v830, 0.0
      %835 = vadd.xlane.f32.xlu0 %v834
      %v836 = vpop.xlane.xlu0 %835
      %v837 = vrcp.pop %v833
      %v838 = vrcp.pop %v836
      %v839 = vmul.f32 %v828, %v837
      %v840 = vmul.f32 %v830, %v838
      %v841 = vpack.c.bf16 %v840, %v839
      %v842 = vpack.c.bf16 %v756, %v753
      %v844 = vsel %vm818, %v841, 0
      %846 = vmatprep.subr.bf16.mxu0 0
      %847 = vmatpush1.bf16.msra.mxu0 0
      %848 = vmatprep.subr.bf16.mxu0 0
      %849 = vmatpush1.bf16.msra.mxu0 0
      %850 = vmatprep.subr.bf16.mxu0 0
      %851 = vmatpush1.bf16.msra.mxu0 0
      %852 = vmatprep.subr.bf16.mxu0 0
      %853 = vmatpush1.bf16.msra.mxu0 0
      %854 = vmatprep.subr.bf16.mxu0 0
      %855 = vmatpush1.bf16.msra.mxu0 0
      %856 = vmatprep.subr.bf16.mxu0 0
      %857 = vmatpush1.bf16.msra.mxu0 0
      %858 = vmatprep.subr.bf16.mxu0 0
      %859 = vmatpush1.bf16.msra.mxu0 0
      %860 = vmatprep.subr.bf16.mxu0 0
      %861 = vmatpush1.bf16.msra.mxu0 %v842
      %862 = vmatprep.subr.bf16.mxu0 0
      %863 = vmatpush2.bf16.msra.mxu0 0
      %864 = vmatprep.subr.bf16.mxu0 0
      %865 = vmatpush2.bf16.msra.mxu0 0
      %866 = vmatprep.subr.bf16.mxu0 0
      %867 = vmatpush2.bf16.msra.mxu0 0
      %868 = vmatprep.subr.bf16.mxu0 0
      %869 = vmatpush2.bf16.msra.mxu0 0
      %870 = vmatprep.subr.bf16.mxu0 0
      %871 = vmatpush2.bf16.msra.mxu0 0
      %872 = vmatprep.subr.bf16.mxu0 0
      %873 = vmatpush2.bf16.msra.mxu0 0
      %874 = vmatprep.subr.bf16.mxu0 0
      %875 = vmatpush2.bf16.msra.mxu0 0
      %876 = vmatprep.subr.bf16.mxu0 0
      %877 = vmatpush2.bf16.msra.mxu0 0
      %878 = vmatprep.mubr.bf16.mxu0 0
      %879 = vmatmul.mubr.bf16.gmra.mxu0 %v844
      %v880 = vpop.f32.mrf.mxu0
      %v881 = vadd.f32 0.0, %v880
      %v882 = vpop.f32.mrf.mxu0
      %v883 = vpop.f32.mrf.mxu0
      %v884 = vadd.f32 0.0, %v883
      %v885 = vpop.f32.mrf.mxu0
      %886 = vdwg.mxu0
      %v887 = vpack.c.bf16 %v884, %v881
      %v888 = vld [vmem:[%s553] sm:$0xf]
      %v890 = vsel %vm770, %v887, 0
      %vm892 = vcmask 1043456
      %v894 = vsel %vm892, %v888, 0
      %896 = vmatprep.subr.bf16.mxu0 0
      %897 = vmatpush1.bf16.msra.mxu0 0
      %898 = vmatprep.subr.bf16.mxu0 0
      %899 = vmatpush1.bf16.msra.mxu0 0
      %900 = vmatprep.subr.bf16.mxu0 0
      %901 = vmatpush1.bf16.msra.mxu0 0
      %902 = vmatprep.subr.bf16.mxu0 0
      %903 = vmatpush1.bf16.msra.mxu0 0
      %904 = vmatprep.subr.bf16.mxu0 0
      %905 = vmatpush1.bf16.msra.mxu0 0
      %906 = vmatprep.subr.bf16.mxu0 0
      %907 = vmatpush1.bf16.msra.mxu0 0
      %908 = vmatprep.subr.bf16.mxu0 0
      %909 = vmatpush1.bf16.msra.mxu0 0
      %910 = vmatprep.subr.bf16.mxu0 0
      %911 = vmatpush1.bf16.msra.mxu0 %v894
      %912 = vmatprep.subr.bf16.mxu0 0
      %913 = vmatpush2.bf16.msra.mxu0 0
      %914 = vmatprep.subr.bf16.mxu0 0
      %915 = vmatpush2.bf16.msra.mxu0 0
      %916 = vmatprep.subr.bf16.mxu0 0
      %917 = vmatpush2.bf16.msra.mxu0 0
      %918 = vmatprep.subr.bf16.mxu0 0
      %919 = vmatpush2.bf16.msra.mxu0 0
      %920 = vmatprep.subr.bf16.mxu0 0
      %921 = vmatpush2.bf16.msra.mxu0 0
      %922 = vmatprep.subr.bf16.mxu0 0
      %923 = vmatpush2.bf16.msra.mxu0 0
      %924 = vmatprep.subr.bf16.mxu0 0
      %925 = vmatpush2.bf16.msra.mxu0 0
      %926 = vmatprep.subr.bf16.mxu0 0
      %927 = vmatpush2.bf16.msra.mxu0 0
      %928 = vmatprep.mubr.bf16.mxu0 0
      %929 = vmatmul.mubr.bf16.gmra.mxu0 %v890
      %v930 = vpop.f32.mrf.mxu0
      %v931 = vadd.f32 0.0, %v930
      %v932 = vpop.f32.mrf.mxu0
      %v933 = vpop.f32.mrf.mxu0
      %v934 = vadd.f32 0.0, %v933
      %v935 = vpop.f32.mrf.mxu0
      %936 = vdwg.mxu0
      %p937 = scmp.eq.s32.totalorder %s28, 0
      // Predicated region
      $region69: #{transformer_forward.13} parent=67 // pred_check
        %p938 = pneg %p937
      $region70: #{transformer_forward.13} parent=67 // pred_check_branch
        %940 = sbr.rel (%p938) target = $region72
      $region71: #{transformer_forward.13} parent=67 // pred_region
        %941 = vst.msk [vmem:[%s558] sm:$0xff] %vm586, %v931
        %942 = vst.msk [vmem:[%s558 + $0x8] sm:$0xff] %vm586, %v934
      $region72: #{transformer_forward.13} parent=67 // pred_fallthru
        _
      %p943 = scmp.gt.s32.totalorder %s28, 0
      // Predicated region
      $region73: #{transformer_forward.13} parent=67 // pred_check
        %p944 = pneg %p943
      $region74: #{transformer_forward.13} parent=67 // pred_check_branch
        %946 = sbr.rel (%p944) target = $region76
      $region75: #{transformer_forward.13} parent=67 // pred_region
        %v947 = vld [vmem:[%s558] sm:$0xff]
        %v948 = vld [vmem:[%s558 + $0x8] sm:$0xff]
        %v949 = vadd.f32 %v947, %v931
        %v950 = vadd.f32 %v948, %v934
        %951 = vst.msk [vmem:[%s558] sm:$0xff] %vm586, %v949
        %952 = vst.msk [vmem:[%s558 + $0x8] sm:$0xff] %vm586, %v950
      $region76: #{transformer_forward.13} parent=67 // pred_fallthru
        _
      %p953 = scmp.eq.s32.totalorder %s28, 3
      // Predicated region
      $region77: #{transformer_forward.13} parent=67 // pred_check
        %p954 = pneg %p953
      $region78: #{transformer_forward.13} parent=67 // pred_check_branch
        %956 = sbr.rel (%p954) target = $region80
      $region79: #{transformer_forward.13} parent=67 // pred_region
        %v957 = vld [vmem:[%s558] sm:$0xff]
        %v958 = vld [vmem:[%s558 + $0x8] sm:$0xff]
        %v959 = vld [vmem:[%s9] sm:$0x1]
        %v961 = vlaneseq
        %v962 = vshrl.u32 %v961, 7
        %v963 = vsub.s32 0, %v962
        %v964 = vrot.slane %v959, %v963
        %v966 = vadd.f32 %v957, %v964
        %v967 = vadd.f32 %v958, %v964
        %v968 = vadd.f32 %v966, %v560
        %v969 = vadd.f32 %v967, %v561
        %v970 = vsel %vm586, %v968, 0.0
        %971 = vadd.xlane.f32.xlu0 %v970
        %v972 = vpop.xlane.xlu0 %971
        %v973 = vsel %vm586, %v969, 0.0
        %974 = vadd.xlane.f32.xlu0 %v973
        %v975 = vpop.xlane.xlu0 %974
        %v976 = vrcp.pop 32.0
        %v977 = vmul.f32 %v972, %v976
        %v978 = vmul.f32 %v975, %v976
        %v979 = vsub.f32 %v968, %v977
        %v980 = vsub.f32 %v969, %v978
        %v981 = vmul.f32 %v979, %v979
        %v982 = vmul.f32 %v980, %v980
        %v983 = vsel %vm586, %v981, 0.0
        %984 = vadd.xlane.f32.xlu0 %v983
        %v985 = vpop.xlane.xlu0 %984
        %v986 = vsel %vm586, %v982, 0.0
        %987 = vadd.xlane.f32.xlu0 %v986
        %v988 = vpop.xlane.xlu0 %987
        %v989 = vmul.f32 %v985, %v976
        %v990 = vmul.f32 %v988, %v976
        %v991 = vadd.f32 %v989, 1e-05
        %v992 = vadd.f32 %v990, 1e-05
        %v993 = vrsqrt.pop %v991
        %v994 = vrsqrt.pop %v992
        %v995 = vmul.f32 %v979, %v993
        %v996 = vmul.f32 %v980, %v994
        %v997 = vld [vmem:[%s10] sm:$0x1]
        %v999 = vlaneseq
        %v1000 = vshrl.u32 %v999, 7
        %v1001 = vsub.s32 0, %v1000
        %v1002 = vrot.slane %v997, %v1001
        %v1004 = vmul.f32 %v995, %v1002
        %v1005 = vmul.f32 %v996, %v1002
        %v1006 = vld [vmem:[%s11] sm:$0x1]
        %v1008 = vlaneseq
        %v1009 = vshrl.u32 %v1008, 7
        %v1010 = vsub.s32 0, %v1009
        %v1011 = vrot.slane %v1006, %v1010
        %v1013 = vadd.f32 %v1004, %v1011
        %v1014 = vadd.f32 %v1005, %v1011
        %1015 = vst.msk [vmem:[%s558] sm:$0xff] %vm586, %v1013
        %1016 = vst.msk [vmem:[%s558 + $0x8] sm:$0xff] %vm586, %v1014
      $region80: #{transformer_forward.13} parent=67 // pred_fallthru
        _
      %p1017 = scmp.lt.s32.totalorder %s27, 1
      %s1018 = scalar_select %p1017, %s27, 1
      %s1019 = smul.addr %s1018, 2
      %s1020 = smul.addr %s1019, 8
      %s1021 = scalar_lea.vmem %s12, %s1020
      // Predicated region
      $region81: #{transformer_forward.13} parent=67 // pred_check
        %p1022 = pneg %p350
      $region82: #{transformer_forward.13} parent=67 // pred_check_branch
        %1024 = sbr.rel (%p1022) target = $region84
      $region83: #{transformer_forward.13} parent=67 // pred_region
        _
      $region84: #{transformer_forward.13} parent=67 // pred_fallthru
        _
    $region68: #{transformer_forward.13} parent=5 // pred_fallthru
      _
    %p1025 = scmp.le.s32.totalorder 2, %s18
    // Predicated region
    $region85: #{transformer_forward.13} parent=5 // pred_check
      %p1026 = pneg %p1025
    $region86: #{transformer_forward.13} parent=5 // pred_check_branch
      %1028 = sbr.rel (%p1026) target = $region88
    $region87: #{transformer_forward.13} parent=5 // pred_region
      %s1029 = ssub.s32 %s18, 2
      // Predicated region
      $region89: #{transformer_forward.13} parent=87 // pred_check
        %p1030 = pneg %p356
      $region90: #{transformer_forward.13} parent=87 // pred_check_branch
        %1032 = sbr.rel (%p1030) target = $region92
      $region91: #{transformer_forward.13} parent=87 // pred_region
        %p1033 = scmp.lt.s32.totalorder %s29, 1
        %s1034 = scalar_select %p1033, %s29, 1
        %s1035 = smul.addr %s1034, 2
        %s1036 = smul.addr %s1035, 8
        %s1037 = scalar_lea.vmem %s12, %s1036
      $region92: #{transformer_forward.13} parent=87 // pred_fallthru
        _
    $region88: #{transformer_forward.13} parent=5 // pred_fallthru
      _
  $region6: #{transformer_forward.13} parent=0 // loop_footer
    %s22 = sadd.s32 1, %s18
  $region7: #{transformer_forward.13} parent=0 // loop_footer_branch
    %17 = sbr.rel target = $region3
  $region8: #{transformer_forward.13} parent=0 // loop_exit
    _

// kernel: transformer_forward.11
$region0: #{transformer_forward.11}
  #allocation0 [shape = 'u32[]', space=smem, size = 0x4, offset = 0x4, fixed_abs, tag = 'smem constant byte address 0x4 - core index']
  #allocation1 [shape = 'u32[144,128]{1,0:T(1,128)}', space=vmem, size = 0x12000, scoped, tag = 'internal scratch']
  %s0 = inlined_call_operand.vmem [shape: f32[2,16,32], index: 0, kind: input, shape index: {}]
  %s1 = inlined_call_operand.vmem [shape: f32[2,16,32], index: 1, kind: input, shape index: {}]
  %s2 = inlined_call_operand.vmem [shape: f32[2,1,16], index: 2, kind: input, shape index: {}]
  %s3 = inlined_call_operand.vmem [shape: bf16[4,32,8], index: 3, kind: input, shape index: {}]
  %s4 = inlined_call_operand.vmem [shape: f32[4,1,8], index: 4, kind: input, shape index: {}]
  %s5 = inlined_call_operand.vmem [shape: bf16[4,32,8], index: 5, kind: input, shape index: {}]
  %s6 = inlined_call_operand.vmem [shape: f32[4,1,8], index: 6, kind: input, shape index: {}]
  %s7 = inlined_call_operand.vmem [shape: bf16[4,32,8], index: 7, kind: input, shape index: {}]
  %s8 = inlined_call_operand.vmem [shape: f32[4,1,8], index: 8, kind: input, shape index: {}]
  %s9 = inlined_call_operand.vmem [shape: bf16[4,8,32], index: 9, kind: input, shape index: {}]
  %s10 = inlined_call_operand.vmem [shape: f32[1,32], index: 10, kind: input, shape index: {}]
  %s11 = inlined_call_operand.vmem [shape: f32[1,32], index: 11, kind: input, shape index: {}]
  %s12 = inlined_call_operand.vmem [shape: f32[1,32], index: 12, kind: input, shape index: {}]
  %s13 = inlined_call_operand.vmem [shape: f32[2,16,32], index: 13, kind: output, shape index: {}]
  %s14 = sld [smem:[#allocation0]]
  $region97: #{transformer_forward.11} parent=0
    _
  %s16 = ssub.s32 1, %s14
  %s17 = scalar_select 0, %s16, %s14
  loop: start=0, step=1, limit=10
  $region2: #{transformer_forward.11} parent=0 // loop_pre_header
    _
  $region3: #{transformer_forward.11} parent=0 // loop_header
    %s19 = sphi 0, %s23
    %p20 = scmp.ge.s32.totalorder %s19, 10
    %s26 = sphi 0, %s38
    %s27 = sphi 0, %s34
    %s28 = sphi 0, %s26
    %s29 = sphi 0, %s27
    %s30 = sphi 0, %s28
    %s31 = sphi 0, %s29
    %s41 = sphi 0, %s43
    %s44 = sphi 0, %s41
    %s45 = sphi 0, %s44
    %s61 = sphi 0, %s45
    %s67 = sphi 0, %s69
    %s70 = sphi 0, %s67
    %s71 = sphi 0, %s70
    %s87 = sphi 0, %s71
    %s93 = sphi 0, %s95
    %s96 = sphi 0, %s93
    %s97 = sphi 0, %s96
    %s113 = sphi 0, %s97
    %s119 = sphi 0, %s121
    %s122 = sphi 0, %s119
    %s123 = sphi 0, %s122
    %s139 = sphi 0, %s123
    %s145 = sphi 0, %s147
    %s148 = sphi 0, %s145
    %s149 = sphi 0, %s148
    %s165 = sphi 0, %s149
    %s171 = sphi 0, %s173
    %s174 = sphi 0, %s171
    %s175 = sphi 0, %s174
    %s191 = sphi 0, %s175
    %s197 = sphi 0, %s199
    %s200 = sphi 0, %s197
    %s201 = sphi 0, %s200
    %s217 = sphi 0, %s201
    %s223 = sphi 0, %s225
    %s226 = sphi 0, %s223
    %s227 = sphi 0, %s226
    %s243 = sphi 0, %s227
    %s249 = sphi 0, %s251
    %s252 = sphi 0, %s249
    %s253 = sphi 0, %s252
    %s269 = sphi 0, %s253
    %s275 = sphi 0, %s277
    %s278 = sphi 0, %s275
    %s279 = sphi 0, %s278
    %s295 = sphi 0, %s279
    %s299 = sphi 0, %s299
    %s301 = sphi 0, %s299
    %s302 = sphi 0, %s301
    %s316 = sphi 0, %s302
    %s320 = sphi 0, %s320
    %s322 = sphi 0, %s320
    %s323 = sphi 0, %s322
    %s337 = sphi 0, %s323
    %s341 = sphi 0, %s341
    %s343 = sphi 0, %s341
    %s344 = sphi 0, %s343
    %s358 = sphi 0, %s344
    %s364 = sphi 0, %s366
    %s367 = sphi 0, %s364
    %s368 = sphi 0, %s367
    %s384 = sphi 0, %s368
  $region4: #{transformer_forward.11} parent=0 // loop_header_branch
    %22 = sbr.rel (%p20) target = $region8
  $region5: #{transformer_forward.11} parent=0 // loop_body
    %s24 = ssub.s32 %s19, 1
    %s25 = ssub.s32 %s19, 2
    %s32 = sadd.s32 1, %s27
    %p33 = scmp.ge.s32.totalorder %s32, 4
    %s34 = scalar_select %p33, 0, %s32
    %s35 = sadd.s32 1, %s26
    %s36 = scalar_select %p33, %s35, %s26
    %p37 = scmp.ge.s32.totalorder %s36, 2
    %s38 = scalar_select %p37, 0, %s36
    %s39 = ssub.s32 %s26, %s38
    %p40 = scmp.eq.s32.totalorder %s39, 0
    %s42 = sadd.s32 %s41, 1
    %s43 = scalar_select %p40, %s41, %s42
    %p46 = pneg %p40
    %p47 = scmp.eq.s32.totalorder %s19, 7
    %p48 = por %p46, %p47
    %p49 = scmp.ne.s32.totalorder %s41, %s44
    %p50 = scmp.eq.s32.totalorder %s19, 0
    %p51 = por %p49, %p50
    %p52 = scmp.ne.s32.totalorder %s41, %s44
    %p53 = scmp.eq.s32.totalorder %s24, 7
    %p54 = por %p52, %p53
    %p55 = scmp.ne.s32.totalorder %s44, %s45
    %p56 = scmp.eq.s32.totalorder %s24, 0
    %p57 = por %p55, %p56
    %p58 = scmp.ne.s32.totalorder %s44, %s45
    %p59 = scmp.eq.s32.totalorder %s25, 7
    %p60 = por %p58, %p59
    %p62 = scmp.ne.s32.totalorder %s45, %s61
    %p63 = scmp.eq.s32.totalorder %s25, 0
    %p64 = por %p62, %p63
    %s65 = ssub.s32 %s26, %s38
    %p66 = scmp.eq.s32.totalorder %s65, 0
    %s68 = sadd.s32 %s67, 1
    %s69 = scalar_select %p66, %s67, %s68
    %p72 = pneg %p66
    %p73 = scmp.eq.s32.totalorder %s19, 7
    %p74 = por %p72, %p73
    %p75 = scmp.ne.s32.totalorder %s67, %s70
    %p76 = scmp.eq.s32.totalorder %s19, 0
    %p77 = por %p75, %p76
    %p78 = scmp.ne.s32.totalorder %s67, %s70
    %p79 = scmp.eq.s32.totalorder %s24, 7
    %p80 = por %p78, %p79
    %p81 = scmp.ne.s32.totalorder %s70, %s71
    %p82 = scmp.eq.s32.totalorder %s24, 0
    %p83 = por %p81, %p82
    %p84 = scmp.ne.s32.totalorder %s70, %s71
    %p85 = scmp.eq.s32.totalorder %s25, 7
    %p86 = por %p84, %p85
    %p88 = scmp.ne.s32.totalorder %s71, %s87
    %p89 = scmp.eq.s32.totalorder %s25, 0
    %p90 = por %p88, %p89
    %s91 = ssub.s32 %s26, %s38
    %p92 = scmp.eq.s32.totalorder %s91, 0
    %s94 = sadd.s32 %s93, 1
    %s95 = scalar_select %p92, %s93, %s94
    %p98 = pneg %p92
    %p99 = scmp.eq.s32.totalorder %s19, 7
    %p100 = por %p98, %p99
    %p101 = scmp.ne.s32.totalorder %s93, %s96
    %p102 = scmp.eq.s32.totalorder %s19, 0
    %p103 = por %p101, %p102
    %p104 = scmp.ne.s32.totalorder %s93, %s96
    %p105 = scmp.eq.s32.totalorder %s24, 7
    %p106 = por %p104, %p105
    %p107 = scmp.ne.s32.totalorder %s96, %s97
    %p108 = scmp.eq.s32.totalorder %s24, 0
    %p109 = por %p107, %p108
    %p110 = scmp.ne.s32.totalorder %s96, %s97
    %p111 = scmp.eq.s32.totalorder %s25, 7
    %p112 = por %p110, %p111
    %p114 = scmp.ne.s32.totalorder %s97, %s113
    %p115 = scmp.eq.s32.totalorder %s25, 0
    %p116 = por %p114, %p115
    %s117 = ssub.s32 %s27, %s34
    %p118 = scmp.eq.s32.totalorder %s117, 0
    %s120 = sadd.s32 %s119, 1
    %s121 = scalar_select %p118, %s119, %s120
    %p124 = pneg %p118
    %p125 = scmp.eq.s32.totalorder %s19, 7
    %p126 = por %p124, %p125
    %p127 = scmp.ne.s32.totalorder %s119, %s122
    %p128 = scmp.eq.s32.totalorder %s19, 0
    %p129 = por %p127, %p128
    %p130 = scmp.ne.s32.totalorder %s119, %s122
    %p131 = scmp.eq.s32.totalorder %s24, 7
    %p132 = por %p130, %p131
    %p133 = scmp.ne.s32.totalorder %s122, %s123
    %p134 = scmp.eq.s32.totalorder %s24, 0
    %p135 = por %p133, %p134
    %p136 = scmp.ne.s32.totalorder %s122, %s123
    %p137 = scmp.eq.s32.totalorder %s25, 7
    %p138 = por %p136, %p137
    %p140 = scmp.ne.s32.totalorder %s123, %s139
    %p141 = scmp.eq.s32.totalorder %s25, 0
    %p142 = por %p140, %p141
    %s143 = ssub.s32 %s27, %s34
    %p144 = scmp.eq.s32.totalorder %s143, 0
    %s146 = sadd.s32 %s145, 1
    %s147 = scalar_select %p144, %s145, %s146
    %p150 = pneg %p144
    %p151 = scmp.eq.s32.totalorder %s19, 7
    %p152 = por %p150, %p151
    %p153 = scmp.ne.s32.totalorder %s145, %s148
    %p154 = scmp.eq.s32.totalorder %s19, 0
    %p155 = por %p153, %p154
    %p156 = scmp.ne.s32.totalorder %s145, %s148
    %p157 = scmp.eq.s32.totalorder %s24, 7
    %p158 = por %p156, %p157
    %p159 = scmp.ne.s32.totalorder %s148, %s149
    %p160 = scmp.eq.s32.totalorder %s24, 0
    %p161 = por %p159, %p160
    %p162 = scmp.ne.s32.totalorder %s148, %s149
    %p163 = scmp.eq.s32.totalorder %s25, 7
    %p164 = por %p162, %p163
    %p166 = scmp.ne.s32.totalorder %s149, %s165
    %p167 = scmp.eq.s32.totalorder %s25, 0
    %p168 = por %p166, %p167
    %s169 = ssub.s32 %s27, %s34
    %p170 = scmp.eq.s32.totalorder %s169, 0
    %s172 = sadd.s32 %s171, 1
    %s173 = scalar_select %p170, %s171, %s172
    %p176 = pneg %p170
    %p177 = scmp.eq.s32.totalorder %s19, 7
    %p178 = por %p176, %p177
    %p179 = scmp.ne.s32.totalorder %s171, %s174
    %p180 = scmp.eq.s32.totalorder %s19, 0
    %p181 = por %p179, %p180
    %p182 = scmp.ne.s32.totalorder %s171, %s174
    %p183 = scmp.eq.s32.totalorder %s24, 7
    %p184 = por %p182, %p183
    %p185 = scmp.ne.s32.totalorder %s174, %s175
    %p186 = scmp.eq.s32.totalorder %s24, 0
    %p187 = por %p185, %p186
    %p188 = scmp.ne.s32.totalorder %s174, %s175
    %p189 = scmp.eq.s32.totalorder %s25, 7
    %p190 = por %p188, %p189
    %p192 = scmp.ne.s32.totalorder %s175, %s191
    %p193 = scmp.eq.s32.totalorder %s25, 0
    %p194 = por %p192, %p193
    %s195 = ssub.s32 %s27, %s34
    %p196 = scmp.eq.s32.totalorder %s195, 0
    %s198 = sadd.s32 %s197, 1
    %s199 = scalar_select %p196, %s197, %s198
    %p202 = pneg %p196
    %p203 = scmp.eq.s32.totalorder %s19, 7
    %p204 = por %p202, %p203
    %p205 = scmp.ne.s32.totalorder %s197, %s200
    %p206 = scmp.eq.s32.totalorder %s19, 0
    %p207 = por %p205, %p206
    %p208 = scmp.ne.s32.totalorder %s197, %s200
    %p209 = scmp.eq.s32.totalorder %s24, 7
    %p210 = por %p208, %p209
    %p211 = scmp.ne.s32.totalorder %s200, %s201
    %p212 = scmp.eq.s32.totalorder %s24, 0
    %p213 = por %p211, %p212
    %p214 = scmp.ne.s32.totalorder %s200, %s201
    %p215 = scmp.eq.s32.totalorder %s25, 7
    %p216 = por %p214, %p215
    %p218 = scmp.ne.s32.totalorder %s201, %s217
    %p219 = scmp.eq.s32.totalorder %s25, 0
    %p220 = por %p218, %p219
    %s221 = ssub.s32 %s27, %s34
    %p222 = scmp.eq.s32.totalorder %s221, 0
    %s224 = sadd.s32 %s223, 1
    %s225 = scalar_select %p222, %s223, %s224
    %p228 = pneg %p222
    %p229 = scmp.eq.s32.totalorder %s19, 7
    %p230 = por %p228, %p229
    %p231 = scmp.ne.s32.totalorder %s223, %s226
    %p232 = scmp.eq.s32.totalorder %s19, 0
    %p233 = por %p231, %p232
    %p234 = scmp.ne.s32.totalorder %s223, %s226
    %p235 = scmp.eq.s32.totalorder %s24, 7
    %p236 = por %p234, %p235
    %p237 = scmp.ne.s32.totalorder %s226, %s227
    %p238 = scmp.eq.s32.totalorder %s24, 0
    %p239 = por %p237, %p238
    %p240 = scmp.ne.s32.totalorder %s226, %s227
    %p241 = scmp.eq.s32.totalorder %s25, 7
    %p242 = por %p240, %p241
    %p244 = scmp.ne.s32.totalorder %s227, %s243
    %p245 = scmp.eq.s32.totalorder %s25, 0
    %p246 = por %p244, %p245
    %s247 = ssub.s32 %s27, %s34
    %p248 = scmp.eq.s32.totalorder %s247, 0
    %s250 = sadd.s32 %s249, 1
    %s251 = scalar_select %p248, %s249, %s250
    %p254 = pneg %p248
    %p255 = scmp.eq.s32.totalorder %s19, 7
    %p256 = por %p254, %p255
    %p257 = scmp.ne.s32.totalorder %s249, %s252
    %p258 = scmp.eq.s32.totalorder %s19, 0
    %p259 = por %p257, %p258
    %p260 = scmp.ne.s32.totalorder %s249, %s252
    %p261 = scmp.eq.s32.totalorder %s24, 7
    %p262 = por %p260, %p261
    %p263 = scmp.ne.s32.totalorder %s252, %s253
    %p264 = scmp.eq.s32.totalorder %s24, 0
    %p265 = por %p263, %p264
    %p266 = scmp.ne.s32.totalorder %s252, %s253
    %p267 = scmp.eq.s32.totalorder %s25, 7
    %p268 = por %p266, %p267
    %p270 = scmp.ne.s32.totalorder %s253, %s269
    %p271 = scmp.eq.s32.totalorder %s25, 0
    %p272 = por %p270, %p271
    %s273 = ssub.s32 %s27, %s34
    %p274 = scmp.eq.s32.totalorder %s273, 0
    %s276 = sadd.s32 %s275, 1
    %s277 = scalar_select %p274, %s275, %s276
    %p280 = pneg %p274
    %p281 = scmp.eq.s32.totalorder %s19, 7
    %p282 = por %p280, %p281
    %p283 = scmp.ne.s32.totalorder %s275, %s278
    %p284 = scmp.eq.s32.totalorder %s19, 0
    %p285 = por %p283, %p284
    %p286 = scmp.ne.s32.totalorder %s275, %s278
    %p287 = scmp.eq.s32.totalorder %s24, 7
    %p288 = por %p286, %p287
    %p289 = scmp.ne.s32.totalorder %s278, %s279
    %p290 = scmp.eq.s32.totalorder %s24, 0
    %p291 = por %p289, %p290
    %p292 = scmp.ne.s32.totalorder %s278, %s279
    %p293 = scmp.eq.s32.totalorder %s25, 7
    %p294 = por %p292, %p293
    %p296 = scmp.ne.s32.totalorder %s279, %s295
    %p297 = scmp.eq.s32.totalorder %s25, 0
    %p298 = por %p296, %p297
    %s300 = sadd.s32 %s299, 1
    %p303 = scmp.eq.s32.totalorder %s19, 7
    %p304 = scmp.ne.s32.totalorder %s299, %s301
    %p305 = scmp.eq.s32.totalorder %s19, 0
    %p306 = por %p304, %p305
    %p307 = scmp.ne.s32.totalorder %s299, %s301
    %p308 = scmp.eq.s32.totalorder %s24, 7
    %p309 = por %p307, %p308
    %p310 = scmp.ne.s32.totalorder %s301, %s302
    %p311 = scmp.eq.s32.totalorder %s24, 0
    %p312 = por %p310, %p311
    %p313 = scmp.ne.s32.totalorder %s301, %s302
    %p314 = scmp.eq.s32.totalorder %s25, 7
    %p315 = por %p313, %p314
    %p317 = scmp.ne.s32.totalorder %s302, %s316
    %p318 = scmp.eq.s32.totalorder %s25, 0
    %p319 = por %p317, %p318
    %s321 = sadd.s32 %s320, 1
    %p324 = scmp.eq.s32.totalorder %s19, 7
    %p325 = scmp.ne.s32.totalorder %s320, %s322
    %p326 = scmp.eq.s32.totalorder %s19, 0
    %p327 = por %p325, %p326
    %p328 = scmp.ne.s32.totalorder %s320, %s322
    %p329 = scmp.eq.s32.totalorder %s24, 7
    %p330 = por %p328, %p329
    %p331 = scmp.ne.s32.totalorder %s322, %s323
    %p332 = scmp.eq.s32.totalorder %s24, 0
    %p333 = por %p331, %p332
    %p334 = scmp.ne.s32.totalorder %s322, %s323
    %p335 = scmp.eq.s32.totalorder %s25, 7
    %p336 = por %p334, %p335
    %p338 = scmp.ne.s32.totalorder %s323, %s337
    %p339 = scmp.eq.s32.totalorder %s25, 0
    %p340 = por %p338, %p339
    %s342 = sadd.s32 %s341, 1
    %p345 = scmp.eq.s32.totalorder %s19, 7
    %p346 = scmp.ne.s32.totalorder %s341, %s343
    %p347 = scmp.eq.s32.totalorder %s19, 0
    %p348 = por %p346, %p347
    %p349 = scmp.ne.s32.totalorder %s341, %s343
    %p350 = scmp.eq.s32.totalorder %s24, 7
    %p351 = por %p349, %p350
    %p352 = scmp.ne.s32.totalorder %s343, %s344
    %p353 = scmp.eq.s32.totalorder %s24, 0
    %p354 = por %p352, %p353
    %p355 = scmp.ne.s32.totalorder %s343, %s344
    %p356 = scmp.eq.s32.totalorder %s25, 7
    %p357 = por %p355, %p356
    %p359 = scmp.ne.s32.totalorder %s344, %s358
    %p360 = scmp.eq.s32.totalorder %s25, 0
    %p361 = por %p359, %p360
    %s362 = ssub.s32 %s26, %s38
    %p363 = scmp.eq.s32.totalorder %s362, 0
    %s365 = sadd.s32 %s364, 1
    %s366 = scalar_select %p363, %s364, %s365
    %p369 = pneg %p363
    %p370 = scmp.eq.s32.totalorder %s19, 7
    %p371 = por %p369, %p370
    %p372 = scmp.ne.s32.totalorder %s364, %s367
    %p373 = scmp.eq.s32.totalorder %s19, 0
    %p374 = por %p372, %p373
    %p375 = scmp.ne.s32.totalorder %s364, %s367
    %p376 = scmp.eq.s32.totalorder %s24, 7
    %p377 = por %p375, %p376
    %p378 = scmp.ne.s32.totalorder %s367, %s368
    %p379 = scmp.eq.s32.totalorder %s24, 0
    %p380 = por %p378, %p379
    %p381 = scmp.ne.s32.totalorder %s367, %s368
    %p382 = scmp.eq.s32.totalorder %s25, 7
    %p383 = por %p381, %p382
    %p385 = scmp.ne.s32.totalorder %s368, %s384
    %p386 = scmp.eq.s32.totalorder %s25, 0
    %p387 = por %p385, %p386
    %p388 = scmp.le.s32.totalorder 1, %s19
    %p389 = scmp.lt.s32.totalorder %s19, 9
    %p390 = pnand %p388, %p389
    %p391 = pneg %p390
    // Predicated region
    $region9: #{transformer_forward.11} parent=5 // pred_check
      _
    $region10: #{transformer_forward.11} parent=5 // pred_check_branch
      %393 = sbr.rel (%p390) target = $region12
    $region11: #{transformer_forward.11} parent=5 // pred_region
      %s394 = ssub.s32 %s19, 1
      // Predicated region
      $region13: #{transformer_forward.11} parent=11 // pred_check
        %p395 = pneg %p312
      $region14: #{transformer_forward.11} parent=11 // pred_check_branch
        %397 = sbr.rel (%p395) target = $region16
      $region15: #{transformer_forward.11} parent=11 // pred_region
        _
      $region16: #{transformer_forward.11} parent=11 // pred_fallthru
        _
      // Predicated region
      $region17: #{transformer_forward.11} parent=11 // pred_check
        %p398 = pneg %p333
      $region18: #{transformer_forward.11} parent=11 // pred_check_branch
        %400 = sbr.rel (%p398) target = $region20
      $region19: #{transformer_forward.11} parent=11 // pred_region
        _
      $region20: #{transformer_forward.11} parent=11 // pred_fallthru
        _
      // Predicated region
      $region21: #{transformer_forward.11} parent=11 // pred_check
        %p401 = pneg %p354
      $region22: #{transformer_forward.11} parent=11 // pred_check_branch
        %403 = sbr.rel (%p401) target = $region24
      $region23: #{transformer_forward.11} parent=11 // pred_region
        _
      $region24: #{transformer_forward.11} parent=11 // pred_fallthru
        _
    $region12: #{transformer_forward.11} parent=5 // pred_fallthru
      _
    %p404 = scmp.lt.s32.totalorder %s19, 8
    // Predicated region
    $region25: #{transformer_forward.11} parent=5 // pred_check
      %p405 = pneg %p404
    $region26: #{transformer_forward.11} parent=5 // pred_check_branch
      %407 = sbr.rel (%p405) target = $region28
    $region27: #{transformer_forward.11} parent=5 // pred_region
      // Predicated region
      $region29: #{transformer_forward.11} parent=27 // pred_check
        %p408 = pneg %p51
      $region30: #{transformer_forward.11} parent=27 // pred_check_branch
        %410 = sbr.rel (%p408) target = $region32
      $region31: #{transformer_forward.11} parent=27 // pred_region
        %p411 = scmp.lt.s32.totalorder %s26, 1
        %s412 = scalar_select %p411, %s26, 1
        %s413 = smul.addr %s412, 2
        %s414 = smul.addr %s413, 8
        %s415 = scalar_lea.vmem %s0, %s414
      $region32: #{transformer_forward.11} parent=27 // pred_fallthru
        _
      // Predicated region
      $region33: #{transformer_forward.11} parent=27 // pred_check
        %p416 = pneg %p77
      $region34: #{transformer_forward.11} parent=27 // pred_check_branch
        %418 = sbr.rel (%p416) target = $region36
      $region35: #{transformer_forward.11} parent=27 // pred_region
        %p419 = scmp.lt.s32.totalorder %s26, 1
        %s420 = scalar_select %p419, %s26, 1
        %s421 = smul.addr %s420, 2
        %s422 = smul.addr %s421, 8
        %s423 = scalar_lea.vmem %s1, %s422
      $region36: #{transformer_forward.11} parent=27 // pred_fallthru
        _
      // Predicated region
      $region37: #{transformer_forward.11} parent=27 // pred_check
        %p424 = pneg %p103
      $region38: #{transformer_forward.11} parent=27 // pred_check_branch
        %426 = sbr.rel (%p424) target = $region40
      $region39: #{transformer_forward.11} parent=27 // pred_region
        %p427 = scmp.lt.s32.totalorder %s26, 1
        %s428 = scalar_select %p427, %s26, 1
        %s429 = scalar_lea.vmem %s2, %s428
      $region40: #{transformer_forward.11} parent=27 // pred_fallthru
        _
      // Predicated region
      $region41: #{transformer_forward.11} parent=27 // pred_check
        %p430 = pneg %p129
      $region42: #{transformer_forward.11} parent=27 // pred_check_branch
        %432 = sbr.rel (%p430) target = $region44
      $region43: #{transformer_forward.11} parent=27 // pred_region
        %p433 = scmp.lt.s32.totalorder %s27, 3
        %s434 = scalar_select %p433, %s27, 3
        %s435 = smul.addr %s434, 4
        %s436 = smul.addr %s435, 4
        %s437 = scalar_lea.vmem %s3, %s436
      $region44: #{transformer_forward.11} parent=27 // pred_fallthru
        _
      // Predicated region
      $region45: #{transformer_forward.11} parent=27 // pred_check
        %p438 = pneg %p155
      $region46: #{transformer_forward.11} parent=27 // pred_check_branch
        %440 = sbr.rel (%p438) target = $region48
      $region47: #{transformer_forward.11} parent=27 // pred_region
        %p441 = scmp.lt.s32.totalorder %s27, 3
        %s442 = scalar_select %p441, %s27, 3
        %s443 = scalar_lea.vmem %s4, %s442
      $region48: #{transformer_forward.11} parent=27 // pred_fallthru
        _
      // Predicated region
      $region49: #{transformer_forward.11} parent=27 // pred_check
        %p444 = pneg %p181
      $region50: #{transformer_forward.11} parent=27 // pred_check_branch
        %446 = sbr.rel (%p444) target = $region52
      $region51: #{transformer_forward.11} parent=27 // pred_region
        %p447 = scmp.lt.s32.totalorder %s27, 3
        %s448 = scalar_select %p447, %s27, 3
        %s449 = smul.addr %s448, 4
        %s450 = smul.addr %s449, 4
        %s451 = scalar_lea.vmem %s5, %s450
      $region52: #{transformer_forward.11} parent=27 // pred_fallthru
        _
      // Predicated region
      $region53: #{transformer_forward.11} parent=27 // pred_check
        %p452 = pneg %p207
      $region54: #{transformer_forward.11} parent=27 // pred_check_branch
        %454 = sbr.rel (%p452) target = $region56
      $region55: #{transformer_forward.11} parent=27 // pred_region
        %p455 = scmp.lt.s32.totalorder %s27, 3
        %s456 = scalar_select %p455, %s27, 3
        %s457 = scalar_lea.vmem %s6, %s456
      $region56: #{transformer_forward.11} parent=27 // pred_fallthru
        _
      // Predicated region
      $region57: #{transformer_forward.11} parent=27 // pred_check
        %p458 = pneg %p233
      $region58: #{transformer_forward.11} parent=27 // pred_check_branch
        %460 = sbr.rel (%p458) target = $region60
      $region59: #{transformer_forward.11} parent=27 // pred_region
        %p461 = scmp.lt.s32.totalorder %s27, 3
        %s462 = scalar_select %p461, %s27, 3
        %s463 = smul.addr %s462, 4
        %s464 = smul.addr %s463, 4
        %s465 = scalar_lea.vmem %s7, %s464
      $region60: #{transformer_forward.11} parent=27 // pred_fallthru
        _
      // Predicated region
      $region61: #{transformer_forward.11} parent=27 // pred_check
        %p466 = pneg %p259
      $region62: #{transformer_forward.11} parent=27 // pred_check_branch
        %468 = sbr.rel (%p466) target = $region64
      $region63: #{transformer_forward.11} parent=27 // pred_region
        %p469 = scmp.lt.s32.totalorder %s27, 3
        %s470 = scalar_select %p469, %s27, 3
        %s471 = scalar_lea.vmem %s8, %s470
      $region64: #{transformer_forward.11} parent=27 // pred_fallthru
        _
      // Predicated region
      $region65: #{transformer_forward.11} parent=27 // pred_check
        %p472 = pneg %p285
      $region66: #{transformer_forward.11} parent=27 // pred_check_branch
        %474 = sbr.rel (%p472) target = $region68
      $region67: #{transformer_forward.11} parent=27 // pred_region
        %p475 = scmp.lt.s32.totalorder %s27, 3
        %s476 = scalar_select %p475, %s27, 3
        %s477 = smul.addr %s476, 4
        %s478 = scalar_lea.vmem %s9, %s477
      $region68: #{transformer_forward.11} parent=27 // pred_fallthru
        _
    $region28: #{transformer_forward.11} parent=5 // pred_fallthru
      _
    %p479 = scmp.le.s32.totalorder 1, %s19
    %p480 = scmp.lt.s32.totalorder %s19, 9
    %p481 = pnand %p479, %p480
    %p482 = pneg %p481
    // Predicated region
    $region69: #{transformer_forward.11} parent=5 // pred_check
      _
    $region70: #{transformer_forward.11} parent=5 // pred_check_branch
      %484 = sbr.rel (%p481) target = $region72
    $region71: #{transformer_forward.11} parent=5 // pred_region
      %s485 = ssub.s32 %s19, 1
      %p486 = scmp.lt.s32.totalorder %s28, 1
      %s487 = scalar_select %p486, %s28, 1
      %s488 = smul.addr %s487, 2
      %s489 = smul.addr %s488, 8
      %s490 = scalar_lea.vmem %s0, %s489
      %p491 = pneg %p57
      %p492 = pneg %p54
      %p493 = scmp.lt.s32.totalorder %s28, 1
      %s494 = scalar_select %p493, %s28, 1
      %s495 = smul.addr %s494, 2
      %s496 = smul.addr %s495, 8
      %s497 = scalar_lea.vmem %s1, %s496
      %p498 = pneg %p83
      %p499 = pneg %p80
      %p500 = scmp.lt.s32.totalorder %s28, 1
      %s501 = scalar_select %p500, %s28, 1
      %s502 = scalar_lea.vmem %s2, %s501
      %p503 = pneg %p109
      %p504 = pneg %p106
      %p505 = scmp.lt.s32.totalorder %s29, 3
      %s506 = scalar_select %p505, %s29, 3
      %s507 = smul.addr %s506, 4
      %s508 = smul.addr %s507, 4
      %s509 = scalar_lea.vmem %s3, %s508
      %p510 = pneg %p135
      %p511 = pneg %p132
      %p512 = scmp.lt.s32.totalorder %s29, 3
      %s513 = scalar_select %p512, %s29, 3
      %s514 = scalar_lea.vmem %s4, %s513
      %p515 = pneg %p161
      %p516 = pneg %p158
      %p517 = scmp.lt.s32.totalorder %s29, 3
      %s518 = scalar_select %p517, %s29, 3
      %s519 = smul.addr %s518, 4
      %s520 = smul.addr %s519, 4
      %s521 = scalar_lea.vmem %s5, %s520
      %p522 = pneg %p187
      %p523 = pneg %p184
      %p524 = scmp.lt.s32.totalorder %s29, 3
      %s525 = scalar_select %p524, %s29, 3
      %s526 = scalar_lea.vmem %s6, %s525
      %p527 = pneg %p213
      %p528 = pneg %p210
      %p529 = scmp.lt.s32.totalorder %s29, 3
      %s530 = scalar_select %p529, %s29, 3
      %s531 = smul.addr %s530, 4
      %s532 = smul.addr %s531, 4
      %s533 = scalar_lea.vmem %s7, %s532
      %p534 = pneg %p239
      %p535 = pneg %p236
      %p536 = scmp.lt.s32.totalorder %s29, 3
      %s537 = scalar_select %p536, %s29, 3
      %s538 = scalar_lea.vmem %s8, %s537
      %p539 = pneg %p265
      %p540 = pneg %p262
      %p541 = scmp.lt.s32.totalorder %s29, 3
      %s542 = scalar_select %p541, %s29, 3
      %s543 = smul.addr %s542, 4
      %s544 = scalar_lea.vmem %s9, %s543
      %p545 = pneg %p291
      %p546 = pneg %p288
      %p547 = pneg %p312
      %p548 = pneg %p309
      %p549 = pneg %p333
      %p550 = pneg %p330
      %p551 = pneg %p354
      %p552 = pneg %p351
      %p553 = pneg %p380
      %p554 = pneg %p377
      %p555 = scmp.lt.s32.totalorder %s28, 1
      %s556 = scalar_select %p555, %s28, 1
      %s557 = smul.addr %s556, 2
      %s558 = smul.addr %s557, 8
      %s559 = scalar_lea.vmem %s13, %s558
      %p560 = scmp.lt.s32.totalorder %s28, 1
      %s561 = scalar_select %p560, %s28, 1
      %s562 = smul.addr %s561, 2
      %s563 = smul.addr %s562, 8
      %s564 = scalar_lea.vmem %s0, %s563
      %p565 = scmp.lt.s32.totalorder %s28, 1
      %s566 = scalar_select %p565, %s28, 1
      %s567 = smul.addr %s566, 2
      %s568 = smul.addr %s567, 8
      %s569 = scalar_lea.vmem %s1, %s568
      %p570 = scmp.lt.s32.totalorder %s28, 1
      %s571 = scalar_select %p570, %s28, 1
      %s572 = scalar_lea.vmem %s2, %s571
      %p573 = scmp.lt.s32.totalorder %s29, 3
      %s574 = scalar_select %p573, %s29, 3
      %s575 = smul.addr %s574, 4
      %s576 = smul.addr %s575, 4
      %s577 = scalar_lea.vmem %s3, %s576
      %p578 = scmp.lt.s32.totalorder %s29, 3
      %s579 = scalar_select %p578, %s29, 3
      %s580 = scalar_lea.vmem %s4, %s579
      %p581 = scmp.lt.s32.totalorder %s29, 3
      %s582 = scalar_select %p581, %s29, 3
      %s583 = smul.addr %s582, 4
      %s584 = smul.addr %s583, 4
      %s585 = scalar_lea.vmem %s5, %s584
      %p586 = scmp.lt.s32.totalorder %s29, 3
      %s587 = scalar_select %p586, %s29, 3
      %s588 = scalar_lea.vmem %s6, %s587
      %p589 = scmp.lt.s32.totalorder %s29, 3
      %s590 = scalar_select %p589, %s29, 3
      %s591 = smul.addr %s590, 4
      %s592 = smul.addr %s591, 4
      %s593 = scalar_lea.vmem %s7, %s592
      %p594 = scmp.lt.s32.totalorder %s29, 3
      %s595 = scalar_select %p594, %s29, 3
      %s596 = scalar_lea.vmem %s8, %s595
      %p597 = scmp.lt.s32.totalorder %s29, 3
      %s598 = scalar_select %p597, %s29, 3
      %s599 = smul.addr %s598, 4
      %s600 = scalar_lea.vmem %s9, %s599
      %p601 = scmp.lt.s32.totalorder %s28, 1
      %s602 = scalar_select %p601, %s28, 1
      %s603 = smul.addr %s602, 2
      %s604 = smul.addr %s603, 8
      %s605 = scalar_lea.vmem %s13, %s604
      %v607 = vld [vmem:[%s564] sm:$0xff]
      %v608 = vld [vmem:[%s564 + $0x8] sm:$0xff]
      %v609 = vld [vmem:[%s569] sm:$0xff]
      %v610 = vld [vmem:[%s569 + $0x8] sm:$0xff]
      %v611 = vadd.f32 %v607, %v609
      %v612 = vadd.f32 %v608, %v610
      %v613 = vpack.c.bf16 %v612, %v611
      %v614 = vld [vmem:[%s577] sm:$0xf]
      %v615 = vld [vmem:[%s577 + $0x4] sm:$0xf]
      %v616 = vld [vmem:[%s577 + $0x8] sm:$0xf]
      %v617 = vld [vmem:[%s577 + $0xc] sm:$0xf]
      %v618 = vld [vmem:[%s580] sm:$0x1]
      %v620 = vlaneseq
      %v621 = vshrl.u32 %v620, 7
      %v622 = vsub.s32 0, %v621
      %v623 = vrot.slane %v618, %v622
      %v629 = vunpack.c.l.b16 %v614
      %v630 = vunpack.c.l.b16 %v615
      %v631 = vunpack.c.l.b16 %v616
      %v632 = vunpack.c.l.b16 %v617
      %v633 = vpack.c.b16 %v630, %v629
      %v634 = vpack.c.b16 %v632, %v631
      %vm637 = vcmask 261120
      %v639 = vsel %vm637, %v613, 0
      %641 = vmatprep.subr.bf16.mxu0 0
      %642 = vmatpush1.bf16.msra.mxu0 0
      %643 = vmatprep.subr.bf16.mxu0 0
      %644 = vmatpush1.bf16.msra.mxu0 0
      %645 = vmatprep.subr.bf16.mxu0 0
      %646 = vmatpush1.bf16.msra.mxu0 0
      %647 = vmatprep.subr.bf16.mxu0 0
      %648 = vmatpush1.bf16.msra.mxu0 0
      %649 = vmatprep.subr.bf16.mxu0 0
      %650 = vmatpush1.bf16.msra.mxu0 0
      %651 = vmatprep.subr.bf16.mxu0 0
      %652 = vmatpush1.bf16.msra.mxu0 0
      %653 = vmatprep.subr.bf16.mxu0 0
      %654 = vmatpush1.bf16.msra.mxu0 %v634
      %655 = vmatprep.subr.bf16.mxu0 0
      %656 = vmatpush1.bf16.msra.mxu0 %v633
      %657 = vmatprep.subr.bf16.mxu0 0
      %658 = vmatpush2.bf16.msra.mxu0 0
      %659 = vmatprep.subr.bf16.mxu0 0
      %660 = vmatpush2.bf16.msra.mxu0 0
      %661 = vmatprep.subr.bf16.mxu0 0
      %662 = vmatpush2.bf16.msra.mxu0 0
      %663 = vmatprep.subr.bf16.mxu0 0
      %664 = vmatpush2.bf16.msra.mxu0 0
      %665 = vmatprep.subr.bf16.mxu0 0
      %666 = vmatpush2.bf16.msra.mxu0 0
      %667 = vmatprep.subr.bf16.mxu0 0
      %668 = vmatpush2.bf16.msra.mxu0 0
      %669 = vmatprep.subr.bf16.mxu0 0
      %670 = vmatpush2.bf16.msra.mxu0 0
      %671 = vmatprep.subr.bf16.mxu0 0
      %672 = vmatpush2.bf16.msra.mxu0 0
      %673 = vmatprep.mubr.bf16.mxu0 0
      %674 = vmatmul.mubr.bf16.gmra.mxu0 %v639
      %v675 = vpop.f32.mrf.mxu0
      %v676 = vadd.f32 %v623, %v675
      %v677 = vpop.f32.mrf.mxu0
      %v678 = vpop.f32.mrf.mxu0
      %v679 = vadd.f32 %v623, %v678
      %v680 = vpop.f32.mrf.mxu0
      %681 = vdwg.mxu0
      %v682 = vld [vmem:[%s585] sm:$0xf]
      %v683 = vld [vmem:[%s585 + $0x4] sm:$0xf]
      %v684 = vld [vmem:[%s585 + $0x8] sm:$0xf]
      %v685 = vld [vmem:[%s585 + $0xc] sm:$0xf]
      %v686 = vld [vmem:[%s588] sm:$0x1]
      %v688 = vlaneseq
      %v689 = vshrl.u32 %v688, 7
      %v690 = vsub.s32 0, %v689
      %v691 = vrot.slane %v686, %v690
      %v697 = vunpack.c.l.b16 %v682
      %v698 = vunpack.c.l.b16 %v683
      %v699 = vunpack.c.l.b16 %v684
      %v700 = vunpack.c.l.b16 %v685
      %v701 = vpack.c.b16 %v698, %v697
      %v702 = vpack.c.b16 %v700, %v699
      %705 = vmatprep.subr.bf16.mxu0 0
      %706 = vmatpush1.bf16.msra.mxu0 0
      %707 = vmatprep.subr.bf16.mxu0 0
      %708 = vmatpush1.bf16.msra.mxu0 0
      %709 = vmatprep.subr.bf16.mxu0 0
      %710 = vmatpush1.bf16.msra.mxu0 0
      %711 = vmatprep.subr.bf16.mxu0 0
      %712 = vmatpush1.bf16.msra.mxu0 0
      %713 = vmatprep.subr.bf16.mxu0 0
      %714 = vmatpush1.bf16.msra.mxu0 0
      %715 = vmatprep.subr.bf16.mxu0 0
      %716 = vmatpush1.bf16.msra.mxu0 0
      %717 = vmatprep.subr.bf16.mxu0 0
      %718 = vmatpush1.bf16.msra.mxu0 %v702
      %719 = vmatprep.subr.bf16.mxu0 0
      %720 = vmatpush1.bf16.msra.mxu0 %v701
      %721 = vmatprep.subr.bf16.mxu0 0
      %722 = vmatpush2.bf16.msra.mxu0 0
      %723 = vmatprep.subr.bf16.mxu0 0
      %724 = vmatpush2.bf16.msra.mxu0 0
      %725 = vmatprep.subr.bf16.mxu0 0
      %726 = vmatpush2.bf16.msra.mxu0 0
      %727 = vmatprep.subr.bf16.mxu0 0
      %728 = vmatpush2.bf16.msra.mxu0 0
      %729 = vmatprep.subr.bf16.mxu0 0
      %730 = vmatpush2.bf16.msra.mxu0 0
      %731 = vmatprep.subr.bf16.mxu0 0
      %732 = vmatpush2.bf16.msra.mxu0 0
      %733 = vmatprep.subr.bf16.mxu0 0
      %734 = vmatpush2.bf16.msra.mxu0 0
      %735 = vmatprep.subr.bf16.mxu0 0
      %736 = vmatpush2.bf16.msra.mxu0 0
      %737 = vmatprep.mubr.bf16.mxu0 0
      %738 = vmatmul.mubr.bf16.gmra.mxu0 %v639
      %v739 = vpop.f32.mrf.mxu0
      %v740 = vadd.f32 %v691, %v739
      %v741 = vpop.f32.mrf.mxu0
      %v742 = vpop.f32.mrf.mxu0
      %v743 = vadd.f32 %v691, %v742
      %v744 = vpop.f32.mrf.mxu0
      %745 = vdwg.mxu0
      %v746 = vld [vmem:[%s593] sm:$0xf]
      %v747 = vld [vmem:[%s593 + $0x4] sm:$0xf]
      %v748 = vld [vmem:[%s593 + $0x8] sm:$0xf]
      %v749 = vld [vmem:[%s593 + $0xc] sm:$0xf]
      %v750 = vld [vmem:[%s596] sm:$0x1]
      %v752 = vlaneseq
      %v753 = vshrl.u32 %v752, 7
      %v754 = vsub.s32 0, %v753
      %v755 = vrot.slane %v750, %v754
      %v761 = vunpack.c.l.b16 %v746
      %v762 = vunpack.c.l.b16 %v747
      %v763 = vunpack.c.l.b16 %v748
      %v764 = vunpack.c.l.b16 %v749
      %v765 = vpack.c.b16 %v762, %v761
      %v766 = vpack.c.b16 %v764, %v763
      %769 = vmatprep.subr.bf16.mxu0 0
      %770 = vmatpush1.bf16.msra.mxu0 0
      %771 = vmatprep.subr.bf16.mxu0 0
      %772 = vmatpush1.bf16.msra.mxu0 0
      %773 = vmatprep.subr.bf16.mxu0 0
      %774 = vmatpush1.bf16.msra.mxu0 0
      %775 = vmatprep.subr.bf16.mxu0 0
      %776 = vmatpush1.bf16.msra.mxu0 0
      %777 = vmatprep.subr.bf16.mxu0 0
      %778 = vmatpush1.bf16.msra.mxu0 0
      %779 = vmatprep.subr.bf16.mxu0 0
      %780 = vmatpush1.bf16.msra.mxu0 0
      %781 = vmatprep.subr.bf16.mxu0 0
      %782 = vmatpush1.bf16.msra.mxu0 %v766
      %783 = vmatprep.subr.bf16.mxu0 0
      %784 = vmatpush1.bf16.msra.mxu0 %v765
      %785 = vmatprep.subr.bf16.mxu0 0
      %786 = vmatpush2.bf16.msra.mxu0 0
      %787 = vmatprep.subr.bf16.mxu0 0
      %788 = vmatpush2.bf16.msra.mxu0 0
      %789 = vmatprep.subr.bf16.mxu0 0
      %790 = vmatpush2.bf16.msra.mxu0 0
      %791 = vmatprep.subr.bf16.mxu0 0
      %792 = vmatpush2.bf16.msra.mxu0 0
      %793 = vmatprep.subr.bf16.mxu0 0
      %794 = vmatpush2.bf16.msra.mxu0 0
      %795 = vmatprep.subr.bf16.mxu0 0
      %796 = vmatpush2.bf16.msra.mxu0 0
      %797 = vmatprep.subr.bf16.mxu0 0
      %798 = vmatpush2.bf16.msra.mxu0 0
      %799 = vmatprep.subr.bf16.mxu0 0
      %800 = vmatpush2.bf16.msra.mxu0 0
      %801 = vmatprep.mubr.bf16.mxu0 0
      %802 = vmatmul.mubr.bf16.gmra.mxu0 %v639
      %v803 = vpop.f32.mrf.mxu0
      %v804 = vadd.f32 %v755, %v803
      %v805 = vpop.f32.mrf.mxu0
      %v806 = vpop.f32.mrf.mxu0
      %v807 = vadd.f32 %v755, %v806
      %v808 = vpop.f32.mrf.mxu0
      %809 = vdwg.mxu0
      %v810 = vmul.f32 %v676, 0.35355338
      %v811 = vmul.f32 %v679, 0.35355338
      %v812 = vpack.c.bf16 %v811, %v810
      %v813 = vpack.c.bf16 %v743, %v740
      %v814 = vld [vmem:[%s572] sm:$0x1]
      %v816 = vlaneseq
      %v817 = vshrl.u32 %v816, 7
      %v818 = vsub.s32 0, %v817
      %v819 = vrot.slane %v814, %v818
      %vm821 = vcmask 64512
      %v823 = vsel %vm821, %v812, 0
      %v826 = vsel %vm821, %v813, 0
      %828 = vmatprep.subr.bf16.mxu0 0
      %829 = vmatpush1.bf16.xpose.msra.mxu0 0
      %830 = vmatprep.subr.bf16.mxu0 0
      %831 = vmatpush1.bf16.xpose.msra.mxu0 0
      %832 = vmatprep.subr.bf16.mxu0 0
      %833 = vmatpush1.bf16.xpose.msra.mxu0 0
      %834 = vmatprep.subr.bf16.mxu0 0
      %835 = vmatpush1.bf16.xpose.msra.mxu0 0
      %836 = vmatprep.subr.bf16.mxu0 0
      %837 = vmatpush1.bf16.xpose.msra.mxu0 0
      %838 = vmatprep.subr.bf16.mxu0 0
      %839 = vmatpush1.bf16.xpose.msra.mxu0 0
      %840 = vmatprep.subr.bf16.mxu0 0
      %841 = vmatpush1.bf16.xpose.msra.mxu0 0
      %842 = vmatprep.subr.bf16.mxu0 0
      %843 = vmatpush1.bf16.xpose.msra.mxu0 %v826
      %844 = vmatprep.subr.bf16.mxu0 0
      %845 = vmatpush2.bf16.xpose.msra.mxu0 0
      %846 = vmatprep.subr.bf16.mxu0 0
      %847 = vmatpush2.bf16.xpose.msra.mxu0 0
      %848 = vmatprep.subr.bf16.mxu0 0
      %849 = vmatpush2.bf16.xpose.msra.mxu0 0
      %850 = vmatprep.subr.bf16.mxu0 0
      %851 = vmatpush2.bf16.xpose.msra.mxu0 0
      %852 = vmatprep.subr.bf16.mxu0 0
      %853 = vmatpush2.bf16.xpose.msra.mxu0 0
      %854 = vmatprep.subr.bf16.mxu0 0
      %855 = vmatpush2.bf16.xpose.msra.mxu0 0
      %856 = vmatprep.subr.bf16.mxu0 0
      %857 = vmatpush2.bf16.xpose.msra.mxu0 0
      %858 = vmatprep.subr.bf16.mxu0 0
      %859 = vmatpush2.bf16.xpose.msra.mxu0 0
      %860 = vmatprep.mubr.bf16.mxu0 0
      %861 = vmatmul.mubr.bf16.gmra.mxu0 %v823
      %v862 = vpop.f32.mrf.mxu0
      %v863 = vadd.f32 %v819, %v862
      %v864 = vpop.f32.mrf.mxu0
      %v865 = vpop.f32.mrf.mxu0
      %v866 = vadd.f32 %v819, %v865
      %v867 = vpop.f32.mrf.mxu0
      %868 = vdwg.mxu0
      %vm869 = vcmask 130048
      %v870 = vsel %vm869, %v863, -inf
      %871 = vmax.xlane.f32.xlu0 %v870
      %v872 = vpop.xlane.xlu0 %871
      %v873 = vsel %vm869, %v866, -inf
      %874 = vmax.xlane.f32.xlu0 %v873
      %v875 = vpop.xlane.xlu0 %874
      %v876 = vsub.f32 %v863, %v872
      %v877 = vsub.f32 %v866, %v875
      %v878 = vmul.f32 %v876, 1.442695
      %v879 = vpow.pop %v878
      %v880 = vmul.f32 %v877, 1.442695
      %v881 = vpow.pop %v880
      %v882 = vsel %vm869, %v879, 0.0
      %883 = vadd.xlane.f32.xlu0 %v882
      %v884 = vpop.xlane.xlu0 %883
      %v885 = vsel %vm869, %v881, 0.0
      %886 = vadd.xlane.f32.xlu0 %v885
      %v887 = vpop.xlane.xlu0 %886
      %v888 = vrcp.pop %v884
      %v889 = vrcp.pop %v887
      %v890 = vmul.f32 %v879, %v888
      %v891 = vmul.f32 %v881, %v889
      %v892 = vpack.c.bf16 %v891, %v890
      %v893 = vpack.c.bf16 %v807, %v804
      %v895 = vsel %vm869, %v892, 0
      %897 = vmatprep.subr.bf16.mxu0 0
      %898 = vmatpush1.bf16.msra.mxu0 0
      %899 = vmatprep.subr.bf16.mxu0 0
      %900 = vmatpush1.bf16.msra.mxu0 0
      %901 = vmatprep.subr.bf16.mxu0 0
      %902 = vmatpush1.bf16.msra.mxu0 0
      %903 = vmatprep.subr.bf16.mxu0 0
      %904 = vmatpush1.bf16.msra.mxu0 0
      %905 = vmatprep.subr.bf16.mxu0 0
      %906 = vmatpush1.bf16.msra.mxu0 0
      %907 = vmatprep.subr.bf16.mxu0 0
      %908 = vmatpush1.bf16.msra.mxu0 0
      %909 = vmatprep.subr.bf16.mxu0 0
      %910 = vmatpush1.bf16.msra.mxu0 0
      %911 = vmatprep.subr.bf16.mxu0 0
      %912 = vmatpush1.bf16.msra.mxu0 %v893
      %913 = vmatprep.subr.bf16.mxu0 0
      %914 = vmatpush2.bf16.msra.mxu0 0
      %915 = vmatprep.subr.bf16.mxu0 0
      %916 = vmatpush2.bf16.msra.mxu0 0
      %917 = vmatprep.subr.bf16.mxu0 0
      %918 = vmatpush2.bf16.msra.mxu0 0
      %919 = vmatprep.subr.bf16.mxu0 0
      %920 = vmatpush2.bf16.msra.mxu0 0
      %921 = vmatprep.subr.bf16.mxu0 0
      %922 = vmatpush2.bf16.msra.mxu0 0
      %923 = vmatprep.subr.bf16.mxu0 0
      %924 = vmatpush2.bf16.msra.mxu0 0
      %925 = vmatprep.subr.bf16.mxu0 0
      %926 = vmatpush2.bf16.msra.mxu0 0
      %927 = vmatprep.subr.bf16.mxu0 0
      %928 = vmatpush2.bf16.msra.mxu0 0
      %929 = vmatprep.mubr.bf16.mxu0 0
      %930 = vmatmul.mubr.bf16.gmra.mxu0 %v895
      %v931 = vpop.f32.mrf.mxu0
      %v932 = vadd.f32 0.0, %v931
      %v933 = vpop.f32.mrf.mxu0
      %v934 = vpop.f32.mrf.mxu0
      %v935 = vadd.f32 0.0, %v934
      %v936 = vpop.f32.mrf.mxu0
      %937 = vdwg.mxu0
      %v938 = vpack.c.bf16 %v935, %v932
      %v939 = vld [vmem:[%s600] sm:$0xf]
      %v941 = vsel %vm821, %v938, 0
      %vm943 = vcmask 1043456
      %v945 = vsel %vm943, %v939, 0
      %947 = vmatprep.subr.bf16.mxu0 0
      %948 = vmatpush1.bf16.msra.mxu0 0
      %949 = vmatprep.subr.bf16.mxu0 0
      %950 = vmatpush1.bf16.msra.mxu0 0
      %951 = vmatprep.subr.bf16.mxu0 0
      %952 = vmatpush1.bf16.msra.mxu0 0
      %953 = vmatprep.subr.bf16.mxu0 0
      %954 = vmatpush1.bf16.msra.mxu0 0
      %955 = vmatprep.subr.bf16.mxu0 0
      %956 = vmatpush1.bf16.msra.mxu0 0
      %957 = vmatprep.subr.bf16.mxu0 0
      %958 = vmatpush1.bf16.msra.mxu0 0
      %959 = vmatprep.subr.bf16.mxu0 0
      %960 = vmatpush1.bf16.msra.mxu0 0
      %961 = vmatprep.subr.bf16.mxu0 0
      %962 = vmatpush1.bf16.msra.mxu0 %v945
      %963 = vmatprep.subr.bf16.mxu0 0
      %964 = vmatpush2.bf16.msra.mxu0 0
      %965 = vmatprep.subr.bf16.mxu0 0
      %966 = vmatpush2.bf16.msra.mxu0 0
      %967 = vmatprep.subr.bf16.mxu0 0
      %968 = vmatpush2.bf16.msra.mxu0 0
      %969 = vmatprep.subr.bf16.mxu0 0
      %970 = vmatpush2.bf16.msra.mxu0 0
      %971 = vmatprep.subr.bf16.mxu0 0
      %972 = vmatpush2.bf16.msra.mxu0 0
      %973 = vmatprep.subr.bf16.mxu0 0
      %974 = vmatpush2.bf16.msra.mxu0 0
      %975 = vmatprep.subr.bf16.mxu0 0
      %976 = vmatpush2.bf16.msra.mxu0 0
      %977 = vmatprep.subr.bf16.mxu0 0
      %978 = vmatpush2.bf16.msra.mxu0 0
      %979 = vmatprep.mubr.bf16.mxu0 0
      %980 = vmatmul.mubr.bf16.gmra.mxu0 %v941
      %v981 = vpop.f32.mrf.mxu0
      %v982 = vadd.f32 0.0, %v981
      %v983 = vpop.f32.mrf.mxu0
      %v984 = vpop.f32.mrf.mxu0
      %v985 = vadd.f32 0.0, %v984
      %v986 = vpop.f32.mrf.mxu0
      %987 = vdwg.mxu0
      %p988 = scmp.eq.s32.totalorder %s29, 0
      // Predicated region
      $region73: #{transformer_forward.11} parent=71 // pred_check
        %p989 = pneg %p988
      $region74: #{transformer_forward.11} parent=71 // pred_check_branch
        %991 = sbr.rel (%p989) target = $region76
      $region75: #{transformer_forward.11} parent=71 // pred_region
        %992 = vst.msk [vmem:[%s605] sm:$0xff] %vm637, %v982
        %993 = vst.msk [vmem:[%s605 + $0x8] sm:$0xff] %vm637, %v985
      $region76: #{transformer_forward.11} parent=71 // pred_fallthru
        _
      %p994 = scmp.gt.s32.totalorder %s29, 0
      // Predicated region
      $region77: #{transformer_forward.11} parent=71 // pred_check
        %p995 = pneg %p994
      $region78: #{transformer_forward.11} parent=71 // pred_check_branch
        %997 = sbr.rel (%p995) target = $region80
      $region79: #{transformer_forward.11} parent=71 // pred_region
        %v998 = vld [vmem:[%s605] sm:$0xff]
        %v999 = vld [vmem:[%s605 + $0x8] sm:$0xff]
        %v1000 = vadd.f32 %v998, %v982
        %v1001 = vadd.f32 %v999, %v985
        %1002 = vst.msk [vmem:[%s605] sm:$0xff] %vm637, %v1000
        %1003 = vst.msk [vmem:[%s605 + $0x8] sm:$0xff] %vm637, %v1001
      $region80: #{transformer_forward.11} parent=71 // pred_fallthru
        _
      %p1004 = scmp.eq.s32.totalorder %s29, 3
      // Predicated region
      $region81: #{transformer_forward.11} parent=71 // pred_check
        %p1005 = pneg %p1004
      $region82: #{transformer_forward.11} parent=71 // pred_check_branch
        %1007 = sbr.rel (%p1005) target = $region84
      $region83: #{transformer_forward.11} parent=71 // pred_region
        %v1008 = vld [vmem:[%s605] sm:$0xff]
        %v1009 = vld [vmem:[%s605 + $0x8] sm:$0xff]
        %v1010 = vld [vmem:[%s10] sm:$0x1]
        %v1012 = vlaneseq
        %v1013 = vshrl.u32 %v1012, 7
        %v1014 = vsub.s32 0, %v1013
        %v1015 = vrot.slane %v1010, %v1014
        %v1017 = vadd.f32 %v1008, %v1015
        %v1018 = vadd.f32 %v1009, %v1015
        %v1019 = vadd.f32 %v1017, %v611
        %v1020 = vadd.f32 %v1018, %v612
        %v1021 = vsel %vm637, %v1019, 0.0
        %1022 = vadd.xlane.f32.xlu0 %v1021
        %v1023 = vpop.xlane.xlu0 %1022
        %v1024 = vsel %vm637, %v1020, 0.0
        %1025 = vadd.xlane.f32.xlu0 %v1024
        %v1026 = vpop.xlane.xlu0 %1025
        %v1027 = vrcp.pop 32.0
        %v1028 = vmul.f32 %v1023, %v1027
        %v1029 = vmul.f32 %v1026, %v1027
        %v1030 = vsub.f32 %v1019, %v1028
        %v1031 = vsub.f32 %v1020, %v1029
        %v1032 = vmul.f32 %v1030, %v1030
        %v1033 = vmul.f32 %v1031, %v1031
        %v1034 = vsel %vm637, %v1032, 0.0
        %1035 = vadd.xlane.f32.xlu0 %v1034
        %v1036 = vpop.xlane.xlu0 %1035
        %v1037 = vsel %vm637, %v1033, 0.0
        %1038 = vadd.xlane.f32.xlu0 %v1037
        %v1039 = vpop.xlane.xlu0 %1038
        %v1040 = vmul.f32 %v1036, %v1027
        %v1041 = vmul.f32 %v1039, %v1027
        %v1042 = vadd.f32 %v1040, 1e-05
        %v1043 = vadd.f32 %v1041, 1e-05
        %v1044 = vrsqrt.pop %v1042
        %v1045 = vrsqrt.pop %v1043
        %v1046 = vmul.f32 %v1030, %v1044
        %v1047 = vmul.f32 %v1031, %v1045
        %v1048 = vld [vmem:[%s11] sm:$0x1]
        %v1050 = vlaneseq
        %v1051 = vshrl.u32 %v1050, 7
        %v1052 = vsub.s32 0, %v1051
        %v1053 = vrot.slane %v1048, %v1052
        %v1055 = vmul.f32 %v1046, %v1053
        %v1056 = vmul.f32 %v1047, %v1053
        %v1057 = vld [vmem:[%s12] sm:$0x1]
        %v1059 = vlaneseq
        %v1060 = vshrl.u32 %v1059, 7
        %v1061 = vsub.s32 0, %v1060
        %v1062 = vrot.slane %v1057, %v1061
        %v1064 = vadd.f32 %v1055, %v1062
        %v1065 = vadd.f32 %v1056, %v1062
        %1066 = vst.msk [vmem:[%s605] sm:$0xff] %vm637, %v1064
        %1067 = vst.msk [vmem:[%s605 + $0x8] sm:$0xff] %vm637, %v1065
      $region84: #{transformer_forward.11} parent=71 // pred_fallthru
        _
      %p1068 = scmp.lt.s32.totalorder %s28, 1
      %s1069 = scalar_select %p1068, %s28, 1
      %s1070 = smul.addr %s1069, 2
      %s1071 = smul.addr %s1070, 8
      %s1072 = scalar_lea.vmem %s13, %s1071
      // Predicated region
      $region85: #{transformer_forward.11} parent=71 // pred_check
        %p1073 = pneg %p377
      $region86: #{transformer_forward.11} parent=71 // pred_check_branch
        %1075 = sbr.rel (%p1073) target = $region88
      $region87: #{transformer_forward.11} parent=71 // pred_region
        _
      $region88: #{transformer_forward.11} parent=71 // pred_fallthru
        _
    $region72: #{transformer_forward.11} parent=5 // pred_fallthru
      _
    %p1076 = scmp.le.s32.totalorder 2, %s19
    // Predicated region
    $region89: #{transformer_forward.11} parent=5 // pred_check
      %p1077 = pneg %p1076
    $region90: #{transformer_forward.11} parent=5 // pred_check_branch
      %1079 = sbr.rel (%p1077) target = $region92
    $region91: #{transformer_forward.11} parent=5 // pred_region
      %s1080 = ssub.s32 %s19, 2
      // Predicated region
      $region93: #{transformer_forward.11} parent=91 // pred_check
        %p1081 = pneg %p383
      $region94: #{transformer_forward.11} parent=91 // pred_check_branch
        %1083 = sbr.rel (%p1081) target = $region96
      $region95: #{transformer_forward.11} parent=91 // pred_region
        %p1084 = scmp.lt.s32.totalorder %s30, 1
        %s1085 = scalar_select %p1084, %s30, 1
        %s1086 = smul.addr %s1085, 2
        %s1087 = smul.addr %s1086, 8
        %s1088 = scalar_lea.vmem %s13, %s1087
      $region96: #{transformer_forward.11} parent=91 // pred_fallthru
        _
    $region92: #{transformer_forward.11} parent=5 // pred_fallthru
      _
  $region6: #{transformer_forward.11} parent=0 // loop_footer
    %s23 = sadd.s32 1, %s19
  $region7: #{transformer_forward.11} parent=0 // loop_footer_branch
    %18 = sbr.rel target = $region3
  $region8: #{transformer_forward.11} parent=0 // loop_exit
    _

// kernel: transformer_forward.18
$region0: #{transformer_forward.18}
  #allocation0 [shape = 'u32[]', space=smem, size = 0x4, offset = 0x4, fixed_abs, tag = 'smem constant byte address 0x4 - core index']
  #allocation1 [shape = 'u32[144,128]{1,0:T(1,128)}', space=vmem, size = 0x12000, scoped, tag = 'internal scratch']
  %s0 = inlined_call_operand.vmem [shape: f32[16,32], index: 0, kind: input, shape index: {}]
  %s1 = inlined_call_operand.vmem [shape: bf16[32,64], index: 1, kind: input, shape index: {}]
  %s2 = inlined_call_operand.vmem [shape: f32[1,64], index: 2, kind: input, shape index: {}]
  %s3 = inlined_call_operand.vmem [shape: bf16[64,32], index: 3, kind: input, shape index: {}]
  %s4 = inlined_call_operand.vmem [shape: f32[1,32], index: 4, kind: input, shape index: {}]
  %s5 = inlined_call_operand.vmem [shape: f32[1,32], index: 5, kind: input, shape index: {}]
  %s6 = inlined_call_operand.vmem [shape: f32[1,32], index: 6, kind: input, shape index: {}]
  %s7 = inlined_call_operand.vmem [shape: f32[16,32], index: 7, kind: output, shape index: {}]
  %s8 = sld [smem:[#allocation0]]
  $region38: #{transformer_forward.18} parent=0
    _
  %s10 = ssub.s32 1, %s8
  %s11 = scalar_select 0, %s10, %s8
  // Predicated region
  $region2: #{transformer_forward.18} parent=0 // pred_check
    _
  $region3: #{transformer_forward.18} parent=0 // pred_check_branch
    %13 = sbr.rel (0) target = $region5
  $region4: #{transformer_forward.18} parent=0 // pred_region
    _
  $region5: #{transformer_forward.18} parent=0 // pred_fallthru
    _
  // Predicated region
  $region6: #{transformer_forward.18} parent=0 // pred_check
    _
  $region7: #{transformer_forward.18} parent=0 // pred_check_branch
    %15 = sbr.rel (0) target = $region9
  $region8: #{transformer_forward.18} parent=0 // pred_region
    _
  $region9: #{transformer_forward.18} parent=0 // pred_fallthru
    _
  // Predicated region
  $region10: #{transformer_forward.18} parent=0 // pred_check
    _
  $region11: #{transformer_forward.18} parent=0 // pred_check_branch
    %17 = sbr.rel (0) target = $region13
  $region12: #{transformer_forward.18} parent=0 // pred_region
    _
  $region13: #{transformer_forward.18} parent=0 // pred_fallthru
    _
  // Predicated region
  $region14: #{transformer_forward.18} parent=0 // pred_check
    _
  $region15: #{transformer_forward.18} parent=0 // pred_check_branch
    %19 = sbr.rel (0) target = $region17
  $region16: #{transformer_forward.18} parent=0 // pred_region
    _
  $region17: #{transformer_forward.18} parent=0 // pred_fallthru
    _
  // Predicated region
  $region18: #{transformer_forward.18} parent=0 // pred_check
    _
  $region19: #{transformer_forward.18} parent=0 // pred_check_branch
    %21 = sbr.rel (0) target = $region21
  $region20: #{transformer_forward.18} parent=0 // pred_region
    _
  $region21: #{transformer_forward.18} parent=0 // pred_fallthru
    _
  // Predicated region
  $region22: #{transformer_forward.18} parent=0 // pred_check
    _
  $region23: #{transformer_forward.18} parent=0 // pred_check_branch
    %23 = sbr.rel (0) target = $region25
  $region24: #{transformer_forward.18} parent=0 // pred_region
    _
  $region25: #{transformer_forward.18} parent=0 // pred_fallthru
    _
  // Predicated region
  $region26: #{transformer_forward.18} parent=0 // pred_check
    _
  $region27: #{transformer_forward.18} parent=0 // pred_check_branch
    %25 = sbr.rel (0) target = $region29
  $region28: #{transformer_forward.18} parent=0 // pred_region
    _
  $region29: #{transformer_forward.18} parent=0 // pred_fallthru
    _
  %v27 = vld [vmem:[%s0] sm:$0xff]
  %v28 = vld [vmem:[%s0 + $0x8] sm:$0xff]
  %v29 = vpack.c.bf16 %v28, %v27
  %v30 = vld [vmem:[%s1] sm:$0xf]
  %v31 = vld [vmem:[%s1 + $0x4] sm:$0xf]
  %v32 = vld [vmem:[%s1 + $0x8] sm:$0xf]
  %v33 = vld [vmem:[%s1 + $0xc] sm:$0xf]
  %v34 = vld [vmem:[%s2] sm:$0x1]
  %v36 = vlaneseq
  %v37 = vshrl.u32 %v36, 7
  %v38 = vsub.s32 0, %v37
  %v39 = vrot.slane %v34, %v38
  %v45 = vunpack.c.l.b16 %v30
  %v46 = vunpack.c.l.b16 %v31
  %v47 = vunpack.c.l.b16 %v32
  %v48 = vunpack.c.l.b16 %v33
  %v49 = vpack.c.b16 %v46, %v45
  %v50 = vpack.c.b16 %v48, %v47
  %vm53 = vcmask 261120
  %v55 = vsel %vm53, %v29, 0
  %57 = vmatprep.subr.bf16.mxu0 0
  %58 = vmatpush1.bf16.msra.mxu0 0
  %59 = vmatprep.subr.bf16.mxu0 0
  %60 = vmatpush1.bf16.msra.mxu0 0
  %61 = vmatprep.subr.bf16.mxu0 0
  %62 = vmatpush1.bf16.msra.mxu0 0
  %63 = vmatprep.subr.bf16.mxu0 0
  %64 = vmatpush1.bf16.msra.mxu0 0
  %65 = vmatprep.subr.bf16.mxu0 0
  %66 = vmatpush1.bf16.msra.mxu0 0
  %67 = vmatprep.subr.bf16.mxu0 0
  %68 = vmatpush1.bf16.msra.mxu0 0
  %69 = vmatprep.subr.bf16.mxu0 0
  %70 = vmatpush1.bf16.msra.mxu0 %v50
  %71 = vmatprep.subr.bf16.mxu0 0
  %72 = vmatpush1.bf16.msra.mxu0 %v49
  %73 = vmatprep.subr.bf16.mxu0 0
  %74 = vmatpush2.bf16.msra.mxu0 0
  %75 = vmatprep.subr.bf16.mxu0 0
  %76 = vmatpush2.bf16.msra.mxu0 0
  %77 = vmatprep.subr.bf16.mxu0 0
  %78 = vmatpush2.bf16.msra.mxu0 0
  %79 = vmatprep.subr.bf16.mxu0 0
  %80 = vmatpush2.bf16.msra.mxu0 0
  %81 = vmatprep.subr.bf16.mxu0 0
  %82 = vmatpush2.bf16.msra.mxu0 0
  %83 = vmatprep.subr.bf16.mxu0 0
  %84 = vmatpush2.bf16.msra.mxu0 0
  %85 = vmatprep.subr.bf16.mxu0 0
  %86 = vmatpush2.bf16.msra.mxu0 0
  %87 = vmatprep.subr.bf16.mxu0 0
  %88 = vmatpush2.bf16.msra.mxu0 0
  %89 = vmatprep.mubr.bf16.mxu0 0
  %90 = vmatmul.mubr.bf16.gmra.mxu0 %v55
  %v91 = vpop.f32.mrf.mxu0
  %v92 = vadd.f32 %v39, %v91
  %v93 = vpop.f32.mrf.mxu0
  %v94 = vpop.f32.mrf.mxu0
  %v95 = vadd.f32 %v39, %v94
  %v96 = vpop.f32.mrf.mxu0
  %97 = vdwg.mxu0
  %v98 = vmax.f32 %v92, 0.0
  %v99 = vmax.f32 %v95, 0.0
  %v100 = vpack.c.bf16 %v99, %v98
  %v101 = vld [vmem:[%s3] sm:$0xf]
  %v102 = vld [vmem:[%s3 + $0x4] sm:$0xf]
  %v103 = vld [vmem:[%s3 + $0x8] sm:$0xf]
  %v104 = vld [vmem:[%s3 + $0xc] sm:$0xf]
  %v105 = vld [vmem:[%s3 + $0x10] sm:$0xf]
  %v106 = vld [vmem:[%s3 + $0x14] sm:$0xf]
  %v107 = vld [vmem:[%s3 + $0x18] sm:$0xf]
  %v108 = vld [vmem:[%s3 + $0x1c] sm:$0xf]
  %v109 = vld [vmem:[%s4] sm:$0x1]
  %v111 = vlaneseq
  %v112 = vshrl.u32 %v111, 7
  %v113 = vsub.s32 0, %v112
  %v114 = vrot.slane %v109, %v113
  %v124 = vunpack.c.l.b16 %v101
  %v125 = vunpack.c.l.b16 %v102
  %v126 = vunpack.c.l.b16 %v103
  %v127 = vunpack.c.l.b16 %v104
  %v128 = vunpack.c.l.b16 %v105
  %v129 = vunpack.c.l.b16 %v106
  %v130 = vunpack.c.l.b16 %v107
  %v131 = vunpack.c.l.b16 %v108
  %v132 = vpack.c.b16 %v125, %v124
  %v133 = vpack.c.b16 %v127, %v126
  %v134 = vpack.c.b16 %v129, %v128
  %v135 = vpack.c.b16 %v131, %v130
  %vm140 = vcmask 523264
  %v142 = vsel %vm140, %v100, 0
  %144 = vmatprep.subr.bf16.mxu0 0
  %145 = vmatpush1.bf16.msra.mxu0 0
  %146 = vmatprep.subr.bf16.mxu0 0
  %147 = vmatpush1.bf16.msra.mxu0 0
  %148 = vmatprep.subr.bf16.mxu0 0
  %149 = vmatpush1.bf16.msra.mxu0 0
  %150 = vmatprep.subr.bf16.mxu0 0
  %151 = vmatpush1.bf16.msra.mxu0 0
  %152 = vmatprep.subr.bf16.mxu0 0
  %153 = vmatpush1.bf16.msra.mxu0 %v135
  %154 = vmatprep.subr.bf16.mxu0 0
  %155 = vmatpush1.bf16.msra.mxu0 %v134
  %156 = vmatprep.subr.bf16.mxu0 0
  %157 = vmatpush1.bf16.msra.mxu0 %v133
  %158 = vmatprep.subr.bf16.mxu0 0
  %159 = vmatpush1.bf16.msra.mxu0 %v132
  %160 = vmatprep.subr.bf16.mxu0 0
  %161 = vmatpush2.bf16.msra.mxu0 0
  %162 = vmatprep.subr.bf16.mxu0 0
  %163 = vmatpush2.bf16.msra.mxu0 0
  %164 = vmatprep.subr.bf16.mxu0 0
  %165 = vmatpush2.bf16.msra.mxu0 0
  %166 = vmatprep.subr.bf16.mxu0 0
  %167 = vmatpush2.bf16.msra.mxu0 0
  %168 = vmatprep.subr.bf16.mxu0 0
  %169 = vmatpush2.bf16.msra.mxu0 0
  %170 = vmatprep.subr.bf16.mxu0 0
  %171 = vmatpush2.bf16.msra.mxu0 0
  %172 = vmatprep.subr.bf16.mxu0 0
  %173 = vmatpush2.bf16.msra.mxu0 0
  %174 = vmatprep.subr.bf16.mxu0 0
  %175 = vmatpush2.bf16.msra.mxu0 0
  %176 = vmatprep.mubr.bf16.mxu0 0
  %177 = vmatmul.mubr.bf16.gmra.mxu0 %v142
  %v178 = vpop.f32.mrf.mxu0
  %v179 = vadd.f32 %v114, %v178
  %v180 = vpop.f32.mrf.mxu0
  %v181 = vpop.f32.mrf.mxu0
  %v182 = vadd.f32 %v114, %v181
  %v183 = vpop.f32.mrf.mxu0
  %184 = vdwg.mxu0
  %v185 = vadd.f32 %v179, %v27
  %v186 = vadd.f32 %v182, %v28
  %v187 = vsel %vm53, %v185, 0.0
  %188 = vadd.xlane.f32.xlu0 %v187
  %v189 = vpop.xlane.xlu0 %188
  %v190 = vsel %vm53, %v186, 0.0
  %191 = vadd.xlane.f32.xlu0 %v190
  %v192 = vpop.xlane.xlu0 %191
  %v193 = vrcp.pop 32.0
  %v194 = vmul.f32 %v189, %v193
  %v195 = vmul.f32 %v192, %v193
  %v196 = vsub.f32 %v185, %v194
  %v197 = vsub.f32 %v186, %v195
  %v198 = vmul.f32 %v196, %v196
  %v199 = vmul.f32 %v197, %v197
  %v200 = vsel %vm53, %v198, 0.0
  %201 = vadd.xlane.f32.xlu0 %v200
  %v202 = vpop.xlane.xlu0 %201
  %v203 = vsel %vm53, %v199, 0.0
  %204 = vadd.xlane.f32.xlu0 %v203
  %v205 = vpop.xlane.xlu0 %204
  %v206 = vmul.f32 %v202, %v193
  %v207 = vmul.f32 %v205, %v193
  %v208 = vadd.f32 %v206, 1e-05
  %v209 = vadd.f32 %v207, 1e-05
  %v210 = vrsqrt.pop %v208
  %v211 = vrsqrt.pop %v209
  %v212 = vmul.f32 %v196, %v210
  %v213 = vmul.f32 %v197, %v211
  %v214 = vld [vmem:[%s5] sm:$0x1]
  %v216 = vlaneseq
  %v217 = vshrl.u32 %v216, 7
  %v218 = vsub.s32 0, %v217
  %v219 = vrot.slane %v214, %v218
  %v221 = vmul.f32 %v212, %v219
  %v222 = vmul.f32 %v213, %v219
  %v223 = vld [vmem:[%s6] sm:$0x1]
  %v225 = vlaneseq
  %v226 = vshrl.u32 %v225, 7
  %v227 = vsub.s32 0, %v226
  %v228 = vrot.slane %v223, %v227
  %v230 = vadd.f32 %v221, %v228
  %v231 = vadd.f32 %v222, %v228
  %232 = vst.msk [vmem:[%s7] sm:$0xff] %vm53, %v230
  %233 = vst.msk [vmem:[%s7 + $0x8] sm:$0xff] %vm53, %v231
  // Predicated region
  $region30: #{transformer_forward.18} parent=0 // pred_check
    _
  $region31: #{transformer_forward.18} parent=0 // pred_check_branch
    %235 = sbr.rel (0) target = $region33
  $region32: #{transformer_forward.18} parent=0 // pred_region
    _
  $region33: #{transformer_forward.18} parent=0 // pred_fallthru
    _
  // Predicated region
  $region34: #{transformer_forward.18} parent=0 // pred_check
    _
  $region35: #{transformer_forward.18} parent=0 // pred_check_branch
    %237 = sbr.rel (0) target = $region37
  $region36: #{transformer_forward.18} parent=0 // pred_region
    _
  $region37: #{transformer_forward.18} parent=0 // pred_fallthru
    _

// kernel: transformer_forward.21
$region0: #{transformer_forward.21}
  #allocation0 [shape = 'u32[]', space=smem, size = 0x4, offset = 0x4, fixed_abs, tag = 'smem constant byte address 0x4 - core index']
  #allocation1 [shape = 'u32[144,128]{1,0:T(1,128)}', space=vmem, size = 0x12000, scoped, tag = 'internal scratch']
  %s0 = inlined_call_operand.vmem [shape: f32[16,32], index: 0, kind: input, shape index: {}]
  %s1 = inlined_call_operand.vmem [shape: bf16[32,64], index: 1, kind: input, shape index: {}]
  %s2 = inlined_call_operand.vmem [shape: f32[1,64], index: 2, kind: input, shape index: {}]
  %s3 = inlined_call_operand.vmem [shape: bf16[64,32], index: 3, kind: input, shape index: {}]
  %s4 = inlined_call_operand.vmem [shape: f32[1,32], index: 4, kind: input, shape index: {}]
  %s5 = inlined_call_operand.vmem [shape: f32[1,32], index: 5, kind: input, shape index: {}]
  %s6 = inlined_call_operand.vmem [shape: f32[1,32], index: 6, kind: input, shape index: {}]
  %s7 = inlined_call_operand.hbm [shape: f32[16,32], index: 7, kind: output, shape index: {}]
  %s8 = sld [smem:[#allocation0]]
  $region38: #{transformer_forward.21} parent=0
    _
  %s10 = ssub.s32 1, %s8
  %s11 = scalar_select 0, %s10, %s8
  $region1: #{transformer_forward.21} parent=0
    #allocation2 [shape = 'u8[8192]{0}', space=vmem, size = 0x2000, scoped, tag = 'output window, operand 0, single buffered']
    #allocation3 [shape = 's32[1]{0}', space=sflag, size = 0x4, scoped, tag = 'scoped memory for transformer_forward.21']
    %12 = vsyncpa [#allocation3], 0
    // Predicated region
    $region2: #{transformer_forward.21} parent=1 // pred_check
      _
    $region3: #{transformer_forward.21} parent=1 // pred_check_branch
      %14 = sbr.rel (0) target = $region5
    $region4: #{transformer_forward.21} parent=1 // pred_region
      _
    $region5: #{transformer_forward.21} parent=1 // pred_fallthru
      _
    // Predicated region
    $region6: #{transformer_forward.21} parent=1 // pred_check
      _
    $region7: #{transformer_forward.21} parent=1 // pred_check_branch
      %16 = sbr.rel (0) target = $region9
    $region8: #{transformer_forward.21} parent=1 // pred_region
      _
    $region9: #{transformer_forward.21} parent=1 // pred_fallthru
      _
    // Predicated region
    $region10: #{transformer_forward.21} parent=1 // pred_check
      _
    $region11: #{transformer_forward.21} parent=1 // pred_check_branch
      %18 = sbr.rel (0) target = $region13
    $region12: #{transformer_forward.21} parent=1 // pred_region
      _
    $region13: #{transformer_forward.21} parent=1 // pred_fallthru
      _
    // Predicated region
    $region14: #{transformer_forward.21} parent=1 // pred_check
      _
    $region15: #{transformer_forward.21} parent=1 // pred_check_branch
      %20 = sbr.rel (0) target = $region17
    $region16: #{transformer_forward.21} parent=1 // pred_region
      _
    $region17: #{transformer_forward.21} parent=1 // pred_fallthru
      _
    // Predicated region
    $region18: #{transformer_forward.21} parent=1 // pred_check
      _
    $region19: #{transformer_forward.21} parent=1 // pred_check_branch
      %22 = sbr.rel (0) target = $region21
    $region20: #{transformer_forward.21} parent=1 // pred_region
      _
    $region21: #{transformer_forward.21} parent=1 // pred_fallthru
      _
    // Predicated region
    $region22: #{transformer_forward.21} parent=1 // pred_check
      _
    $region23: #{transformer_forward.21} parent=1 // pred_check_branch
      %24 = sbr.rel (0) target = $region25
    $region24: #{transformer_forward.21} parent=1 // pred_region
      _
    $region25: #{transformer_forward.21} parent=1 // pred_fallthru
      _
    // Predicated region
    $region26: #{transformer_forward.21} parent=1 // pred_check
      _
    $region27: #{transformer_forward.21} parent=1 // pred_check_branch
      %26 = sbr.rel (0) target = $region29
    $region28: #{transformer_forward.21} parent=1 // pred_region
      _
    $region29: #{transformer_forward.21} parent=1 // pred_fallthru
      _
    %v28 = vld [vmem:[%s0] sm:$0xff]
    %v29 = vld [vmem:[%s0 + $0x8] sm:$0xff]
    %v30 = vpack.c.bf16 %v29, %v28
    %v31 = vld [vmem:[%s1] sm:$0xf]
    %v32 = vld [vmem:[%s1 + $0x4] sm:$0xf]
    %v33 = vld [vmem:[%s1 + $0x8] sm:$0xf]
    %v34 = vld [vmem:[%s1 + $0xc] sm:$0xf]
    %v35 = vld [vmem:[%s2] sm:$0x1]
    %v37 = vlaneseq
    %v38 = vshrl.u32 %v37, 7
    %v39 = vsub.s32 0, %v38
    %v40 = vrot.slane %v35, %v39
    %v46 = vunpack.c.l.b16 %v31
    %v47 = vunpack.c.l.b16 %v32
    %v48 = vunpack.c.l.b16 %v33
    %v49 = vunpack.c.l.b16 %v34
    %v50 = vpack.c.b16 %v47, %v46
    %v51 = vpack.c.b16 %v49, %v48
    %vm54 = vcmask 261120
    %v56 = vsel %vm54, %v30, 0
    %58 = vmatprep.subr.bf16.mxu0 0
    %59 = vmatpush1.bf16.msra.mxu0 0
    %60 = vmatprep.subr.bf16.mxu0 0
    %61 = vmatpush1.bf16.msra.mxu0 0
    %62 = vmatprep.subr.bf16.mxu0 0
    %63 = vmatpush1.bf16.msra.mxu0 0
    %64 = vmatprep.subr.bf16.mxu0 0
    %65 = vmatpush1.bf16.msra.mxu0 0
    %66 = vmatprep.subr.bf16.mxu0 0
    %67 = vmatpush1.bf16.msra.mxu0 0
    %68 = vmatprep.subr.bf16.mxu0 0
    %69 = vmatpush1.bf16.msra.mxu0 0
    %70 = vmatprep.subr.bf16.mxu0 0
    %71 = vmatpush1.bf16.msra.mxu0 %v51
    %72 = vmatprep.subr.bf16.mxu0 0
    %73 = vmatpush1.bf16.msra.mxu0 %v50
    %74 = vmatprep.subr.bf16.mxu0 0
    %75 = vmatpush2.bf16.msra.mxu0 0
    %76 = vmatprep.subr.bf16.mxu0 0
    %77 = vmatpush2.bf16.msra.mxu0 0
    %78 = vmatprep.subr.bf16.mxu0 0
    %79 = vmatpush2.bf16.msra.mxu0 0
    %80 = vmatprep.subr.bf16.mxu0 0
    %81 = vmatpush2.bf16.msra.mxu0 0
    %82 = vmatprep.subr.bf16.mxu0 0
    %83 = vmatpush2.bf16.msra.mxu0 0
    %84 = vmatprep.subr.bf16.mxu0 0
    %85 = vmatpush2.bf16.msra.mxu0 0
    %86 = vmatprep.subr.bf16.mxu0 0
    %87 = vmatpush2.bf16.msra.mxu0 0
    %88 = vmatprep.subr.bf16.mxu0 0
    %89 = vmatpush2.bf16.msra.mxu0 0
    %90 = vmatprep.mubr.bf16.mxu0 0
    %91 = vmatmul.mubr.bf16.gmra.mxu0 %v56
    %v92 = vpop.f32.mrf.mxu0
    %v93 = vadd.f32 %v40, %v92
    %v94 = vpop.f32.mrf.mxu0
    %v95 = vpop.f32.mrf.mxu0
    %v96 = vadd.f32 %v40, %v95
    %v97 = vpop.f32.mrf.mxu0
    %98 = vdwg.mxu0
    %v99 = vmax.f32 %v93, 0.0
    %v100 = vmax.f32 %v96, 0.0
    %v101 = vpack.c.bf16 %v100, %v99
    %v102 = vld [vmem:[%s3] sm:$0xf]
    %v103 = vld [vmem:[%s3 + $0x4] sm:$0xf]
    %v104 = vld [vmem:[%s3 + $0x8] sm:$0xf]
    %v105 = vld [vmem:[%s3 + $0xc] sm:$0xf]
    %v106 = vld [vmem:[%s3 + $0x10] sm:$0xf]
    %v107 = vld [vmem:[%s3 + $0x14] sm:$0xf]
    %v108 = vld [vmem:[%s3 + $0x18] sm:$0xf]
    %v109 = vld [vmem:[%s3 + $0x1c] sm:$0xf]
    %v110 = vld [vmem:[%s4] sm:$0x1]
    %v112 = vlaneseq
    %v113 = vshrl.u32 %v112, 7
    %v114 = vsub.s32 0, %v113
    %v115 = vrot.slane %v110, %v114
    %v125 = vunpack.c.l.b16 %v102
    %v126 = vunpack.c.l.b16 %v103
    %v127 = vunpack.c.l.b16 %v104
    %v128 = vunpack.c.l.b16 %v105
    %v129 = vunpack.c.l.b16 %v106
    %v130 = vunpack.c.l.b16 %v107
    %v131 = vunpack.c.l.b16 %v108
    %v132 = vunpack.c.l.b16 %v109
    %v133 = vpack.c.b16 %v126, %v125
    %v134 = vpack.c.b16 %v128, %v127
    %v135 = vpack.c.b16 %v130, %v129
    %v136 = vpack.c.b16 %v132, %v131
    %vm141 = vcmask 523264
    %v143 = vsel %vm141, %v101, 0
    %145 = vmatprep.subr.bf16.mxu0 0
    %146 = vmatpush1.bf16.msra.mxu0 0
    %147 = vmatprep.subr.bf16.mxu0 0
    %148 = vmatpush1.bf16.msra.mxu0 0
    %149 = vmatprep.subr.bf16.mxu0 0
    %150 = vmatpush1.bf16.msra.mxu0 0
    %151 = vmatprep.subr.bf16.mxu0 0
    %152 = vmatpush1.bf16.msra.mxu0 0
    %153 = vmatprep.subr.bf16.mxu0 0
    %154 = vmatpush1.bf16.msra.mxu0 %v136
    %155 = vmatprep.subr.bf16.mxu0 0
    %156 = vmatpush1.bf16.msra.mxu0 %v135
    %157 = vmatprep.subr.bf16.mxu0 0
    %158 = vmatpush1.bf16.msra.mxu0 %v134
    %159 = vmatprep.subr.bf16.mxu0 0
    %160 = vmatpush1.bf16.msra.mxu0 %v133
    %161 = vmatprep.subr.bf16.mxu0 0
    %162 = vmatpush2.bf16.msra.mxu0 0
    %163 = vmatprep.subr.bf16.mxu0 0
    %164 = vmatpush2.bf16.msra.mxu0 0
    %165 = vmatprep.subr.bf16.mxu0 0
    %166 = vmatpush2.bf16.msra.mxu0 0
    %167 = vmatprep.subr.bf16.mxu0 0
    %168 = vmatpush2.bf16.msra.mxu0 0
    %169 = vmatprep.subr.bf16.mxu0 0
    %170 = vmatpush2.bf16.msra.mxu0 0
    %171 = vmatprep.subr.bf16.mxu0 0
    %172 = vmatpush2.bf16.msra.mxu0 0
    %173 = vmatprep.subr.bf16.mxu0 0
    %174 = vmatpush2.bf16.msra.mxu0 0
    %175 = vmatprep.subr.bf16.mxu0 0
    %176 = vmatpush2.bf16.msra.mxu0 0
    %177 = vmatprep.mubr.bf16.mxu0 0
    %178 = vmatmul.mubr.bf16.gmra.mxu0 %v143
    %v179 = vpop.f32.mrf.mxu0
    %v180 = vadd.f32 %v115, %v179
    %v181 = vpop.f32.mrf.mxu0
    %v182 = vpop.f32.mrf.mxu0
    %v183 = vadd.f32 %v115, %v182
    %v184 = vpop.f32.mrf.mxu0
    %185 = vdwg.mxu0
    %v186 = vadd.f32 %v180, %v28
    %v187 = vadd.f32 %v183, %v29
    %v188 = vsel %vm54, %v186, 0.0
    %189 = vadd.xlane.f32.xlu0 %v188
    %v190 = vpop.xlane.xlu0 %189
    %v191 = vsel %vm54, %v187, 0.0
    %192 = vadd.xlane.f32.xlu0 %v191
    %v193 = vpop.xlane.xlu0 %192
    %v194 = vrcp.pop 32.0
    %v195 = vmul.f32 %v190, %v194
    %v196 = vmul.f32 %v193, %v194
    %v197 = vsub.f32 %v186, %v195
    %v198 = vsub.f32 %v187, %v196
    %v199 = vmul.f32 %v197, %v197
    %v200 = vmul.f32 %v198, %v198
    %v201 = vsel %vm54, %v199, 0.0
    %202 = vadd.xlane.f32.xlu0 %v201
    %v203 = vpop.xlane.xlu0 %202
    %v204 = vsel %vm54, %v200, 0.0
    %205 = vadd.xlane.f32.xlu0 %v204
    %v206 = vpop.xlane.xlu0 %205
    %v207 = vmul.f32 %v203, %v194
    %v208 = vmul.f32 %v206, %v194
    %v209 = vadd.f32 %v207, 1e-05
    %v210 = vadd.f32 %v208, 1e-05
    %v211 = vrsqrt.pop %v209
    %v212 = vrsqrt.pop %v210
    %v213 = vmul.f32 %v197, %v211
    %v214 = vmul.f32 %v198, %v212
    %v215 = vld [vmem:[%s5] sm:$0x1]
    %v217 = vlaneseq
    %v218 = vshrl.u32 %v217, 7
    %v219 = vsub.s32 0, %v218
    %v220 = vrot.slane %v215, %v219
    %v222 = vmul.f32 %v213, %v220
    %v223 = vmul.f32 %v214, %v220
    %v224 = vld [vmem:[%s6] sm:$0x1]
    %v226 = vlaneseq
    %v227 = vshrl.u32 %v226, 7
    %v228 = vsub.s32 0, %v227
    %v229 = vrot.slane %v224, %v228
    %v231 = vadd.f32 %v222, %v229
    %v232 = vadd.f32 %v223, %v229
    %233 = vst.msk [vmem:[#allocation2] sm:$0xff] %vm54, %v231
    %234 = vst.msk [vmem:[#allocation2 + $0x8] sm:$0xff] %vm54, %v232
    // Predicated region
    $region30: #{transformer_forward.21} parent=1 // pred_check
      _
    $region31: #{transformer_forward.21} parent=1 // pred_check_branch
      %236 = sbr.rel (0) target = $region33
    $region32: #{transformer_forward.21} parent=1 // pred_region
      %s238 = ssub.s32 256, 256
      %239 = vsyncadd [#allocation3], %s238
      %s240 = sshll.u32 [#allocation2], 4
      %s241 = int_to_ptr.vmem [resolvable:$true] %s240
      %246 = dma.vmem_to_hbm [thread:$0]  %s241, 256, %s7, [#allocation3], 128, 128, 8
    $region33: #{transformer_forward.21} parent=1 // pred_fallthru
      _
    // Predicated region
    $region34: #{transformer_forward.21} parent=1 // pred_check
      _
    $region35: #{transformer_forward.21} parent=1 // pred_check_branch
      %248 = sbr.rel (0) target = $region37
    $region36: #{transformer_forward.21} parent=1 // pred_region
      %249 = dma.done [#allocation3], 256
    $region37: #{transformer_forward.21} parent=1 // pred_fallthru
      _
    %250 = vsyncpa [#allocation3], 1

// kernel: transformer_forward.16
$region0: #{transformer_forward.16}
  #allocation0 [shape = 'u32[]', space=smem, size = 0x4, offset = 0x4, fixed_abs, tag = 'smem constant byte address 0x4 - core index']
  #allocation1 [shape = 'u32[144,128]{1,0:T(1,128)}', space=vmem, size = 0x12000, scoped, tag = 'internal scratch']
  %s0 = inlined_call_operand.vmem [shape: f32[2,8,32], index: 0, kind: input, shape index: {}]
  %s1 = inlined_call_operand.vmem [shape: f32[2,8,32], index: 1, kind: input, shape index: {}]
  %s2 = inlined_call_operand.vmem [shape: bf16[4,32,8], index: 2, kind: input, shape index: {}]
  %s3 = inlined_call_operand.vmem [shape: f32[4,1,8], index: 3, kind: input, shape index: {}]
  %s4 = inlined_call_operand.vmem [shape: bf16[4,32,8], index: 4, kind: input, shape index: {}]
  %s5 = inlined_call_operand.vmem [shape: f32[4,1,8], index: 5, kind: input, shape index: {}]
  %s6 = inlined_call_operand.vmem [shape: bf16[4,32,8], index: 6, kind: input, shape index: {}]
  %s7 = inlined_call_operand.vmem [shape: f32[4,1,8], index: 7, kind: input, shape index: {}]
  %s8 = inlined_call_operand.vmem [shape: bf16[4,8,32], index: 8, kind: input, shape index: {}]
  %s9 = inlined_call_operand.vmem [shape: f32[1,32], index: 9, kind: input, shape index: {}]
  %s10 = inlined_call_operand.vmem [shape: f32[1,32], index: 10, kind: input, shape index: {}]
  %s11 = inlined_call_operand.vmem [shape: f32[1,32], index: 11, kind: input, shape index: {}]
  %s12 = inlined_call_operand.vmem [shape: f32[2,8,32], index: 12, kind: output, shape index: {}]
  %s13 = sld [smem:[#allocation0]]
  $region93: #{transformer_forward.16} parent=0
    _
  %s15 = ssub.s32 1, %s13
  %s16 = scalar_select 0, %s15, %s13
  loop: start=0, step=1, limit=10
  $region2: #{transformer_forward.16} parent=0 // loop_pre_header
    _
  $region3: #{transformer_forward.16} parent=0 // loop_header
    %s18 = sphi 0, %s22
    %p19 = scmp.ge.s32.totalorder %s18, 10
    %s25 = sphi 0, %s37
    %s26 = sphi 0, %s33
    %s27 = sphi 0, %s25
    %s28 = sphi 0, %s26
    %s29 = sphi 0, %s27
    %s30 = sphi 0, %s28
    %s40 = sphi 0, %s42
    %s43 = sphi 0, %s40
    %s44 = sphi 0, %s43
    %s60 = sphi 0, %s44
    %s66 = sphi 0, %s68
    %s69 = sphi 0, %s66
    %s70 = sphi 0, %s69
    %s86 = sphi 0, %s70
    %s92 = sphi 0, %s94
    %s95 = sphi 0, %s92
    %s96 = sphi 0, %s95
    %s112 = sphi 0, %s96
    %s118 = sphi 0, %s120
    %s121 = sphi 0, %s118
    %s122 = sphi 0, %s121
    %s138 = sphi 0, %s122
    %s144 = sphi 0, %s146
    %s147 = sphi 0, %s144
    %s148 = sphi 0, %s147
    %s164 = sphi 0, %s148
    %s170 = sphi 0, %s172
    %s173 = sphi 0, %s170
    %s174 = sphi 0, %s173
    %s190 = sphi 0, %s174
    %s196 = sphi 0, %s198
    %s199 = sphi 0, %s196
    %s200 = sphi 0, %s199
    %s216 = sphi 0, %s200
    %s222 = sphi 0, %s224
    %s225 = sphi 0, %s222
    %s226 = sphi 0, %s225
    %s242 = sphi 0, %s226
    %s248 = sphi 0, %s250
    %s251 = sphi 0, %s248
    %s252 = sphi 0, %s251
    %s268 = sphi 0, %s252
    %s272 = sphi 0, %s272
    %s274 = sphi 0, %s272
    %s275 = sphi 0, %s274
    %s289 = sphi 0, %s275
    %s293 = sphi 0, %s293
    %s295 = sphi 0, %s293
    %s296 = sphi 0, %s295
    %s310 = sphi 0, %s296
    %s314 = sphi 0, %s314
    %s316 = sphi 0, %s314
    %s317 = sphi 0, %s316
    %s331 = sphi 0, %s317
    %s337 = sphi 0, %s339
    %s340 = sphi 0, %s337
    %s341 = sphi 0, %s340
    %s357 = sphi 0, %s341
  $region4: #{transformer_forward.16} parent=0 // loop_header_branch
    %21 = sbr.rel (%p19) target = $region8
  $region5: #{transformer_forward.16} parent=0 // loop_body
    %s23 = ssub.s32 %s18, 1
    %s24 = ssub.s32 %s18, 2
    %s31 = sadd.s32 1, %s26
    %p32 = scmp.ge.s32.totalorder %s31, 4
    %s33 = scalar_select %p32, 0, %s31
    %s34 = sadd.s32 1, %s25
    %s35 = scalar_select %p32, %s34, %s25
    %p36 = scmp.ge.s32.totalorder %s35, 2
    %s37 = scalar_select %p36, 0, %s35
    %s38 = ssub.s32 %s25, %s37
    %p39 = scmp.eq.s32.totalorder %s38, 0
    %s41 = sadd.s32 %s40, 1
    %s42 = scalar_select %p39, %s40, %s41
    %p45 = pneg %p39
    %p46 = scmp.eq.s32.totalorder %s18, 7
    %p47 = por %p45, %p46
    %p48 = scmp.ne.s32.totalorder %s40, %s43
    %p49 = scmp.eq.s32.totalorder %s18, 0
    %p50 = por %p48, %p49
    %p51 = scmp.ne.s32.totalorder %s40, %s43
    %p52 = scmp.eq.s32.totalorder %s23, 7
    %p53 = por %p51, %p52
    %p54 = scmp.ne.s32.totalorder %s43, %s44
    %p55 = scmp.eq.s32.totalorder %s23, 0
    %p56 = por %p54, %p55
    %p57 = scmp.ne.s32.totalorder %s43, %s44
    %p58 = scmp.eq.s32.totalorder %s24, 7
    %p59 = por %p57, %p58
    %p61 = scmp.ne.s32.totalorder %s44, %s60
    %p62 = scmp.eq.s32.totalorder %s24, 0
    %p63 = por %p61, %p62
    %s64 = ssub.s32 %s25, %s37
    %p65 = scmp.eq.s32.totalorder %s64, 0
    %s67 = sadd.s32 %s66, 1
    %s68 = scalar_select %p65, %s66, %s67
    %p71 = pneg %p65
    %p72 = scmp.eq.s32.totalorder %s18, 7
    %p73 = por %p71, %p72
    %p74 = scmp.ne.s32.totalorder %s66, %s69
    %p75 = scmp.eq.s32.totalorder %s18, 0
    %p76 = por %p74, %p75
    %p77 = scmp.ne.s32.totalorder %s66, %s69
    %p78 = scmp.eq.s32.totalorder %s23, 7
    %p79 = por %p77, %p78
    %p80 = scmp.ne.s32.totalorder %s69, %s70
    %p81 = scmp.eq.s32.totalorder %s23, 0
    %p82 = por %p80, %p81
    %p83 = scmp.ne.s32.totalorder %s69, %s70
    %p84 = scmp.eq.s32.totalorder %s24, 7
    %p85 = por %p83, %p84
    %p87 = scmp.ne.s32.totalorder %s70, %s86
    %p88 = scmp.eq.s32.totalorder %s24, 0
    %p89 = por %p87, %p88
    %s90 = ssub.s32 %s26, %s33
    %p91 = scmp.eq.s32.totalorder %s90, 0
    %s93 = sadd.s32 %s92, 1
    %s94 = scalar_select %p91, %s92, %s93
    %p97 = pneg %p91
    %p98 = scmp.eq.s32.totalorder %s18, 7
    %p99 = por %p97, %p98
    %p100 = scmp.ne.s32.totalorder %s92, %s95
    %p101 = scmp.eq.s32.totalorder %s18, 0
    %p102 = por %p100, %p101
    %p103 = scmp.ne.s32.totalorder %s92, %s95
    %p104 = scmp.eq.s32.totalorder %s23, 7
    %p105 = por %p103, %p104
    %p106 = scmp.ne.s32.totalorder %s95, %s96
    %p107 = scmp.eq.s32.totalorder %s23, 0
    %p108 = por %p106, %p107
    %p109 = scmp.ne.s32.totalorder %s95, %s96
    %p110 = scmp.eq.s32.totalorder %s24, 7
    %p111 = por %p109, %p110
    %p113 = scmp.ne.s32.totalorder %s96, %s112
    %p114 = scmp.eq.s32.totalorder %s24, 0
    %p115 = por %p113, %p114
    %s116 = ssub.s32 %s26, %s33
    %p117 = scmp.eq.s32.totalorder %s116, 0
    %s119 = sadd.s32 %s118, 1
    %s120 = scalar_select %p117, %s118, %s119
    %p123 = pneg %p117
    %p124 = scmp.eq.s32.totalorder %s18, 7
    %p125 = por %p123, %p124
    %p126 = scmp.ne.s32.totalorder %s118, %s121
    %p127 = scmp.eq.s32.totalorder %s18, 0
    %p128 = por %p126, %p127
    %p129 = scmp.ne.s32.totalorder %s118, %s121
    %p130 = scmp.eq.s32.totalorder %s23, 7
    %p131 = por %p129, %p130
    %p132 = scmp.ne.s32.totalorder %s121, %s122
    %p133 = scmp.eq.s32.totalorder %s23, 0
    %p134 = por %p132, %p133
    %p135 = scmp.ne.s32.totalorder %s121, %s122
    %p136 = scmp.eq.s32.totalorder %s24, 7
    %p137 = por %p135, %p136
    %p139 = scmp.ne.s32.totalorder %s122, %s138
    %p140 = scmp.eq.s32.totalorder %s24, 0
    %p141 = por %p139, %p140
    %s142 = ssub.s32 %s26, %s33
    %p143 = scmp.eq.s32.totalorder %s142, 0
    %s145 = sadd.s32 %s144, 1
    %s146 = scalar_select %p143, %s144, %s145
    %p149 = pneg %p143
    %p150 = scmp.eq.s32.totalorder %s18, 7
    %p151 = por %p149, %p150
    %p152 = scmp.ne.s32.totalorder %s144, %s147
    %p153 = scmp.eq.s32.totalorder %s18, 0
    %p154 = por %p152, %p153
    %p155 = scmp.ne.s32.totalorder %s144, %s147
    %p156 = scmp.eq.s32.totalorder %s23, 7
    %p157 = por %p155, %p156
    %p158 = scmp.ne.s32.totalorder %s147, %s148
    %p159 = scmp.eq.s32.totalorder %s23, 0
    %p160 = por %p158, %p159
    %p161 = scmp.ne.s32.totalorder %s147, %s148
    %p162 = scmp.eq.s32.totalorder %s24, 7
    %p163 = por %p161, %p162
    %p165 = scmp.ne.s32.totalorder %s148, %s164
    %p166 = scmp.eq.s32.totalorder %s24, 0
    %p167 = por %p165, %p166
    %s168 = ssub.s32 %s26, %s33
    %p169 = scmp.eq.s32.totalorder %s168, 0
    %s171 = sadd.s32 %s170, 1
    %s172 = scalar_select %p169, %s170, %s171
    %p175 = pneg %p169
    %p176 = scmp.eq.s32.totalorder %s18, 7
    %p177 = por %p175, %p176
    %p178 = scmp.ne.s32.totalorder %s170, %s173
    %p179 = scmp.eq.s32.totalorder %s18, 0
    %p180 = por %p178, %p179
    %p181 = scmp.ne.s32.totalorder %s170, %s173
    %p182 = scmp.eq.s32.totalorder %s23, 7
    %p183 = por %p181, %p182
    %p184 = scmp.ne.s32.totalorder %s173, %s174
    %p185 = scmp.eq.s32.totalorder %s23, 0
    %p186 = por %p184, %p185
    %p187 = scmp.ne.s32.totalorder %s173, %s174
    %p188 = scmp.eq.s32.totalorder %s24, 7
    %p189 = por %p187, %p188
    %p191 = scmp.ne.s32.totalorder %s174, %s190
    %p192 = scmp.eq.s32.totalorder %s24, 0
    %p193 = por %p191, %p192
    %s194 = ssub.s32 %s26, %s33
    %p195 = scmp.eq.s32.totalorder %s194, 0
    %s197 = sadd.s32 %s196, 1
    %s198 = scalar_select %p195, %s196, %s197
    %p201 = pneg %p195
    %p202 = scmp.eq.s32.totalorder %s18, 7
    %p203 = por %p201, %p202
    %p204 = scmp.ne.s32.totalorder %s196, %s199
    %p205 = scmp.eq.s32.totalorder %s18, 0
    %p206 = por %p204, %p205
    %p207 = scmp.ne.s32.totalorder %s196, %s199
    %p208 = scmp.eq.s32.totalorder %s23, 7
    %p209 = por %p207, %p208
    %p210 = scmp.ne.s32.totalorder %s199, %s200
    %p211 = scmp.eq.s32.totalorder %s23, 0
    %p212 = por %p210, %p211
    %p213 = scmp.ne.s32.totalorder %s199, %s200
    %p214 = scmp.eq.s32.totalorder %s24, 7
    %p215 = por %p213, %p214
    %p217 = scmp.ne.s32.totalorder %s200, %s216
    %p218 = scmp.eq.s32.totalorder %s24, 0
    %p219 = por %p217, %p218
    %s220 = ssub.s32 %s26, %s33
    %p221 = scmp.eq.s32.totalorder %s220, 0
    %s223 = sadd.s32 %s222, 1
    %s224 = scalar_select %p221, %s222, %s223
    %p227 = pneg %p221
    %p228 = scmp.eq.s32.totalorder %s18, 7
    %p229 = por %p227, %p228
    %p230 = scmp.ne.s32.totalorder %s222, %s225
    %p231 = scmp.eq.s32.totalorder %s18, 0
    %p232 = por %p230, %p231
    %p233 = scmp.ne.s32.totalorder %s222, %s225
    %p234 = scmp.eq.s32.totalorder %s23, 7
    %p235 = por %p233, %p234
    %p236 = scmp.ne.s32.totalorder %s225, %s226
    %p237 = scmp.eq.s32.totalorder %s23, 0
    %p238 = por %p236, %p237
    %p239 = scmp.ne.s32.totalorder %s225, %s226
    %p240 = scmp.eq.s32.totalorder %s24, 7
    %p241 = por %p239, %p240
    %p243 = scmp.ne.s32.totalorder %s226, %s242
    %p244 = scmp.eq.s32.totalorder %s24, 0
    %p245 = por %p243, %p244
    %s246 = ssub.s32 %s26, %s33
    %p247 = scmp.eq.s32.totalorder %s246, 0
    %s249 = sadd.s32 %s248, 1
    %s250 = scalar_select %p247, %s248, %s249
    %p253 = pneg %p247
    %p254 = scmp.eq.s32.totalorder %s18, 7
    %p255 = por %p253, %p254
    %p256 = scmp.ne.s32.totalorder %s248, %s251
    %p257 = scmp.eq.s32.totalorder %s18, 0
    %p258 = por %p256, %p257
    %p259 = scmp.ne.s32.totalorder %s248, %s251
    %p260 = scmp.eq.s32.totalorder %s23, 7
    %p261 = por %p259, %p260
    %p262 = scmp.ne.s32.totalorder %s251, %s252
    %p263 = scmp.eq.s32.totalorder %s23, 0
    %p264 = por %p262, %p263
    %p265 = scmp.ne.s32.totalorder %s251, %s252
    %p266 = scmp.eq.s32.totalorder %s24, 7
    %p267 = por %p265, %p266
    %p269 = scmp.ne.s32.totalorder %s252, %s268
    %p270 = scmp.eq.s32.totalorder %s24, 0
    %p271 = por %p269, %p270
    %s273 = sadd.s32 %s272, 1
    %p276 = scmp.eq.s32.totalorder %s18, 7
    %p277 = scmp.ne.s32.totalorder %s272, %s274
    %p278 = scmp.eq.s32.totalorder %s18, 0
    %p279 = por %p277, %p278
    %p280 = scmp.ne.s32.totalorder %s272, %s274
    %p281 = scmp.eq.s32.totalorder %s23, 7
    %p282 = por %p280, %p281
    %p283 = scmp.ne.s32.totalorder %s274, %s275
    %p284 = scmp.eq.s32.totalorder %s23, 0
    %p285 = por %p283, %p284
    %p286 = scmp.ne.s32.totalorder %s274, %s275
    %p287 = scmp.eq.s32.totalorder %s24, 7
    %p288 = por %p286, %p287
    %p290 = scmp.ne.s32.totalorder %s275, %s289
    %p291 = scmp.eq.s32.totalorder %s24, 0
    %p292 = por %p290, %p291
    %s294 = sadd.s32 %s293, 1
    %p297 = scmp.eq.s32.totalorder %s18, 7
    %p298 = scmp.ne.s32.totalorder %s293, %s295
    %p299 = scmp.eq.s32.totalorder %s18, 0
    %p300 = por %p298, %p299
    %p301 = scmp.ne.s32.totalorder %s293, %s295
    %p302 = scmp.eq.s32.totalorder %s23, 7
    %p303 = por %p301, %p302
    %p304 = scmp.ne.s32.totalorder %s295, %s296
    %p305 = scmp.eq.s32.totalorder %s23, 0
    %p306 = por %p304, %p305
    %p307 = scmp.ne.s32.totalorder %s295, %s296
    %p308 = scmp.eq.s32.totalorder %s24, 7
    %p309 = por %p307, %p308
    %p311 = scmp.ne.s32.totalorder %s296, %s310
    %p312 = scmp.eq.s32.totalorder %s24, 0
    %p313 = por %p311, %p312
    %s315 = sadd.s32 %s314, 1
    %p318 = scmp.eq.s32.totalorder %s18, 7
    %p319 = scmp.ne.s32.totalorder %s314, %s316
    %p320 = scmp.eq.s32.totalorder %s18, 0
    %p321 = por %p319, %p320
    %p322 = scmp.ne.s32.totalorder %s314, %s316
    %p323 = scmp.eq.s32.totalorder %s23, 7
    %p324 = por %p322, %p323
    %p325 = scmp.ne.s32.totalorder %s316, %s317
    %p326 = scmp.eq.s32.totalorder %s23, 0
    %p327 = por %p325, %p326
    %p328 = scmp.ne.s32.totalorder %s316, %s317
    %p329 = scmp.eq.s32.totalorder %s24, 7
    %p330 = por %p328, %p329
    %p332 = scmp.ne.s32.totalorder %s317, %s331
    %p333 = scmp.eq.s32.totalorder %s24, 0
    %p334 = por %p332, %p333
    %s335 = ssub.s32 %s25, %s37
    %p336 = scmp.eq.s32.totalorder %s335, 0
    %s338 = sadd.s32 %s337, 1
    %s339 = scalar_select %p336, %s337, %s338
    %p342 = pneg %p336
    %p343 = scmp.eq.s32.totalorder %s18, 7
    %p344 = por %p342, %p343
    %p345 = scmp.ne.s32.totalorder %s337, %s340
    %p346 = scmp.eq.s32.totalorder %s18, 0
    %p347 = por %p345, %p346
    %p348 = scmp.ne.s32.totalorder %s337, %s340
    %p349 = scmp.eq.s32.totalorder %s23, 7
    %p350 = por %p348, %p349
    %p351 = scmp.ne.s32.totalorder %s340, %s341
    %p352 = scmp.eq.s32.totalorder %s23, 0
    %p353 = por %p351, %p352
    %p354 = scmp.ne.s32.totalorder %s340, %s341
    %p355 = scmp.eq.s32.totalorder %s24, 7
    %p356 = por %p354, %p355
    %p358 = scmp.ne.s32.totalorder %s341, %s357
    %p359 = scmp.eq.s32.totalorder %s24, 0
    %p360 = por %p358, %p359
    %p361 = scmp.le.s32.totalorder 1, %s18
    %p362 = scmp.lt.s32.totalorder %s18, 9
    %p363 = pnand %p361, %p362
    %p364 = pneg %p363
    // Predicated region
    $region9: #{transformer_forward.16} parent=5 // pred_check
      _
    $region10: #{transformer_forward.16} parent=5 // pred_check_branch
      %366 = sbr.rel (%p363) target = $region12
    $region11: #{transformer_forward.16} parent=5 // pred_region
      %s367 = ssub.s32 %s18, 1
      // Predicated region
      $region13: #{transformer_forward.16} parent=11 // pred_check
        %p368 = pneg %p285
      $region14: #{transformer_forward.16} parent=11 // pred_check_branch
        %370 = sbr.rel (%p368) target = $region16
      $region15: #{transformer_forward.16} parent=11 // pred_region
        _
      $region16: #{transformer_forward.16} parent=11 // pred_fallthru
        _
      // Predicated region
      $region17: #{transformer_forward.16} parent=11 // pred_check
        %p371 = pneg %p306
      $region18: #{transformer_forward.16} parent=11 // pred_check_branch
        %373 = sbr.rel (%p371) target = $region20
      $region19: #{transformer_forward.16} parent=11 // pred_region
        _
      $region20: #{transformer_forward.16} parent=11 // pred_fallthru
        _
      // Predicated region
      $region21: #{transformer_forward.16} parent=11 // pred_check
        %p374 = pneg %p327
      $region22: #{transformer_forward.16} parent=11 // pred_check_branch
        %376 = sbr.rel (%p374) target = $region24
      $region23: #{transformer_forward.16} parent=11 // pred_region
        _
      $region24: #{transformer_forward.16} parent=11 // pred_fallthru
        _
    $region12: #{transformer_forward.16} parent=5 // pred_fallthru
      _
    %p377 = scmp.lt.s32.totalorder %s18, 8
    // Predicated region
    $region25: #{transformer_forward.16} parent=5 // pred_check
      %p378 = pneg %p377
    $region26: #{transformer_forward.16} parent=5 // pred_check_branch
      %380 = sbr.rel (%p378) target = $region28
    $region27: #{transformer_forward.16} parent=5 // pred_region
      // Predicated region
      $region29: #{transformer_forward.16} parent=27 // pred_check
        %p381 = pneg %p50
      $region30: #{transformer_forward.16} parent=27 // pred_check_branch
        %383 = sbr.rel (%p381) target = $region32
      $region31: #{transformer_forward.16} parent=27 // pred_region
        %p384 = scmp.lt.s32.totalorder %s25, 1
        %s385 = scalar_select %p384, %s25, 1
        %s386 = smul.addr %s385, 8
        %s387 = scalar_lea.vmem %s0, %s386
      $region32: #{transformer_forward.16} parent=27 // pred_fallthru
        _
      // Predicated region
      $region33: #{transformer_forward.16} parent=27 // pred_check
        %p388 = pneg %p76
      $region34: #{transformer_forward.16} parent=27 // pred_check_branch
        %390 = sbr.rel (%p388) target = $region36
      $region35: #{transformer_forward.16} parent=27 // pred_region
        %p391 = scmp.lt.s32.totalorder %s25, 1
        %s392 = scalar_select %p391, %s25, 1
        %s393 = smul.addr %s392, 8
        %s394 = scalar_lea.vmem %s1, %s393
      $region36: #{transformer_forward.16} parent=27 // pred_fallthru
        _
      // Predicated region
      $region37: #{transformer_forward.16} parent=27 // pred_check
        %p395 = pneg %p102
      $region38: #{transformer_forward.16} parent=27 // pred_check_branch
        %397 = sbr.rel (%p395) target = $region40
      $region39: #{transformer_forward.16} parent=27 // pred_region
        %p398 = scmp.lt.s32.totalorder %s26, 3
        %s399 = scalar_select %p398, %s26, 3
        %s400 = smul.addr %s399, 4
        %s401 = smul.addr %s400, 4
        %s402 = scalar_lea.vmem %s2, %s401
      $region40: #{transformer_forward.16} parent=27 // pred_fallthru
        _
      // Predicated region
      $region41: #{transformer_forward.16} parent=27 // pred_check
        %p403 = pneg %p128
      $region42: #{transformer_forward.16} parent=27 // pred_check_branch
        %405 = sbr.rel (%p403) target = $region44
      $region43: #{transformer_forward.16} parent=27 // pred_region
        %p406 = scmp.lt.s32.totalorder %s26, 3
        %s407 = scalar_select %p406, %s26, 3
        %s408 = scalar_lea.vmem %s3, %s407
      $region44: #{transformer_forward.16} parent=27 // pred_fallthru
        _
      // Predicated region
      $region45: #{transformer_forward.16} parent=27 // pred_check
        %p409 = pneg %p154
      $region46: #{transformer_forward.16} parent=27 // pred_check_branch
        %411 = sbr.rel (%p409) target = $region48
      $region47: #{transformer_forward.16} parent=27 // pred_region
        %p412 = scmp.lt.s32.totalorder %s26, 3
        %s413 = scalar_select %p412, %s26, 3
        %s414 = smul.addr %s413, 4
        %s415 = smul.addr %s414, 4
        %s416 = scalar_lea.vmem %s4, %s415
      $region48: #{transformer_forward.16} parent=27 // pred_fallthru
        _
      // Predicated region
      $region49: #{transformer_forward.16} parent=27 // pred_check
        %p417 = pneg %p180
      $region50: #{transformer_forward.16} parent=27 // pred_check_branch
        %419 = sbr.rel (%p417) target = $region52
      $region51: #{transformer_forward.16} parent=27 // pred_region
        %p420 = scmp.lt.s32.totalorder %s26, 3
        %s421 = scalar_select %p420, %s26, 3
        %s422 = scalar_lea.vmem %s5, %s421
      $region52: #{transformer_forward.16} parent=27 // pred_fallthru
        _
      // Predicated region
      $region53: #{transformer_forward.16} parent=27 // pred_check
        %p423 = pneg %p206
      $region54: #{transformer_forward.16} parent=27 // pred_check_branch
        %425 = sbr.rel (%p423) target = $region56
      $region55: #{transformer_forward.16} parent=27 // pred_region
        %p426 = scmp.lt.s32.totalorder %s26, 3
        %s427 = scalar_select %p426, %s26, 3
        %s428 = smul.addr %s427, 4
        %s429 = smul.addr %s428, 4
        %s430 = scalar_lea.vmem %s6, %s429
      $region56: #{transformer_forward.16} parent=27 // pred_fallthru
        _
      // Predicated region
      $region57: #{transformer_forward.16} parent=27 // pred_check
        %p431 = pneg %p232
      $region58: #{transformer_forward.16} parent=27 // pred_check_branch
        %433 = sbr.rel (%p431) target = $region60
      $region59: #{transformer_forward.16} parent=27 // pred_region
        %p434 = scmp.lt.s32.totalorder %s26, 3
        %s435 = scalar_select %p434, %s26, 3
        %s436 = scalar_lea.vmem %s7, %s435
      $region60: #{transformer_forward.16} parent=27 // pred_fallthru
        _
      // Predicated region
      $region61: #{transformer_forward.16} parent=27 // pred_check
        %p437 = pneg %p258
      $region62: #{transformer_forward.16} parent=27 // pred_check_branch
        %439 = sbr.rel (%p437) target = $region64
      $region63: #{transformer_forward.16} parent=27 // pred_region
        %p440 = scmp.lt.s32.totalorder %s26, 3
        %s441 = scalar_select %p440, %s26, 3
        %s442 = smul.addr %s441, 4
        %s443 = scalar_lea.vmem %s8, %s442
      $region64: #{transformer_forward.16} parent=27 // pred_fallthru
        _
    $region28: #{transformer_forward.16} parent=5 // pred_fallthru
      _
    %p444 = scmp.le.s32.totalorder 1, %s18
    %p445 = scmp.lt.s32.totalorder %s18, 9
    %p446 = pnand %p444, %p445
    %p447 = pneg %p446
    // Predicated region
    $region65: #{transformer_forward.16} parent=5 // pred_check
      _
    $region66: #{transformer_forward.16} parent=5 // pred_check_branch
      %449 = sbr.rel (%p446) target = $region68
    $region67: #{transformer_forward.16} parent=5 // pred_region
      %s450 = ssub.s32 %s18, 1
      %p451 = scmp.lt.s32.totalorder %s27, 1
      %s452 = scalar_select %p451, %s27, 1
      %s453 = smul.addr %s452, 8
      %s454 = scalar_lea.vmem %s0, %s453
      %p455 = pneg %p56
      %p456 = pneg %p53
      %p457 = scmp.lt.s32.totalorder %s27, 1
      %s458 = scalar_select %p457, %s27, 1
      %s459 = smul.addr %s458, 8
      %s460 = scalar_lea.vmem %s1, %s459
      %p461 = pneg %p82
      %p462 = pneg %p79
      %p463 = scmp.lt.s32.totalorder %s28, 3
      %s464 = scalar_select %p463, %s28, 3
      %s465 = smul.addr %s464, 4
      %s466 = smul.addr %s465, 4
      %s467 = scalar_lea.vmem %s2, %s466
      %p468 = pneg %p108
      %p469 = pneg %p105
      %p470 = scmp.lt.s32.totalorder %s28, 3
      %s471 = scalar_select %p470, %s28, 3
      %s472 = scalar_lea.vmem %s3, %s471
      %p473 = pneg %p134
      %p474 = pneg %p131
      %p475 = scmp.lt.s32.totalorder %s28, 3
      %s476 = scalar_select %p475, %s28, 3
      %s477 = smul.addr %s476, 4
      %s478 = smul.addr %s477, 4
      %s479 = scalar_lea.vmem %s4, %s478
      %p480 = pneg %p160
      %p481 = pneg %p157
      %p482 = scmp.lt.s32.totalorder %s28, 3
      %s483 = scalar_select %p482, %s28, 3
      %s484 = scalar_lea.vmem %s5, %s483
      %p485 = pneg %p186
      %p486 = pneg %p183
      %p487 = scmp.lt.s32.totalorder %s28, 3
      %s488 = scalar_select %p487, %s28, 3
      %s489 = smul.addr %s488, 4
      %s490 = smul.addr %s489, 4
      %s491 = scalar_lea.vmem %s6, %s490
      %p492 = pneg %p212
      %p493 = pneg %p209
      %p494 = scmp.lt.s32.totalorder %s28, 3
      %s495 = scalar_select %p494, %s28, 3
      %s496 = scalar_lea.vmem %s7, %s495
      %p497 = pneg %p238
      %p498 = pneg %p235
      %p499 = scmp.lt.s32.totalorder %s28, 3
      %s500 = scalar_select %p499, %s28, 3
      %s501 = smul.addr %s500, 4
      %s502 = scalar_lea.vmem %s8, %s501
      %p503 = pneg %p264
      %p504 = pneg %p261
      %p505 = pneg %p285
      %p506 = pneg %p282
      %p507 = pneg %p306
      %p508 = pneg %p303
      %p509 = pneg %p327
      %p510 = pneg %p324
      %p511 = pneg %p353
      %p512 = pneg %p350
      %p513 = scmp.lt.s32.totalorder %s27, 1
      %s514 = scalar_select %p513, %s27, 1
      %s515 = smul.addr %s514, 8
      %s516 = scalar_lea.vmem %s12, %s515
      %p517 = scmp.lt.s32.totalorder %s27, 1
      %s518 = scalar_select %p517, %s27, 1
      %s519 = smul.addr %s518, 8
      %s520 = scalar_lea.vmem %s0, %s519
      %p521 = scmp.lt.s32.totalorder %s27, 1
      %s522 = scalar_select %p521, %s27, 1
      %s523 = smul.addr %s522, 8
      %s524 = scalar_lea.vmem %s1, %s523
      %p525 = scmp.lt.s32.totalorder %s28, 3
      %s526 = scalar_select %p525, %s28, 3
      %s527 = smul.addr %s526, 4
      %s528 = smul.addr %s527, 4
      %s529 = scalar_lea.vmem %s2, %s528
      %p530 = scmp.lt.s32.totalorder %s28, 3
      %s531 = scalar_select %p530, %s28, 3
      %s532 = scalar_lea.vmem %s3, %s531
      %p533 = scmp.lt.s32.totalorder %s28, 3
      %s534 = scalar_select %p533, %s28, 3
      %s535 = smul.addr %s534, 4
      %s536 = smul.addr %s535, 4
      %s537 = scalar_lea.vmem %s4, %s536
      %p538 = scmp.lt.s32.totalorder %s28, 3
      %s539 = scalar_select %p538, %s28, 3
      %s540 = scalar_lea.vmem %s5, %s539
      %p541 = scmp.lt.s32.totalorder %s28, 3
      %s542 = scalar_select %p541, %s28, 3
      %s543 = smul.addr %s542, 4
      %s544 = smul.addr %s543, 4
      %s545 = scalar_lea.vmem %s6, %s544
      %p546 = scmp.lt.s32.totalorder %s28, 3
      %s547 = scalar_select %p546, %s28, 3
      %s548 = scalar_lea.vmem %s7, %s547
      %p549 = scmp.lt.s32.totalorder %s28, 3
      %s550 = scalar_select %p549, %s28, 3
      %s551 = smul.addr %s550, 4
      %s552 = scalar_lea.vmem %s8, %s551
      %p553 = scmp.lt.s32.totalorder %s27, 1
      %s554 = scalar_select %p553, %s27, 1
      %s555 = smul.addr %s554, 8
      %s556 = scalar_lea.vmem %s12, %s555
      %v558 = vld [vmem:[%s520] sm:$0xff]
      %v559 = vld [vmem:[%s524] sm:$0xff]
      %v560 = vadd.f32 %v558, %v559
      %v561 = vpack.c.bf16 %v560, %v560
      %v562 = vld [vmem:[%s529] sm:$0xf]
      %v563 = vld [vmem:[%s529 + $0x4] sm:$0xf]
      %v564 = vld [vmem:[%s529 + $0x8] sm:$0xf]
      %v565 = vld [vmem:[%s529 + $0xc] sm:$0xf]
      %v566 = vld [vmem:[%s532] sm:$0x1]
      %v568 = vlaneseq
      %v569 = vshrl.u32 %v568, 7
      %v570 = vsub.s32 0, %v569
      %v571 = vrot.slane %v566, %v570
      %v577 = vunpack.c.l.b16 %v562
      %v578 = vunpack.c.l.b16 %v563
      %v579 = vunpack.c.l.b16 %v564
      %v580 = vunpack.c.l.b16 %v565
      %v581 = vpack.c.b16 %v578, %v577
      %v582 = vpack.c.b16 %v580, %v579
      %vm585 = vcmask 261120
      %v587 = vsel %vm585, %v561, 0
      %589 = vmatprep.subr.bf16.mxu0 0
      %590 = vmatpush1.bf16.msra.mxu0 0
      %591 = vmatprep.subr.bf16.mxu0 0
      %592 = vmatpush1.bf16.msra.mxu0 0
      %593 = vmatprep.subr.bf16.mxu0 0
      %594 = vmatpush1.bf16.msra.mxu0 0
      %595 = vmatprep.subr.bf16.mxu0 0
      %596 = vmatpush1.bf16.msra.mxu0 0
      %597 = vmatprep.subr.bf16.mxu0 0
      %598 = vmatpush1.bf16.msra.mxu0 0
      %599 = vmatprep.subr.bf16.mxu0 0
      %600 = vmatpush1.bf16.msra.mxu0 0
      %601 = vmatprep.subr.bf16.mxu0 0
      %602 = vmatpush1.bf16.msra.mxu0 %v582
      %603 = vmatprep.subr.bf16.mxu0 0
      %604 = vmatpush1.bf16.msra.mxu0 %v581
      %605 = vmatprep.subr.bf16.mxu0 0
      %606 = vmatpush2.bf16.msra.mxu0 0
      %607 = vmatprep.subr.bf16.mxu0 0
      %608 = vmatpush2.bf16.msra.mxu0 0
      %609 = vmatprep.subr.bf16.mxu0 0
      %610 = vmatpush2.bf16.msra.mxu0 0
      %611 = vmatprep.subr.bf16.mxu0 0
      %612 = vmatpush2.bf16.msra.mxu0 0
      %613 = vmatprep.subr.bf16.mxu0 0
      %614 = vmatpush2.bf16.msra.mxu0 0
      %615 = vmatprep.subr.bf16.mxu0 0
      %616 = vmatpush2.bf16.msra.mxu0 0
      %617 = vmatprep.subr.bf16.mxu0 0
      %618 = vmatpush2.bf16.msra.mxu0 0
      %619 = vmatprep.subr.bf16.mxu0 0
      %620 = vmatpush2.bf16.msra.mxu0 0
      %621 = vmatprep.mubr.bf16.mxu0 0
      %622 = vmatmul.mubr.bf16.gmra.mxu0 %v587
      %v623 = vpop.f32.mrf.mxu0
      %v624 = vadd.f32 %v571, %v623
      %v625 = vpop.f32.mrf.mxu0
      %v626 = vpop.f32.mrf.mxu0
      %v627 = vpop.f32.mrf.mxu0
      %628 = vdwg.mxu0
      %v629 = vld [vmem:[%s537] sm:$0xf]
      %v630 = vld [vmem:[%s537 + $0x4] sm:$0xf]
      %v631 = vld [vmem:[%s537 + $0x8] sm:$0xf]
      %v632 = vld [vmem:[%s537 + $0xc] sm:$0xf]
      %v633 = vld [vmem:[%s540] sm:$0x1]
      %v635 = vlaneseq
      %v636 = vshrl.u32 %v635, 7
      %v637 = vsub.s32 0, %v636
      %v638 = vrot.slane %v633, %v637
      %v644 = vunpack.c.l.b16 %v629
      %v645 = vunpack.c.l.b16 %v630
      %v646 = vunpack.c.l.b16 %v631
      %v647 = vunpack.c.l.b16 %v632
      %v648 = vpack.c.b16 %v645, %v644
      %v649 = vpack.c.b16 %v647, %v646
      %652 = vmatprep.subr.bf16.mxu0 0
      %653 = vmatpush1.bf16.msra.mxu0 0
      %654 = vmatprep.subr.bf16.mxu0 0
      %655 = vmatpush1.bf16.msra.mxu0 0
      %656 = vmatprep.subr.bf16.mxu0 0
      %657 = vmatpush1.bf16.msra.mxu0 0
      %658 = vmatprep.subr.bf16.mxu0 0
      %659 = vmatpush1.bf16.msra.mxu0 0
      %660 = vmatprep.subr.bf16.mxu0 0
      %661 = vmatpush1.bf16.msra.mxu0 0
      %662 = vmatprep.subr.bf16.mxu0 0
      %663 = vmatpush1.bf16.msra.mxu0 0
      %664 = vmatprep.subr.bf16.mxu0 0
      %665 = vmatpush1.bf16.msra.mxu0 %v649
      %666 = vmatprep.subr.bf16.mxu0 0
      %667 = vmatpush1.bf16.msra.mxu0 %v648
      %668 = vmatprep.subr.bf16.mxu0 0
      %669 = vmatpush2.bf16.msra.mxu0 0
      %670 = vmatprep.subr.bf16.mxu0 0
      %671 = vmatpush2.bf16.msra.mxu0 0
      %672 = vmatprep.subr.bf16.mxu0 0
      %673 = vmatpush2.bf16.msra.mxu0 0
      %674 = vmatprep.subr.bf16.mxu0 0
      %675 = vmatpush2.bf16.msra.mxu0 0
      %676 = vmatprep.subr.bf16.mxu0 0
      %677 = vmatpush2.bf16.msra.mxu0 0
      %678 = vmatprep.subr.bf16.mxu0 0
      %679 = vmatpush2.bf16.msra.mxu0 0
      %680 = vmatprep.subr.bf16.mxu0 0
      %681 = vmatpush2.bf16.msra.mxu0 0
      %682 = vmatprep.subr.bf16.mxu0 0
      %683 = vmatpush2.bf16.msra.mxu0 0
      %684 = vmatprep.mubr.bf16.mxu0 0
      %685 = vmatmul.mubr.bf16.gmra.mxu0 %v587
      %v686 = vpop.f32.mrf.mxu0
      %v687 = vadd.f32 %v638, %v686
      %v688 = vpop.f32.mrf.mxu0
      %v689 = vpop.f32.mrf.mxu0
      %v690 = vpop.f32.mrf.mxu0
      %691 = vdwg.mxu0
      %v692 = vld [vmem:[%s545] sm:$0xf]
      %v693 = vld [vmem:[%s545 + $0x4] sm:$0xf]
      %v694 = vld [vmem:[%s545 + $0x8] sm:$0xf]
      %v695 = vld [vmem:[%s545 + $0xc] sm:$0xf]
      %v696 = vld [vmem:[%s548] sm:$0x1]
      %v698 = vlaneseq
      %v699 = vshrl.u32 %v698, 7
      %v700 = vsub.s32 0, %v699
      %v701 = vrot.slane %v696, %v700
      %v707 = vunpack.c.l.b16 %v692
      %v708 = vunpack.c.l.b16 %v693
      %v709 = vunpack.c.l.b16 %v694
      %v710 = vunpack.c.l.b16 %v695
      %v711 = vpack.c.b16 %v708, %v707
      %v712 = vpack.c.b16 %v710, %v709
      %715 = vmatprep.subr.bf16.mxu0 0
      %716 = vmatpush1.bf16.msra.mxu0 0
      %717 = vmatprep.subr.bf16.mxu0 0
      %718 = vmatpush1.bf16.msra.mxu0 0
      %719 = vmatprep.subr.bf16.mxu0 0
      %720 = vmatpush1.bf16.msra.mxu0 0
      %721 = vmatprep.subr.bf16.mxu0 0
      %722 = vmatpush1.bf16.msra.mxu0 0
      %723 = vmatprep.subr.bf16.mxu0 0
      %724 = vmatpush1.bf16.msra.mxu0 0
      %725 = vmatprep.subr.bf16.mxu0 0
      %726 = vmatpush1.bf16.msra.mxu0 0
      %727 = vmatprep.subr.bf16.mxu0 0
      %728 = vmatpush1.bf16.msra.mxu0 %v712
      %729 = vmatprep.subr.bf16.mxu0 0
      %730 = vmatpush1.bf16.msra.mxu0 %v711
      %731 = vmatprep.subr.bf16.mxu0 0
      %732 = vmatpush2.bf16.msra.mxu0 0
      %733 = vmatprep.subr.bf16.mxu0 0
      %734 = vmatpush2.bf16.msra.mxu0 0
      %735 = vmatprep.subr.bf16.mxu0 0
      %736 = vmatpush2.bf16.msra.mxu0 0
      %737 = vmatprep.subr.bf16.mxu0 0
      %738 = vmatpush2.bf16.msra.mxu0 0
      %739 = vmatprep.subr.bf16.mxu0 0
      %740 = vmatpush2.bf16.msra.mxu0 0
      %741 = vmatprep.subr.bf16.mxu0 0
      %742 = vmatpush2.bf16.msra.mxu0 0
      %743 = vmatprep.subr.bf16.mxu0 0
      %744 = vmatpush2.bf16.msra.mxu0 0
      %745 = vmatprep.subr.bf16.mxu0 0
      %746 = vmatpush2.bf16.msra.mxu0 0
      %747 = vmatprep.mubr.bf16.mxu0 0
      %748 = vmatmul.mubr.bf16.gmra.mxu0 %v587
      %v749 = vpop.f32.mrf.mxu0
      %v750 = vadd.f32 %v701, %v749
      %v751 = vpop.f32.mrf.mxu0
      %v752 = vpop.f32.mrf.mxu0
      %v753 = vpop.f32.mrf.mxu0
      %754 = vdwg.mxu0
      %v755 = vmul.f32 %v624, 0.35355338
      %v756 = vpack.c.bf16 %v755, %v755
      %v757 = vpack.c.bf16 %v687, %v687
      %vm758 = vcmask 64512
      %v760 = vsel %vm758, %v756, 0
      %v763 = vsel %vm758, %v757, 0
      %765 = vmatprep.subr.bf16.mxu0 0
      %766 = vmatpush1.bf16.xpose.msra.mxu0 0
      %767 = vmatprep.subr.bf16.mxu0 0
      %768 = vmatpush1.bf16.xpose.msra.mxu0 0
      %769 = vmatprep.subr.bf16.mxu0 0
      %770 = vmatpush1.bf16.xpose.msra.mxu0 0
      %771 = vmatprep.subr.bf16.mxu0 0
      %772 = vmatpush1.bf16.xpose.msra.mxu0 0
      %773 = vmatprep.subr.bf16.mxu0 0
      %774 = vmatpush1.bf16.xpose.msra.mxu0 0
      %775 = vmatprep.subr.bf16.mxu0 0
      %776 = vmatpush1.bf16.xpose.msra.mxu0 0
      %777 = vmatprep.subr.bf16.mxu0 0
      %778 = vmatpush1.bf16.xpose.msra.mxu0 0
      %779 = vmatprep.subr.bf16.mxu0 0
      %780 = vmatpush1.bf16.xpose.msra.mxu0 %v763
      %781 = vmatprep.subr.bf16.mxu0 0
      %782 = vmatpush2.bf16.xpose.msra.mxu0 0
      %783 = vmatprep.subr.bf16.mxu0 0
      %784 = vmatpush2.bf16.xpose.msra.mxu0 0
      %785 = vmatprep.subr.bf16.mxu0 0
      %786 = vmatpush2.bf16.xpose.msra.mxu0 0
      %787 = vmatprep.subr.bf16.mxu0 0
      %788 = vmatpush2.bf16.xpose.msra.mxu0 0
      %789 = vmatprep.subr.bf16.mxu0 0
      %790 = vmatpush2.bf16.xpose.msra.mxu0 0
      %791 = vmatprep.subr.bf16.mxu0 0
      %792 = vmatpush2.bf16.xpose.msra.mxu0 0
      %793 = vmatprep.subr.bf16.mxu0 0
      %794 = vmatpush2.bf16.xpose.msra.mxu0 0
      %795 = vmatprep.subr.bf16.mxu0 0
      %796 = vmatpush2.bf16.xpose.msra.mxu0 0
      %797 = vmatprep.mubr.bf16.mxu0 0
      %798 = vmatmul.mubr.bf16.gmra.mxu0 %v760
      %v799 = vpop.f32.mrf.mxu0
      %v800 = vadd.f32 0.0, %v799
      %v801 = vpop.f32.mrf.mxu0
      %v802 = vpop.f32.mrf.mxu0
      %v803 = vpop.f32.mrf.mxu0
      %804 = vdwg.mxu0
      %v805 = vsel %vm758, %v800, -inf
      %806 = vmax.xlane.f32.xlu0 %v805
      %v807 = vpop.xlane.xlu0 %806
      %v808 = vsub.f32 %v800, %v807
      %v809 = vmul.f32 %v808, 1.442695
      %v810 = vpow.pop %v809
      %v811 = vsel %vm758, %v810, 0.0
      %812 = vadd.xlane.f32.xlu0 %v811
      %v813 = vpop.xlane.xlu0 %812
      %v814 = vrcp.pop %v813
      %v815 = vmul.f32 %v810, %v814
      %v816 = vpack.c.bf16 %v815, %v815
      %v817 = vpack.c.bf16 %v750, %v750
      %v819 = vsel %vm758, %v816, 0
      %vm821 = vcmask 1043456
      %v823 = vsel %vm821, %v817, 0
      %825 = vmatprep.subr.bf16.mxu0 0
      %826 = vmatpush1.bf16.msra.mxu0 0
      %827 = vmatprep.subr.bf16.mxu0 0
      %828 = vmatpush1.bf16.msra.mxu0 0
      %829 = vmatprep.subr.bf16.mxu0 0
      %830 = vmatpush1.bf16.msra.mxu0 0
      %831 = vmatprep.subr.bf16.mxu0 0
      %832 = vmatpush1.bf16.msra.mxu0 0
      %833 = vmatprep.subr.bf16.mxu0 0
      %834 = vmatpush1.bf16.msra.mxu0 0
      %835 = vmatprep.subr.bf16.mxu0 0
      %836 = vmatpush1.bf16.msra.mxu0 0
      %837 = vmatprep.subr.bf16.mxu0 0
      %838 = vmatpush1.bf16.msra.mxu0 0
      %839 = vmatprep.subr.bf16.mxu0 0
      %840 = vmatpush1.bf16.msra.mxu0 %v823
      %841 = vmatprep.subr.bf16.mxu0 0
      %842 = vmatpush2.bf16.msra.mxu0 0
      %843 = vmatprep.subr.bf16.mxu0 0
      %844 = vmatpush2.bf16.msra.mxu0 0
      %845 = vmatprep.subr.bf16.mxu0 0
      %846 = vmatpush2.bf16.msra.mxu0 0
      %847 = vmatprep.subr.bf16.mxu0 0
      %848 = vmatpush2.bf16.msra.mxu0 0
      %849 = vmatprep.subr.bf16.mxu0 0
      %850 = vmatpush2.bf16.msra.mxu0 0
      %851 = vmatprep.subr.bf16.mxu0 0
      %852 = vmatpush2.bf16.msra.mxu0 0
      %853 = vmatprep.subr.bf16.mxu0 0
      %854 = vmatpush2.bf16.msra.mxu0 0
      %855 = vmatprep.subr.bf16.mxu0 0
      %856 = vmatpush2.bf16.msra.mxu0 0
      %857 = vmatprep.mubr.bf16.mxu0 0
      %858 = vmatmul.mubr.bf16.gmra.mxu0 %v819
      %v859 = vpop.f32.mrf.mxu0
      %v860 = vadd.f32 0.0, %v859
      %v861 = vpop.f32.mrf.mxu0
      %v862 = vpop.f32.mrf.mxu0
      %v863 = vpop.f32.mrf.mxu0
      %864 = vdwg.mxu0
      %v865 = vpack.c.bf16 %v860, %v860
      %v866 = vld [vmem:[%s552] sm:$0xf]
      %v868 = vsel %vm758, %v865, 0
      %v871 = vsel %vm821, %v866, 0
      %873 = vmatprep.subr.bf16.mxu0 0
      %874 = vmatpush1.bf16.msra.mxu0 0
      %875 = vmatprep.subr.bf16.mxu0 0
      %876 = vmatpush1.bf16.msra.mxu0 0
      %877 = vmatprep.subr.bf16.mxu0 0
      %878 = vmatpush1.bf16.msra.mxu0 0
      %879 = vmatprep.subr.bf16.mxu0 0
      %880 = vmatpush1.bf16.msra.mxu0 0
      %881 = vmatprep.subr.bf16.mxu0 0
      %882 = vmatpush1.bf16.msra.mxu0 0
      %883 = vmatprep.subr.bf16.mxu0 0
      %884 = vmatpush1.bf16.msra.mxu0 0
      %885 = vmatprep.subr.bf16.mxu0 0
      %886 = vmatpush1.bf16.msra.mxu0 0
      %887 = vmatprep.subr.bf16.mxu0 0
      %888 = vmatpush1.bf16.msra.mxu0 %v871
      %889 = vmatprep.subr.bf16.mxu0 0
      %890 = vmatpush2.bf16.msra.mxu0 0
      %891 = vmatprep.subr.bf16.mxu0 0
      %892 = vmatpush2.bf16.msra.mxu0 0
      %893 = vmatprep.subr.bf16.mxu0 0
      %894 = vmatpush2.bf16.msra.mxu0 0
      %895 = vmatprep.subr.bf16.mxu0 0
      %896 = vmatpush2.bf16.msra.mxu0 0
      %897 = vmatprep.subr.bf16.mxu0 0
      %898 = vmatpush2.bf16.msra.mxu0 0
      %899 = vmatprep.subr.bf16.mxu0 0
      %900 = vmatpush2.bf16.msra.mxu0 0
      %901 = vmatprep.subr.bf16.mxu0 0
      %902 = vmatpush2.bf16.msra.mxu0 0
      %903 = vmatprep.subr.bf16.mxu0 0
      %904 = vmatpush2.bf16.msra.mxu0 0
      %905 = vmatprep.mubr.bf16.mxu0 0
      %906 = vmatmul.mubr.bf16.gmra.mxu0 %v868
      %v907 = vpop.f32.mrf.mxu0
      %v908 = vadd.f32 0.0, %v907
      %v909 = vpop.f32.mrf.mxu0
      %v910 = vpop.f32.mrf.mxu0
      %v911 = vpop.f32.mrf.mxu0
      %912 = vdwg.mxu0
      %p913 = scmp.eq.s32.totalorder %s28, 0
      // Predicated region
      $region69: #{transformer_forward.16} parent=67 // pred_check
        %p914 = pneg %p913
      $region70: #{transformer_forward.16} parent=67 // pred_check_branch
        %916 = sbr.rel (%p914) target = $region72
      $region71: #{transformer_forward.16} parent=67 // pred_region
        %917 = vst.msk [vmem:[%s556] sm:$0xff] %vm585, %v908
      $region72: #{transformer_forward.16} parent=67 // pred_fallthru
        _
      %p918 = scmp.gt.s32.totalorder %s28, 0
      // Predicated region
      $region73: #{transformer_forward.16} parent=67 // pred_check
        %p919 = pneg %p918
      $region74: #{transformer_forward.16} parent=67 // pred_check_branch
        %921 = sbr.rel (%p919) target = $region76
      $region75: #{transformer_forward.16} parent=67 // pred_region
        %v922 = vld [vmem:[%s556] sm:$0xff]
        %v923 = vadd.f32 %v922, %v908
        %924 = vst.msk [vmem:[%s556] sm:$0xff] %vm585, %v923
      $region76: #{transformer_forward.16} parent=67 // pred_fallthru
        _
      %p925 = scmp.eq.s32.totalorder %s28, 3
      // Predicated region
      $region77: #{transformer_forward.16} parent=67 // pred_check
        %p926 = pneg %p925
      $region78: #{transformer_forward.16} parent=67 // pred_check_branch
        %928 = sbr.rel (%p926) target = $region80
      $region79: #{transformer_forward.16} parent=67 // pred_region
        %v929 = vld [vmem:[%s556] sm:$0xff]
        %v930 = vld [vmem:[%s9] sm:$0x1]
        %v932 = vlaneseq
        %v933 = vshrl.u32 %v932, 7
        %v934 = vsub.s32 0, %v933
        %v935 = vrot.slane %v930, %v934
        %v937 = vadd.f32 %v929, %v935
        %v938 = vadd.f32 %v937, %v560
        %v939 = vsel %vm585, %v938, 0.0
        %940 = vadd.xlane.f32.xlu0 %v939
        %v941 = vpop.xlane.xlu0 %940
        %v942 = vrcp.pop 32.0
        %v943 = vmul.f32 %v941, %v942
        %v944 = vsub.f32 %v938, %v943
        %v945 = vmul.f32 %v944, %v944
        %v946 = vsel %vm585, %v945, 0.0
        %947 = vadd.xlane.f32.xlu0 %v946
        %v948 = vpop.xlane.xlu0 %947
        %v949 = vmul.f32 %v948, %v942
        %v950 = vadd.f32 %v949, 1e-05
        %v951 = vrsqrt.pop %v950
        %v952 = vmul.f32 %v944, %v951
        %v953 = vld [vmem:[%s10] sm:$0x1]
        %v955 = vlaneseq
        %v956 = vshrl.u32 %v955, 7
        %v957 = vsub.s32 0, %v956
        %v958 = vrot.slane %v953, %v957
        %v960 = vmul.f32 %v952, %v958
        %v961 = vld [vmem:[%s11] sm:$0x1]
        %v963 = vlaneseq
        %v964 = vshrl.u32 %v963, 7
        %v965 = vsub.s32 0, %v964
        %v966 = vrot.slane %v961, %v965
        %v968 = vadd.f32 %v960, %v966
        %969 = vst.msk [vmem:[%s556] sm:$0xff] %vm585, %v968
      $region80: #{transformer_forward.16} parent=67 // pred_fallthru
        _
      %p970 = scmp.lt.s32.totalorder %s27, 1
      %s971 = scalar_select %p970, %s27, 1
      %s972 = smul.addr %s971, 8
      %s973 = scalar_lea.vmem %s12, %s972
      // Predicated region
      $region81: #{transformer_forward.16} parent=67 // pred_check
        %p974 = pneg %p350
      $region82: #{transformer_forward.16} parent=67 // pred_check_branch
        %976 = sbr.rel (%p974) target = $region84
      $region83: #{transformer_forward.16} parent=67 // pred_region
        _
      $region84: #{transformer_forward.16} parent=67 // pred_fallthru
        _
    $region68: #{transformer_forward.16} parent=5 // pred_fallthru
      _
    %p977 = scmp.le.s32.totalorder 2, %s18
    // Predicated region
    $region85: #{transformer_forward.16} parent=5 // pred_check
      %p978 = pneg %p977
    $region86: #{transformer_forward.16} parent=5 // pred_check_branch
      %980 = sbr.rel (%p978) target = $region88
    $region87: #{transformer_forward.16} parent=5 // pred_region
      %s981 = ssub.s32 %s18, 2
      // Predicated region
      $region89: #{transformer_forward.16} parent=87 // pred_check
        %p982 = pneg %p356
      $region90: #{transformer_forward.16} parent=87 // pred_check_branch
        %984 = sbr.rel (%p982) target = $region92
      $region91: #{transformer_forward.16} parent=87 // pred_region
        %p985 = scmp.lt.s32.totalorder %s29, 1
        %s986 = scalar_select %p985, %s29, 1
        %s987 = smul.addr %s986, 8
        %s988 = scalar_lea.vmem %s12, %s987
      $region92: #{transformer_forward.16} parent=87 // pred_fallthru
        _
    $region88: #{transformer_forward.16} parent=5 // pred_fallthru
      _
  $region6: #{transformer_forward.16} parent=0 // loop_footer
    %s22 = sadd.s32 1, %s18
  $region7: #{transformer_forward.16} parent=0 // loop_footer_branch
    %17 = sbr.rel target = $region3
  $region8: #{transformer_forward.16} parent=0 // loop_exit
    _

// kernel: transformer_forward.17
$region0: #{transformer_forward.17}
  #allocation0 [shape = 'u32[]', space=smem, size = 0x4, offset = 0x4, fixed_abs, tag = 'smem constant byte address 0x4 - core index']
  #allocation1 [shape = 'u32[144,128]{1,0:T(1,128)}', space=vmem, size = 0x12000, scoped, tag = 'internal scratch']
  %s0 = inlined_call_operand.vmem [shape: f32[2,8,32], index: 0, kind: input, shape index: {}]
  %s1 = inlined_call_operand.vmem [shape: f32[2,16,32], index: 1, kind: input, shape index: {}]
  %s2 = inlined_call_operand.vmem [shape: f32[2,1,16], index: 2, kind: input, shape index: {}]
  %s3 = inlined_call_operand.vmem [shape: bf16[4,32,8], index: 3, kind: input, shape index: {}]
  %s4 = inlined_call_operand.vmem [shape: f32[4,1,8], index: 4, kind: input, shape index: {}]
  %s5 = inlined_call_operand.vmem [shape: bf16[4,32,8], index: 5, kind: input, shape index: {}]
  %s6 = inlined_call_operand.vmem [shape: f32[4,1,8], index: 6, kind: input, shape index: {}]
  %s7 = inlined_call_operand.vmem [shape: bf16[4,32,8], index: 7, kind: input, shape index: {}]
  %s8 = inlined_call_operand.vmem [shape: f32[4,1,8], index: 8, kind: input, shape index: {}]
  %s9 = inlined_call_operand.vmem [shape: bf16[4,8,32], index: 9, kind: input, shape index: {}]
  %s10 = inlined_call_operand.vmem [shape: f32[1,32], index: 10, kind: input, shape index: {}]
  %s11 = inlined_call_operand.vmem [shape: f32[1,32], index: 11, kind: input, shape index: {}]
  %s12 = inlined_call_operand.vmem [shape: f32[1,32], index: 12, kind: input, shape index: {}]
  %s13 = inlined_call_operand.vmem [shape: f32[2,8,32], index: 13, kind: output, shape index: {}]
  %s14 = sld [smem:[#allocation0]]
  $region97: #{transformer_forward.17} parent=0
    _
  %s16 = ssub.s32 1, %s14
  %s17 = scalar_select 0, %s16, %s14
  loop: start=0, step=1, limit=10
  $region2: #{transformer_forward.17} parent=0 // loop_pre_header
    _
  $region3: #{transformer_forward.17} parent=0 // loop_header
    %s19 = sphi 0, %s23
    %p20 = scmp.ge.s32.totalorder %s19, 10
    %s26 = sphi 0, %s38
    %s27 = sphi 0, %s34
    %s28 = sphi 0, %s26
    %s29 = sphi 0, %s27
    %s30 = sphi 0, %s28
    %s31 = sphi 0, %s29
    %s41 = sphi 0, %s43
    %s44 = sphi 0, %s41
    %s45 = sphi 0, %s44
    %s61 = sphi 0, %s45
    %s67 = sphi 0, %s69
    %s70 = sphi 0, %s67
    %s71 = sphi 0, %s70
    %s87 = sphi 0, %s71
    %s93 = sphi 0, %s95
    %s96 = sphi 0, %s93
    %s97 = sphi 0, %s96
    %s113 = sphi 0, %s97
    %s119 = sphi 0, %s121
    %s122 = sphi 0, %s119
    %s123 = sphi 0, %s122
    %s139 = sphi 0, %s123
    %s145 = sphi 0, %s147
    %s148 = sphi 0, %s145
    %s149 = sphi 0, %s148
    %s165 = sphi 0, %s149
    %s171 = sphi 0, %s173
    %s174 = sphi 0, %s171
    %s175 = sphi 0, %s174
    %s191 = sphi 0, %s175
    %s197 = sphi 0, %s199
    %s200 = sphi 0, %s197
    %s201 = sphi 0, %s200
    %s217 = sphi 0, %s201
    %s223 = sphi 0, %s225
    %s226 = sphi 0, %s223
    %s227 = sphi 0, %s226
    %s243 = sphi 0, %s227
    %s249 = sphi 0, %s251
    %s252 = sphi 0, %s249
    %s253 = sphi 0, %s252
    %s269 = sphi 0, %s253
    %s275 = sphi 0, %s277
    %s278 = sphi 0, %s275
    %s279 = sphi 0, %s278
    %s295 = sphi 0, %s279
    %s299 = sphi 0, %s299
    %s301 = sphi 0, %s299
    %s302 = sphi 0, %s301
    %s316 = sphi 0, %s302
    %s320 = sphi 0, %s320
    %s322 = sphi 0, %s320
    %s323 = sphi 0, %s322
    %s337 = sphi 0, %s323
    %s341 = sphi 0, %s341
    %s343 = sphi 0, %s341
    %s344 = sphi 0, %s343
    %s358 = sphi 0, %s344
    %s364 = sphi 0, %s366
    %s367 = sphi 0, %s364
    %s368 = sphi 0, %s367
    %s384 = sphi 0, %s368
  $region4: #{transformer_forward.17} parent=0 // loop_header_branch
    %22 = sbr.rel (%p20) target = $region8
  $region5: #{transformer_forward.17} parent=0 // loop_body
    %s24 = ssub.s32 %s19, 1
    %s25 = ssub.s32 %s19, 2
    %s32 = sadd.s32 1, %s27
    %p33 = scmp.ge.s32.totalorder %s32, 4
    %s34 = scalar_select %p33, 0, %s32
    %s35 = sadd.s32 1, %s26
    %s36 = scalar_select %p33, %s35, %s26
    %p37 = scmp.ge.s32.totalorder %s36, 2
    %s38 = scalar_select %p37, 0, %s36
    %s39 = ssub.s32 %s26, %s38
    %p40 = scmp.eq.s32.totalorder %s39, 0
    %s42 = sadd.s32 %s41, 1
    %s43 = scalar_select %p40, %s41, %s42
    %p46 = pneg %p40
    %p47 = scmp.eq.s32.totalorder %s19, 7
    %p48 = por %p46, %p47
    %p49 = scmp.ne.s32.totalorder %s41, %s44
    %p50 = scmp.eq.s32.totalorder %s19, 0
    %p51 = por %p49, %p50
    %p52 = scmp.ne.s32.totalorder %s41, %s44
    %p53 = scmp.eq.s32.totalorder %s24, 7
    %p54 = por %p52, %p53
    %p55 = scmp.ne.s32.totalorder %s44, %s45
    %p56 = scmp.eq.s32.totalorder %s24, 0
    %p57 = por %p55, %p56
    %p58 = scmp.ne.s32.totalorder %s44, %s45
    %p59 = scmp.eq.s32.totalorder %s25, 7
    %p60 = por %p58, %p59
    %p62 = scmp.ne.s32.totalorder %s45, %s61
    %p63 = scmp.eq.s32.totalorder %s25, 0
    %p64 = por %p62, %p63
    %s65 = ssub.s32 %s26, %s38
    %p66 = scmp.eq.s32.totalorder %s65, 0
    %s68 = sadd.s32 %s67, 1
    %s69 = scalar_select %p66, %s67, %s68
    %p72 = pneg %p66
    %p73 = scmp.eq.s32.totalorder %s19, 7
    %p74 = por %p72, %p73
    %p75 = scmp.ne.s32.totalorder %s67, %s70
    %p76 = scmp.eq.s32.totalorder %s19, 0
    %p77 = por %p75, %p76
    %p78 = scmp.ne.s32.totalorder %s67, %s70
    %p79 = scmp.eq.s32.totalorder %s24, 7
    %p80 = por %p78, %p79
    %p81 = scmp.ne.s32.totalorder %s70, %s71
    %p82 = scmp.eq.s32.totalorder %s24, 0
    %p83 = por %p81, %p82
    %p84 = scmp.ne.s32.totalorder %s70, %s71
    %p85 = scmp.eq.s32.totalorder %s25, 7
    %p86 = por %p84, %p85
    %p88 = scmp.ne.s32.totalorder %s71, %s87
    %p89 = scmp.eq.s32.totalorder %s25, 0
    %p90 = por %p88, %p89
    %s91 = ssub.s32 %s26, %s38
    %p92 = scmp.eq.s32.totalorder %s91, 0
    %s94 = sadd.s32 %s93, 1
    %s95 = scalar_select %p92, %s93, %s94
    %p98 = pneg %p92
    %p99 = scmp.eq.s32.totalorder %s19, 7
    %p100 = por %p98, %p99
    %p101 = scmp.ne.s32.totalorder %s93, %s96
    %p102 = scmp.eq.s32.totalorder %s19, 0
    %p103 = por %p101, %p102
    %p104 = scmp.ne.s32.totalorder %s93, %s96
    %p105 = scmp.eq.s32.totalorder %s24, 7
    %p106 = por %p104, %p105
    %p107 = scmp.ne.s32.totalorder %s96, %s97
    %p108 = scmp.eq.s32.totalorder %s24, 0
    %p109 = por %p107, %p108
    %p110 = scmp.ne.s32.totalorder %s96, %s97
    %p111 = scmp.eq.s32.totalorder %s25, 7
    %p112 = por %p110, %p111
    %p114 = scmp.ne.s32.totalorder %s97, %s113
    %p115 = scmp.eq.s32.totalorder %s25, 0
    %p116 = por %p114, %p115
    %s117 = ssub.s32 %s27, %s34
    %p118 = scmp.eq.s32.totalorder %s117, 0
    %s120 = sadd.s32 %s119, 1
    %s121 = scalar_select %p118, %s119, %s120
    %p124 = pneg %p118
    %p125 = scmp.eq.s32.totalorder %s19, 7
    %p126 = por %p124, %p125
    %p127 = scmp.ne.s32.totalorder %s119, %s122
    %p128 = scmp.eq.s32.totalorder %s19, 0
    %p129 = por %p127, %p128
    %p130 = scmp.ne.s32.totalorder %s119, %s122
    %p131 = scmp.eq.s32.totalorder %s24, 7
    %p132 = por %p130, %p131
    %p133 = scmp.ne.s32.totalorder %s122, %s123
    %p134 = scmp.eq.s32.totalorder %s24, 0
    %p135 = por %p133, %p134
    %p136 = scmp.ne.s32.totalorder %s122, %s123
    %p137 = scmp.eq.s32.totalorder %s25, 7
    %p138 = por %p136, %p137
    %p140 = scmp.ne.s32.totalorder %s123, %s139
    %p141 = scmp.eq.s32.totalorder %s25, 0
    %p142 = por %p140, %p141
    %s143 = ssub.s32 %s27, %s34
    %p144 = scmp.eq.s32.totalorder %s143, 0
    %s146 = sadd.s32 %s145, 1
    %s147 = scalar_select %p144, %s145, %s146
    %p150 = pneg %p144
    %p151 = scmp.eq.s32.totalorder %s19, 7
    %p152 = por %p150, %p151
    %p153 = scmp.ne.s32.totalorder %s145, %s148
    %p154 = scmp.eq.s32.totalorder %s19, 0
    %p155 = por %p153, %p154
    %p156 = scmp.ne.s32.totalorder %s145, %s148
    %p157 = scmp.eq.s32.totalorder %s24, 7
    %p158 = por %p156, %p157
    %p159 = scmp.ne.s32.totalorder %s148, %s149
    %p160 = scmp.eq.s32.totalorder %s24, 0
    %p161 = por %p159, %p160
    %p162 = scmp.ne.s32.totalorder %s148, %s149
    %p163 = scmp.eq.s32.totalorder %s25, 7
    %p164 = por %p162, %p163
    %p166 = scmp.ne.s32.totalorder %s149, %s165
    %p167 = scmp.eq.s32.totalorder %s25, 0
    %p168 = por %p166, %p167
    %s169 = ssub.s32 %s27, %s34
    %p170 = scmp.eq.s32.totalorder %s169, 0
    %s172 = sadd.s32 %s171, 1
    %s173 = scalar_select %p170, %s171, %s172
    %p176 = pneg %p170
    %p177 = scmp.eq.s32.totalorder %s19, 7
    %p178 = por %p176, %p177
    %p179 = scmp.ne.s32.totalorder %s171, %s174
    %p180 = scmp.eq.s32.totalorder %s19, 0
    %p181 = por %p179, %p180
    %p182 = scmp.ne.s32.totalorder %s171, %s174
    %p183 = scmp.eq.s32.totalorder %s24, 7
    %p184 = por %p182, %p183
    %p185 = scmp.ne.s32.totalorder %s174, %s175
    %p186 = scmp.eq.s32.totalorder %s24, 0
    %p187 = por %p185, %p186
    %p188 = scmp.ne.s32.totalorder %s174, %s175
    %p189 = scmp.eq.s32.totalorder %s25, 7
    %p190 = por %p188, %p189
    %p192 = scmp.ne.s32.totalorder %s175, %s191
    %p193 = scmp.eq.s32.totalorder %s25, 0
    %p194 = por %p192, %p193
    %s195 = ssub.s32 %s27, %s34
    %p196 = scmp.eq.s32.totalorder %s195, 0
    %s198 = sadd.s32 %s197, 1
    %s199 = scalar_select %p196, %s197, %s198
    %p202 = pneg %p196
    %p203 = scmp.eq.s32.totalorder %s19, 7
    %p204 = por %p202, %p203
    %p205 = scmp.ne.s32.totalorder %s197, %s200
    %p206 = scmp.eq.s32.totalorder %s19, 0
    %p207 = por %p205, %p206
    %p208 = scmp.ne.s32.totalorder %s197, %s200
    %p209 = scmp.eq.s32.totalorder %s24, 7
    %p210 = por %p208, %p209
    %p211 = scmp.ne.s32.totalorder %s200, %s201
    %p212 = scmp.eq.s32.totalorder %s24, 0
    %p213 = por %p211, %p212
    %p214 = scmp.ne.s32.totalorder %s200, %s201
    %p215 = scmp.eq.s32.totalorder %s25, 7
    %p216 = por %p214, %p215
    %p218 = scmp.ne.s32.totalorder %s201, %s217
    %p219 = scmp.eq.s32.totalorder %s25, 0
    %p220 = por %p218, %p219
    %s221 = ssub.s32 %s27, %s34
    %p222 = scmp.eq.s32.totalorder %s221, 0
    %s224 = sadd.s32 %s223, 1
    %s225 = scalar_select %p222, %s223, %s224
    %p228 = pneg %p222
    %p229 = scmp.eq.s32.totalorder %s19, 7
    %p230 = por %p228, %p229
    %p231 = scmp.ne.s32.totalorder %s223, %s226
    %p232 = scmp.eq.s32.totalorder %s19, 0
    %p233 = por %p231, %p232
    %p234 = scmp.ne.s32.totalorder %s223, %s226
    %p235 = scmp.eq.s32.totalorder %s24, 7
    %p236 = por %p234, %p235
    %p237 = scmp.ne.s32.totalorder %s226, %s227
    %p238 = scmp.eq.s32.totalorder %s24, 0
    %p239 = por %p237, %p238
    %p240 = scmp.ne.s32.totalorder %s226, %s227
    %p241 = scmp.eq.s32.totalorder %s25, 7
    %p242 = por %p240, %p241
    %p244 = scmp.ne.s32.totalorder %s227, %s243
    %p245 = scmp.eq.s32.totalorder %s25, 0
    %p246 = por %p244, %p245
    %s247 = ssub.s32 %s27, %s34
    %p248 = scmp.eq.s32.totalorder %s247, 0
    %s250 = sadd.s32 %s249, 1
    %s251 = scalar_select %p248, %s249, %s250
    %p254 = pneg %p248
    %p255 = scmp.eq.s32.totalorder %s19, 7
    %p256 = por %p254, %p255
    %p257 = scmp.ne.s32.totalorder %s249, %s252
    %p258 = scmp.eq.s32.totalorder %s19, 0
    %p259 = por %p257, %p258
    %p260 = scmp.ne.s32.totalorder %s249, %s252
    %p261 = scmp.eq.s32.totalorder %s24, 7
    %p262 = por %p260, %p261
    %p263 = scmp.ne.s32.totalorder %s252, %s253
    %p264 = scmp.eq.s32.totalorder %s24, 0
    %p265 = por %p263, %p264
    %p266 = scmp.ne.s32.totalorder %s252, %s253
    %p267 = scmp.eq.s32.totalorder %s25, 7
    %p268 = por %p266, %p267
    %p270 = scmp.ne.s32.totalorder %s253, %s269
    %p271 = scmp.eq.s32.totalorder %s25, 0
    %p272 = por %p270, %p271
    %s273 = ssub.s32 %s27, %s34
    %p274 = scmp.eq.s32.totalorder %s273, 0
    %s276 = sadd.s32 %s275, 1
    %s277 = scalar_select %p274, %s275, %s276
    %p280 = pneg %p274
    %p281 = scmp.eq.s32.totalorder %s19, 7
    %p282 = por %p280, %p281
    %p283 = scmp.ne.s32.totalorder %s275, %s278
    %p284 = scmp.eq.s32.totalorder %s19, 0
    %p285 = por %p283, %p284
    %p286 = scmp.ne.s32.totalorder %s275, %s278
    %p287 = scmp.eq.s32.totalorder %s24, 7
    %p288 = por %p286, %p287
    %p289 = scmp.ne.s32.totalorder %s278, %s279
    %p290 = scmp.eq.s32.totalorder %s24, 0
    %p291 = por %p289, %p290
    %p292 = scmp.ne.s32.totalorder %s278, %s279
    %p293 = scmp.eq.s32.totalorder %s25, 7
    %p294 = por %p292, %p293
    %p296 = scmp.ne.s32.totalorder %s279, %s295
    %p297 = scmp.eq.s32.totalorder %s25, 0
    %p298 = por %p296, %p297
    %s300 = sadd.s32 %s299, 1
    %p303 = scmp.eq.s32.totalorder %s19, 7
    %p304 = scmp.ne.s32.totalorder %s299, %s301
    %p305 = scmp.eq.s32.totalorder %s19, 0
    %p306 = por %p304, %p305
    %p307 = scmp.ne.s32.totalorder %s299, %s301
    %p308 = scmp.eq.s32.totalorder %s24, 7
    %p309 = por %p307, %p308
    %p310 = scmp.ne.s32.totalorder %s301, %s302
    %p311 = scmp.eq.s32.totalorder %s24, 0
    %p312 = por %p310, %p311
    %p313 = scmp.ne.s32.totalorder %s301, %s302
    %p314 = scmp.eq.s32.totalorder %s25, 7
    %p315 = por %p313, %p314
    %p317 = scmp.ne.s32.totalorder %s302, %s316
    %p318 = scmp.eq.s32.totalorder %s25, 0
    %p319 = por %p317, %p318
    %s321 = sadd.s32 %s320, 1
    %p324 = scmp.eq.s32.totalorder %s19, 7
    %p325 = scmp.ne.s32.totalorder %s320, %s322
    %p326 = scmp.eq.s32.totalorder %s19, 0
    %p327 = por %p325, %p326
    %p328 = scmp.ne.s32.totalorder %s320, %s322
    %p329 = scmp.eq.s32.totalorder %s24, 7
    %p330 = por %p328, %p329
    %p331 = scmp.ne.s32.totalorder %s322, %s323
    %p332 = scmp.eq.s32.totalorder %s24, 0
    %p333 = por %p331, %p332
    %p334 = scmp.ne.s32.totalorder %s322, %s323
    %p335 = scmp.eq.s32.totalorder %s25, 7
    %p336 = por %p334, %p335
    %p338 = scmp.ne.s32.totalorder %s323, %s337
    %p339 = scmp.eq.s32.totalorder %s25, 0
    %p340 = por %p338, %p339
    %s342 = sadd.s32 %s341, 1
    %p345 = scmp.eq.s32.totalorder %s19, 7
    %p346 = scmp.ne.s32.totalorder %s341, %s343
    %p347 = scmp.eq.s32.totalorder %s19, 0
    %p348 = por %p346, %p347
    %p349 = scmp.ne.s32.totalorder %s341, %s343
    %p350 = scmp.eq.s32.totalorder %s24, 7
    %p351 = por %p349, %p350
    %p352 = scmp.ne.s32.totalorder %s343, %s344
    %p353 = scmp.eq.s32.totalorder %s24, 0
    %p354 = por %p352, %p353
    %p355 = scmp.ne.s32.totalorder %s343, %s344
    %p356 = scmp.eq.s32.totalorder %s25, 7
    %p357 = por %p355, %p356
    %p359 = scmp.ne.s32.totalorder %s344, %s358
    %p360 = scmp.eq.s32.totalorder %s25, 0
    %p361 = por %p359, %p360
    %s362 = ssub.s32 %s26, %s38
    %p363 = scmp.eq.s32.totalorder %s362, 0
    %s365 = sadd.s32 %s364, 1
    %s366 = scalar_select %p363, %s364, %s365
    %p369 = pneg %p363
    %p370 = scmp.eq.s32.totalorder %s19, 7
    %p371 = por %p369, %p370
    %p372 = scmp.ne.s32.totalorder %s364, %s367
    %p373 = scmp.eq.s32.totalorder %s19, 0
    %p374 = por %p372, %p373
    %p375 = scmp.ne.s32.totalorder %s364, %s367
    %p376 = scmp.eq.s32.totalorder %s24, 7
    %p377 = por %p375, %p376
    %p378 = scmp.ne.s32.totalorder %s367, %s368
    %p379 = scmp.eq.s32.totalorder %s24, 0
    %p380 = por %p378, %p379
    %p381 = scmp.ne.s32.totalorder %s367, %s368
    %p382 = scmp.eq.s32.totalorder %s25, 7
    %p383 = por %p381, %p382
    %p385 = scmp.ne.s32.totalorder %s368, %s384
    %p386 = scmp.eq.s32.totalorder %s25, 0
    %p387 = por %p385, %p386
    %p388 = scmp.le.s32.totalorder 1, %s19
    %p389 = scmp.lt.s32.totalorder %s19, 9
    %p390 = pnand %p388, %p389
    %p391 = pneg %p390
    // Predicated region
    $region9: #{transformer_forward.17} parent=5 // pred_check
      _
    $region10: #{transformer_forward.17} parent=5 // pred_check_branch
      %393 = sbr.rel (%p390) target = $region12
    $region11: #{transformer_forward.17} parent=5 // pred_region
      %s394 = ssub.s32 %s19, 1
      // Predicated region
      $region13: #{transformer_forward.17} parent=11 // pred_check
        %p395 = pneg %p312
      $region14: #{transformer_forward.17} parent=11 // pred_check_branch
        %397 = sbr.rel (%p395) target = $region16
      $region15: #{transformer_forward.17} parent=11 // pred_region
        _
      $region16: #{transformer_forward.17} parent=11 // pred_fallthru
        _
      // Predicated region
      $region17: #{transformer_forward.17} parent=11 // pred_check
        %p398 = pneg %p333
      $region18: #{transformer_forward.17} parent=11 // pred_check_branch
        %400 = sbr.rel (%p398) target = $region20
      $region19: #{transformer_forward.17} parent=11 // pred_region
        _
      $region20: #{transformer_forward.17} parent=11 // pred_fallthru
        _
      // Predicated region
      $region21: #{transformer_forward.17} parent=11 // pred_check
        %p401 = pneg %p354
      $region22: #{transformer_forward.17} parent=11 // pred_check_branch
        %403 = sbr.rel (%p401) target = $region24
      $region23: #{transformer_forward.17} parent=11 // pred_region
        _
      $region24: #{transformer_forward.17} parent=11 // pred_fallthru
        _
    $region12: #{transformer_forward.17} parent=5 // pred_fallthru
      _
    %p404 = scmp.lt.s32.totalorder %s19, 8
    // Predicated region
    $region25: #{transformer_forward.17} parent=5 // pred_check
      %p405 = pneg %p404
    $region26: #{transformer_forward.17} parent=5 // pred_check_branch
      %407 = sbr.rel (%p405) target = $region28
    $region27: #{transformer_forward.17} parent=5 // pred_region
      // Predicated region
      $region29: #{transformer_forward.17} parent=27 // pred_check
        %p408 = pneg %p51
      $region30: #{transformer_forward.17} parent=27 // pred_check_branch
        %410 = sbr.rel (%p408) target = $region32
      $region31: #{transformer_forward.17} parent=27 // pred_region
        %p411 = scmp.lt.s32.totalorder %s26, 1
        %s412 = scalar_select %p411, %s26, 1
        %s413 = smul.addr %s412, 8
        %s414 = scalar_lea.vmem %s0, %s413
      $region32: #{transformer_forward.17} parent=27 // pred_fallthru
        _
      // Predicated region
      $region33: #{transformer_forward.17} parent=27 // pred_check
        %p415 = pneg %p77
      $region34: #{transformer_forward.17} parent=27 // pred_check_branch
        %417 = sbr.rel (%p415) target = $region36
      $region35: #{transformer_forward.17} parent=27 // pred_region
        %p418 = scmp.lt.s32.totalorder %s26, 1
        %s419 = scalar_select %p418, %s26, 1
        %s420 = smul.addr %s419, 2
        %s421 = smul.addr %s420, 8
        %s422 = scalar_lea.vmem %s1, %s421
      $region36: #{transformer_forward.17} parent=27 // pred_fallthru
        _
      // Predicated region
      $region37: #{transformer_forward.17} parent=27 // pred_check
        %p423 = pneg %p103
      $region38: #{transformer_forward.17} parent=27 // pred_check_branch
        %425 = sbr.rel (%p423) target = $region40
      $region39: #{transformer_forward.17} parent=27 // pred_region
        %p426 = scmp.lt.s32.totalorder %s26, 1
        %s427 = scalar_select %p426, %s26, 1
        %s428 = scalar_lea.vmem %s2, %s427
      $region40: #{transformer_forward.17} parent=27 // pred_fallthru
        _
      // Predicated region
      $region41: #{transformer_forward.17} parent=27 // pred_check
        %p429 = pneg %p129
      $region42: #{transformer_forward.17} parent=27 // pred_check_branch
        %431 = sbr.rel (%p429) target = $region44
      $region43: #{transformer_forward.17} parent=27 // pred_region
        %p432 = scmp.lt.s32.totalorder %s27, 3
        %s433 = scalar_select %p432, %s27, 3
        %s434 = smul.addr %s433, 4
        %s435 = smul.addr %s434, 4
        %s436 = scalar_lea.vmem %s3, %s435
      $region44: #{transformer_forward.17} parent=27 // pred_fallthru
        _
      // Predicated region
      $region45: #{transformer_forward.17} parent=27 // pred_check
        %p437 = pneg %p155
      $region46: #{transformer_forward.17} parent=27 // pred_check_branch
        %439 = sbr.rel (%p437) target = $region48
      $region47: #{transformer_forward.17} parent=27 // pred_region
        %p440 = scmp.lt.s32.totalorder %s27, 3
        %s441 = scalar_select %p440, %s27, 3
        %s442 = scalar_lea.vmem %s4, %s441
      $region48: #{transformer_forward.17} parent=27 // pred_fallthru
        _
      // Predicated region
      $region49: #{transformer_forward.17} parent=27 // pred_check
        %p443 = pneg %p181
      $region50: #{transformer_forward.17} parent=27 // pred_check_branch
        %445 = sbr.rel (%p443) target = $region52
      $region51: #{transformer_forward.17} parent=27 // pred_region
        %p446 = scmp.lt.s32.totalorder %s27, 3
        %s447 = scalar_select %p446, %s27, 3
        %s448 = smul.addr %s447, 4
        %s449 = smul.addr %s448, 4
        %s450 = scalar_lea.vmem %s5, %s449
      $region52: #{transformer_forward.17} parent=27 // pred_fallthru
        _
      // Predicated region
      $region53: #{transformer_forward.17} parent=27 // pred_check
        %p451 = pneg %p207
      $region54: #{transformer_forward.17} parent=27 // pred_check_branch
        %453 = sbr.rel (%p451) target = $region56
      $region55: #{transformer_forward.17} parent=27 // pred_region
        %p454 = scmp.lt.s32.totalorder %s27, 3
        %s455 = scalar_select %p454, %s27, 3
        %s456 = scalar_lea.vmem %s6, %s455
      $region56: #{transformer_forward.17} parent=27 // pred_fallthru
        _
      // Predicated region
      $region57: #{transformer_forward.17} parent=27 // pred_check
        %p457 = pneg %p233
      $region58: #{transformer_forward.17} parent=27 // pred_check_branch
        %459 = sbr.rel (%p457) target = $region60
      $region59: #{transformer_forward.17} parent=27 // pred_region
        %p460 = scmp.lt.s32.totalorder %s27, 3
        %s461 = scalar_select %p460, %s27, 3
        %s462 = smul.addr %s461, 4
        %s463 = smul.addr %s462, 4
        %s464 = scalar_lea.vmem %s7, %s463
      $region60: #{transformer_forward.17} parent=27 // pred_fallthru
        _
      // Predicated region
      $region61: #{transformer_forward.17} parent=27 // pred_check
        %p465 = pneg %p259
      $region62: #{transformer_forward.17} parent=27 // pred_check_branch
        %467 = sbr.rel (%p465) target = $region64
      $region63: #{transformer_forward.17} parent=27 // pred_region
        %p468 = scmp.lt.s32.totalorder %s27, 3
        %s469 = scalar_select %p468, %s27, 3
        %s470 = scalar_lea.vmem %s8, %s469
      $region64: #{transformer_forward.17} parent=27 // pred_fallthru
        _
      // Predicated region
      $region65: #{transformer_forward.17} parent=27 // pred_check
        %p471 = pneg %p285
      $region66: #{transformer_forward.17} parent=27 // pred_check_branch
        %473 = sbr.rel (%p471) target = $region68
      $region67: #{transformer_forward.17} parent=27 // pred_region
        %p474 = scmp.lt.s32.totalorder %s27, 3
        %s475 = scalar_select %p474, %s27, 3
        %s476 = smul.addr %s475, 4
        %s477 = scalar_lea.vmem %s9, %s476
      $region68: #{transformer_forward.17} parent=27 // pred_fallthru
        _
    $region28: #{transformer_forward.17} parent=5 // pred_fallthru
      _
    %p478 = scmp.le.s32.totalorder 1, %s19
    %p479 = scmp.lt.s32.totalorder %s19, 9
    %p480 = pnand %p478, %p479
    %p481 = pneg %p480
    // Predicated region
    $region69: #{transformer_forward.17} parent=5 // pred_check
      _
    $region70: #{transformer_forward.17} parent=5 // pred_check_branch
      %483 = sbr.rel (%p480) target = $region72
    $region71: #{transformer_forward.17} parent=5 // pred_region
      %s484 = ssub.s32 %s19, 1
      %p485 = scmp.lt.s32.totalorder %s28, 1
      %s486 = scalar_select %p485, %s28, 1
      %s487 = smul.addr %s486, 8
      %s488 = scalar_lea.vmem %s0, %s487
      %p489 = pneg %p57
      %p490 = pneg %p54
      %p491 = scmp.lt.s32.totalorder %s28, 1
      %s492 = scalar_select %p491, %s28, 1
      %s493 = smul.addr %s492, 2
      %s494 = smul.addr %s493, 8
      %s495 = scalar_lea.vmem %s1, %s494
      %p496 = pneg %p83
      %p497 = pneg %p80
      %p498 = scmp.lt.s32.totalorder %s28, 1
      %s499 = scalar_select %p498, %s28, 1
      %s500 = scalar_lea.vmem %s2, %s499
      %p501 = pneg %p109
      %p502 = pneg %p106
      %p503 = scmp.lt.s32.totalorder %s29, 3
      %s504 = scalar_select %p503, %s29, 3
      %s505 = smul.addr %s504, 4
      %s506 = smul.addr %s505, 4
      %s507 = scalar_lea.vmem %s3, %s506
      %p508 = pneg %p135
      %p509 = pneg %p132
      %p510 = scmp.lt.s32.totalorder %s29, 3
      %s511 = scalar_select %p510, %s29, 3
      %s512 = scalar_lea.vmem %s4, %s511
      %p513 = pneg %p161
      %p514 = pneg %p158
      %p515 = scmp.lt.s32.totalorder %s29, 3
      %s516 = scalar_select %p515, %s29, 3
      %s517 = smul.addr %s516, 4
      %s518 = smul.addr %s517, 4
      %s519 = scalar_lea.vmem %s5, %s518
      %p520 = pneg %p187
      %p521 = pneg %p184
      %p522 = scmp.lt.s32.totalorder %s29, 3
      %s523 = scalar_select %p522, %s29, 3
      %s524 = scalar_lea.vmem %s6, %s523
      %p525 = pneg %p213
      %p526 = pneg %p210
      %p527 = scmp.lt.s32.totalorder %s29, 3
      %s528 = scalar_select %p527, %s29, 3
      %s529 = smul.addr %s528, 4
      %s530 = smul.addr %s529, 4
      %s531 = scalar_lea.vmem %s7, %s530
      %p532 = pneg %p239
      %p533 = pneg %p236
      %p534 = scmp.lt.s32.totalorder %s29, 3
      %s535 = scalar_select %p534, %s29, 3
      %s536 = scalar_lea.vmem %s8, %s535
      %p537 = pneg %p265
      %p538 = pneg %p262
      %p539 = scmp.lt.s32.totalorder %s29, 3
      %s540 = scalar_select %p539, %s29, 3
      %s541 = smul.addr %s540, 4
      %s542 = scalar_lea.vmem %s9, %s541
      %p543 = pneg %p291
      %p544 = pneg %p288
      %p545 = pneg %p312
      %p546 = pneg %p309
      %p547 = pneg %p333
      %p548 = pneg %p330
      %p549 = pneg %p354
      %p550 = pneg %p351
      %p551 = pneg %p380
      %p552 = pneg %p377
      %p553 = scmp.lt.s32.totalorder %s28, 1
      %s554 = scalar_select %p553, %s28, 1
      %s555 = smul.addr %s554, 8
      %s556 = scalar_lea.vmem %s13, %s555
      %p557 = scmp.lt.s32.totalorder %s28, 1
      %s558 = scalar_select %p557, %s28, 1
      %s559 = smul.addr %s558, 8
      %s560 = scalar_lea.vmem %s0, %s559
      %p561 = scmp.lt.s32.totalorder %s28, 1
      %s562 = scalar_select %p561, %s28, 1
      %s563 = smul.addr %s562, 2
      %s564 = smul.addr %s563, 8
      %s565 = scalar_lea.vmem %s1, %s564
      %p566 = scmp.lt.s32.totalorder %s28, 1
      %s567 = scalar_select %p566, %s28, 1
      %s568 = scalar_lea.vmem %s2, %s567
      %p569 = scmp.lt.s32.totalorder %s29, 3
      %s570 = scalar_select %p569, %s29, 3
      %s571 = smul.addr %s570, 4
      %s572 = smul.addr %s571, 4
      %s573 = scalar_lea.vmem %s3, %s572
      %p574 = scmp.lt.s32.totalorder %s29, 3
      %s575 = scalar_select %p574, %s29, 3
      %s576 = scalar_lea.vmem %s4, %s575
      %p577 = scmp.lt.s32.totalorder %s29, 3
      %s578 = scalar_select %p577, %s29, 3
      %s579 = smul.addr %s578, 4
      %s580 = smul.addr %s579, 4
      %s581 = scalar_lea.vmem %s5, %s580
      %p582 = scmp.lt.s32.totalorder %s29, 3
      %s583 = scalar_select %p582, %s29, 3
      %s584 = scalar_lea.vmem %s6, %s583
      %p585 = scmp.lt.s32.totalorder %s29, 3
      %s586 = scalar_select %p585, %s29, 3
      %s587 = smul.addr %s586, 4
      %s588 = smul.addr %s587, 4
      %s589 = scalar_lea.vmem %s7, %s588
      %p590 = scmp.lt.s32.totalorder %s29, 3
      %s591 = scalar_select %p590, %s29, 3
      %s592 = scalar_lea.vmem %s8, %s591
      %p593 = scmp.lt.s32.totalorder %s29, 3
      %s594 = scalar_select %p593, %s29, 3
      %s595 = smul.addr %s594, 4
      %s596 = scalar_lea.vmem %s9, %s595
      %p597 = scmp.lt.s32.totalorder %s28, 1
      %s598 = scalar_select %p597, %s28, 1
      %s599 = smul.addr %s598, 8
      %s600 = scalar_lea.vmem %s13, %s599
      %v602 = vld [vmem:[%s560] sm:$0xff]
      %v603 = vld [vmem:[%s565] sm:$0xff]
      %v604 = vld [vmem:[%s565 + $0x8] sm:$0xff]
      %v605 = vpack.c.bf16 %v602, %v602
      %v606 = vpack.c.bf16 %v604, %v603
      %v607 = vld [vmem:[%s573] sm:$0xf]
      %v608 = vld [vmem:[%s573 + $0x4] sm:$0xf]
      %v609 = vld [vmem:[%s573 + $0x8] sm:$0xf]
      %v610 = vld [vmem:[%s573 + $0xc] sm:$0xf]
      %v611 = vld [vmem:[%s576] sm:$0x1]
      %v613 = vlaneseq
      %v614 = vshrl.u32 %v613, 7
      %v615 = vsub.s32 0, %v614
      %v616 = vrot.slane %v611, %v615
      %v622 = vunpack.c.l.b16 %v607
      %v623 = vunpack.c.l.b16 %v608
      %v624 = vunpack.c.l.b16 %v609
      %v625 = vunpack.c.l.b16 %v610
      %v626 = vpack.c.b16 %v623, %v622
      %v627 = vpack.c.b16 %v625, %v624
      %vm630 = vcmask 261120
      %v632 = vsel %vm630, %v605, 0
      %634 = vmatprep.subr.bf16.mxu0 0
      %635 = vmatpush1.bf16.msra.mxu0 0
      %636 = vmatprep.subr.bf16.mxu0 0
      %637 = vmatpush1.bf16.msra.mxu0 0
      %638 = vmatprep.subr.bf16.mxu0 0
      %639 = vmatpush1.bf16.msra.mxu0 0
      %640 = vmatprep.subr.bf16.mxu0 0
      %641 = vmatpush1.bf16.msra.mxu0 0
      %642 = vmatprep.subr.bf16.mxu0 0
      %643 = vmatpush1.bf16.msra.mxu0 0
      %644 = vmatprep.subr.bf16.mxu0 0
      %645 = vmatpush1.bf16.msra.mxu0 0
      %646 = vmatprep.subr.bf16.mxu0 0
      %647 = vmatpush1.bf16.msra.mxu0 %v627
      %648 = vmatprep.subr.bf16.mxu0 0
      %649 = vmatpush1.bf16.msra.mxu0 %v626
      %650 = vmatprep.subr.bf16.mxu0 0
      %651 = vmatpush2.bf16.msra.mxu0 0
      %652 = vmatprep.subr.bf16.mxu0 0
      %653 = vmatpush2.bf16.msra.mxu0 0
      %654 = vmatprep.subr.bf16.mxu0 0
      %655 = vmatpush2.bf16.msra.mxu0 0
      %656 = vmatprep.subr.bf16.mxu0 0
      %657 = vmatpush2.bf16.msra.mxu0 0
      %658 = vmatprep.subr.bf16.mxu0 0
      %659 = vmatpush2.bf16.msra.mxu0 0
      %660 = vmatprep.subr.bf16.mxu0 0
      %661 = vmatpush2.bf16.msra.mxu0 0
      %662 = vmatprep.subr.bf16.mxu0 0
      %663 = vmatpush2.bf16.msra.mxu0 0
      %664 = vmatprep.subr.bf16.mxu0 0
      %665 = vmatpush2.bf16.msra.mxu0 0
      %666 = vmatprep.mubr.bf16.mxu0 0
      %667 = vmatmul.mubr.bf16.gmra.mxu0 %v632
      %v668 = vpop.f32.mrf.mxu0
      %v669 = vadd.f32 %v616, %v668
      %v670 = vpop.f32.mrf.mxu0
      %v671 = vpop.f32.mrf.mxu0
      %v672 = vpop.f32.mrf.mxu0
      %673 = vdwg.mxu0
      %v674 = vld [vmem:[%s581] sm:$0xf]
      %v675 = vld [vmem:[%s581 + $0x4] sm:$0xf]
      %v676 = vld [vmem:[%s581 + $0x8] sm:$0xf]
      %v677 = vld [vmem:[%s581 + $0xc] sm:$0xf]
      %v678 = vld [vmem:[%s584] sm:$0x1]
      %v680 = vlaneseq
      %v681 = vshrl.u32 %v680, 7
      %v682 = vsub.s32 0, %v681
      %v683 = vrot.slane %v678, %v682
      %v689 = vunpack.c.l.b16 %v674
      %v690 = vunpack.c.l.b16 %v675
      %v691 = vunpack.c.l.b16 %v676
      %v692 = vunpack.c.l.b16 %v677
      %v693 = vpack.c.b16 %v690, %v689
      %v694 = vpack.c.b16 %v692, %v691
      %v698 = vsel %vm630, %v606, 0
      %700 = vmatprep.subr.bf16.mxu0 0
      %701 = vmatpush1.bf16.msra.mxu0 0
      %702 = vmatprep.subr.bf16.mxu0 0
      %703 = vmatpush1.bf16.msra.mxu0 0
      %704 = vmatprep.subr.bf16.mxu0 0
      %705 = vmatpush1.bf16.msra.mxu0 0
      %706 = vmatprep.subr.bf16.mxu0 0
      %707 = vmatpush1.bf16.msra.mxu0 0
      %708 = vmatprep.subr.bf16.mxu0 0
      %709 = vmatpush1.bf16.msra.mxu0 0
      %710 = vmatprep.subr.bf16.mxu0 0
      %711 = vmatpush1.bf16.msra.mxu0 0
      %712 = vmatprep.subr.bf16.mxu0 0
      %713 = vmatpush1.bf16.msra.mxu0 %v694
      %714 = vmatprep.subr.bf16.mxu0 0
      %715 = vmatpush1.bf16.msra.mxu0 %v693
      %716 = vmatprep.subr.bf16.mxu0 0
      %717 = vmatpush2.bf16.msra.mxu0 0
      %718 = vmatprep.subr.bf16.mxu0 0
      %719 = vmatpush2.bf16.msra.mxu0 0
      %720 = vmatprep.subr.bf16.mxu0 0
      %721 = vmatpush2.bf16.msra.mxu0 0
      %722 = vmatprep.subr.bf16.mxu0 0
      %723 = vmatpush2.bf16.msra.mxu0 0
      %724 = vmatprep.subr.bf16.mxu0 0
      %725 = vmatpush2.bf16.msra.mxu0 0
      %726 = vmatprep.subr.bf16.mxu0 0
      %727 = vmatpush2.bf16.msra.mxu0 0
      %728 = vmatprep.subr.bf16.mxu0 0
      %729 = vmatpush2.bf16.msra.mxu0 0
      %730 = vmatprep.subr.bf16.mxu0 0
      %731 = vmatpush2.bf16.msra.mxu0 0
      %732 = vmatprep.mubr.bf16.mxu0 0
      %733 = vmatmul.mubr.bf16.gmra.mxu0 %v698
      %v734 = vpop.f32.mrf.mxu0
      %v735 = vadd.f32 %v683, %v734
      %v736 = vpop.f32.mrf.mxu0
      %v737 = vpop.f32.mrf.mxu0
      %v738 = vadd.f32 %v683, %v737
      %v739 = vpop.f32.mrf.mxu0
      %740 = vdwg.mxu0
      %v741 = vld [vmem:[%s589] sm:$0xf]
      %v742 = vld [vmem:[%s589 + $0x4] sm:$0xf]
      %v743 = vld [vmem:[%s589 + $0x8] sm:$0xf]
      %v744 = vld [vmem:[%s589 + $0xc] sm:$0xf]
      %v745 = vld [vmem:[%s592] sm:$0x1]
      %v747 = vlaneseq
      %v748 = vshrl.u32 %v747, 7
      %v749 = vsub.s32 0, %v748
      %v750 = vrot.slane %v745, %v749
      %v756 = vunpack.c.l.b16 %v741
      %v757 = vunpack.c.l.b16 %v742
      %v758 = vunpack.c.l.b16 %v743
      %v759 = vunpack.c.l.b16 %v744
      %v760 = vpack.c.b16 %v757, %v756
      %v761 = vpack.c.b16 %v759, %v758
      %764 = vmatprep.subr.bf16.mxu0 0
      %765 = vmatpush1.bf16.msra.mxu0 0
      %766 = vmatprep.subr.bf16.mxu0 0
      %767 = vmatpush1.bf16.msra.mxu0 0
      %768 = vmatprep.subr.bf16.mxu0 0
      %769 = vmatpush1.bf16.msra.mxu0 0
      %770 = vmatprep.subr.bf16.mxu0 0
      %771 = vmatpush1.bf16.msra.mxu0 0
      %772 = vmatprep.subr.bf16.mxu0 0
      %773 = vmatpush1.bf16.msra.mxu0 0
      %774 = vmatprep.subr.bf16.mxu0 0
      %775 = vmatpush1.bf16.msra.mxu0 0
      %776 = vmatprep.subr.bf16.mxu0 0
      %777 = vmatpush1.bf16.msra.mxu0 %v761
      %778 = vmatprep.subr.bf16.mxu0 0
      %779 = vmatpush1.bf16.msra.mxu0 %v760
      %780 = vmatprep.subr.bf16.mxu0 0
      %781 = vmatpush2.bf16.msra.mxu0 0
      %782 = vmatprep.subr.bf16.mxu0 0
      %783 = vmatpush2.bf16.msra.mxu0 0
      %784 = vmatprep.subr.bf16.mxu0 0
      %785 = vmatpush2.bf16.msra.mxu0 0
      %786 = vmatprep.subr.bf16.mxu0 0
      %787 = vmatpush2.bf16.msra.mxu0 0
      %788 = vmatprep.subr.bf16.mxu0 0
      %789 = vmatpush2.bf16.msra.mxu0 0
      %790 = vmatprep.subr.bf16.mxu0 0
      %791 = vmatpush2.bf16.msra.mxu0 0
      %792 = vmatprep.subr.bf16.mxu0 0
      %793 = vmatpush2.bf16.msra.mxu0 0
      %794 = vmatprep.subr.bf16.mxu0 0
      %795 = vmatpush2.bf16.msra.mxu0 0
      %796 = vmatprep.mubr.bf16.mxu0 0
      %797 = vmatmul.mubr.bf16.gmra.mxu0 %v698
      %v798 = vpop.f32.mrf.mxu0
      %v799 = vadd.f32 %v750, %v798
      %v800 = vpop.f32.mrf.mxu0
      %v801 = vpop.f32.mrf.mxu0
      %v802 = vadd.f32 %v750, %v801
      %v803 = vpop.f32.mrf.mxu0
      %804 = vdwg.mxu0
      %v805 = vmul.f32 %v669, 0.35355338
      %v806 = vpack.c.bf16 %v805, %v805
      %v807 = vpack.c.bf16 %v738, %v735
      %v808 = vld [vmem:[%s568] sm:$0x1]
      %v810 = vlaneseq
      %v811 = vshrl.u32 %v810, 7
      %v812 = vsub.s32 0, %v811
      %v813 = vrot.slane %v808, %v812
      %vm815 = vcmask 64512
      %v817 = vsel %vm815, %v806, 0
      %v820 = vsel %vm815, %v807, 0
      %822 = vmatprep.subr.bf16.mxu0 0
      %823 = vmatpush1.bf16.xpose.msra.mxu0 0
      %824 = vmatprep.subr.bf16.mxu0 0
      %825 = vmatpush1.bf16.xpose.msra.mxu0 0
      %826 = vmatprep.subr.bf16.mxu0 0
      %827 = vmatpush1.bf16.xpose.msra.mxu0 0
      %828 = vmatprep.subr.bf16.mxu0 0
      %829 = vmatpush1.bf16.xpose.msra.mxu0 0
      %830 = vmatprep.subr.bf16.mxu0 0
      %831 = vmatpush1.bf16.xpose.msra.mxu0 0
      %832 = vmatprep.subr.bf16.mxu0 0
      %833 = vmatpush1.bf16.xpose.msra.mxu0 0
      %834 = vmatprep.subr.bf16.mxu0 0
      %835 = vmatpush1.bf16.xpose.msra.mxu0 0
      %836 = vmatprep.subr.bf16.mxu0 0
      %837 = vmatpush1.bf16.xpose.msra.mxu0 %v820
      %838 = vmatprep.subr.bf16.mxu0 0
      %839 = vmatpush2.bf16.xpose.msra.mxu0 0
      %840 = vmatprep.subr.bf16.mxu0 0
      %841 = vmatpush2.bf16.xpose.msra.mxu0 0
      %842 = vmatprep.subr.bf16.mxu0 0
      %843 = vmatpush2.bf16.xpose.msra.mxu0 0
      %844 = vmatprep.subr.bf16.mxu0 0
      %845 = vmatpush2.bf16.xpose.msra.mxu0 0
      %846 = vmatprep.subr.bf16.mxu0 0
      %847 = vmatpush2.bf16.xpose.msra.mxu0 0
      %848 = vmatprep.subr.bf16.mxu0 0
      %849 = vmatpush2.bf16.xpose.msra.mxu0 0
      %850 = vmatprep.subr.bf16.mxu0 0
      %851 = vmatpush2.bf16.xpose.msra.mxu0 0
      %852 = vmatprep.subr.bf16.mxu0 0
      %853 = vmatpush2.bf16.xpose.msra.mxu0 0
      %854 = vmatprep.mubr.bf16.mxu0 0
      %855 = vmatmul.mubr.bf16.gmra.mxu0 %v817
      %v856 = vpop.f32.mrf.mxu0
      %v857 = vadd.f32 %v813, %v856
      %v858 = vpop.f32.mrf.mxu0
      %v859 = vpop.f32.mrf.mxu0
      %v860 = vpop.f32.mrf.mxu0
      %861 = vdwg.mxu0
      %vm862 = vcmask 130048
      %v863 = vsel %vm862, %v857, -inf
      %864 = vmax.xlane.f32.xlu0 %v863
      %v865 = vpop.xlane.xlu0 %864
      %v866 = vsub.f32 %v857, %v865
      %v867 = vmul.f32 %v866, 1.442695
      %v868 = vpow.pop %v867
      %v869 = vsel %vm862, %v868, 0.0
      %870 = vadd.xlane.f32.xlu0 %v869
      %v871 = vpop.xlane.xlu0 %870
      %v872 = vrcp.pop %v871
      %v873 = vmul.f32 %v868, %v872
      %v874 = vpack.c.bf16 %v873, %v873
      %v875 = vpack.c.bf16 %v802, %v799
      %v877 = vsel %vm862, %v874, 0
      %879 = vmatprep.subr.bf16.mxu0 0
      %880 = vmatpush1.bf16.msra.mxu0 0
      %881 = vmatprep.subr.bf16.mxu0 0
      %882 = vmatpush1.bf16.msra.mxu0 0
      %883 = vmatprep.subr.bf16.mxu0 0
      %884 = vmatpush1.bf16.msra.mxu0 0
      %885 = vmatprep.subr.bf16.mxu0 0
      %886 = vmatpush1.bf16.msra.mxu0 0
      %887 = vmatprep.subr.bf16.mxu0 0
      %888 = vmatpush1.bf16.msra.mxu0 0
      %889 = vmatprep.subr.bf16.mxu0 0
      %890 = vmatpush1.bf16.msra.mxu0 0
      %891 = vmatprep.subr.bf16.mxu0 0
      %892 = vmatpush1.bf16.msra.mxu0 0
      %893 = vmatprep.subr.bf16.mxu0 0
      %894 = vmatpush1.bf16.msra.mxu0 %v875
      %895 = vmatprep.subr.bf16.mxu0 0
      %896 = vmatpush2.bf16.msra.mxu0 0
      %897 = vmatprep.subr.bf16.mxu0 0
      %898 = vmatpush2.bf16.msra.mxu0 0
      %899 = vmatprep.subr.bf16.mxu0 0
      %900 = vmatpush2.bf16.msra.mxu0 0
      %901 = vmatprep.subr.bf16.mxu0 0
      %902 = vmatpush2.bf16.msra.mxu0 0
      %903 = vmatprep.subr.bf16.mxu0 0
      %904 = vmatpush2.bf16.msra.mxu0 0
      %905 = vmatprep.subr.bf16.mxu0 0
      %906 = vmatpush2.bf16.msra.mxu0 0
      %907 = vmatprep.subr.bf16.mxu0 0
      %908 = vmatpush2.bf16.msra.mxu0 0
      %909 = vmatprep.subr.bf16.mxu0 0
      %910 = vmatpush2.bf16.msra.mxu0 0
      %911 = vmatprep.mubr.bf16.mxu0 0
      %912 = vmatmul.mubr.bf16.gmra.mxu0 %v877
      %v913 = vpop.f32.mrf.mxu0
      %v914 = vadd.f32 0.0, %v913
      %v915 = vpop.f32.mrf.mxu0
      %v916 = vpop.f32.mrf.mxu0
      %v917 = vpop.f32.mrf.mxu0
      %918 = vdwg.mxu0
      %v919 = vpack.c.bf16 %v914, %v914
      %v920 = vld [vmem:[%s596] sm:$0xf]
      %v922 = vsel %vm815, %v919, 0
      %vm924 = vcmask 1043456
      %v926 = vsel %vm924, %v920, 0
      %928 = vmatprep.subr.bf16.mxu0 0
      %929 = vmatpush1.bf16.msra.mxu0 0
      %930 = vmatprep.subr.bf16.mxu0 0
      %931 = vmatpush1.bf16.msra.mxu0 0
      %932 = vmatprep.subr.bf16.mxu0 0
      %933 = vmatpush1.bf16.msra.mxu0 0
      %934 = vmatprep.subr.bf16.mxu0 0
      %935 = vmatpush1.bf16.msra.mxu0 0
      %936 = vmatprep.subr.bf16.mxu0 0
      %937 = vmatpush1.bf16.msra.mxu0 0
      %938 = vmatprep.subr.bf16.mxu0 0
      %939 = vmatpush1.bf16.msra.mxu0 0
      %940 = vmatprep.subr.bf16.mxu0 0
      %941 = vmatpush1.bf16.msra.mxu0 0
      %942 = vmatprep.subr.bf16.mxu0 0
      %943 = vmatpush1.bf16.msra.mxu0 %v926
      %944 = vmatprep.subr.bf16.mxu0 0
      %945 = vmatpush2.bf16.msra.mxu0 0
      %946 = vmatprep.subr.bf16.mxu0 0
      %947 = vmatpush2.bf16.msra.mxu0 0
      %948 = vmatprep.subr.bf16.mxu0 0
      %949 = vmatpush2.bf16.msra.mxu0 0
      %950 = vmatprep.subr.bf16.mxu0 0
      %951 = vmatpush2.bf16.msra.mxu0 0
      %952 = vmatprep.subr.bf16.mxu0 0
      %953 = vmatpush2.bf16.msra.mxu0 0
      %954 = vmatprep.subr.bf16.mxu0 0
      %955 = vmatpush2.bf16.msra.mxu0 0
      %956 = vmatprep.subr.bf16.mxu0 0
      %957 = vmatpush2.bf16.msra.mxu0 0
      %958 = vmatprep.subr.bf16.mxu0 0
      %959 = vmatpush2.bf16.msra.mxu0 0
      %960 = vmatprep.mubr.bf16.mxu0 0
      %961 = vmatmul.mubr.bf16.gmra.mxu0 %v922
      %v962 = vpop.f32.mrf.mxu0
      %v963 = vadd.f32 0.0, %v962
      %v964 = vpop.f32.mrf.mxu0
      %v965 = vpop.f32.mrf.mxu0
      %v966 = vpop.f32.mrf.mxu0
      %967 = vdwg.mxu0
      %p968 = scmp.eq.s32.totalorder %s29, 0
      // Predicated region
      $region73: #{transformer_forward.17} parent=71 // pred_check
        %p969 = pneg %p968
      $region74: #{transformer_forward.17} parent=71 // pred_check_branch
        %971 = sbr.rel (%p969) target = $region76
      $region75: #{transformer_forward.17} parent=71 // pred_region
        %972 = vst.msk [vmem:[%s600] sm:$0xff] %vm630, %v963
      $region76: #{transformer_forward.17} parent=71 // pred_fallthru
        _
      %p973 = scmp.gt.s32.totalorder %s29, 0
      // Predicated region
      $region77: #{transformer_forward.17} parent=71 // pred_check
        %p974 = pneg %p973
      $region78: #{transformer_forward.17} parent=71 // pred_check_branch
        %976 = sbr.rel (%p974) target = $region80
      $region79: #{transformer_forward.17} parent=71 // pred_region
        %v977 = vld [vmem:[%s600] sm:$0xff]
        %v978 = vadd.f32 %v977, %v963
        %979 = vst.msk [vmem:[%s600] sm:$0xff] %vm630, %v978
      $region80: #{transformer_forward.17} parent=71 // pred_fallthru
        _
      %p980 = scmp.eq.s32.totalorder %s29, 3
      // Predicated region
      $region81: #{transformer_forward.17} parent=71 // pred_check
        %p981 = pneg %p980
      $region82: #{transformer_forward.17} parent=71 // pred_check_branch
        %983 = sbr.rel (%p981) target = $region84
      $region83: #{transformer_forward.17} parent=71 // pred_region
        %v984 = vld [vmem:[%s600] sm:$0xff]
        %v985 = vld [vmem:[%s10] sm:$0x1]
        %v987 = vlaneseq
        %v988 = vshrl.u32 %v987, 7
        %v989 = vsub.s32 0, %v988
        %v990 = vrot.slane %v985, %v989
        %v992 = vadd.f32 %v984, %v990
        %v993 = vadd.f32 %v992, %v602
        %v994 = vsel %vm630, %v993, 0.0
        %995 = vadd.xlane.f32.xlu0 %v994
        %v996 = vpop.xlane.xlu0 %995
        %v997 = vrcp.pop 32.0
        %v998 = vmul.f32 %v996, %v997
        %v999 = vsub.f32 %v993, %v998
        %v1000 = vmul.f32 %v999, %v999
        %v1001 = vsel %vm630, %v1000, 0.0
        %1002 = vadd.xlane.f32.xlu0 %v1001
        %v1003 = vpop.xlane.xlu0 %1002
        %v1004 = vmul.f32 %v1003, %v997
        %v1005 = vadd.f32 %v1004, 1e-05
        %v1006 = vrsqrt.pop %v1005
        %v1007 = vmul.f32 %v999, %v1006
        %v1008 = vld [vmem:[%s11] sm:$0x1]
        %v1010 = vlaneseq
        %v1011 = vshrl.u32 %v1010, 7
        %v1012 = vsub.s32 0, %v1011
        %v1013 = vrot.slane %v1008, %v1012
        %v1015 = vmul.f32 %v1007, %v1013
        %v1016 = vld [vmem:[%s12] sm:$0x1]
        %v1018 = vlaneseq
        %v1019 = vshrl.u32 %v1018, 7
        %v1020 = vsub.s32 0, %v1019
        %v1021 = vrot.slane %v1016, %v1020
        %v1023 = vadd.f32 %v1015, %v1021
        %1024 = vst.msk [vmem:[%s600] sm:$0xff] %vm630, %v1023
      $region84: #{transformer_forward.17} parent=71 // pred_fallthru
        _
      %p1025 = scmp.lt.s32.totalorder %s28, 1
      %s1026 = scalar_select %p1025, %s28, 1
      %s1027 = smul.addr %s1026, 8
      %s1028 = scalar_lea.vmem %s13, %s1027
      // Predicated region
      $region85: #{transformer_forward.17} parent=71 // pred_check
        %p1029 = pneg %p377
      $region86: #{transformer_forward.17} parent=71 // pred_check_branch
        %1031 = sbr.rel (%p1029) target = $region88
      $region87: #{transformer_forward.17} parent=71 // pred_region
        _
      $region88: #{transformer_forward.17} parent=71 // pred_fallthru
        _
    $region72: #{transformer_forward.17} parent=5 // pred_fallthru
      _
    %p1032 = scmp.le.s32.totalorder 2, %s19
    // Predicated region
    $region89: #{transformer_forward.17} parent=5 // pred_check
      %p1033 = pneg %p1032
    $region90: #{transformer_forward.17} parent=5 // pred_check_branch
      %1035 = sbr.rel (%p1033) target = $region92
    $region91: #{transformer_forward.17} parent=5 // pred_region
      %s1036 = ssub.s32 %s19, 2
      // Predicated region
      $region93: #{transformer_forward.17} parent=91 // pred_check
        %p1037 = pneg %p383
      $region94: #{transformer_forward.17} parent=91 // pred_check_branch
        %1039 = sbr.rel (%p1037) target = $region96
      $region95: #{transformer_forward.17} parent=91 // pred_region
        %p1040 = scmp.lt.s32.totalorder %s30, 1
        %s1041 = scalar_select %p1040, %s30, 1
        %s1042 = smul.addr %s1041, 8
        %s1043 = scalar_lea.vmem %s13, %s1042
      $region96: #{transformer_forward.17} parent=91 // pred_fallthru
        _
    $region92: #{transformer_forward.17} parent=5 // pred_fallthru
      _
  $region6: #{transformer_forward.17} parent=0 // loop_footer
    %s23 = sadd.s32 1, %s19
  $region7: #{transformer_forward.17} parent=0 // loop_footer_branch
    %18 = sbr.rel target = $region3
  $region8: #{transformer_forward.17} parent=0 // loop_exit
    _

</llo_original>
